<compile_context>
chip_gen: v7x
topology: tpu7x:2x2x1
jax: 0.10.0
libtpu: 0.0.40
codegen_flags: <defaults>
</compile_context>

<pallas_src>
import functools
import math

import jax
import jax.numpy as jnp
from jax import lax
from jax.experimental import pallas as pl
from jax.experimental.pallas import tpu as pltpu

# ----------------------------- config (small shapes) -------------------------------
PROBLEM_NAME = "tsp"
NODE_DIM = 2            # tsp -> node_dim = 2
NODE_DIM_PAD = 8        # zero-padded for layout friendliness (zero rows in W, identical math)
EMBED_DIM = 32
HIDDEN_DIM = 64         # FFN hidden dim
N_HEADS = 4
N_LAYERS = 2
SEQ_LEN = 16            # graph size / seq_length
K_OPT = 4               # k of the k-opt decoder
V_RANGE = 6.0
KEY_DIM = EMBED_DIM // N_HEADS


# ----------------------------------- helpers ---------------------------------------
def _layer_norm(x, g, b, eps=1e-5):
    mu = jnp.mean(x, axis=-1, keepdims=True)
    var = jnp.mean((x - mu) ** 2, axis=-1, keepdims=True)
    return (x - mu) * lax.rsqrt(var + eps) * g + b


def _cat(xs, axis):
    return xs[0] if len(xs) == 1 else jnp.concatenate(xs, axis=axis)


def _pick_batch_tile(bs, gs):
    """Target ~256-512 folded rows (bt*gs) per grid step; only split into >=2 tiles
    when every tile still keeps >=128 rows (keeps both v7x TensorCores MXU-efficient,
    collapses to a single tile for small batches on all generations)."""
    best = bs
    for n_tiles in range(2, bs + 1):
        if bs % n_tiles:
            continue
        bt = bs // n_tiles
        if bt * gs < 128:
            break
        best = bt
        if bt * gs <= 512:
            break
    return best


# ----------------------------------- fused kernel -----------------------------------
def _actor_fused_kernel(x_ref, vt_ref, emb_w_ref, emb_b_ref, cpe_ref,
                        pos_wq_ref, pos_wk_ref,
                        wqkv_ref, wo_ref, ln_ref, w1_ref, b1_ref, w2_ref, b2_ref,
                        dwg_ref, dwk_ref, dwu_ref,
                        h_out_ref, act_ref, ll_ref,
                        *, bt, gs, d, n_heads, kd, n_layers, k, v_range):
    f32 = jnp.float32
    att_scale = 1.0 / math.sqrt(kd)
    dec_scale = 1.0 / math.sqrt(d)
    rows = bt * gs

    # ---------------- node embedding (batch folded onto sublanes) ----------------
    ndp = x_ref.shape[-1]
    x = x_ref[...].reshape(rows, ndp)                                     # (rows, ndp)
    h = jnp.dot(x, emb_w_ref[...], preferred_element_type=f32) + emb_b_ref[...]

    # ---- cyclic positional embedding: ONE one-hot matmul over the whole tile ----
    vt = vt_ref[...]                                                      # (bt, gs) int32
    j_iota = lax.broadcasted_iota(jnp.int32, (bt, gs, gs), 2)
    onehot_vt = (vt[:, :, None] == j_iota).astype(f32).reshape(rows, gs)  # (rows, gs)
    h_pos = jnp.dot(onehot_vt, cpe_ref[...], preferred_element_type=f32)  # (rows, d)

    # ---------- MultiHeadPosCompat: aux scores stay resident in VMEM ----------
    pq = jnp.dot(h_pos, pos_wq_ref[...],
                 preferred_element_type=f32).reshape(bt, gs, n_heads * kd)
    pk = jnp.dot(h_pos, pos_wk_ref[...],
                 preferred_element_type=f32).reshape(bt, gs, n_heads * kd)
    aux = [jnp.einsum('bqc,bkc->bqk',
                      pq[..., hd * kd:(hd + 1) * kd],
                      pk[..., hd * kd:(hd + 1) * kd],
                      preferred_element_type=f32) * att_scale
           for hd in range(n_heads)]                                      # nh x (bt, gs, gs)

    # -------- encoder layers (stacked-head QKV / output projections, batched heads) --------
    for l in range(n_layers):
        ln = ln_ref[l]                                                    # (4, d)
        qkv = jnp.dot(h, wqkv_ref[l], preferred_element_type=f32)         # (rows, 3*nh*kd)
        qkv3 = qkv.reshape(bt, gs, 3 * n_heads * kd)
        head_outs = []
        for hd in range(n_heads):
            q = qkv3[..., hd * kd:(hd + 1) * kd]
            kk = qkv3[..., (n_heads + hd) * kd:(n_heads + hd + 1) * kd]
            v = qkv3[..., (2 * n_heads + hd) * kd:(2 * n_heads + hd + 1) * kd]
            compat = jnp.einsum('bqc,bkc->bqk', q, kk,
                                preferred_element_type=f32) * att_scale + aux[hd]
            compat = compat - jnp.max(compat, axis=-1, keepdims=True)
            p = jnp.exp(compat)
            p = p * pl.reciprocal(jnp.sum(p, axis=-1, keepdims=True), approx=True)
            head_outs.append(jnp.einsum('bqk,bkc->bqc', p, v,
                                        preferred_element_type=f32))      # (bt, gs, kd)
        heads = _cat(head_outs, -1).reshape(rows, n_heads * kd)           # (rows, nh*kd)
        mha = jnp.dot(heads, wo_ref[l], preferred_element_type=f32)       # (rows, d)
        h1 = _layer_norm(h + mha, ln[0:1], ln[1:2])
        ff = jnp.maximum(jnp.dot(h1, w1_ref[l], preferred_element_type=f32) + b1_ref[l], 0.0)
        ff = jnp.dot(ff, w2_ref[l], preferred_element_type=f32) + b2_ref[l]
        h = _layer_norm(h1 + ff, ln[2:3], ln[3:4])

    h_out_ref[...] = h.reshape(bt, gs, d)

    # ---------- kopt pointer decoder (greedy, batched over the batch tile) ----------
    # TODO(synk): kopt_Decoder internals (with_RNN / with_feature3 / simpleMDP /
    #             multinomial sampling / context2 / last_action) unavailable; plain
    #             pointer path with deterministic greedy selection is implemented.
    # All per-step work is VPU/XLU only: h@Wk and h@Wu are hoisted out of the loop and
    # (onehot@h)@Wu is re-associated into onehot@(h@Wu), so no MXU round-trip sits on
    # the serial q -> logits -> onehot -> q dependence chain.
    h3 = h.reshape(bt, gs, d)
    keys3 = jnp.dot(h, dwk_ref[...], preferred_element_type=f32).reshape(bt, gs, d)
    hu3 = jnp.dot(h, dwu_ref[...], preferred_element_type=f32).reshape(bt, gs, d)
    gmean = jnp.mean(h3, axis=1)                                          # (bt, d)
    q = jnp.dot(gmean, dwg_ref[...], preferred_element_type=f32)          # (bt, d)

    node_iota = lax.broadcasted_iota(jnp.int32, (bt, gs), 1)
    slot_iota = lax.broadcasted_iota(jnp.int32, (bt, k), 1)
    mask = jnp.zeros((bt, gs), f32)
    acts = jnp.zeros((bt, k), jnp.int32)
    logll = jnp.zeros((bt, 1), f32)

    for t in range(k):                                                    # k small & static
        logits = jnp.sum(q[:, None, :] * keys3, axis=-1)                  # (bt, gs) VPU+XLU
        logits = v_range * jnp.tanh(logits * dec_scale)
        logits = jnp.where(mask > 0.5, jnp.float32(-1e9), logits)
        m = jnp.max(logits, axis=-1, keepdims=True)                       # (bt, 1)
        a = jnp.min(jnp.where(logits == m, node_iota, gs),
                    axis=-1, keepdims=True)                               # per-row argmax
        onehot = (node_iota == a).astype(f32)                             # (bt, gs)
        denom = jnp.sum(jnp.exp(logits - m), axis=-1, keepdims=True)
        sel_logit = jnp.sum(logits * onehot, axis=-1, keepdims=True)
        logll = logll + (sel_logit - m) - jnp.log(denom)
        acts = jnp.where(slot_iota == t, a, acts)
        mask = mask + onehot
        q = jnp.sum(onehot[:, :, None] * hu3, axis=1)                     # (bt, d) VPU+XLU

    act_ref[...] = acts
    ll_ref[...] = logll


# ------------------------------ pallas_call wrapper ---------------------------------
def _const_map(ndim):
    return lambda i: (0,) * ndim


def actor_forward_fused(params, x_in, visited_time, *, batch_tile=None,
                        k=K_OPT, v_range=V_RANGE):
    bs, gs, in_d = x_in.shape
    d, nh, kd, hid, nl = EMBED_DIM, N_HEADS, KEY_DIM, HIDDEN_DIM, N_LAYERS

    if batch_tile is None:
        batch_tile = _pick_batch_tile(bs, gs)
    assert bs % batch_tile == 0
    n_tiles = bs // batch_tile

    x_pad = jnp.pad(x_in.astype(jnp.float32),
                    ((0, 0), (0, 0), (0, NODE_DIM_PAD - in_d)))
    vt = visited_time.astype(jnp.int32)                                   # (bs, gs)

    kern = functools.partial(
        _actor_fused_kernel, bt=batch_tile, gs=gs, d=d, n_heads=nh, kd=kd,
        n_layers=nl, k=k, v_range=v_range)

    h_em, action, log_ll = pl.pallas_call(
        kern,
        out_shape=(
            jax.ShapeDtypeStruct((bs, gs, d), jnp.float32),
            jax.ShapeDtypeStruct((bs, k), jnp.int32),
            jax.ShapeDtypeStruct((bs, 1), jnp.float32),
        ),
        grid=(n_tiles,),
        in_specs=[
            pl.BlockSpec((batch_tile, gs, NODE_DIM_PAD), lambda i: (i, 0, 0)),
            pl.BlockSpec((batch_tile, gs), lambda i: (i, 0)),
            pl.BlockSpec((NODE_DIM_PAD, d), _const_map(2)),
            pl.BlockSpec((1, d), _const_map(2)),
            pl.BlockSpec((gs, d), _const_map(2)),
            pl.BlockSpec((d, nh * kd), _const_map(2)),
            pl.BlockSpec((d, nh * kd), _const_map(2)),
            pl.BlockSpec((nl, d, 3 * nh * kd), _const_map(3)),
            pl.BlockSpec((nl, nh * kd, d), _const_map(3)),
            pl.BlockSpec((nl, 4, d), _const_map(3)),
            pl.BlockSpec((nl, d, hid), _const_map(3)),
            pl.BlockSpec((nl, 1, hid), _const_map(3)),
            pl.BlockSpec((nl, hid, d), _const_map(3)),
            pl.BlockSpec((nl, 1, d), _const_map(3)),
            pl.BlockSpec((d, d), _const_map(2)),
            pl.BlockSpec((d, d), _const_map(2)),
            pl.BlockSpec((d, d), _const_map(2)),
        ],
        out_specs=(
            pl.BlockSpec((batch_tile, gs, d), lambda i: (i, 0, 0)),
            pl.BlockSpec((batch_tile, k), lambda i: (i, 0)),
            pl.BlockSpec((batch_tile, 1), lambda i: (i, 0)),
        ),
        compiler_params=pltpu.CompilerParams(dimension_semantics=("parallel",)),
    )(x_pad, vt,
      params["emb_w"], params["emb_b"], params["cpe"],
      params["pos_wq"], params["pos_wk"],
      params["wqkv"], params["wo"], params["ln"],
      params["w1"], params["b1"], params["w2"], params["b2"],
      params["dec_wg"], params["dec_wk"], params["dec_wu"])
    return action, log_ll[:, 0], h_em


# ------------------------------- glue / parameters ----------------------------------
class TSPProblem:
    NAME = "tsp"

    @staticmethod
    def get_order(solution, return_solution=False):
        # solution[b, t] = node visited at time t ; visited_time[b, node] = t
        bs, gs = solution.shape
        vt = jnp.zeros((bs, gs), dtype=jnp.int32)
        vt = vt.at[jnp.arange(bs)[:, None], solution].set(
            jnp.broadcast_to(jnp.arange(gs, dtype=jnp.int32), (bs, gs)))
        return vt


def cyclic_pos_pattern(gs, d):
    # TODO(synk): exact DACT/NeuOpt cyclic-positional-encoding pattern unavailable; using a
    #             deterministic cyclic sinusoid table of identical shape/role.
    pos = jnp.arange(gs, dtype=jnp.float32)[:, None]
    i = jnp.arange(d, dtype=jnp.float32)[None, :]
    freq = 2.0 * jnp.pi * (jnp.floor(i / 2.0) + 1.0) / gs
    phase = (i % 2.0) * (jnp.pi / 2.0)
    return jnp.sin(freq * pos + phase)


def init_actor_params(key):
    d, hid, nh, kd, nl = EMBED_DIM, HIDDEN_DIM, N_HEADS, KEY_DIM, N_LAYERS
    keys = iter(jax.random.split(key, 32))

    def dense(shape, fan_in):
        return jax.random.normal(next(keys), shape, jnp.float32) / math.sqrt(fan_in)

    emb_w = jnp.zeros((NODE_DIM_PAD, d), jnp.float32).at[:NODE_DIM].set(
        dense((NODE_DIM, d), NODE_DIM))
    ln = jnp.zeros((nl, 4, d), jnp.float32).at[:, 0].set(1.0).at[:, 2].set(1.0)
    return {
        "emb_w": emb_w,
        "emb_b": jnp.zeros((1, d), jnp.float32),
        "cpe": cyclic_pos_pattern(SEQ_LEN, d),
        "pos_wq": dense((d, nh * kd), d),           # heads stacked on lanes
        "pos_wk": dense((d, nh * kd), d),
        "wqkv": dense((nl, d, 3 * nh * kd), d),     # [Q heads | K heads | V heads]
        "wo": dense((nl, nh * kd, d), kd),
        "ln": ln,                                   # [ln1_g, ln1_b, ln2_g, ln2_b] per layer
        "w1": dense((nl, d, hid), d),
        "b1": jnp.zeros((nl, 1, hid), jnp.float32),
        "w2": dense((nl, hid, d), hid),
        "b2": jnp.zeros((nl, 1, d), jnp.float32),
        "dec_wg": dense((d, d), d),
        "dec_wk": dense((d, d), d),
        "dec_wu": dense((d, d), d),
    }


def actor_forward(params, problem, x_in, solution, to_critic=True):
    """Mirrors Actor.forward for problem='tsp', with_timestep=False, require_entropy=False."""
    assert problem.NAME == "tsp"
    visited_time = problem.get_order(solution, return_solution=False)
    action, log_ll, h_em = actor_forward_fused(params, x_in, visited_time)
    return action, log_ll, (h_em if to_critic else None)


# --------------------------------------- main ---------------------------------------
if __name__ == "__main__":
    key = jax.random.PRNGKey(0)
    pkey, xkey, skey = jax.random.split(key, 3)

    params = init_actor_params(pkey)

    bs = 2
    x_in = jax.random.uniform(xkey, (bs, SEQ_LEN, NODE_DIM), jnp.float32)
    sol = jnp.stack([jax.random.permutation(kk, SEQ_LEN)
                     for kk in jax.random.split(skey, bs)]).astype(jnp.int32)

    problem = TSPProblem()
    action, log_ll, h_em = actor_forward(params, problem, x_in, sol, to_critic=True)
    jax.block_until_ready((action, log_ll, h_em))

    assert action.shape == (bs, K_OPT)
    assert log_ll.shape == (bs,)
    assert h_em.shape == (bs, SEQ_LEN, EMBED_DIM)
    print("KERNEL_OK")
</pallas_src>

<mosaic_0001>
module attributes {stable_mosaic.version = 11 : i64} {
  func.func @_actor_fused_kernel(%arg0: i32, %arg1: memref<2x16x8xf32, #tpu.memory_space<vmem>>, %arg2: memref<2x16xi32, #tpu.memory_space<vmem>>, %arg3: memref<8x32xf32, #tpu.memory_space<vmem>>, %arg4: memref<1x32xf32, #tpu.memory_space<vmem>>, %arg5: memref<16x32xf32, #tpu.memory_space<vmem>>, %arg6: memref<32x32xf32, #tpu.memory_space<vmem>>, %arg7: memref<32x32xf32, #tpu.memory_space<vmem>>, %arg8: memref<2x32x96xf32, #tpu.memory_space<vmem>>, %arg9: memref<2x32x32xf32, #tpu.memory_space<vmem>>, %arg10: memref<2x4x32xf32, #tpu.memory_space<vmem>>, %arg11: memref<2x32x64xf32, #tpu.memory_space<vmem>>, %arg12: memref<2x1x64xf32, #tpu.memory_space<vmem>>, %arg13: memref<2x64x32xf32, #tpu.memory_space<vmem>>, %arg14: memref<2x1x32xf32, #tpu.memory_space<vmem>>, %arg15: memref<32x32xf32, #tpu.memory_space<vmem>>, %arg16: memref<32x32xf32, #tpu.memory_space<vmem>>, %arg17: memref<32x32xf32, #tpu.memory_space<vmem>>, %arg18: memref<2x16x32xf32, #tpu.memory_space<vmem>>, %arg19: memref<2x4xi32, #tpu.memory_space<vmem>>, %arg20: memref<2x1xf32, #tpu.memory_space<vmem>>) attributes {dimension_semantics = [#tpu.dimension_semantics<parallel>], iteration_bounds = array<i64: 1>, scalar_prefetch = 0 : i64, scratch_operands = 0 : i64, tpu.core_type = #tpu.core_type<tc>, window_params = [{transform_indices = @transform_0, window_bounds = array<i64: 2, 16, 8>}, {transform_indices = @transform_1, window_bounds = array<i64: 2, 16>}, {pipeline_mode = #tpu.pipeline_mode<synchronous>, transform_indices = @transform_2, window_bounds = array<i64: 8, 32>}, {pipeline_mode = #tpu.pipeline_mode<synchronous>, transform_indices = @transform_3, window_bounds = array<i64: 1, 32>}, {pipeline_mode = #tpu.pipeline_mode<synchronous>, transform_indices = @transform_4, window_bounds = array<i64: 16, 32>}, {pipeline_mode = #tpu.pipeline_mode<synchronous>, transform_indices = @transform_5, window_bounds = array<i64: 32, 32>}, {pipeline_mode = #tpu.pipeline_mode<synchronous>, transform_indices = @transform_6, window_bounds = array<i64: 32, 32>}, {pipeline_mode = #tpu.pipeline_mode<synchronous>, transform_indices = @transform_7, window_bounds = array<i64: 2, 32, 96>}, {pipeline_mode = #tpu.pipeline_mode<synchronous>, transform_indices = @transform_8, window_bounds = array<i64: 2, 32, 32>}, {pipeline_mode = #tpu.pipeline_mode<synchronous>, transform_indices = @transform_9, window_bounds = array<i64: 2, 4, 32>}, {pipeline_mode = #tpu.pipeline_mode<synchronous>, transform_indices = @transform_10, window_bounds = array<i64: 2, 32, 64>}, {pipeline_mode = #tpu.pipeline_mode<synchronous>, transform_indices = @transform_11, window_bounds = array<i64: 2, 1, 64>}, {pipeline_mode = #tpu.pipeline_mode<synchronous>, transform_indices = @transform_12, window_bounds = array<i64: 2, 64, 32>}, {pipeline_mode = #tpu.pipeline_mode<synchronous>, transform_indices = @transform_13, window_bounds = array<i64: 2, 1, 32>}, {pipeline_mode = #tpu.pipeline_mode<synchronous>, transform_indices = @transform_14, window_bounds = array<i64: 32, 32>}, {pipeline_mode = #tpu.pipeline_mode<synchronous>, transform_indices = @transform_15, window_bounds = array<i64: 32, 32>}, {pipeline_mode = #tpu.pipeline_mode<synchronous>, transform_indices = @transform_16, window_bounds = array<i64: 32, 32>}, {transform_indices = @transform_17, window_bounds = array<i64: 2, 16, 32>}, {transform_indices = @transform_18, window_bounds = array<i64: 2, 4>}, {transform_indices = @transform_19, window_bounds = array<i64: 2, 1>}]} {
    %c0 = arith.constant 0 : index
    %c0_0 = arith.constant 0 : index
    %c0_1 = arith.constant 0 : index
    %0 = vector.load %arg1[%c0, %c0_0, %c0_1] : memref<2x16x8xf32, #tpu.memory_space<vmem>>, vector<2x16x8xf32>
    %1 = vector.shape_cast %0 : vector<2x16x8xf32> to vector<32x8xf32>
    %c0_2 = arith.constant 0 : index
    %c0_3 = arith.constant 0 : index
    %2 = vector.load %arg3[%c0_2, %c0_3] : memref<8x32xf32, #tpu.memory_space<vmem>>, vector<8x32xf32>
    %cst = arith.constant dense<0.000000e+00> : vector<32x32xf32>
    %3 = tpu.matmul %1, %2, %cst {dimension_numbers = #tpu.dot_dimension_numbers<[1], [0], [0], [1], [0, 0, 1, 1], [], []>} : vector<32x8xf32>, vector<8x32xf32>, vector<32x32xf32> -> vector<32x32xf32>
    %c0_4 = arith.constant 0 : index
    %c0_5 = arith.constant 0 : index
    %4 = vector.load %arg4[%c0_4, %c0_5] : memref<1x32xf32, #tpu.memory_space<vmem>>, vector<1x32xf32>
    %5 = vector.broadcast %4 : vector<1x32xf32> to vector<32x32xf32>
    %6 = arith.addf %3, %5 : vector<32x32xf32>
    %c0_6 = arith.constant 0 : index
    %c0_7 = arith.constant 0 : index
    %7 = vector.load %arg2[%c0_6, %c0_7] : memref<2x16xi32, #tpu.memory_space<vmem>>, vector<2x16xi32>
    %8 = tpu.iota {dimensions = array<i32: 2>} : vector<2x16x16xi32>
    %9 = vector.shape_cast %7 : vector<2x16xi32> to vector<2x16x1xi32>
    %10 = vector.broadcast %9 : vector<2x16x1xi32> to vector<2x16x16xi32>
    %11 = arith.cmpi eq, %10, %8 : vector<2x16x16xi32>
    %12 = arith.extui %11 : vector<2x16x16xi1> to vector<2x16x16xi32>
    %13 = arith.sitofp %12 : vector<2x16x16xi32> to vector<2x16x16xf32>
    %14 = vector.shape_cast %13 : vector<2x16x16xf32> to vector<32x16xf32>
    %c0_8 = arith.constant 0 : index
    %c0_9 = arith.constant 0 : index
    %15 = vector.load %arg5[%c0_8, %c0_9] : memref<16x32xf32, #tpu.memory_space<vmem>>, vector<16x32xf32>
    %cst_10 = arith.constant dense<0.000000e+00> : vector<32x32xf32>
    %16 = tpu.matmul %14, %15, %cst_10 {dimension_numbers = #tpu.dot_dimension_numbers<[1], [0], [0], [1], [0, 0, 1, 1], [], []>} : vector<32x16xf32>, vector<16x32xf32>, vector<32x32xf32> -> vector<32x32xf32>
    %c0_11 = arith.constant 0 : index
    %c0_12 = arith.constant 0 : index
    %17 = vector.load %arg6[%c0_11, %c0_12] : memref<32x32xf32, #tpu.memory_space<vmem>>, vector<32x32xf32>
    %cst_13 = arith.constant dense<0.000000e+00> : vector<32x32xf32>
    %18 = tpu.matmul %16, %17, %cst_13 {dimension_numbers = #tpu.dot_dimension_numbers<[1], [0], [0], [1], [0, 0, 1, 1], [], []>} : vector<32x32xf32>, vector<32x32xf32>, vector<32x32xf32> -> vector<32x32xf32>
    %19 = vector.shape_cast %18 : vector<32x32xf32> to vector<2x16x32xf32>
    %c0_14 = arith.constant 0 : index
    %c0_15 = arith.constant 0 : index
    %20 = vector.load %arg7[%c0_14, %c0_15] : memref<32x32xf32, #tpu.memory_space<vmem>>, vector<32x32xf32>
    %cst_16 = arith.constant dense<0.000000e+00> : vector<32x32xf32>
    %21 = tpu.matmul %16, %20, %cst_16 {dimension_numbers = #tpu.dot_dimension_numbers<[1], [0], [0], [1], [0, 0, 1, 1], [], []>} : vector<32x32xf32>, vector<32x32xf32>, vector<32x32xf32> -> vector<32x32xf32>
    %22 = vector.shape_cast %21 : vector<32x32xf32> to vector<2x16x32xf32>
    %23 = vector.extract_strided_slice %19 {offsets = [0, 0, 0], sizes = [2, 16, 8], strides = [1, 1, 1]} : vector<2x16x32xf32> to vector<2x16x8xf32>
    %24 = vector.extract_strided_slice %22 {offsets = [0, 0, 0], sizes = [2, 16, 8], strides = [1, 1, 1]} : vector<2x16x32xf32> to vector<2x16x8xf32>
    "tpu.trace_start"() <{level = 10 : i32, message = "bqc,bkc->bqk"}> : () -> ()
    %cst_17 = arith.constant dense<0.000000e+00> : vector<2x16x16xf32>
    %25 = tpu.matmul %23, %24, %cst_17 {dimension_numbers = #tpu.dot_dimension_numbers<[2], [2], [1], [1], [0, 0, 0, 1, 1, 1], [0], [0]>} : vector<2x16x8xf32>, vector<2x16x8xf32>, vector<2x16x16xf32> -> vector<2x16x16xf32>
    "tpu.trace_stop"() : () -> ()
    %cst_18 = arith.constant 0.353553385 : f32
    %26 = vector.broadcast %cst_18 : f32 to vector<2x16x16xf32>
    %27 = arith.mulf %25, %26 : vector<2x16x16xf32>
    %28 = vector.extract_strided_slice %19 {offsets = [0, 0, 8], sizes = [2, 16, 8], strides = [1, 1, 1]} : vector<2x16x32xf32> to vector<2x16x8xf32>
    %29 = vector.extract_strided_slice %22 {offsets = [0, 0, 8], sizes = [2, 16, 8], strides = [1, 1, 1]} : vector<2x16x32xf32> to vector<2x16x8xf32>
    "tpu.trace_start"() <{level = 10 : i32, message = "bqc,bkc->bqk"}> : () -> ()
    %cst_19 = arith.constant dense<0.000000e+00> : vector<2x16x16xf32>
    %30 = tpu.matmul %28, %29, %cst_19 {dimension_numbers = #tpu.dot_dimension_numbers<[2], [2], [1], [1], [0, 0, 0, 1, 1, 1], [0], [0]>} : vector<2x16x8xf32>, vector<2x16x8xf32>, vector<2x16x16xf32> -> vector<2x16x16xf32>
    "tpu.trace_stop"() : () -> ()
    %cst_20 = arith.constant 0.353553385 : f32
    %31 = vector.broadcast %cst_20 : f32 to vector<2x16x16xf32>
    %32 = arith.mulf %30, %31 : vector<2x16x16xf32>
    %33 = vector.extract_strided_slice %19 {offsets = [0, 0, 16], sizes = [2, 16, 8], strides = [1, 1, 1]} : vector<2x16x32xf32> to vector<2x16x8xf32>
    %34 = vector.extract_strided_slice %22 {offsets = [0, 0, 16], sizes = [2, 16, 8], strides = [1, 1, 1]} : vector<2x16x32xf32> to vector<2x16x8xf32>
    "tpu.trace_start"() <{level = 10 : i32, message = "bqc,bkc->bqk"}> : () -> ()
    %cst_21 = arith.constant dense<0.000000e+00> : vector<2x16x16xf32>
    %35 = tpu.matmul %33, %34, %cst_21 {dimension_numbers = #tpu.dot_dimension_numbers<[2], [2], [1], [1], [0, 0, 0, 1, 1, 1], [0], [0]>} : vector<2x16x8xf32>, vector<2x16x8xf32>, vector<2x16x16xf32> -> vector<2x16x16xf32>
    "tpu.trace_stop"() : () -> ()
    %cst_22 = arith.constant 0.353553385 : f32
    %36 = vector.broadcast %cst_22 : f32 to vector<2x16x16xf32>
    %37 = arith.mulf %35, %36 : vector<2x16x16xf32>
    %38 = vector.extract_strided_slice %19 {offsets = [0, 0, 24], sizes = [2, 16, 8], strides = [1, 1, 1]} : vector<2x16x32xf32> to vector<2x16x8xf32>
    %39 = vector.extract_strided_slice %22 {offsets = [0, 0, 24], sizes = [2, 16, 8], strides = [1, 1, 1]} : vector<2x16x32xf32> to vector<2x16x8xf32>
    "tpu.trace_start"() <{level = 10 : i32, message = "bqc,bkc->bqk"}> : () -> ()
    %cst_23 = arith.constant dense<0.000000e+00> : vector<2x16x16xf32>
    %40 = tpu.matmul %38, %39, %cst_23 {dimension_numbers = #tpu.dot_dimension_numbers<[2], [2], [1], [1], [0, 0, 0, 1, 1, 1], [0], [0]>} : vector<2x16x8xf32>, vector<2x16x8xf32>, vector<2x16x16xf32> -> vector<2x16x16xf32>
    "tpu.trace_stop"() : () -> ()
    %cst_24 = arith.constant 0.353553385 : f32
    %41 = vector.broadcast %cst_24 : f32 to vector<2x16x16xf32>
    %42 = arith.mulf %40, %41 : vector<2x16x16xf32>
    %c0_25 = arith.constant 0 : index
    %c0_26 = arith.constant 0 : index
    %c0_27 = arith.constant 0 : index
    %43 = vector.load %arg10[%c0_25, %c0_26, %c0_27] : memref<2x4x32xf32, #tpu.memory_space<vmem>>, vector<1x4x32xf32>
    %44 = vector.shape_cast %43 : vector<1x4x32xf32> to vector<4x32xf32>
    %c0_28 = arith.constant 0 : index
    %c0_29 = arith.constant 0 : index
    %c0_30 = arith.constant 0 : index
    %45 = vector.load %arg8[%c0_28, %c0_29, %c0_30] : memref<2x32x96xf32, #tpu.memory_space<vmem>>, vector<1x32x96xf32>
    %46 = vector.shape_cast %45 : vector<1x32x96xf32> to vector<32x96xf32>
    %cst_31 = arith.constant dense<0.000000e+00> : vector<32x96xf32>
    %47 = tpu.matmul %6, %46, %cst_31 {dimension_numbers = #tpu.dot_dimension_numbers<[1], [0], [0], [1], [0, 0, 1, 1], [], []>} : vector<32x32xf32>, vector<32x96xf32>, vector<32x96xf32> -> vector<32x96xf32>
    %48 = vector.shape_cast %47 : vector<32x96xf32> to vector<2x16x96xf32>
    %49 = vector.extract_strided_slice %48 {offsets = [0, 0, 0], sizes = [2, 16, 8], strides = [1, 1, 1]} : vector<2x16x96xf32> to vector<2x16x8xf32>
    %50 = vector.extract_strided_slice %48 {offsets = [0, 0, 32], sizes = [2, 16, 8], strides = [1, 1, 1]} : vector<2x16x96xf32> to vector<2x16x8xf32>
    %51 = vector.extract_strided_slice %48 {offsets = [0, 0, 64], sizes = [2, 16, 8], strides = [1, 1, 1]} : vector<2x16x96xf32> to vector<2x16x8xf32>
    "tpu.trace_start"() <{level = 10 : i32, message = "bqc,bkc->bqk"}> : () -> ()
    %cst_32 = arith.constant dense<0.000000e+00> : vector<2x16x16xf32>
    %52 = tpu.matmul %49, %50, %cst_32 {dimension_numbers = #tpu.dot_dimension_numbers<[2], [2], [1], [1], [0, 0, 0, 1, 1, 1], [0], [0]>} : vector<2x16x8xf32>, vector<2x16x8xf32>, vector<2x16x16xf32> -> vector<2x16x16xf32>
    "tpu.trace_stop"() : () -> ()
    %cst_33 = arith.constant 0.353553385 : f32
    %53 = vector.broadcast %cst_33 : f32 to vector<2x16x16xf32>
    %54 = arith.mulf %52, %53 : vector<2x16x16xf32>
    %55 = arith.addf %54, %27 : vector<2x16x16xf32>
    %cst_34 = arith.constant dense<0xFF800000> : vector<2x16xf32>
    %56 = vector.multi_reduction <maximumf>, %55, %cst_34 [2] : vector<2x16x16xf32> to vector<2x16xf32>
    %57 = vector.shape_cast %56 : vector<2x16xf32> to vector<2x16x1xf32>
    %58 = vector.broadcast %57 : vector<2x16x1xf32> to vector<2x16x16xf32>
    %59 = arith.subf %55, %58 : vector<2x16x16xf32>
    %60 = math.exp %59 : vector<2x16x16xf32>
    %cst_35 = arith.constant dense<0.000000e+00> : vector<2x16xf32>
    %61 = vector.multi_reduction <add>, %60, %cst_35 [2] : vector<2x16x16xf32> to vector<2x16xf32>
    %62 = vector.shape_cast %61 : vector<2x16xf32> to vector<2x16x1xf32>
    %63 = tpu.reciprocal %62 {approx = true} : vector<2x16x1xf32> -> vector<2x16x1xf32>
    %64 = vector.broadcast %63 : vector<2x16x1xf32> to vector<2x16x16xf32>
    %65 = arith.mulf %60, %64 : vector<2x16x16xf32>
    "tpu.trace_start"() <{level = 10 : i32, message = "bqk,bkc->bqc"}> : () -> ()
    %cst_36 = arith.constant dense<0.000000e+00> : vector<2x16x8xf32>
    %66 = tpu.matmul %65, %51, %cst_36 {dimension_numbers = #tpu.dot_dimension_numbers<[2], [1], [1], [2], [0, 0, 0, 1, 1, 2], [0], [0]>} : vector<2x16x16xf32>, vector<2x16x8xf32>, vector<2x16x8xf32> -> vector<2x16x8xf32>
    "tpu.trace_stop"() : () -> ()
    %67 = vector.extract_strided_slice %48 {offsets = [0, 0, 8], sizes = [2, 16, 8], strides = [1, 1, 1]} : vector<2x16x96xf32> to vector<2x16x8xf32>
    %68 = vector.extract_strided_slice %48 {offsets = [0, 0, 40], sizes = [2, 16, 8], strides = [1, 1, 1]} : vector<2x16x96xf32> to vector<2x16x8xf32>
    %69 = vector.extract_strided_slice %48 {offsets = [0, 0, 72], sizes = [2, 16, 8], strides = [1, 1, 1]} : vector<2x16x96xf32> to vector<2x16x8xf32>
    "tpu.trace_start"() <{level = 10 : i32, message = "bqc,bkc->bqk"}> : () -> ()
    %cst_37 = arith.constant dense<0.000000e+00> : vector<2x16x16xf32>
    %70 = tpu.matmul %67, %68, %cst_37 {dimension_numbers = #tpu.dot_dimension_numbers<[2], [2], [1], [1], [0, 0, 0, 1, 1, 1], [0], [0]>} : vector<2x16x8xf32>, vector<2x16x8xf32>, vector<2x16x16xf32> -> vector<2x16x16xf32>
    "tpu.trace_stop"() : () -> ()
    %cst_38 = arith.constant 0.353553385 : f32
    %71 = vector.broadcast %cst_38 : f32 to vector<2x16x16xf32>
    %72 = arith.mulf %70, %71 : vector<2x16x16xf32>
    %73 = arith.addf %72, %32 : vector<2x16x16xf32>
    %cst_39 = arith.constant dense<0xFF800000> : vector<2x16xf32>
    %74 = vector.multi_reduction <maximumf>, %73, %cst_39 [2] : vector<2x16x16xf32> to vector<2x16xf32>
    %75 = vector.shape_cast %74 : vector<2x16xf32> to vector<2x16x1xf32>
    %76 = vector.broadcast %75 : vector<2x16x1xf32> to vector<2x16x16xf32>
    %77 = arith.subf %73, %76 : vector<2x16x16xf32>
    %78 = math.exp %77 : vector<2x16x16xf32>
    %cst_40 = arith.constant dense<0.000000e+00> : vector<2x16xf32>
    %79 = vector.multi_reduction <add>, %78, %cst_40 [2] : vector<2x16x16xf32> to vector<2x16xf32>
    %80 = vector.shape_cast %79 : vector<2x16xf32> to vector<2x16x1xf32>
    %81 = tpu.reciprocal %80 {approx = true} : vector<2x16x1xf32> -> vector<2x16x1xf32>
    %82 = vector.broadcast %81 : vector<2x16x1xf32> to vector<2x16x16xf32>
    %83 = arith.mulf %78, %82 : vector<2x16x16xf32>
    "tpu.trace_start"() <{level = 10 : i32, message = "bqk,bkc->bqc"}> : () -> ()
    %cst_41 = arith.constant dense<0.000000e+00> : vector<2x16x8xf32>
    %84 = tpu.matmul %83, %69, %cst_41 {dimension_numbers = #tpu.dot_dimension_numbers<[2], [1], [1], [2], [0, 0, 0, 1, 1, 2], [0], [0]>} : vector<2x16x16xf32>, vector<2x16x8xf32>, vector<2x16x8xf32> -> vector<2x16x8xf32>
    "tpu.trace_stop"() : () -> ()
    %85 = vector.extract_strided_slice %48 {offsets = [0, 0, 16], sizes = [2, 16, 8], strides = [1, 1, 1]} : vector<2x16x96xf32> to vector<2x16x8xf32>
    %86 = vector.extract_strided_slice %48 {offsets = [0, 0, 48], sizes = [2, 16, 8], strides = [1, 1, 1]} : vector<2x16x96xf32> to vector<2x16x8xf32>
    %87 = vector.extract_strided_slice %48 {offsets = [0, 0, 80], sizes = [2, 16, 8], strides = [1, 1, 1]} : vector<2x16x96xf32> to vector<2x16x8xf32>
    "tpu.trace_start"() <{level = 10 : i32, message = "bqc,bkc->bqk"}> : () -> ()
    %cst_42 = arith.constant dense<0.000000e+00> : vector<2x16x16xf32>
    %88 = tpu.matmul %85, %86, %cst_42 {dimension_numbers = #tpu.dot_dimension_numbers<[2], [2], [1], [1], [0, 0, 0, 1, 1, 1], [0], [0]>} : vector<2x16x8xf32>, vector<2x16x8xf32>, vector<2x16x16xf32> -> vector<2x16x16xf32>
    "tpu.trace_stop"() : () -> ()
    %cst_43 = arith.constant 0.353553385 : f32
    %89 = vector.broadcast %cst_43 : f32 to vector<2x16x16xf32>
    %90 = arith.mulf %88, %89 : vector<2x16x16xf32>
    %91 = arith.addf %90, %37 : vector<2x16x16xf32>
    %cst_44 = arith.constant dense<0xFF800000> : vector<2x16xf32>
    %92 = vector.multi_reduction <maximumf>, %91, %cst_44 [2] : vector<2x16x16xf32> to vector<2x16xf32>
    %93 = vector.shape_cast %92 : vector<2x16xf32> to vector<2x16x1xf32>
    %94 = vector.broadcast %93 : vector<2x16x1xf32> to vector<2x16x16xf32>
    %95 = arith.subf %91, %94 : vector<2x16x16xf32>
    %96 = math.exp %95 : vector<2x16x16xf32>
    %cst_45 = arith.constant dense<0.000000e+00> : vector<2x16xf32>
    %97 = vector.multi_reduction <add>, %96, %cst_45 [2] : vector<2x16x16xf32> to vector<2x16xf32>
    %98 = vector.shape_cast %97 : vector<2x16xf32> to vector<2x16x1xf32>
    %99 = tpu.reciprocal %98 {approx = true} : vector<2x16x1xf32> -> vector<2x16x1xf32>
    %100 = vector.broadcast %99 : vector<2x16x1xf32> to vector<2x16x16xf32>
    %101 = arith.mulf %96, %100 : vector<2x16x16xf32>
    "tpu.trace_start"() <{level = 10 : i32, message = "bqk,bkc->bqc"}> : () -> ()
    %cst_46 = arith.constant dense<0.000000e+00> : vector<2x16x8xf32>
    %102 = tpu.matmul %101, %87, %cst_46 {dimension_numbers = #tpu.dot_dimension_numbers<[2], [1], [1], [2], [0, 0, 0, 1, 1, 2], [0], [0]>} : vector<2x16x16xf32>, vector<2x16x8xf32>, vector<2x16x8xf32> -> vector<2x16x8xf32>
    "tpu.trace_stop"() : () -> ()
    %103 = vector.extract_strided_slice %48 {offsets = [0, 0, 24], sizes = [2, 16, 8], strides = [1, 1, 1]} : vector<2x16x96xf32> to vector<2x16x8xf32>
    %104 = vector.extract_strided_slice %48 {offsets = [0, 0, 56], sizes = [2, 16, 8], strides = [1, 1, 1]} : vector<2x16x96xf32> to vector<2x16x8xf32>
    %105 = vector.extract_strided_slice %48 {offsets = [0, 0, 88], sizes = [2, 16, 8], strides = [1, 1, 1]} : vector<2x16x96xf32> to vector<2x16x8xf32>
    "tpu.trace_start"() <{level = 10 : i32, message = "bqc,bkc->bqk"}> : () -> ()
    %cst_47 = arith.constant dense<0.000000e+00> : vector<2x16x16xf32>
    %106 = tpu.matmul %103, %104, %cst_47 {dimension_numbers = #tpu.dot_dimension_numbers<[2], [2], [1], [1], [0, 0, 0, 1, 1, 1], [0], [0]>} : vector<2x16x8xf32>, vector<2x16x8xf32>, vector<2x16x16xf32> -> vector<2x16x16xf32>
    "tpu.trace_stop"() : () -> ()
    %cst_48 = arith.constant 0.353553385 : f32
    %107 = vector.broadcast %cst_48 : f32 to vector<2x16x16xf32>
    %108 = arith.mulf %106, %107 : vector<2x16x16xf32>
    %109 = arith.addf %108, %42 : vector<2x16x16xf32>
    %cst_49 = arith.constant dense<0xFF800000> : vector<2x16xf32>
    %110 = vector.multi_reduction <maximumf>, %109, %cst_49 [2] : vector<2x16x16xf32> to vector<2x16xf32>
    %111 = vector.shape_cast %110 : vector<2x16xf32> to vector<2x16x1xf32>
    %112 = vector.broadcast %111 : vector<2x16x1xf32> to vector<2x16x16xf32>
    %113 = arith.subf %109, %112 : vector<2x16x16xf32>
    %114 = math.exp %113 : vector<2x16x16xf32>
    %cst_50 = arith.constant dense<0.000000e+00> : vector<2x16xf32>
    %115 = vector.multi_reduction <add>, %114, %cst_50 [2] : vector<2x16x16xf32> to vector<2x16xf32>
    %116 = vector.shape_cast %115 : vector<2x16xf32> to vector<2x16x1xf32>
    %117 = tpu.reciprocal %116 {approx = true} : vector<2x16x1xf32> -> vector<2x16x1xf32>
    %118 = vector.broadcast %117 : vector<2x16x1xf32> to vector<2x16x16xf32>
    %119 = arith.mulf %114, %118 : vector<2x16x16xf32>
    "tpu.trace_start"() <{level = 10 : i32, message = "bqk,bkc->bqc"}> : () -> ()
    %cst_51 = arith.constant dense<0.000000e+00> : vector<2x16x8xf32>
    %120 = tpu.matmul %119, %105, %cst_51 {dimension_numbers = #tpu.dot_dimension_numbers<[2], [1], [1], [2], [0, 0, 0, 1, 1, 2], [0], [0]>} : vector<2x16x16xf32>, vector<2x16x8xf32>, vector<2x16x8xf32> -> vector<2x16x8xf32>
    "tpu.trace_stop"() : () -> ()
    %121 = tpu.concatenate %66, %84, %102, %120 in 2 : vector<2x16x8xf32>, vector<2x16x8xf32>, vector<2x16x8xf32>, vector<2x16x8xf32> -> vector<2x16x32xf32>
    %122 = vector.shape_cast %121 : vector<2x16x32xf32> to vector<32x32xf32>
    %c0_52 = arith.constant 0 : index
    %c0_53 = arith.constant 0 : index
    %c0_54 = arith.constant 0 : index
    %123 = vector.load %arg9[%c0_52, %c0_53, %c0_54] : memref<2x32x32xf32, #tpu.memory_space<vmem>>, vector<1x32x32xf32>
    %124 = vector.shape_cast %123 : vector<1x32x32xf32> to vector<32x32xf32>
    %cst_55 = arith.constant dense<0.000000e+00> : vector<32x32xf32>
    %125 = tpu.matmul %122, %124, %cst_55 {dimension_numbers = #tpu.dot_dimension_numbers<[1], [0], [0], [1], [0, 0, 1, 1], [], []>} : vector<32x32xf32>, vector<32x32xf32>, vector<32x32xf32> -> vector<32x32xf32>
    %126 = arith.addf %6, %125 : vector<32x32xf32>
    %127 = vector.extract_strided_slice %44 {offsets = [0, 0], sizes = [1, 32], strides = [1, 1]} : vector<4x32xf32> to vector<1x32xf32>
    %128 = vector.extract_strided_slice %44 {offsets = [1, 0], sizes = [1, 32], strides = [1, 1]} : vector<4x32xf32> to vector<1x32xf32>
    %cst_56 = arith.constant dense<0.000000e+00> : vector<32xf32>
    %129 = vector.multi_reduction <add>, %126, %cst_56 [1] : vector<32x32xf32> to vector<32xf32>
    %130 = vector.shape_cast %129 : vector<32xf32> to vector<32x1xf32>
    %cst_57 = arith.constant 3.200000e+01 : f32
    %131 = vector.broadcast %cst_57 : f32 to vector<32x1xf32>
    %132 = arith.divf %130, %131 : vector<32x1xf32>
    %133 = vector.broadcast %132 : vector<32x1xf32> to vector<32x32xf32>
    %134 = arith.subf %126, %133 : vector<32x32xf32>
    %135 = arith.mulf %134, %134 : vector<32x32xf32>
    %cst_58 = arith.constant dense<0.000000e+00> : vector<32xf32>
    %136 = vector.multi_reduction <add>, %135, %cst_58 [1] : vector<32x32xf32> to vector<32xf32>
    %137 = vector.shape_cast %136 : vector<32xf32> to vector<32x1xf32>
    %cst_59 = arith.constant 3.200000e+01 : f32
    %138 = vector.broadcast %cst_59 : f32 to vector<32x1xf32>
    %139 = arith.divf %137, %138 : vector<32x1xf32>
    %140 = vector.broadcast %132 : vector<32x1xf32> to vector<32x32xf32>
    %141 = arith.subf %126, %140 : vector<32x32xf32>
    %cst_60 = arith.constant 9.99999974E-6 : f32
    %142 = vector.broadcast %cst_60 : f32 to vector<32x1xf32>
    %143 = arith.addf %139, %142 : vector<32x1xf32>
    %144 = math.rsqrt %143 : vector<32x1xf32>
    %145 = vector.broadcast %144 : vector<32x1xf32> to vector<32x32xf32>
    %146 = arith.mulf %141, %145 : vector<32x32xf32>
    %147 = vector.broadcast %127 : vector<1x32xf32> to vector<32x32xf32>
    %148 = arith.mulf %146, %147 : vector<32x32xf32>
    %149 = vector.broadcast %128 : vector<1x32xf32> to vector<32x32xf32>
    %150 = arith.addf %148, %149 : vector<32x32xf32>
    %c0_61 = arith.constant 0 : index
    %c0_62 = arith.constant 0 : index
    %c0_63 = arith.constant 0 : index
    %151 = vector.load %arg11[%c0_61, %c0_62, %c0_63] : memref<2x32x64xf32, #tpu.memory_space<vmem>>, vector<1x32x64xf32>
    %152 = vector.shape_cast %151 : vector<1x32x64xf32> to vector<32x64xf32>
    %cst_64 = arith.constant dense<0.000000e+00> : vector<32x64xf32>
    %153 = tpu.matmul %150, %152, %cst_64 {dimension_numbers = #tpu.dot_dimension_numbers<[1], [0], [0], [1], [0, 0, 1, 1], [], []>} : vector<32x32xf32>, vector<32x64xf32>, vector<32x64xf32> -> vector<32x64xf32>
    %c0_65 = arith.constant 0 : index
    %c0_66 = arith.constant 0 : index
    %c0_67 = arith.constant 0 : index
    %154 = vector.load %arg12[%c0_65, %c0_66, %c0_67] : memref<2x1x64xf32, #tpu.memory_space<vmem>>, vector<1x1x64xf32>
    %155 = vector.shape_cast %154 : vector<1x1x64xf32> to vector<1x64xf32>
    %156 = vector.broadcast %155 : vector<1x64xf32> to vector<32x64xf32>
    %157 = arith.addf %153, %156 : vector<32x64xf32>
    %cst_68 = arith.constant 0.000000e+00 : f32
    %158 = vector.broadcast %cst_68 : f32 to vector<32x64xf32>
    %159 = arith.maximumf %157, %158 : vector<32x64xf32>
    %c0_69 = arith.constant 0 : index
    %c0_70 = arith.constant 0 : index
    %c0_71 = arith.constant 0 : index
    %160 = vector.load %arg13[%c0_69, %c0_70, %c0_71] : memref<2x64x32xf32, #tpu.memory_space<vmem>>, vector<1x64x32xf32>
    %161 = vector.shape_cast %160 : vector<1x64x32xf32> to vector<64x32xf32>
    %cst_72 = arith.constant dense<0.000000e+00> : vector<32x32xf32>
    %162 = tpu.matmul %159, %161, %cst_72 {dimension_numbers = #tpu.dot_dimension_numbers<[1], [0], [0], [1], [0, 0, 1, 1], [], []>} : vector<32x64xf32>, vector<64x32xf32>, vector<32x32xf32> -> vector<32x32xf32>
    %c0_73 = arith.constant 0 : index
    %c0_74 = arith.constant 0 : index
    %c0_75 = arith.constant 0 : index
    %163 = vector.load %arg14[%c0_73, %c0_74, %c0_75] : memref<2x1x32xf32, #tpu.memory_space<vmem>>, vector<1x1x32xf32>
    %164 = vector.shape_cast %163 : vector<1x1x32xf32> to vector<1x32xf32>
    %165 = vector.broadcast %164 : vector<1x32xf32> to vector<32x32xf32>
    %166 = arith.addf %162, %165 : vector<32x32xf32>
    %167 = arith.addf %150, %166 : vector<32x32xf32>
    %168 = vector.extract_strided_slice %44 {offsets = [2, 0], sizes = [1, 32], strides = [1, 1]} : vector<4x32xf32> to vector<1x32xf32>
    %169 = vector.extract_strided_slice %44 {offsets = [3, 0], sizes = [1, 32], strides = [1, 1]} : vector<4x32xf32> to vector<1x32xf32>
    %cst_76 = arith.constant dense<0.000000e+00> : vector<32xf32>
    %170 = vector.multi_reduction <add>, %167, %cst_76 [1] : vector<32x32xf32> to vector<32xf32>
    %171 = vector.shape_cast %170 : vector<32xf32> to vector<32x1xf32>
    %cst_77 = arith.constant 3.200000e+01 : f32
    %172 = vector.broadcast %cst_77 : f32 to vector<32x1xf32>
    %173 = arith.divf %171, %172 : vector<32x1xf32>
    %174 = vector.broadcast %173 : vector<32x1xf32> to vector<32x32xf32>
    %175 = arith.subf %167, %174 : vector<32x32xf32>
    %176 = arith.mulf %175, %175 : vector<32x32xf32>
    %cst_78 = arith.constant dense<0.000000e+00> : vector<32xf32>
    %177 = vector.multi_reduction <add>, %176, %cst_78 [1] : vector<32x32xf32> to vector<32xf32>
    %178 = vector.shape_cast %177 : vector<32xf32> to vector<32x1xf32>
    %cst_79 = arith.constant 3.200000e+01 : f32
    %179 = vector.broadcast %cst_79 : f32 to vector<32x1xf32>
    %180 = arith.divf %178, %179 : vector<32x1xf32>
    %181 = vector.broadcast %173 : vector<32x1xf32> to vector<32x32xf32>
    %182 = arith.subf %167, %181 : vector<32x32xf32>
    %cst_80 = arith.constant 9.99999974E-6 : f32
    %183 = vector.broadcast %cst_80 : f32 to vector<32x1xf32>
    %184 = arith.addf %180, %183 : vector<32x1xf32>
    %185 = math.rsqrt %184 : vector<32x1xf32>
    %186 = vector.broadcast %185 : vector<32x1xf32> to vector<32x32xf32>
    %187 = arith.mulf %182, %186 : vector<32x32xf32>
    %188 = vector.broadcast %168 : vector<1x32xf32> to vector<32x32xf32>
    %189 = arith.mulf %187, %188 : vector<32x32xf32>
    %190 = vector.broadcast %169 : vector<1x32xf32> to vector<32x32xf32>
    %191 = arith.addf %189, %190 : vector<32x32xf32>
    %c1 = arith.constant 1 : index
    %c0_81 = arith.constant 0 : index
    %c0_82 = arith.constant 0 : index
    %192 = vector.load %arg10[%c1, %c0_81, %c0_82] : memref<2x4x32xf32, #tpu.memory_space<vmem>>, vector<1x4x32xf32>
    %193 = vector.shape_cast %192 : vector<1x4x32xf32> to vector<4x32xf32>
    %c1_83 = arith.constant 1 : index
    %c0_84 = arith.constant 0 : index
    %c0_85 = arith.constant 0 : index
    %194 = vector.load %arg8[%c1_83, %c0_84, %c0_85] : memref<2x32x96xf32, #tpu.memory_space<vmem>>, vector<1x32x96xf32>
    %195 = vector.shape_cast %194 : vector<1x32x96xf32> to vector<32x96xf32>
    %cst_86 = arith.constant dense<0.000000e+00> : vector<32x96xf32>
    %196 = tpu.matmul %191, %195, %cst_86 {dimension_numbers = #tpu.dot_dimension_numbers<[1], [0], [0], [1], [0, 0, 1, 1], [], []>} : vector<32x32xf32>, vector<32x96xf32>, vector<32x96xf32> -> vector<32x96xf32>
    %197 = vector.shape_cast %196 : vector<32x96xf32> to vector<2x16x96xf32>
    %198 = vector.extract_strided_slice %197 {offsets = [0, 0, 0], sizes = [2, 16, 8], strides = [1, 1, 1]} : vector<2x16x96xf32> to vector<2x16x8xf32>
    %199 = vector.extract_strided_slice %197 {offsets = [0, 0, 32], sizes = [2, 16, 8], strides = [1, 1, 1]} : vector<2x16x96xf32> to vector<2x16x8xf32>
    %200 = vector.extract_strided_slice %197 {offsets = [0, 0, 64], sizes = [2, 16, 8], strides = [1, 1, 1]} : vector<2x16x96xf32> to vector<2x16x8xf32>
    "tpu.trace_start"() <{level = 10 : i32, message = "bqc,bkc->bqk"}> : () -> ()
    %cst_87 = arith.constant dense<0.000000e+00> : vector<2x16x16xf32>
    %201 = tpu.matmul %198, %199, %cst_87 {dimension_numbers = #tpu.dot_dimension_numbers<[2], [2], [1], [1], [0, 0, 0, 1, 1, 1], [0], [0]>} : vector<2x16x8xf32>, vector<2x16x8xf32>, vector<2x16x16xf32> -> vector<2x16x16xf32>
    "tpu.trace_stop"() : () -> ()
    %cst_88 = arith.constant 0.353553385 : f32
    %202 = vector.broadcast %cst_88 : f32 to vector<2x16x16xf32>
    %203 = arith.mulf %201, %202 : vector<2x16x16xf32>
    %204 = arith.addf %203, %27 : vector<2x16x16xf32>
    %cst_89 = arith.constant dense<0xFF800000> : vector<2x16xf32>
    %205 = vector.multi_reduction <maximumf>, %204, %cst_89 [2] : vector<2x16x16xf32> to vector<2x16xf32>
    %206 = vector.shape_cast %205 : vector<2x16xf32> to vector<2x16x1xf32>
    %207 = vector.broadcast %206 : vector<2x16x1xf32> to vector<2x16x16xf32>
    %208 = arith.subf %204, %207 : vector<2x16x16xf32>
    %209 = math.exp %208 : vector<2x16x16xf32>
    %cst_90 = arith.constant dense<0.000000e+00> : vector<2x16xf32>
    %210 = vector.multi_reduction <add>, %209, %cst_90 [2] : vector<2x16x16xf32> to vector<2x16xf32>
    %211 = vector.shape_cast %210 : vector<2x16xf32> to vector<2x16x1xf32>
    %212 = tpu.reciprocal %211 {approx = true} : vector<2x16x1xf32> -> vector<2x16x1xf32>
    %213 = vector.broadcast %212 : vector<2x16x1xf32> to vector<2x16x16xf32>
    %214 = arith.mulf %209, %213 : vector<2x16x16xf32>
    "tpu.trace_start"() <{level = 10 : i32, message = "bqk,bkc->bqc"}> : () -> ()
    %cst_91 = arith.constant dense<0.000000e+00> : vector<2x16x8xf32>
    %215 = tpu.matmul %214, %200, %cst_91 {dimension_numbers = #tpu.dot_dimension_numbers<[2], [1], [1], [2], [0, 0, 0, 1, 1, 2], [0], [0]>} : vector<2x16x16xf32>, vector<2x16x8xf32>, vector<2x16x8xf32> -> vector<2x16x8xf32>
    "tpu.trace_stop"() : () -> ()
    %216 = vector.extract_strided_slice %197 {offsets = [0, 0, 8], sizes = [2, 16, 8], strides = [1, 1, 1]} : vector<2x16x96xf32> to vector<2x16x8xf32>
    %217 = vector.extract_strided_slice %197 {offsets = [0, 0, 40], sizes = [2, 16, 8], strides = [1, 1, 1]} : vector<2x16x96xf32> to vector<2x16x8xf32>
    %218 = vector.extract_strided_slice %197 {offsets = [0, 0, 72], sizes = [2, 16, 8], strides = [1, 1, 1]} : vector<2x16x96xf32> to vector<2x16x8xf32>
    "tpu.trace_start"() <{level = 10 : i32, message = "bqc,bkc->bqk"}> : () -> ()
    %cst_92 = arith.constant dense<0.000000e+00> : vector<2x16x16xf32>
    %219 = tpu.matmul %216, %217, %cst_92 {dimension_numbers = #tpu.dot_dimension_numbers<[2], [2], [1], [1], [0, 0, 0, 1, 1, 1], [0], [0]>} : vector<2x16x8xf32>, vector<2x16x8xf32>, vector<2x16x16xf32> -> vector<2x16x16xf32>
    "tpu.trace_stop"() : () -> ()
    %cst_93 = arith.constant 0.353553385 : f32
    %220 = vector.broadcast %cst_93 : f32 to vector<2x16x16xf32>
    %221 = arith.mulf %219, %220 : vector<2x16x16xf32>
    %222 = arith.addf %221, %32 : vector<2x16x16xf32>
    %cst_94 = arith.constant dense<0xFF800000> : vector<2x16xf32>
    %223 = vector.multi_reduction <maximumf>, %222, %cst_94 [2] : vector<2x16x16xf32> to vector<2x16xf32>
    %224 = vector.shape_cast %223 : vector<2x16xf32> to vector<2x16x1xf32>
    %225 = vector.broadcast %224 : vector<2x16x1xf32> to vector<2x16x16xf32>
    %226 = arith.subf %222, %225 : vector<2x16x16xf32>
    %227 = math.exp %226 : vector<2x16x16xf32>
    %cst_95 = arith.constant dense<0.000000e+00> : vector<2x16xf32>
    %228 = vector.multi_reduction <add>, %227, %cst_95 [2] : vector<2x16x16xf32> to vector<2x16xf32>
    %229 = vector.shape_cast %228 : vector<2x16xf32> to vector<2x16x1xf32>
    %230 = tpu.reciprocal %229 {approx = true} : vector<2x16x1xf32> -> vector<2x16x1xf32>
    %231 = vector.broadcast %230 : vector<2x16x1xf32> to vector<2x16x16xf32>
    %232 = arith.mulf %227, %231 : vector<2x16x16xf32>
    "tpu.trace_start"() <{level = 10 : i32, message = "bqk,bkc->bqc"}> : () -> ()
    %cst_96 = arith.constant dense<0.000000e+00> : vector<2x16x8xf32>
    %233 = tpu.matmul %232, %218, %cst_96 {dimension_numbers = #tpu.dot_dimension_numbers<[2], [1], [1], [2], [0, 0, 0, 1, 1, 2], [0], [0]>} : vector<2x16x16xf32>, vector<2x16x8xf32>, vector<2x16x8xf32> -> vector<2x16x8xf32>
    "tpu.trace_stop"() : () -> ()
    %234 = vector.extract_strided_slice %197 {offsets = [0, 0, 16], sizes = [2, 16, 8], strides = [1, 1, 1]} : vector<2x16x96xf32> to vector<2x16x8xf32>
    %235 = vector.extract_strided_slice %197 {offsets = [0, 0, 48], sizes = [2, 16, 8], strides = [1, 1, 1]} : vector<2x16x96xf32> to vector<2x16x8xf32>
    %236 = vector.extract_strided_slice %197 {offsets = [0, 0, 80], sizes = [2, 16, 8], strides = [1, 1, 1]} : vector<2x16x96xf32> to vector<2x16x8xf32>
    "tpu.trace_start"() <{level = 10 : i32, message = "bqc,bkc->bqk"}> : () -> ()
    %cst_97 = arith.constant dense<0.000000e+00> : vector<2x16x16xf32>
    %237 = tpu.matmul %234, %235, %cst_97 {dimension_numbers = #tpu.dot_dimension_numbers<[2], [2], [1], [1], [0, 0, 0, 1, 1, 1], [0], [0]>} : vector<2x16x8xf32>, vector<2x16x8xf32>, vector<2x16x16xf32> -> vector<2x16x16xf32>
    "tpu.trace_stop"() : () -> ()
    %cst_98 = arith.constant 0.353553385 : f32
    %238 = vector.broadcast %cst_98 : f32 to vector<2x16x16xf32>
    %239 = arith.mulf %237, %238 : vector<2x16x16xf32>
    %240 = arith.addf %239, %37 : vector<2x16x16xf32>
    %cst_99 = arith.constant dense<0xFF800000> : vector<2x16xf32>
    %241 = vector.multi_reduction <maximumf>, %240, %cst_99 [2] : vector<2x16x16xf32> to vector<2x16xf32>
    %242 = vector.shape_cast %241 : vector<2x16xf32> to vector<2x16x1xf32>
    %243 = vector.broadcast %242 : vector<2x16x1xf32> to vector<2x16x16xf32>
    %244 = arith.subf %240, %243 : vector<2x16x16xf32>
    %245 = math.exp %244 : vector<2x16x16xf32>
    %cst_100 = arith.constant dense<0.000000e+00> : vector<2x16xf32>
    %246 = vector.multi_reduction <add>, %245, %cst_100 [2] : vector<2x16x16xf32> to vector<2x16xf32>
    %247 = vector.shape_cast %246 : vector<2x16xf32> to vector<2x16x1xf32>
    %248 = tpu.reciprocal %247 {approx = true} : vector<2x16x1xf32> -> vector<2x16x1xf32>
    %249 = vector.broadcast %248 : vector<2x16x1xf32> to vector<2x16x16xf32>
    %250 = arith.mulf %245, %249 : vector<2x16x16xf32>
    "tpu.trace_start"() <{level = 10 : i32, message = "bqk,bkc->bqc"}> : () -> ()
    %cst_101 = arith.constant dense<0.000000e+00> : vector<2x16x8xf32>
    %251 = tpu.matmul %250, %236, %cst_101 {dimension_numbers = #tpu.dot_dimension_numbers<[2], [1], [1], [2], [0, 0, 0, 1, 1, 2], [0], [0]>} : vector<2x16x16xf32>, vector<2x16x8xf32>, vector<2x16x8xf32> -> vector<2x16x8xf32>
    "tpu.trace_stop"() : () -> ()
    %252 = vector.extract_strided_slice %197 {offsets = [0, 0, 24], sizes = [2, 16, 8], strides = [1, 1, 1]} : vector<2x16x96xf32> to vector<2x16x8xf32>
    %253 = vector.extract_strided_slice %197 {offsets = [0, 0, 56], sizes = [2, 16, 8], strides = [1, 1, 1]} : vector<2x16x96xf32> to vector<2x16x8xf32>
    %254 = vector.extract_strided_slice %197 {offsets = [0, 0, 88], sizes = [2, 16, 8], strides = [1, 1, 1]} : vector<2x16x96xf32> to vector<2x16x8xf32>
    "tpu.trace_start"() <{level = 10 : i32, message = "bqc,bkc->bqk"}> : () -> ()
    %cst_102 = arith.constant dense<0.000000e+00> : vector<2x16x16xf32>
    %255 = tpu.matmul %252, %253, %cst_102 {dimension_numbers = #tpu.dot_dimension_numbers<[2], [2], [1], [1], [0, 0, 0, 1, 1, 1], [0], [0]>} : vector<2x16x8xf32>, vector<2x16x8xf32>, vector<2x16x16xf32> -> vector<2x16x16xf32>
    "tpu.trace_stop"() : () -> ()
    %cst_103 = arith.constant 0.353553385 : f32
    %256 = vector.broadcast %cst_103 : f32 to vector<2x16x16xf32>
    %257 = arith.mulf %255, %256 : vector<2x16x16xf32>
    %258 = arith.addf %257, %42 : vector<2x16x16xf32>
    %cst_104 = arith.constant dense<0xFF800000> : vector<2x16xf32>
    %259 = vector.multi_reduction <maximumf>, %258, %cst_104 [2] : vector<2x16x16xf32> to vector<2x16xf32>
    %260 = vector.shape_cast %259 : vector<2x16xf32> to vector<2x16x1xf32>
    %261 = vector.broadcast %260 : vector<2x16x1xf32> to vector<2x16x16xf32>
    %262 = arith.subf %258, %261 : vector<2x16x16xf32>
    %263 = math.exp %262 : vector<2x16x16xf32>
    %cst_105 = arith.constant dense<0.000000e+00> : vector<2x16xf32>
    %264 = vector.multi_reduction <add>, %263, %cst_105 [2] : vector<2x16x16xf32> to vector<2x16xf32>
    %265 = vector.shape_cast %264 : vector<2x16xf32> to vector<2x16x1xf32>
    %266 = tpu.reciprocal %265 {approx = true} : vector<2x16x1xf32> -> vector<2x16x1xf32>
    %267 = vector.broadcast %266 : vector<2x16x1xf32> to vector<2x16x16xf32>
    %268 = arith.mulf %263, %267 : vector<2x16x16xf32>
    "tpu.trace_start"() <{level = 10 : i32, message = "bqk,bkc->bqc"}> : () -> ()
    %cst_106 = arith.constant dense<0.000000e+00> : vector<2x16x8xf32>
    %269 = tpu.matmul %268, %254, %cst_106 {dimension_numbers = #tpu.dot_dimension_numbers<[2], [1], [1], [2], [0, 0, 0, 1, 1, 2], [0], [0]>} : vector<2x16x16xf32>, vector<2x16x8xf32>, vector<2x16x8xf32> -> vector<2x16x8xf32>
    "tpu.trace_stop"() : () -> ()
    %270 = tpu.concatenate %215, %233, %251, %269 in 2 : vector<2x16x8xf32>, vector<2x16x8xf32>, vector<2x16x8xf32>, vector<2x16x8xf32> -> vector<2x16x32xf32>
    %271 = vector.shape_cast %270 : vector<2x16x32xf32> to vector<32x32xf32>
    %c1_107 = arith.constant 1 : index
    %c0_108 = arith.constant 0 : index
    %c0_109 = arith.constant 0 : index
    %272 = vector.load %arg9[%c1_107, %c0_108, %c0_109] : memref<2x32x32xf32, #tpu.memory_space<vmem>>, vector<1x32x32xf32>
    %273 = vector.shape_cast %272 : vector<1x32x32xf32> to vector<32x32xf32>
    %cst_110 = arith.constant dense<0.000000e+00> : vector<32x32xf32>
    %274 = tpu.matmul %271, %273, %cst_110 {dimension_numbers = #tpu.dot_dimension_numbers<[1], [0], [0], [1], [0, 0, 1, 1], [], []>} : vector<32x32xf32>, vector<32x32xf32>, vector<32x32xf32> -> vector<32x32xf32>
    %275 = arith.addf %191, %274 : vector<32x32xf32>
    %276 = vector.extract_strided_slice %193 {offsets = [0, 0], sizes = [1, 32], strides = [1, 1]} : vector<4x32xf32> to vector<1x32xf32>
    %277 = vector.extract_strided_slice %193 {offsets = [1, 0], sizes = [1, 32], strides = [1, 1]} : vector<4x32xf32> to vector<1x32xf32>
    %cst_111 = arith.constant dense<0.000000e+00> : vector<32xf32>
    %278 = vector.multi_reduction <add>, %275, %cst_111 [1] : vector<32x32xf32> to vector<32xf32>
    %279 = vector.shape_cast %278 : vector<32xf32> to vector<32x1xf32>
    %cst_112 = arith.constant 3.200000e+01 : f32
    %280 = vector.broadcast %cst_112 : f32 to vector<32x1xf32>
    %281 = arith.divf %279, %280 : vector<32x1xf32>
    %282 = vector.broadcast %281 : vector<32x1xf32> to vector<32x32xf32>
    %283 = arith.subf %275, %282 : vector<32x32xf32>
    %284 = arith.mulf %283, %283 : vector<32x32xf32>
    %cst_113 = arith.constant dense<0.000000e+00> : vector<32xf32>
    %285 = vector.multi_reduction <add>, %284, %cst_113 [1] : vector<32x32xf32> to vector<32xf32>
    %286 = vector.shape_cast %285 : vector<32xf32> to vector<32x1xf32>
    %cst_114 = arith.constant 3.200000e+01 : f32
    %287 = vector.broadcast %cst_114 : f32 to vector<32x1xf32>
    %288 = arith.divf %286, %287 : vector<32x1xf32>
    %289 = vector.broadcast %281 : vector<32x1xf32> to vector<32x32xf32>
    %290 = arith.subf %275, %289 : vector<32x32xf32>
    %cst_115 = arith.constant 9.99999974E-6 : f32
    %291 = vector.broadcast %cst_115 : f32 to vector<32x1xf32>
    %292 = arith.addf %288, %291 : vector<32x1xf32>
    %293 = math.rsqrt %292 : vector<32x1xf32>
    %294 = vector.broadcast %293 : vector<32x1xf32> to vector<32x32xf32>
    %295 = arith.mulf %290, %294 : vector<32x32xf32>
    %296 = vector.broadcast %276 : vector<1x32xf32> to vector<32x32xf32>
    %297 = arith.mulf %295, %296 : vector<32x32xf32>
    %298 = vector.broadcast %277 : vector<1x32xf32> to vector<32x32xf32>
    %299 = arith.addf %297, %298 : vector<32x32xf32>
    %c1_116 = arith.constant 1 : index
    %c0_117 = arith.constant 0 : index
    %c0_118 = arith.constant 0 : index
    %300 = vector.load %arg11[%c1_116, %c0_117, %c0_118] : memref<2x32x64xf32, #tpu.memory_space<vmem>>, vector<1x32x64xf32>
    %301 = vector.shape_cast %300 : vector<1x32x64xf32> to vector<32x64xf32>
    %cst_119 = arith.constant dense<0.000000e+00> : vector<32x64xf32>
    %302 = tpu.matmul %299, %301, %cst_119 {dimension_numbers = #tpu.dot_dimension_numbers<[1], [0], [0], [1], [0, 0, 1, 1], [], []>} : vector<32x32xf32>, vector<32x64xf32>, vector<32x64xf32> -> vector<32x64xf32>
    %c1_120 = arith.constant 1 : index
    %c0_121 = arith.constant 0 : index
    %c0_122 = arith.constant 0 : index
    %303 = vector.load %arg12[%c1_120, %c0_121, %c0_122] : memref<2x1x64xf32, #tpu.memory_space<vmem>>, vector<1x1x64xf32>
    %304 = vector.shape_cast %303 : vector<1x1x64xf32> to vector<1x64xf32>
    %305 = vector.broadcast %304 : vector<1x64xf32> to vector<32x64xf32>
    %306 = arith.addf %302, %305 : vector<32x64xf32>
    %cst_123 = arith.constant 0.000000e+00 : f32
    %307 = vector.broadcast %cst_123 : f32 to vector<32x64xf32>
    %308 = arith.maximumf %306, %307 : vector<32x64xf32>
    %c1_124 = arith.constant 1 : index
    %c0_125 = arith.constant 0 : index
    %c0_126 = arith.constant 0 : index
    %309 = vector.load %arg13[%c1_124, %c0_125, %c0_126] : memref<2x64x32xf32, #tpu.memory_space<vmem>>, vector<1x64x32xf32>
    %310 = vector.shape_cast %309 : vector<1x64x32xf32> to vector<64x32xf32>
    %cst_127 = arith.constant dense<0.000000e+00> : vector<32x32xf32>
    %311 = tpu.matmul %308, %310, %cst_127 {dimension_numbers = #tpu.dot_dimension_numbers<[1], [0], [0], [1], [0, 0, 1, 1], [], []>} : vector<32x64xf32>, vector<64x32xf32>, vector<32x32xf32> -> vector<32x32xf32>
    %c1_128 = arith.constant 1 : index
    %c0_129 = arith.constant 0 : index
    %c0_130 = arith.constant 0 : index
    %312 = vector.load %arg14[%c1_128, %c0_129, %c0_130] : memref<2x1x32xf32, #tpu.memory_space<vmem>>, vector<1x1x32xf32>
    %313 = vector.shape_cast %312 : vector<1x1x32xf32> to vector<1x32xf32>
    %314 = vector.broadcast %313 : vector<1x32xf32> to vector<32x32xf32>
    %315 = arith.addf %311, %314 : vector<32x32xf32>
    %316 = arith.addf %299, %315 : vector<32x32xf32>
    %317 = vector.extract_strided_slice %193 {offsets = [2, 0], sizes = [1, 32], strides = [1, 1]} : vector<4x32xf32> to vector<1x32xf32>
    %318 = vector.extract_strided_slice %193 {offsets = [3, 0], sizes = [1, 32], strides = [1, 1]} : vector<4x32xf32> to vector<1x32xf32>
    %cst_131 = arith.constant dense<0.000000e+00> : vector<32xf32>
    %319 = vector.multi_reduction <add>, %316, %cst_131 [1] : vector<32x32xf32> to vector<32xf32>
    %320 = vector.shape_cast %319 : vector<32xf32> to vector<32x1xf32>
    %cst_132 = arith.constant 3.200000e+01 : f32
    %321 = vector.broadcast %cst_132 : f32 to vector<32x1xf32>
    %322 = arith.divf %320, %321 : vector<32x1xf32>
    %323 = vector.broadcast %322 : vector<32x1xf32> to vector<32x32xf32>
    %324 = arith.subf %316, %323 : vector<32x32xf32>
    %325 = arith.mulf %324, %324 : vector<32x32xf32>
    %cst_133 = arith.constant dense<0.000000e+00> : vector<32xf32>
    %326 = vector.multi_reduction <add>, %325, %cst_133 [1] : vector<32x32xf32> to vector<32xf32>
    %327 = vector.shape_cast %326 : vector<32xf32> to vector<32x1xf32>
    %cst_134 = arith.constant 3.200000e+01 : f32
    %328 = vector.broadcast %cst_134 : f32 to vector<32x1xf32>
    %329 = arith.divf %327, %328 : vector<32x1xf32>
    %330 = vector.broadcast %322 : vector<32x1xf32> to vector<32x32xf32>
    %331 = arith.subf %316, %330 : vector<32x32xf32>
    %cst_135 = arith.constant 9.99999974E-6 : f32
    %332 = vector.broadcast %cst_135 : f32 to vector<32x1xf32>
    %333 = arith.addf %329, %332 : vector<32x1xf32>
    %334 = math.rsqrt %333 : vector<32x1xf32>
    %335 = vector.broadcast %334 : vector<32x1xf32> to vector<32x32xf32>
    %336 = arith.mulf %331, %335 : vector<32x32xf32>
    %337 = vector.broadcast %317 : vector<1x32xf32> to vector<32x32xf32>
    %338 = arith.mulf %336, %337 : vector<32x32xf32>
    %339 = vector.broadcast %318 : vector<1x32xf32> to vector<32x32xf32>
    %340 = arith.addf %338, %339 : vector<32x32xf32>
    %341 = vector.shape_cast %340 : vector<32x32xf32> to vector<2x16x32xf32>
    %c0_136 = arith.constant 0 : index
    %c0_137 = arith.constant 0 : index
    %c0_138 = arith.constant 0 : index
    %342 = vector.load %arg18[%c0_136, %c0_137, %c0_138] : memref<2x16x32xf32, #tpu.memory_space<vmem>>, vector<2x16x32xf32>
    tpu.vector_store %arg18[%c0_136, %c0_137, %c0_138], %341 {strides = array<i32>} : memref<2x16x32xf32, #tpu.memory_space<vmem>>, vector<2x16x32xf32>,
    %343 = vector.shape_cast %340 : vector<32x32xf32> to vector<2x16x32xf32>
    %c0_139 = arith.constant 0 : index
    %c0_140 = arith.constant 0 : index
    %344 = vector.load %arg16[%c0_139, %c0_140] : memref<32x32xf32, #tpu.memory_space<vmem>>, vector<32x32xf32>
    %cst_141 = arith.constant dense<0.000000e+00> : vector<32x32xf32>
    %345 = tpu.matmul %340, %344, %cst_141 {dimension_numbers = #tpu.dot_dimension_numbers<[1], [0], [0], [1], [0, 0, 1, 1], [], []>} : vector<32x32xf32>, vector<32x32xf32>, vector<32x32xf32> -> vector<32x32xf32>
    %346 = vector.shape_cast %345 : vector<32x32xf32> to vector<2x16x32xf32>
    %c0_142 = arith.constant 0 : index
    %c0_143 = arith.constant 0 : index
    %347 = vector.load %arg17[%c0_142, %c0_143] : memref<32x32xf32, #tpu.memory_space<vmem>>, vector<32x32xf32>
    %cst_144 = arith.constant dense<0.000000e+00> : vector<32x32xf32>
    %348 = tpu.matmul %340, %347, %cst_144 {dimension_numbers = #tpu.dot_dimension_numbers<[1], [0], [0], [1], [0, 0, 1, 1], [], []>} : vector<32x32xf32>, vector<32x32xf32>, vector<32x32xf32> -> vector<32x32xf32>
    %349 = vector.shape_cast %348 : vector<32x32xf32> to vector<2x16x32xf32>
    %cst_145 = arith.constant dense<0.000000e+00> : vector<2x32xf32>
    %350 = vector.multi_reduction <add>, %343, %cst_145 [1] : vector<2x16x32xf32> to vector<2x32xf32>
    %cst_146 = arith.constant 1.600000e+01 : f32
    %351 = vector.broadcast %cst_146 : f32 to vector<2x32xf32>
    %352 = arith.divf %350, %351 : vector<2x32xf32>
    %c0_147 = arith.constant 0 : index
    %c0_148 = arith.constant 0 : index
    %353 = vector.load %arg15[%c0_147, %c0_148] : memref<32x32xf32, #tpu.memory_space<vmem>>, vector<32x32xf32>
    %cst_149 = arith.constant dense<0.000000e+00> : vector<2x32xf32>
    %354 = tpu.matmul %352, %353, %cst_149 {dimension_numbers = #tpu.dot_dimension_numbers<[1], [0], [0], [1], [0, 0, 1, 1], [], []>} : vector<2x32xf32>, vector<32x32xf32>, vector<2x32xf32> -> vector<2x32xf32>
    %355 = tpu.iota {dimensions = array<i32: 1>} : vector<2x16xi32>
    %356 = tpu.iota {dimensions = array<i32: 1>} : vector<2x4xi32>
    %cst_150 = arith.constant 0.000000e+00 : f32
    %357 = vector.broadcast %cst_150 : f32 to vector<2x16xf32>
    %c0_i32 = arith.constant 0 : i32
    %358 = vector.broadcast %c0_i32 : i32 to vector<2x4xi32>
    %cst_151 = arith.constant 0.000000e+00 : f32
    %359 = vector.broadcast %cst_151 : f32 to vector<2x1xf32>
    %360 = vector.shape_cast %354 : vector<2x32xf32> to vector<2x1x32xf32>
    %361 = vector.broadcast %360 : vector<2x1x32xf32> to vector<2x16x32xf32>
    %362 = arith.mulf %361, %346 : vector<2x16x32xf32>
    %cst_152 = arith.constant dense<0.000000e+00> : vector<2x16xf32>
    %363 = vector.multi_reduction <add>, %362, %cst_152 [2] : vector<2x16x32xf32> to vector<2x16xf32>
    %cst_153 = arith.constant 0.176776692 : f32
    %364 = vector.broadcast %cst_153 : f32 to vector<2x16xf32>
    %365 = arith.mulf %363, %364 : vector<2x16xf32>
    %366 = math.tanh %365 : vector<2x16xf32>
    %cst_154 = arith.constant 6.000000e+00 : f32
    %367 = vector.broadcast %cst_154 : f32 to vector<2x16xf32>
    %368 = arith.mulf %367, %366 : vector<2x16xf32>
    %cst_155 = arith.constant 5.000000e-01 : f32
    %369 = vector.broadcast %cst_155 : f32 to vector<2x16xf32>
    %370 = arith.cmpf ogt, %357, %369 : vector<2x16xf32>
    %cst_156 = arith.constant -1.000000e+09 : f32
    %371 = vector.broadcast %cst_156 : f32 to vector<2x16xf32>
    %372 = arith.select %370, %371, %368 : vector<2x16xi1>, vector<2x16xf32>
    %cst_157 = arith.constant dense<0xFF800000> : vector<2xf32>
    %373 = vector.multi_reduction <maximumf>, %372, %cst_157 [1] : vector<2x16xf32> to vector<2xf32>
    %374 = vector.shape_cast %373 : vector<2xf32> to vector<2x1xf32>
    %375 = vector.broadcast %374 : vector<2x1xf32> to vector<2x16xf32>
    %376 = arith.cmpf oeq, %372, %375 : vector<2x16xf32>
    %c16_i32 = arith.constant 16 : i32
    %377 = vector.broadcast %c16_i32 : i32 to vector<2x16xi32>
    %378 = arith.select %376, %355, %377 : vector<2x16xi1>, vector<2x16xi32>
    %cst_158 = arith.constant dense<2147483647> : vector<2xi32>
    %379 = vector.multi_reduction <minsi>, %378, %cst_158 [1] : vector<2x16xi32> to vector<2xi32>
    %380 = vector.shape_cast %379 : vector<2xi32> to vector<2x1xi32>
    %381 = vector.broadcast %380 : vector<2x1xi32> to vector<2x16xi32>
    %382 = arith.cmpi eq, %355, %381 : vector<2x16xi32>
    %383 = arith.extui %382 : vector<2x16xi1> to vector<2x16xi32>
    %384 = arith.sitofp %383 : vector<2x16xi32> to vector<2x16xf32>
    %385 = vector.broadcast %374 : vector<2x1xf32> to vector<2x16xf32>
    %386 = arith.subf %372, %385 : vector<2x16xf32>
    %387 = math.exp %386 : vector<2x16xf32>
    %cst_159 = arith.constant dense<0.000000e+00> : vector<2xf32>
    %388 = vector.multi_reduction <add>, %387, %cst_159 [1] : vector<2x16xf32> to vector<2xf32>
    %389 = vector.shape_cast %388 : vector<2xf32> to vector<2x1xf32>
    %390 = arith.mulf %372, %384 : vector<2x16xf32>
    %cst_160 = arith.constant dense<0.000000e+00> : vector<2xf32>
    %391 = vector.multi_reduction <add>, %390, %cst_160 [1] : vector<2x16xf32> to vector<2xf32>
    %392 = vector.shape_cast %391 : vector<2xf32> to vector<2x1xf32>
    %393 = arith.subf %392, %374 : vector<2x1xf32>
    %394 = arith.addf %359, %393 : vector<2x1xf32>
    %395 = math.log %389 : vector<2x1xf32>
    %396 = arith.subf %394, %395 : vector<2x1xf32>
    %c0_i32_161 = arith.constant 0 : i32
    %397 = vector.broadcast %c0_i32_161 : i32 to vector<2x4xi32>
    %398 = arith.cmpi eq, %356, %397 : vector<2x4xi32>
    %399 = vector.shape_cast %380 : vector<2x1xi32> to vector<2x1xi32>
    %400 = vector.broadcast %399 : vector<2x1xi32> to vector<2x4xi32>
    %401 = arith.select %398, %400, %358 : vector<2x4xi1>, vector<2x4xi32>
    %402 = arith.addf %357, %384 : vector<2x16xf32>
    %403 = vector.shape_cast %384 : vector<2x16xf32> to vector<2x16x1xf32>
    %404 = vector.broadcast %403 : vector<2x16x1xf32> to vector<2x16x32xf32>
    %405 = arith.mulf %404, %349 : vector<2x16x32xf32>
    %cst_162 = arith.constant dense<0.000000e+00> : vector<2x32xf32>
    %406 = vector.multi_reduction <add>, %405, %cst_162 [1] : vector<2x16x32xf32> to vector<2x32xf32>
    %407 = vector.shape_cast %406 : vector<2x32xf32> to vector<2x1x32xf32>
    %408 = vector.broadcast %407 : vector<2x1x32xf32> to vector<2x16x32xf32>
    %409 = arith.mulf %408, %346 : vector<2x16x32xf32>
    %cst_163 = arith.constant dense<0.000000e+00> : vector<2x16xf32>
    %410 = vector.multi_reduction <add>, %409, %cst_163 [2] : vector<2x16x32xf32> to vector<2x16xf32>
    %cst_164 = arith.constant 0.176776692 : f32
    %411 = vector.broadcast %cst_164 : f32 to vector<2x16xf32>
    %412 = arith.mulf %410, %411 : vector<2x16xf32>
    %413 = math.tanh %412 : vector<2x16xf32>
    %cst_165 = arith.constant 6.000000e+00 : f32
    %414 = vector.broadcast %cst_165 : f32 to vector<2x16xf32>
    %415 = arith.mulf %414, %413 : vector<2x16xf32>
    %cst_166 = arith.constant 5.000000e-01 : f32
    %416 = vector.broadcast %cst_166 : f32 to vector<2x16xf32>
    %417 = arith.cmpf ogt, %402, %416 : vector<2x16xf32>
    %cst_167 = arith.constant -1.000000e+09 : f32
    %418 = vector.broadcast %cst_167 : f32 to vector<2x16xf32>
    %419 = arith.select %417, %418, %415 : vector<2x16xi1>, vector<2x16xf32>
    %cst_168 = arith.constant dense<0xFF800000> : vector<2xf32>
    %420 = vector.multi_reduction <maximumf>, %419, %cst_168 [1] : vector<2x16xf32> to vector<2xf32>
    %421 = vector.shape_cast %420 : vector<2xf32> to vector<2x1xf32>
    %422 = vector.broadcast %421 : vector<2x1xf32> to vector<2x16xf32>
    %423 = arith.cmpf oeq, %419, %422 : vector<2x16xf32>
    %c16_i32_169 = arith.constant 16 : i32
    %424 = vector.broadcast %c16_i32_169 : i32 to vector<2x16xi32>
    %425 = arith.select %423, %355, %424 : vector<2x16xi1>, vector<2x16xi32>
    %cst_170 = arith.constant dense<2147483647> : vector<2xi32>
    %426 = vector.multi_reduction <minsi>, %425, %cst_170 [1] : vector<2x16xi32> to vector<2xi32>
    %427 = vector.shape_cast %426 : vector<2xi32> to vector<2x1xi32>
    %428 = vector.broadcast %427 : vector<2x1xi32> to vector<2x16xi32>
    %429 = arith.cmpi eq, %355, %428 : vector<2x16xi32>
    %430 = arith.extui %429 : vector<2x16xi1> to vector<2x16xi32>
    %431 = arith.sitofp %430 : vector<2x16xi32> to vector<2x16xf32>
    %432 = vector.broadcast %421 : vector<2x1xf32> to vector<2x16xf32>
    %433 = arith.subf %419, %432 : vector<2x16xf32>
    %434 = math.exp %433 : vector<2x16xf32>
    %cst_171 = arith.constant dense<0.000000e+00> : vector<2xf32>
    %435 = vector.multi_reduction <add>, %434, %cst_171 [1] : vector<2x16xf32> to vector<2xf32>
    %436 = vector.shape_cast %435 : vector<2xf32> to vector<2x1xf32>
    %437 = arith.mulf %419, %431 : vector<2x16xf32>
    %cst_172 = arith.constant dense<0.000000e+00> : vector<2xf32>
    %438 = vector.multi_reduction <add>, %437, %cst_172 [1] : vector<2x16xf32> to vector<2xf32>
    %439 = vector.shape_cast %438 : vector<2xf32> to vector<2x1xf32>
    %440 = arith.subf %439, %421 : vector<2x1xf32>
    %441 = arith.addf %396, %440 : vector<2x1xf32>
    %442 = math.log %436 : vector<2x1xf32>
    %443 = arith.subf %441, %442 : vector<2x1xf32>
    %c1_i32 = arith.constant 1 : i32
    %444 = vector.broadcast %c1_i32 : i32 to vector<2x4xi32>
    %445 = arith.cmpi eq, %356, %444 : vector<2x4xi32>
    %446 = vector.shape_cast %427 : vector<2x1xi32> to vector<2x1xi32>
    %447 = vector.broadcast %446 : vector<2x1xi32> to vector<2x4xi32>
    %448 = arith.select %445, %447, %401 : vector<2x4xi1>, vector<2x4xi32>
    %449 = arith.addf %402, %431 : vector<2x16xf32>
    %450 = vector.shape_cast %431 : vector<2x16xf32> to vector<2x16x1xf32>
    %451 = vector.broadcast %450 : vector<2x16x1xf32> to vector<2x16x32xf32>
    %452 = arith.mulf %451, %349 : vector<2x16x32xf32>
    %cst_173 = arith.constant dense<0.000000e+00> : vector<2x32xf32>
    %453 = vector.multi_reduction <add>, %452, %cst_173 [1] : vector<2x16x32xf32> to vector<2x32xf32>
    %454 = vector.shape_cast %453 : vector<2x32xf32> to vector<2x1x32xf32>
    %455 = vector.broadcast %454 : vector<2x1x32xf32> to vector<2x16x32xf32>
    %456 = arith.mulf %455, %346 : vector<2x16x32xf32>
    %cst_174 = arith.constant dense<0.000000e+00> : vector<2x16xf32>
    %457 = vector.multi_reduction <add>, %456, %cst_174 [2] : vector<2x16x32xf32> to vector<2x16xf32>
    %cst_175 = arith.constant 0.176776692 : f32
    %458 = vector.broadcast %cst_175 : f32 to vector<2x16xf32>
    %459 = arith.mulf %457, %458 : vector<2x16xf32>
    %460 = math.tanh %459 : vector<2x16xf32>
    %cst_176 = arith.constant 6.000000e+00 : f32
    %461 = vector.broadcast %cst_176 : f32 to vector<2x16xf32>
    %462 = arith.mulf %461, %460 : vector<2x16xf32>
    %cst_177 = arith.constant 5.000000e-01 : f32
    %463 = vector.broadcast %cst_177 : f32 to vector<2x16xf32>
    %464 = arith.cmpf ogt, %449, %463 : vector<2x16xf32>
    %cst_178 = arith.constant -1.000000e+09 : f32
    %465 = vector.broadcast %cst_178 : f32 to vector<2x16xf32>
    %466 = arith.select %464, %465, %462 : vector<2x16xi1>, vector<2x16xf32>
    %cst_179 = arith.constant dense<0xFF800000> : vector<2xf32>
    %467 = vector.multi_reduction <maximumf>, %466, %cst_179 [1] : vector<2x16xf32> to vector<2xf32>
    %468 = vector.shape_cast %467 : vector<2xf32> to vector<2x1xf32>
    %469 = vector.broadcast %468 : vector<2x1xf32> to vector<2x16xf32>
    %470 = arith.cmpf oeq, %466, %469 : vector<2x16xf32>
    %c16_i32_180 = arith.constant 16 : i32
    %471 = vector.broadcast %c16_i32_180 : i32 to vector<2x16xi32>
    %472 = arith.select %470, %355, %471 : vector<2x16xi1>, vector<2x16xi32>
    %cst_181 = arith.constant dense<2147483647> : vector<2xi32>
    %473 = vector.multi_reduction <minsi>, %472, %cst_181 [1] : vector<2x16xi32> to vector<2xi32>
    %474 = vector.shape_cast %473 : vector<2xi32> to vector<2x1xi32>
    %475 = vector.broadcast %474 : vector<2x1xi32> to vector<2x16xi32>
    %476 = arith.cmpi eq, %355, %475 : vector<2x16xi32>
    %477 = arith.extui %476 : vector<2x16xi1> to vector<2x16xi32>
    %478 = arith.sitofp %477 : vector<2x16xi32> to vector<2x16xf32>
    %479 = vector.broadcast %468 : vector<2x1xf32> to vector<2x16xf32>
    %480 = arith.subf %466, %479 : vector<2x16xf32>
    %481 = math.exp %480 : vector<2x16xf32>
    %cst_182 = arith.constant dense<0.000000e+00> : vector<2xf32>
    %482 = vector.multi_reduction <add>, %481, %cst_182 [1] : vector<2x16xf32> to vector<2xf32>
    %483 = vector.shape_cast %482 : vector<2xf32> to vector<2x1xf32>
    %484 = arith.mulf %466, %478 : vector<2x16xf32>
    %cst_183 = arith.constant dense<0.000000e+00> : vector<2xf32>
    %485 = vector.multi_reduction <add>, %484, %cst_183 [1] : vector<2x16xf32> to vector<2xf32>
    %486 = vector.shape_cast %485 : vector<2xf32> to vector<2x1xf32>
    %487 = arith.subf %486, %468 : vector<2x1xf32>
    %488 = arith.addf %443, %487 : vector<2x1xf32>
    %489 = math.log %483 : vector<2x1xf32>
    %490 = arith.subf %488, %489 : vector<2x1xf32>
    %c2_i32 = arith.constant 2 : i32
    %491 = vector.broadcast %c2_i32 : i32 to vector<2x4xi32>
    %492 = arith.cmpi eq, %356, %491 : vector<2x4xi32>
    %493 = vector.shape_cast %474 : vector<2x1xi32> to vector<2x1xi32>
    %494 = vector.broadcast %493 : vector<2x1xi32> to vector<2x4xi32>
    %495 = arith.select %492, %494, %448 : vector<2x4xi1>, vector<2x4xi32>
    %496 = arith.addf %449, %478 : vector<2x16xf32>
    %497 = vector.shape_cast %478 : vector<2x16xf32> to vector<2x16x1xf32>
    %498 = vector.broadcast %497 : vector<2x16x1xf32> to vector<2x16x32xf32>
    %499 = arith.mulf %498, %349 : vector<2x16x32xf32>
    %cst_184 = arith.constant dense<0.000000e+00> : vector<2x32xf32>
    %500 = vector.multi_reduction <add>, %499, %cst_184 [1] : vector<2x16x32xf32> to vector<2x32xf32>
    %501 = vector.shape_cast %500 : vector<2x32xf32> to vector<2x1x32xf32>
    %502 = vector.broadcast %501 : vector<2x1x32xf32> to vector<2x16x32xf32>
    %503 = arith.mulf %502, %346 : vector<2x16x32xf32>
    %cst_185 = arith.constant dense<0.000000e+00> : vector<2x16xf32>
    %504 = vector.multi_reduction <add>, %503, %cst_185 [2] : vector<2x16x32xf32> to vector<2x16xf32>
    %cst_186 = arith.constant 0.176776692 : f32
    %505 = vector.broadcast %cst_186 : f32 to vector<2x16xf32>
    %506 = arith.mulf %504, %505 : vector<2x16xf32>
    %507 = math.tanh %506 : vector<2x16xf32>
    %cst_187 = arith.constant 6.000000e+00 : f32
    %508 = vector.broadcast %cst_187 : f32 to vector<2x16xf32>
    %509 = arith.mulf %508, %507 : vector<2x16xf32>
    %cst_188 = arith.constant 5.000000e-01 : f32
    %510 = vector.broadcast %cst_188 : f32 to vector<2x16xf32>
    %511 = arith.cmpf ogt, %496, %510 : vector<2x16xf32>
    %cst_189 = arith.constant -1.000000e+09 : f32
    %512 = vector.broadcast %cst_189 : f32 to vector<2x16xf32>
    %513 = arith.select %511, %512, %509 : vector<2x16xi1>, vector<2x16xf32>
    %cst_190 = arith.constant dense<0xFF800000> : vector<2xf32>
    %514 = vector.multi_reduction <maximumf>, %513, %cst_190 [1] : vector<2x16xf32> to vector<2xf32>
    %515 = vector.shape_cast %514 : vector<2xf32> to vector<2x1xf32>
    %516 = vector.broadcast %515 : vector<2x1xf32> to vector<2x16xf32>
    %517 = arith.cmpf oeq, %513, %516 : vector<2x16xf32>
    %c16_i32_191 = arith.constant 16 : i32
    %518 = vector.broadcast %c16_i32_191 : i32 to vector<2x16xi32>
    %519 = arith.select %517, %355, %518 : vector<2x16xi1>, vector<2x16xi32>
    %cst_192 = arith.constant dense<2147483647> : vector<2xi32>
    %520 = vector.multi_reduction <minsi>, %519, %cst_192 [1] : vector<2x16xi32> to vector<2xi32>
    %521 = vector.shape_cast %520 : vector<2xi32> to vector<2x1xi32>
    %522 = vector.broadcast %521 : vector<2x1xi32> to vector<2x16xi32>
    %523 = arith.cmpi eq, %355, %522 : vector<2x16xi32>
    %524 = arith.extui %523 : vector<2x16xi1> to vector<2x16xi32>
    %525 = arith.sitofp %524 : vector<2x16xi32> to vector<2x16xf32>
    %526 = vector.broadcast %515 : vector<2x1xf32> to vector<2x16xf32>
    %527 = arith.subf %513, %526 : vector<2x16xf32>
    %528 = math.exp %527 : vector<2x16xf32>
    %cst_193 = arith.constant dense<0.000000e+00> : vector<2xf32>
    %529 = vector.multi_reduction <add>, %528, %cst_193 [1] : vector<2x16xf32> to vector<2xf32>
    %530 = vector.shape_cast %529 : vector<2xf32> to vector<2x1xf32>
    %531 = arith.mulf %513, %525 : vector<2x16xf32>
    %cst_194 = arith.constant dense<0.000000e+00> : vector<2xf32>
    %532 = vector.multi_reduction <add>, %531, %cst_194 [1] : vector<2x16xf32> to vector<2xf32>
    %533 = vector.shape_cast %532 : vector<2xf32> to vector<2x1xf32>
    %534 = arith.subf %533, %515 : vector<2x1xf32>
    %535 = arith.addf %490, %534 : vector<2x1xf32>
    %536 = math.log %530 : vector<2x1xf32>
    %537 = arith.subf %535, %536 : vector<2x1xf32>
    %c3_i32 = arith.constant 3 : i32
    %538 = vector.broadcast %c3_i32 : i32 to vector<2x4xi32>
    %539 = arith.cmpi eq, %356, %538 : vector<2x4xi32>
    %540 = vector.shape_cast %521 : vector<2x1xi32> to vector<2x1xi32>
    %541 = vector.broadcast %540 : vector<2x1xi32> to vector<2x4xi32>
    %542 = arith.select %539, %541, %495 : vector<2x4xi1>, vector<2x4xi32>
    %c0_195 = arith.constant 0 : index
    %c0_196 = arith.constant 0 : index
    %543 = vector.load %arg19[%c0_195, %c0_196] : memref<2x4xi32, #tpu.memory_space<vmem>>, vector<2x4xi32>
    tpu.vector_store %arg19[%c0_195, %c0_196], %542 {strides = array<i32>} : memref<2x4xi32, #tpu.memory_space<vmem>>, vector<2x4xi32>,
    %c0_197 = arith.constant 0 : index
    %c0_198 = arith.constant 0 : index
    %544 = vector.load %arg20[%c0_197, %c0_198] : memref<2x1xf32, #tpu.memory_space<vmem>>, vector<2x1xf32>
    tpu.vector_store %arg20[%c0_197, %c0_198], %537 {strides = array<i32>} : memref<2x1xf32, #tpu.memory_space<vmem>>, vector<2x1xf32>,
    return
  }
  func.func @transform_0(%arg0: i32) -> (i32, i32, i32) {
    %c0_i32 = arith.constant 0 : i32
    %c0_i32_0 = arith.constant 0 : i32
    %c0_i32_1 = arith.constant 0 : i32
    return %arg0, %c0_i32, %c0_i32_0 : i32, i32, i32
  }
  func.func @transform_1(%arg0: i32) -> (i32, i32) {
    %c0_i32 = arith.constant 0 : i32
    %c0_i32_0 = arith.constant 0 : i32
    return %arg0, %c0_i32 : i32, i32
  }
  func.func @transform_2(%arg0: i32) -> (i32, i32) {
    %c0_i32 = arith.constant 0 : i32
    %c0_i32_0 = arith.constant 0 : i32
    %c0_i32_1 = arith.constant 0 : i32
    return %c0_i32, %c0_i32_0 : i32, i32
  }
  func.func @transform_3(%arg0: i32) -> (i32, i32) {
    %c0_i32 = arith.constant 0 : i32
    %c0_i32_0 = arith.constant 0 : i32
    %c0_i32_1 = arith.constant 0 : i32
    return %c0_i32, %c0_i32_0 : i32, i32
  }
  func.func @transform_4(%arg0: i32) -> (i32, i32) {
    %c0_i32 = arith.constant 0 : i32
    %c0_i32_0 = arith.constant 0 : i32
    %c0_i32_1 = arith.constant 0 : i32
    return %c0_i32, %c0_i32_0 : i32, i32
  }
  func.func @transform_5(%arg0: i32) -> (i32, i32) {
    %c0_i32 = arith.constant 0 : i32
    %c0_i32_0 = arith.constant 0 : i32
    %c0_i32_1 = arith.constant 0 : i32
    return %c0_i32, %c0_i32_0 : i32, i32
  }
  func.func @transform_6(%arg0: i32) -> (i32, i32) {
    %c0_i32 = arith.constant 0 : i32
    %c0_i32_0 = arith.constant 0 : i32
    %c0_i32_1 = arith.constant 0 : i32
    return %c0_i32, %c0_i32_0 : i32, i32
  }
  func.func @transform_7(%arg0: i32) -> (i32, i32, i32) {
    %c0_i32 = arith.constant 0 : i32
    %c0_i32_0 = arith.constant 0 : i32
    %c0_i32_1 = arith.constant 0 : i32
    %c0_i32_2 = arith.constant 0 : i32
    return %c0_i32, %c0_i32_0, %c0_i32_1 : i32, i32, i32
  }
  func.func @transform_8(%arg0: i32) -> (i32, i32, i32) {
    %c0_i32 = arith.constant 0 : i32
    %c0_i32_0 = arith.constant 0 : i32
    %c0_i32_1 = arith.constant 0 : i32
    %c0_i32_2 = arith.constant 0 : i32
    return %c0_i32, %c0_i32_0, %c0_i32_1 : i32, i32, i32
  }
  func.func @transform_9(%arg0: i32) -> (i32, i32, i32) {
    %c0_i32 = arith.constant 0 : i32
    %c0_i32_0 = arith.constant 0 : i32
    %c0_i32_1 = arith.constant 0 : i32
    %c0_i32_2 = arith.constant 0 : i32
    return %c0_i32, %c0_i32_0, %c0_i32_1 : i32, i32, i32
  }
  func.func @transform_10(%arg0: i32) -> (i32, i32, i32) {
    %c0_i32 = arith.constant 0 : i32
    %c0_i32_0 = arith.constant 0 : i32
    %c0_i32_1 = arith.constant 0 : i32
    %c0_i32_2 = arith.constant 0 : i32
    return %c0_i32, %c0_i32_0, %c0_i32_1 : i32, i32, i32
  }
  func.func @transform_11(%arg0: i32) -> (i32, i32, i32) {
    %c0_i32 = arith.constant 0 : i32
    %c0_i32_0 = arith.constant 0 : i32
    %c0_i32_1 = arith.constant 0 : i32
    %c0_i32_2 = arith.constant 0 : i32
    return %c0_i32, %c0_i32_0, %c0_i32_1 : i32, i32, i32
  }
  func.func @transform_12(%arg0: i32) -> (i32, i32, i32) {
    %c0_i32 = arith.constant 0 : i32
    %c0_i32_0 = arith.constant 0 : i32
    %c0_i32_1 = arith.constant 0 : i32
    %c0_i32_2 = arith.constant 0 : i32
    return %c0_i32, %c0_i32_0, %c0_i32_1 : i32, i32, i32
  }
  func.func @transform_13(%arg0: i32) -> (i32, i32, i32) {
    %c0_i32 = arith.constant 0 : i32
    %c0_i32_0 = arith.constant 0 : i32
    %c0_i32_1 = arith.constant 0 : i32
    %c0_i32_2 = arith.constant 0 : i32
    return %c0_i32, %c0_i32_0, %c0_i32_1 : i32, i32, i32
  }
  func.func @transform_14(%arg0: i32) -> (i32, i32) {
    %c0_i32 = arith.constant 0 : i32
    %c0_i32_0 = arith.constant 0 : i32
    %c0_i32_1 = arith.constant 0 : i32
    return %c0_i32, %c0_i32_0 : i32, i32
  }
  func.func @transform_15(%arg0: i32) -> (i32, i32) {
    %c0_i32 = arith.constant 0 : i32
    %c0_i32_0 = arith.constant 0 : i32
    %c0_i32_1 = arith.constant 0 : i32
    return %c0_i32, %c0_i32_0 : i32, i32
  }
  func.func @transform_16(%arg0: i32) -> (i32, i32) {
    %c0_i32 = arith.constant 0 : i32
    %c0_i32_0 = arith.constant 0 : i32
    %c0_i32_1 = arith.constant 0 : i32
    return %c0_i32, %c0_i32_0 : i32, i32
  }
  func.func @transform_17(%arg0: i32) -> (i32, i32, i32) {
    %c0_i32 = arith.constant 0 : i32
    %c0_i32_0 = arith.constant 0 : i32
    %c0_i32_1 = arith.constant 0 : i32
    return %arg0, %c0_i32, %c0_i32_0 : i32, i32, i32
  }
  func.func @transform_18(%arg0: i32) -> (i32, i32) {
    %c0_i32 = arith.constant 0 : i32
    %c0_i32_0 = arith.constant 0 : i32
    return %arg0, %c0_i32 : i32, i32
  }
  func.func @transform_19(%arg0: i32) -> (i32, i32) {
    %c0_i32 = arith.constant 0 : i32
    %c0_i32_0 = arith.constant 0 : i32
    return %arg0, %c0_i32 : i32, i32
  }
}

</mosaic_0001>

<llo_original>
// kernel: tpu_custom_call.1
$region0: #{tpu_custom_call.1}
  #allocation0 [shape = 'u32[]', space=smem, size = 0x4, offset = 0x4, fixed_abs, tag = 'smem constant byte address 0x4 - core index']
  #allocation1 [shape = 'u32[144,128]{1,0:T(1,128)}', space=vmem, size = 0x12000, scoped, tag = 'internal scratch']
  %s0 = inlined_call_operand.vmem [shape: f32[2,16,8], index: 0, kind: input, shape index: {}]
  %s1 = inlined_call_operand.hbm [shape: s32[2,16], index: 1, kind: input, shape index: {}]
  %s2 = inlined_call_operand.hbm [shape: f32[8,32], index: 2, kind: input, shape index: {}]
  %s3 = inlined_call_operand.vmem [shape: f32[1,32], index: 3, kind: input, shape index: {}]
  %s4 = inlined_call_operand.hbm [shape: f32[16,32], index: 4, kind: input, shape index: {}]
  %s5 = inlined_call_operand.hbm [shape: f32[32,32], index: 5, kind: input, shape index: {}]
  %s6 = inlined_call_operand.hbm [shape: f32[32,32], index: 6, kind: input, shape index: {}]
  %s7 = inlined_call_operand.vmem [shape: f32[2,32,96], index: 7, kind: input, shape index: {}]
  %s8 = inlined_call_operand.vmem [shape: f32[2,32,32], index: 8, kind: input, shape index: {}]
  %s9 = inlined_call_operand.hbm [shape: f32[2,4,32], index: 9, kind: input, shape index: {}]
  %s10 = inlined_call_operand.vmem [shape: f32[2,32,64], index: 10, kind: input, shape index: {}]
  %s11 = inlined_call_operand.hbm [shape: f32[2,1,64], index: 11, kind: input, shape index: {}]
  %s12 = inlined_call_operand.vmem [shape: f32[2,64,32], index: 12, kind: input, shape index: {}]
  %s13 = inlined_call_operand.hbm [shape: f32[2,1,32], index: 13, kind: input, shape index: {}]
  %s14 = inlined_call_operand.vmem [shape: f32[32,32], index: 14, kind: input, shape index: {}]
  %s15 = inlined_call_operand.hbm [shape: f32[32,32], index: 15, kind: input, shape index: {}]
  %s16 = inlined_call_operand.hbm [shape: f32[32,32], index: 16, kind: input, shape index: {}]
  %s17 = inlined_call_operand.hbm [shape: f32[2,16,32], index: 17, kind: output, shape index: {0}]
  %s18 = inlined_call_operand.hbm [shape: s32[2,4], index: 18, kind: output, shape index: {1}]
  %s19 = inlined_call_operand.vmem [shape: f32[2,1], index: 19, kind: output, shape index: {2}]
  %20 = xla_tuple %s17, %s18, %s19
  %s21 = sld [smem:[#allocation0]]
  $region134: #{tpu_custom_call.1} parent=0
    _
  %s23 = ssub.s32 1, %s21
  %s24 = scalar_select 0, %s23, %s21
  $region1: #{tpu_custom_call.1} parent=0
    #allocation2 [shape = 'u8[1024]{0}', space=vmem, size = 0x400, scoped, tag = 'input window, operand 1, single buffered']
    #allocation3 [shape = 's32[1]{0}', space=sflag, size = 0x4, scoped, tag = 'scoped memory for tpu_custom_call.1']
    #allocation4 [shape = 's32[1]{0}', space=sflag, size = 0x4, scoped, tag = 'scoped memory for tpu_custom_call.1']
    #allocation5 [shape = 'u8[4096]{0}', space=vmem, size = 0x1000, scoped, tag = 'input window, operand 2, single buffered']
    #allocation6 [shape = 's32[1]{0}', space=sflag, size = 0x4, scoped, tag = 'scoped memory for tpu_custom_call.1']
    #allocation7 [shape = 'u8[8192]{0}', space=vmem, size = 0x2000, scoped, tag = 'input window, operand 4, single buffered']
    #allocation8 [shape = 'u8[16384]{0}', space=vmem, size = 0x4000, scoped, tag = 'input window, operand 5, single buffered']
    #allocation9 [shape = 's32[1]{0}', space=sflag, size = 0x4, scoped, tag = 'scoped memory for tpu_custom_call.1']
    #allocation10 [shape = 'u8[16384]{0}', space=vmem, size = 0x4000, scoped, tag = 'input window, operand 6, single buffered']
    #allocation11 [shape = 'u8[4096]{0}', space=vmem, size = 0x1000, scoped, tag = 'input window, operand 9, single buffered']
    #allocation12 [shape = 's32[1]{0}', space=sflag, size = 0x4, scoped, tag = 'scoped memory for tpu_custom_call.1']
    #allocation13 [shape = 'u8[1024]{0}', space=vmem, size = 0x400, scoped, tag = 'input window, operand 11, single buffered']
    #allocation14 [shape = 'u8[1024]{0}', space=vmem, size = 0x400, scoped, tag = 'input window, operand 13, single buffered']
    #allocation15 [shape = 's32[1]{0}', space=sflag, size = 0x4, scoped, tag = 'scoped memory for tpu_custom_call.1']
    #allocation16 [shape = 'u8[16384]{0}', space=vmem, size = 0x4000, scoped, tag = 'input window, operand 15, single buffered']
    #allocation17 [shape = 'u8[16384]{0}', space=vmem, size = 0x4000, scoped, tag = 'input window, operand 16, single buffered']
    #allocation18 [shape = 's32[1]{0}', space=sflag, size = 0x4, scoped, tag = 'scoped memory for tpu_custom_call.1']
    #allocation19 [shape = 'u8[16384]{0}', space=vmem, size = 0x4000, scoped, tag = 'output window, operand 0, single buffered']
    #allocation20 [shape = 'u8[1024]{0}', space=vmem, size = 0x400, scoped, tag = 'output window, operand 1, single buffered']
    #allocation21 [shape = 's32[1]{0}', space=sflag, size = 0x4, scoped, tag = 'scoped memory for tpu_custom_call.1']
    %25 = vsyncpa [#allocation3], 0
    %26 = vsyncpa [#allocation6], 0
    %27 = vsyncpa [#allocation9], 0
    %28 = vsyncpa [#allocation12], 0
    %29 = vsyncpa [#allocation15], 0
    %30 = vsyncpa [#allocation18], 0
    %31 = vsyncpa [#allocation4], 0
    %32 = vsyncpa [#allocation21], 0
    // Predicated region
    $region2: #{tpu_custom_call.1} parent=1 // pred_check
      _
    $region3: #{tpu_custom_call.1} parent=1 // pred_check_branch
      %34 = sbr.rel (0) target = $region5
    $region4: #{tpu_custom_call.1} parent=1 // pred_region
      _
    $region5: #{tpu_custom_call.1} parent=1 // pred_fallthru
      _
    // Predicated region
    $region6: #{tpu_custom_call.1} parent=1 // pred_check
      _
    $region7: #{tpu_custom_call.1} parent=1 // pred_check_branch
      %36 = sbr.rel (0) target = $region9
    $region8: #{tpu_custom_call.1} parent=1 // pred_region
      %s38 = ssub.s32 32, 32
      %39 = vsyncadd [#allocation3], %s38
      %s41 = sshll.u32 [#allocation2], 4
      %s42 = int_to_ptr.vmem [resolvable:$true] %s41
      %44 = dma.hbm_to_vmem [thread:$0]  %s1, 32, %s42, [#allocation3]
    $region9: #{tpu_custom_call.1} parent=1 // pred_fallthru
      _
    // Predicated region
    $region10: #{tpu_custom_call.1} parent=1 // pred_check
      _
    $region11: #{tpu_custom_call.1} parent=1 // pred_check_branch
      %46 = sbr.rel (0) target = $region13
    $region12: #{tpu_custom_call.1} parent=1 // pred_region
      %s48 = ssub.s32 128, 128
      %49 = vsyncadd [#allocation6], %s48
      %s51 = sshll.u32 [#allocation5], 4
      %s52 = int_to_ptr.vmem [resolvable:$true] %s51
      %54 = dma.hbm_to_vmem [thread:$0]  %s2, 128, %s52, [#allocation6]
    $region13: #{tpu_custom_call.1} parent=1 // pred_fallthru
      _
    // Predicated region
    $region14: #{tpu_custom_call.1} parent=1 // pred_check
      _
    $region15: #{tpu_custom_call.1} parent=1 // pred_check_branch
      %56 = sbr.rel (0) target = $region17
    $region16: #{tpu_custom_call.1} parent=1 // pred_region
      _
    $region17: #{tpu_custom_call.1} parent=1 // pred_fallthru
      _
    // Predicated region
    $region18: #{tpu_custom_call.1} parent=1 // pred_check
      _
    $region19: #{tpu_custom_call.1} parent=1 // pred_check_branch
      %58 = sbr.rel (0) target = $region21
    $region20: #{tpu_custom_call.1} parent=1 // pred_region
      %s60 = ssub.s32 256, 256
      %61 = vsyncadd [#allocation6], %s60
      %s62 = sshll.u32 [#allocation7], 4
      %s63 = int_to_ptr.vmem [resolvable:$true] %s62
      %68 = dma.hbm_to_vmem [thread:$0]  %s4, 256, %s63, [#allocation6], 128, 128, 8
    $region21: #{tpu_custom_call.1} parent=1 // pred_fallthru
      _
    // Predicated region
    $region22: #{tpu_custom_call.1} parent=1 // pred_check
      _
    $region23: #{tpu_custom_call.1} parent=1 // pred_check_branch
      %70 = sbr.rel (0) target = $region25
    $region24: #{tpu_custom_call.1} parent=1 // pred_region
      %s72 = ssub.s32 512, 512
      %73 = vsyncadd [#allocation9], %s72
      %s74 = sshll.u32 [#allocation8], 4
      %s75 = int_to_ptr.vmem [resolvable:$true] %s74
      %80 = dma.hbm_to_vmem [thread:$0]  %s5, 512, %s75, [#allocation9], 128, 128, 8
    $region25: #{tpu_custom_call.1} parent=1 // pred_fallthru
      _
    // Predicated region
    $region26: #{tpu_custom_call.1} parent=1 // pred_check
      _
    $region27: #{tpu_custom_call.1} parent=1 // pred_check_branch
      %82 = sbr.rel (0) target = $region29
    $region28: #{tpu_custom_call.1} parent=1 // pred_region
      %s84 = ssub.s32 512, 512
      %85 = vsyncadd [#allocation9], %s84
      %s86 = sshll.u32 [#allocation10], 4
      %s87 = int_to_ptr.vmem [resolvable:$true] %s86
      %92 = dma.hbm_to_vmem [thread:$0]  %s6, 512, %s87, [#allocation9], 128, 128, 8
    $region29: #{tpu_custom_call.1} parent=1 // pred_fallthru
      _
    // Predicated region
    $region30: #{tpu_custom_call.1} parent=1 // pred_check
      _
    $region31: #{tpu_custom_call.1} parent=1 // pred_check_branch
      %94 = sbr.rel (0) target = $region33
    $region32: #{tpu_custom_call.1} parent=1 // pred_region
      _
    $region33: #{tpu_custom_call.1} parent=1 // pred_fallthru
      _
    // Predicated region
    $region34: #{tpu_custom_call.1} parent=1 // pred_check
      _
    $region35: #{tpu_custom_call.1} parent=1 // pred_check_branch
      %96 = sbr.rel (0) target = $region37
    $region36: #{tpu_custom_call.1} parent=1 // pred_region
      _
    $region37: #{tpu_custom_call.1} parent=1 // pred_fallthru
      _
    // Predicated region
    $region38: #{tpu_custom_call.1} parent=1 // pred_check
      _
    $region39: #{tpu_custom_call.1} parent=1 // pred_check_branch
      %98 = sbr.rel (0) target = $region41
    $region40: #{tpu_custom_call.1} parent=1 // pred_region
      %s100 = ssub.s32 128, 128
      %101 = vsyncadd [#allocation12], %s100
      %s102 = sshll.u32 [#allocation11], 4
      %s103 = int_to_ptr.vmem [resolvable:$true] %s102
      %108 = dma.hbm_to_vmem [thread:$0]  %s9, 128, %s103, [#allocation12], 64, 64, 4
    $region41: #{tpu_custom_call.1} parent=1 // pred_fallthru
      _
    // Predicated region
    $region42: #{tpu_custom_call.1} parent=1 // pred_check
      _
    $region43: #{tpu_custom_call.1} parent=1 // pred_check_branch
      %110 = sbr.rel (0) target = $region45
    $region44: #{tpu_custom_call.1} parent=1 // pred_region
      _
    $region45: #{tpu_custom_call.1} parent=1 // pred_fallthru
      _
    // Predicated region
    $region46: #{tpu_custom_call.1} parent=1 // pred_check
      _
    $region47: #{tpu_custom_call.1} parent=1 // pred_check_branch
      %112 = sbr.rel (0) target = $region49
    $region48: #{tpu_custom_call.1} parent=1 // pred_region
      %s114 = ssub.s32 32, 32
      %115 = vsyncadd [#allocation12], %s114
      %s116 = sshll.u32 [#allocation13], 4
      %s117 = int_to_ptr.vmem [resolvable:$true] %s116
      %122 = dma.hbm_to_vmem [thread:$0]  %s11, 32, %s117, [#allocation12], 16, 16, 1
    $region49: #{tpu_custom_call.1} parent=1 // pred_fallthru
      _
    // Predicated region
    $region50: #{tpu_custom_call.1} parent=1 // pred_check
      _
    $region51: #{tpu_custom_call.1} parent=1 // pred_check_branch
      %124 = sbr.rel (0) target = $region53
    $region52: #{tpu_custom_call.1} parent=1 // pred_region
      _
    $region53: #{tpu_custom_call.1} parent=1 // pred_fallthru
      _
    // Predicated region
    $region54: #{tpu_custom_call.1} parent=1 // pred_check
      _
    $region55: #{tpu_custom_call.1} parent=1 // pred_check_branch
      %126 = sbr.rel (0) target = $region57
    $region56: #{tpu_custom_call.1} parent=1 // pred_region
      %s128 = ssub.s32 32, 32
      %129 = vsyncadd [#allocation15], %s128
      %s130 = sshll.u32 [#allocation14], 4
      %s131 = int_to_ptr.vmem [resolvable:$true] %s130
      %136 = dma.hbm_to_vmem [thread:$0]  %s13, 32, %s131, [#allocation15], 16, 16, 1
    $region57: #{tpu_custom_call.1} parent=1 // pred_fallthru
      _
    // Predicated region
    $region58: #{tpu_custom_call.1} parent=1 // pred_check
      _
    $region59: #{tpu_custom_call.1} parent=1 // pred_check_branch
      %138 = sbr.rel (0) target = $region61
    $region60: #{tpu_custom_call.1} parent=1 // pred_region
      _
    $region61: #{tpu_custom_call.1} parent=1 // pred_fallthru
      _
    // Predicated region
    $region62: #{tpu_custom_call.1} parent=1 // pred_check
      _
    $region63: #{tpu_custom_call.1} parent=1 // pred_check_branch
      %140 = sbr.rel (0) target = $region65
    $region64: #{tpu_custom_call.1} parent=1 // pred_region
      %s142 = ssub.s32 512, 512
      %143 = vsyncadd [#allocation15], %s142
      %s144 = sshll.u32 [#allocation16], 4
      %s145 = int_to_ptr.vmem [resolvable:$true] %s144
      %150 = dma.hbm_to_vmem [thread:$0]  %s15, 512, %s145, [#allocation15], 128, 128, 8
    $region65: #{tpu_custom_call.1} parent=1 // pred_fallthru
      _
    // Predicated region
    $region66: #{tpu_custom_call.1} parent=1 // pred_check
      _
    $region67: #{tpu_custom_call.1} parent=1 // pred_check_branch
      %152 = sbr.rel (0) target = $region69
    $region68: #{tpu_custom_call.1} parent=1 // pred_region
      %s154 = ssub.s32 512, 512
      %155 = vsyncadd [#allocation18], %s154
      %s156 = sshll.u32 [#allocation17], 4
      %s157 = int_to_ptr.vmem [resolvable:$true] %s156
      %162 = dma.hbm_to_vmem [thread:$0]  %s16, 512, %s157, [#allocation18], 128, 128, 8
    $region69: #{tpu_custom_call.1} parent=1 // pred_fallthru
      _
    // Predicated region
    $region70: #{tpu_custom_call.1} parent=1 // pred_check
      _
    $region71: #{tpu_custom_call.1} parent=1 // pred_check_branch
      %164 = sbr.rel (0) target = $region73
    $region72: #{tpu_custom_call.1} parent=1 // pred_region
      %165 = dma.done [#allocation3], 32
    $region73: #{tpu_custom_call.1} parent=1 // pred_fallthru
      _
    // Predicated region
    $region74: #{tpu_custom_call.1} parent=1 // pred_check
      _
    $region75: #{tpu_custom_call.1} parent=1 // pred_check_branch
      %167 = sbr.rel (0) target = $region77
    $region76: #{tpu_custom_call.1} parent=1 // pred_region
      %168 = dma.done [#allocation6], 128
    $region77: #{tpu_custom_call.1} parent=1 // pred_fallthru
      _
    // Predicated region
    $region78: #{tpu_custom_call.1} parent=1 // pred_check
      _
    $region79: #{tpu_custom_call.1} parent=1 // pred_check_branch
      %170 = sbr.rel (0) target = $region81
    $region80: #{tpu_custom_call.1} parent=1 // pred_region
      %171 = dma.done [#allocation6], 256
    $region81: #{tpu_custom_call.1} parent=1 // pred_fallthru
      _
    // Predicated region
    $region82: #{tpu_custom_call.1} parent=1 // pred_check
      _
    $region83: #{tpu_custom_call.1} parent=1 // pred_check_branch
      %173 = sbr.rel (0) target = $region85
    $region84: #{tpu_custom_call.1} parent=1 // pred_region
      %174 = dma.done [#allocation9], 512
    $region85: #{tpu_custom_call.1} parent=1 // pred_fallthru
      _
    // Predicated region
    $region86: #{tpu_custom_call.1} parent=1 // pred_check
      _
    $region87: #{tpu_custom_call.1} parent=1 // pred_check_branch
      %176 = sbr.rel (0) target = $region89
    $region88: #{tpu_custom_call.1} parent=1 // pred_region
      %177 = dma.done [#allocation9], 512
    $region89: #{tpu_custom_call.1} parent=1 // pred_fallthru
      _
    // Predicated region
    $region90: #{tpu_custom_call.1} parent=1 // pred_check
      _
    $region91: #{tpu_custom_call.1} parent=1 // pred_check_branch
      %179 = sbr.rel (0) target = $region93
    $region92: #{tpu_custom_call.1} parent=1 // pred_region
      %180 = dma.done [#allocation12], 128
    $region93: #{tpu_custom_call.1} parent=1 // pred_fallthru
      _
    // Predicated region
    $region94: #{tpu_custom_call.1} parent=1 // pred_check
      _
    $region95: #{tpu_custom_call.1} parent=1 // pred_check_branch
      %182 = sbr.rel (0) target = $region97
    $region96: #{tpu_custom_call.1} parent=1 // pred_region
      %183 = dma.done [#allocation12], 32
    $region97: #{tpu_custom_call.1} parent=1 // pred_fallthru
      _
    // Predicated region
    $region98: #{tpu_custom_call.1} parent=1 // pred_check
      _
    $region99: #{tpu_custom_call.1} parent=1 // pred_check_branch
      %185 = sbr.rel (0) target = $region101
    $region100: #{tpu_custom_call.1} parent=1 // pred_region
      %186 = dma.done [#allocation15], 32
    $region101: #{tpu_custom_call.1} parent=1 // pred_fallthru
      _
    // Predicated region
    $region102: #{tpu_custom_call.1} parent=1 // pred_check
      _
    $region103: #{tpu_custom_call.1} parent=1 // pred_check_branch
      %188 = sbr.rel (0) target = $region105
    $region104: #{tpu_custom_call.1} parent=1 // pred_region
      %189 = dma.done [#allocation15], 512
    $region105: #{tpu_custom_call.1} parent=1 // pred_fallthru
      _
    // Predicated region
    $region106: #{tpu_custom_call.1} parent=1 // pred_check
      _
    $region107: #{tpu_custom_call.1} parent=1 // pred_check_branch
      %191 = sbr.rel (0) target = $region109
    $region108: #{tpu_custom_call.1} parent=1 // pred_region
      %192 = dma.done [#allocation18], 512
    $region109: #{tpu_custom_call.1} parent=1 // pred_fallthru
      _
    %v193 = vld [vmem:[%s0] sm:$0xff]
    %v194 = vld [vmem:[%s0 + $0x8] sm:$0xff]
    %v195 = vld [vmem:[%s0 + $0x10] sm:$0xff]
    %v196 = vld [vmem:[%s0 + $0x18] sm:$0xff]
    %v197 = vld [vmem:[#allocation5] sm:$0xff]
    %v198 = vld [vmem:[%s3] sm:$0x1]
    %v200 = vlaneseq
    %v201 = vshrl.u32 %v200, 7
    %v202 = vsub.s32 0, %v201
    %v203 = vrot.slane %v198, %v202
    %vm205 = vcmask 64512
    %v207 = vsel %vm205, %v193, 0
    %v210 = vsel %vm205, %v194, 0
    %v213 = vsel %vm205, %v195, 0
    %v216 = vsel %vm205, %v196, 0
    %218 = vmatprep.subr.mxu0 0.0
    %219 = vmatpush1.msra.mxu0 %v197
    %220 = vmatprep.subr.mxu0 0.0
    %221 = vmatpush1.msra.mxu0 0.0
    %222 = vmatprep.subr.mxu0 0.0
    %223 = vmatpush1.msra.mxu0 0.0
    %224 = vmatprep.subr.mxu0 0.0
    %225 = vmatpush1.msra.mxu0 0.0
    %226 = vmatprep.subr.mxu0 0.0
    %227 = vmatpush1.msra.mxu0 0.0
    %228 = vmatprep.subr.mxu0 0.0
    %229 = vmatpush1.msra.mxu0 0.0
    %230 = vmatprep.subr.mxu0 0.0
    %231 = vmatpush1.msra.mxu0 0.0
    %232 = vmatprep.subr.mxu0 0.0
    %233 = vmatpush1.msra.mxu0 0.0
    %234 = vmatprep.subr.mxu0 0.0
    %235 = vmatpush1.msra.mxu0 0.0
    %236 = vmatprep.subr.mxu0 0.0
    %237 = vmatpush1.msra.mxu0 0.0
    %238 = vmatprep.subr.mxu0 0.0
    %239 = vmatpush1.msra.mxu0 0.0
    %240 = vmatprep.subr.mxu0 0.0
    %241 = vmatpush1.msra.mxu0 0.0
    %242 = vmatprep.subr.mxu0 0.0
    %243 = vmatpush1.msra.mxu0 0.0
    %244 = vmatprep.subr.mxu0 0.0
    %245 = vmatpush1.msra.mxu0 0.0
    %246 = vmatprep.subr.mxu0 0.0
    %247 = vmatpush1.msra.mxu0 0.0
    %248 = vmatprep.subr.mxu0 0.0
    %249 = vmatpush1.msra.mxu0 0.0
    %250 = vmatprep.subr.mxu0 0.0
    %251 = vmatpush1.msra.mxu0 0.0
    %252 = vmatprep.subr.mxu0 0.0
    %253 = vmatpush1.msra.mxu0 0.0
    %254 = vmatprep.subr.mxu0 0.0
    %255 = vmatpush1.msra.mxu0 0.0
    %256 = vmatprep.subr.mxu0 0.0
    %257 = vmatpush1.msra.mxu0 0.0
    %258 = vmatprep.subr.mxu0 0.0
    %259 = vmatpush1.msra.mxu0 0.0
    %260 = vmatprep.subr.mxu0 0.0
    %261 = vmatpush1.msra.mxu0 0.0
    %262 = vmatprep.subr.mxu0 0.0
    %263 = vmatpush1.msra.mxu0 0.0
    %264 = vmatprep.subr.mxu0 0.0
    %265 = vmatpush1.msra.mxu0 0.0
    %266 = vmatprep.subr.mxu0 0.0
    %267 = vmatpush1.msra.mxu0 0.0
    %268 = vmatprep.subr.mxu0 0.0
    %269 = vmatpush1.msra.mxu0 0.0
    %270 = vmatprep.subr.mxu0 0.0
    %271 = vmatpush1.msra.mxu0 0.0
    %272 = vmatprep.subr.mxu0 0.0
    %273 = vmatpush1.msra.mxu0 0.0
    %274 = vmatprep.subr.mxu0 0.0
    %275 = vmatpush1.msra.mxu0 0.0
    %276 = vmatprep.subr.mxu0 0.0
    %277 = vmatpush1.msra.mxu0 0.0
    %278 = vmatprep.subr.mxu0 0.0
    %279 = vmatpush1.msra.mxu0 0.0
    %280 = vmatprep.subr.mxu0 0.0
    %281 = vmatpush1.msra.mxu0 0.0
    %282 = vmatprep.mubr.f32.mxu0 0.0
    %283 = vmatmul.mubr.f32.gmra.mrb[0].mxu0 %v207
    %v284 = vpop.f32.mrb[0].mxu0
    %v285 = vadd.f32 %v203, %v284
    %v286 = vpop.f32.mrb[0].mxu0
    %287 = vmatprep.mubr.f32.mxu0 0.0
    %288 = vmatmul.mubr.f32.gmra.mrb[0].mxu0 %v210
    %v289 = vpop.f32.mrb[0].mxu0
    %v290 = vadd.f32 %v203, %v289
    %v291 = vpop.f32.mrb[0].mxu0
    %292 = vmatprep.mubr.f32.mxu0 0.0
    %293 = vmatmul.mubr.f32.gmra.mrb[0].mxu0 %v213
    %v294 = vpop.f32.mrb[0].mxu0
    %v295 = vadd.f32 %v203, %v294
    %v296 = vpop.f32.mrb[0].mxu0
    %297 = vmatprep.mubr.f32.mxu0 0.0
    %298 = vmatmul.mubr.f32.gmra.mrb[0].mxu0 %v216
    %v299 = vpop.f32.mrb[0].mxu0
    %v300 = vadd.f32 %v203, %v299
    %v301 = vpop.f32.mrb[0].mxu0
    %302 = vdwg.mxu0
    %v303 = vld [vmem:[#allocation2] sm:$0x3]
    %v304 = vlaneseq
    %v305 = vand.u32 %v304, 127
    %v306 = vlaneseq
    %v307 = vshrl.u32 %v306, 7
    %v308 = vsub.s32 0, %v307
    %v309 = vrot.slane %v303, %v308
    %311 = vbcast.lane.b32.xlu0 %v309, 256
    %v312 = vpop.permute.xlu0 %311
    %s314 = sor.u32 256, 8
    %315 = vbcast.lane.b32.xlu0 %v309, %s314
    %v316 = vpop.permute.xlu0 %315
    %v317 = vlaneseq
    %v318 = vshrl.u32 %v317, 7
    %v319 = vsub.s32 1, %v318
    %v320 = vrot.slane %v303, %v319
    %322 = vbcast.lane.b32.xlu0 %v320, 256
    %v323 = vpop.permute.xlu0 %322
    %s325 = sor.u32 256, 8
    %326 = vbcast.lane.b32.xlu0 %v320, %s325
    %v327 = vpop.permute.xlu0 %326
    %vm328 = vcmp.eq.s32.totalorder %v312, %v305
    %vm329 = vcmp.eq.s32.totalorder %v316, %v305
    %vm330 = vcmp.eq.s32.totalorder %v323, %v305
    %vm331 = vcmp.eq.s32.totalorder %v327, %v305
    %v332 = vsel %vm328, 1, 0
    %v333 = vsel %vm329, 1, 0
    %v334 = vsel %vm330, 1, 0
    %v335 = vsel %vm331, 1, 0
    %v336 = vcvt.s32.f32 %v332
    %v337 = vcvt.s32.f32 %v333
    %v338 = vcvt.s32.f32 %v334
    %v339 = vcvt.s32.f32 %v335
    %v340 = vld [vmem:[#allocation7] sm:$0xff]
    %v341 = vld [vmem:[#allocation7 + $0x8] sm:$0xff]
    %vm342 = vcmask 130048
    %v344 = vsel %vm342, %v336, 0
    %v347 = vsel %vm342, %v337, 0
    %v350 = vsel %vm342, %v338, 0
    %v353 = vsel %vm342, %v339, 0
    %355 = vmatprep.subr.mxu0 0.0
    %356 = vmatpush1.msra.mxu0 %v340
    %357 = vmatprep.subr.mxu0 0.0
    %358 = vmatpush1.msra.mxu0 %v341
    %359 = vmatprep.subr.mxu0 0.0
    %360 = vmatpush1.msra.mxu0 0.0
    %361 = vmatprep.subr.mxu0 0.0
    %362 = vmatpush1.msra.mxu0 0.0
    %363 = vmatprep.subr.mxu0 0.0
    %364 = vmatpush1.msra.mxu0 0.0
    %365 = vmatprep.subr.mxu0 0.0
    %366 = vmatpush1.msra.mxu0 0.0
    %367 = vmatprep.subr.mxu0 0.0
    %368 = vmatpush1.msra.mxu0 0.0
    %369 = vmatprep.subr.mxu0 0.0
    %370 = vmatpush1.msra.mxu0 0.0
    %371 = vmatprep.subr.mxu0 0.0
    %372 = vmatpush1.msra.mxu0 0.0
    %373 = vmatprep.subr.mxu0 0.0
    %374 = vmatpush1.msra.mxu0 0.0
    %375 = vmatprep.subr.mxu0 0.0
    %376 = vmatpush1.msra.mxu0 0.0
    %377 = vmatprep.subr.mxu0 0.0
    %378 = vmatpush1.msra.mxu0 0.0
    %379 = vmatprep.subr.mxu0 0.0
    %380 = vmatpush1.msra.mxu0 0.0
    %381 = vmatprep.subr.mxu0 0.0
    %382 = vmatpush1.msra.mxu0 0.0
    %383 = vmatprep.subr.mxu0 0.0
    %384 = vmatpush1.msra.mxu0 0.0
    %385 = vmatprep.subr.mxu0 0.0
    %386 = vmatpush1.msra.mxu0 0.0
    %387 = vmatprep.subr.mxu0 0.0
    %388 = vmatpush1.msra.mxu0 0.0
    %389 = vmatprep.subr.mxu0 0.0
    %390 = vmatpush1.msra.mxu0 0.0
    %391 = vmatprep.subr.mxu0 0.0
    %392 = vmatpush1.msra.mxu0 0.0
    %393 = vmatprep.subr.mxu0 0.0
    %394 = vmatpush1.msra.mxu0 0.0
    %395 = vmatprep.subr.mxu0 0.0
    %396 = vmatpush1.msra.mxu0 0.0
    %397 = vmatprep.subr.mxu0 0.0
    %398 = vmatpush1.msra.mxu0 0.0
    %399 = vmatprep.subr.mxu0 0.0
    %400 = vmatpush1.msra.mxu0 0.0
    %401 = vmatprep.subr.mxu0 0.0
    %402 = vmatpush1.msra.mxu0 0.0
    %403 = vmatprep.subr.mxu0 0.0
    %404 = vmatpush1.msra.mxu0 0.0
    %405 = vmatprep.subr.mxu0 0.0
    %406 = vmatpush1.msra.mxu0 0.0
    %407 = vmatprep.subr.mxu0 0.0
    %408 = vmatpush1.msra.mxu0 0.0
    %409 = vmatprep.subr.mxu0 0.0
    %410 = vmatpush1.msra.mxu0 0.0
    %411 = vmatprep.subr.mxu0 0.0
    %412 = vmatpush1.msra.mxu0 0.0
    %413 = vmatprep.subr.mxu0 0.0
    %414 = vmatpush1.msra.mxu0 0.0
    %415 = vmatprep.subr.mxu0 0.0
    %416 = vmatpush1.msra.mxu0 0.0
    %417 = vmatprep.subr.mxu0 0.0
    %418 = vmatpush1.msra.mxu0 0.0
    %419 = vmatprep.mubr.f32.mxu0 0.0
    %420 = vmatmul.mubr.f32.gmra.mrb[0].mxu0 %v344
    %v421 = vpop.f32.mrb[0].mxu0
    %v422 = vadd.f32 0.0, %v421
    %v423 = vpop.f32.mrb[0].mxu0
    %424 = vmatprep.mubr.f32.mxu0 0.0
    %425 = vmatmul.mubr.f32.gmra.mrb[0].mxu0 %v347
    %v426 = vpop.f32.mrb[0].mxu0
    %v427 = vadd.f32 0.0, %v426
    %v428 = vpop.f32.mrb[0].mxu0
    %429 = vmatprep.mubr.f32.mxu0 0.0
    %430 = vmatmul.mubr.f32.gmra.mrb[0].mxu0 %v350
    %v431 = vpop.f32.mrb[0].mxu0
    %v432 = vadd.f32 0.0, %v431
    %v433 = vpop.f32.mrb[0].mxu0
    %434 = vmatprep.mubr.f32.mxu0 0.0
    %435 = vmatmul.mubr.f32.gmra.mrb[0].mxu0 %v353
    %v436 = vpop.f32.mrb[0].mxu0
    %v437 = vadd.f32 0.0, %v436
    %v438 = vpop.f32.mrb[0].mxu0
    %439 = vdwg.mxu0
    %v440 = vld [vmem:[#allocation8] sm:$0xff]
    %v441 = vld [vmem:[#allocation8 + $0x8] sm:$0xff]
    %v442 = vld [vmem:[#allocation8 + $0x10] sm:$0xff]
    %v443 = vld [vmem:[#allocation8 + $0x18] sm:$0xff]
    %vm444 = vcmask 261120
    %v446 = vsel %vm444, %v422, 0
    %v449 = vsel %vm444, %v427, 0
    %v452 = vsel %vm444, %v432, 0
    %v455 = vsel %vm444, %v437, 0
    %457 = vmatprep.subr.mxu0 0.0
    %458 = vmatpush1.msra.mxu0 %v440
    %459 = vmatprep.subr.mxu0 0.0
    %460 = vmatpush1.msra.mxu0 %v441
    %461 = vmatprep.subr.mxu0 0.0
    %462 = vmatpush1.msra.mxu0 %v442
    %463 = vmatprep.subr.mxu0 0.0
    %464 = vmatpush1.msra.mxu0 %v443
    %465 = vmatprep.subr.mxu0 0.0
    %466 = vmatpush1.msra.mxu0 0.0
    %467 = vmatprep.subr.mxu0 0.0
    %468 = vmatpush1.msra.mxu0 0.0
    %469 = vmatprep.subr.mxu0 0.0
    %470 = vmatpush1.msra.mxu0 0.0
    %471 = vmatprep.subr.mxu0 0.0
    %472 = vmatpush1.msra.mxu0 0.0
    %473 = vmatprep.subr.mxu0 0.0
    %474 = vmatpush1.msra.mxu0 0.0
    %475 = vmatprep.subr.mxu0 0.0
    %476 = vmatpush1.msra.mxu0 0.0
    %477 = vmatprep.subr.mxu0 0.0
    %478 = vmatpush1.msra.mxu0 0.0
    %479 = vmatprep.subr.mxu0 0.0
    %480 = vmatpush1.msra.mxu0 0.0
    %481 = vmatprep.subr.mxu0 0.0
    %482 = vmatpush1.msra.mxu0 0.0
    %483 = vmatprep.subr.mxu0 0.0
    %484 = vmatpush1.msra.mxu0 0.0
    %485 = vmatprep.subr.mxu0 0.0
    %486 = vmatpush1.msra.mxu0 0.0
    %487 = vmatprep.subr.mxu0 0.0
    %488 = vmatpush1.msra.mxu0 0.0
    %489 = vmatprep.subr.mxu0 0.0
    %490 = vmatpush1.msra.mxu0 0.0
    %491 = vmatprep.subr.mxu0 0.0
    %492 = vmatpush1.msra.mxu0 0.0
    %493 = vmatprep.subr.mxu0 0.0
    %494 = vmatpush1.msra.mxu0 0.0
    %495 = vmatprep.subr.mxu0 0.0
    %496 = vmatpush1.msra.mxu0 0.0
    %497 = vmatprep.subr.mxu0 0.0
    %498 = vmatpush1.msra.mxu0 0.0
    %499 = vmatprep.subr.mxu0 0.0
    %500 = vmatpush1.msra.mxu0 0.0
    %501 = vmatprep.subr.mxu0 0.0
    %502 = vmatpush1.msra.mxu0 0.0
    %503 = vmatprep.subr.mxu0 0.0
    %504 = vmatpush1.msra.mxu0 0.0
    %505 = vmatprep.subr.mxu0 0.0
    %506 = vmatpush1.msra.mxu0 0.0
    %507 = vmatprep.subr.mxu0 0.0
    %508 = vmatpush1.msra.mxu0 0.0
    %509 = vmatprep.subr.mxu0 0.0
    %510 = vmatpush1.msra.mxu0 0.0
    %511 = vmatprep.subr.mxu0 0.0
    %512 = vmatpush1.msra.mxu0 0.0
    %513 = vmatprep.subr.mxu0 0.0
    %514 = vmatpush1.msra.mxu0 0.0
    %515 = vmatprep.subr.mxu0 0.0
    %516 = vmatpush1.msra.mxu0 0.0
    %517 = vmatprep.subr.mxu0 0.0
    %518 = vmatpush1.msra.mxu0 0.0
    %519 = vmatprep.subr.mxu0 0.0
    %520 = vmatpush1.msra.mxu0 0.0
    %521 = vmatprep.mubr.f32.mxu0 0.0
    %522 = vmatmul.mubr.f32.gmra.mrb[0].mxu0 %v446
    %v523 = vpop.f32.mrb[0].mxu0
    %v524 = vadd.f32 0.0, %v523
    %v525 = vpop.f32.mrb[0].mxu0
    %526 = vmatprep.mubr.f32.mxu0 0.0
    %527 = vmatmul.mubr.f32.gmra.mrb[0].mxu0 %v449
    %v528 = vpop.f32.mrb[0].mxu0
    %v529 = vadd.f32 0.0, %v528
    %v530 = vpop.f32.mrb[0].mxu0
    %531 = vmatprep.mubr.f32.mxu0 0.0
    %532 = vmatmul.mubr.f32.gmra.mrb[0].mxu0 %v452
    %v533 = vpop.f32.mrb[0].mxu0
    %v534 = vadd.f32 0.0, %v533
    %v535 = vpop.f32.mrb[0].mxu0
    %536 = vmatprep.mubr.f32.mxu0 0.0
    %537 = vmatmul.mubr.f32.gmra.mrb[0].mxu0 %v455
    %v538 = vpop.f32.mrb[0].mxu0
    %v539 = vadd.f32 0.0, %v538
    %v540 = vpop.f32.mrb[0].mxu0
    %541 = vdwg.mxu0
    %v542 = vld [vmem:[#allocation10] sm:$0xff]
    %v543 = vld [vmem:[#allocation10 + $0x8] sm:$0xff]
    %v544 = vld [vmem:[#allocation10 + $0x10] sm:$0xff]
    %v545 = vld [vmem:[#allocation10 + $0x18] sm:$0xff]
    %546 = vmatprep.subr.mxu0 0.0
    %547 = vmatpush1.msra.mxu0 %v542
    %548 = vmatprep.subr.mxu0 0.0
    %549 = vmatpush1.msra.mxu0 %v543
    %550 = vmatprep.subr.mxu0 0.0
    %551 = vmatpush1.msra.mxu0 %v544
    %552 = vmatprep.subr.mxu0 0.0
    %553 = vmatpush1.msra.mxu0 %v545
    %554 = vmatprep.subr.mxu0 0.0
    %555 = vmatpush1.msra.mxu0 0.0
    %556 = vmatprep.subr.mxu0 0.0
    %557 = vmatpush1.msra.mxu0 0.0
    %558 = vmatprep.subr.mxu0 0.0
    %559 = vmatpush1.msra.mxu0 0.0
    %560 = vmatprep.subr.mxu0 0.0
    %561 = vmatpush1.msra.mxu0 0.0
    %562 = vmatprep.subr.mxu0 0.0
    %563 = vmatpush1.msra.mxu0 0.0
    %564 = vmatprep.subr.mxu0 0.0
    %565 = vmatpush1.msra.mxu0 0.0
    %566 = vmatprep.subr.mxu0 0.0
    %567 = vmatpush1.msra.mxu0 0.0
    %568 = vmatprep.subr.mxu0 0.0
    %569 = vmatpush1.msra.mxu0 0.0
    %570 = vmatprep.subr.mxu0 0.0
    %571 = vmatpush1.msra.mxu0 0.0
    %572 = vmatprep.subr.mxu0 0.0
    %573 = vmatpush1.msra.mxu0 0.0
    %574 = vmatprep.subr.mxu0 0.0
    %575 = vmatpush1.msra.mxu0 0.0
    %576 = vmatprep.subr.mxu0 0.0
    %577 = vmatpush1.msra.mxu0 0.0
    %578 = vmatprep.subr.mxu0 0.0
    %579 = vmatpush1.msra.mxu0 0.0
    %580 = vmatprep.subr.mxu0 0.0
    %581 = vmatpush1.msra.mxu0 0.0
    %582 = vmatprep.subr.mxu0 0.0
    %583 = vmatpush1.msra.mxu0 0.0
    %584 = vmatprep.subr.mxu0 0.0
    %585 = vmatpush1.msra.mxu0 0.0
    %586 = vmatprep.subr.mxu0 0.0
    %587 = vmatpush1.msra.mxu0 0.0
    %588 = vmatprep.subr.mxu0 0.0
    %589 = vmatpush1.msra.mxu0 0.0
    %590 = vmatprep.subr.mxu0 0.0
    %591 = vmatpush1.msra.mxu0 0.0
    %592 = vmatprep.subr.mxu0 0.0
    %593 = vmatpush1.msra.mxu0 0.0
    %594 = vmatprep.subr.mxu0 0.0
    %595 = vmatpush1.msra.mxu0 0.0
    %596 = vmatprep.subr.mxu0 0.0
    %597 = vmatpush1.msra.mxu0 0.0
    %598 = vmatprep.subr.mxu0 0.0
    %599 = vmatpush1.msra.mxu0 0.0
    %600 = vmatprep.subr.mxu0 0.0
    %601 = vmatpush1.msra.mxu0 0.0
    %602 = vmatprep.subr.mxu0 0.0
    %603 = vmatpush1.msra.mxu0 0.0
    %604 = vmatprep.subr.mxu0 0.0
    %605 = vmatpush1.msra.mxu0 0.0
    %606 = vmatprep.subr.mxu0 0.0
    %607 = vmatpush1.msra.mxu0 0.0
    %608 = vmatprep.subr.mxu0 0.0
    %609 = vmatpush1.msra.mxu0 0.0
    %610 = vmatprep.mubr.f32.mxu0 0.0
    %611 = vmatmul.mubr.f32.gmra.mrb[0].mxu0 %v446
    %v612 = vpop.f32.mrb[0].mxu0
    %v613 = vadd.f32 0.0, %v612
    %v614 = vpop.f32.mrb[0].mxu0
    %615 = vmatprep.mubr.f32.mxu0 0.0
    %616 = vmatmul.mubr.f32.gmra.mrb[0].mxu0 %v449
    %v617 = vpop.f32.mrb[0].mxu0
    %v618 = vadd.f32 0.0, %v617
    %v619 = vpop.f32.mrb[0].mxu0
    %620 = vmatprep.mubr.f32.mxu0 0.0
    %621 = vmatmul.mubr.f32.gmra.mrb[0].mxu0 %v452
    %v622 = vpop.f32.mrb[0].mxu0
    %v623 = vadd.f32 0.0, %v622
    %v624 = vpop.f32.mrb[0].mxu0
    %625 = vmatprep.mubr.f32.mxu0 0.0
    %626 = vmatmul.mubr.f32.gmra.mrb[0].mxu0 %v455
    %v627 = vpop.f32.mrb[0].mxu0
    %v628 = vadd.f32 0.0, %v627
    %v629 = vpop.f32.mrb[0].mxu0
    %630 = vdwg.mxu0
    %v632 = vsel %vm205, %v524, 0
    %v635 = vsel %vm205, %v529, 0
    %v638 = vsel %vm205, %v613, 0
    %v641 = vsel %vm205, %v618, 0
    %643 = vmatprep.subr.mxu0 0.0
    %644 = vmatpush1.xpose.msra.mxu0 %v638
    %645 = vmatprep.subr.mxu0 0.0
    %646 = vmatpush1.xpose.msra.mxu0 %v641
    %647 = vmatprep.subr.mxu0 0.0
    %648 = vmatpush1.xpose.msra.mxu0 0.0
    %649 = vmatprep.subr.mxu0 0.0
    %650 = vmatpush1.xpose.msra.mxu0 0.0
    %651 = vmatprep.subr.mxu0 0.0
    %652 = vmatpush1.xpose.msra.mxu0 0.0
    %653 = vmatprep.subr.mxu0 0.0
    %654 = vmatpush1.xpose.msra.mxu0 0.0
    %655 = vmatprep.subr.mxu0 0.0
    %656 = vmatpush1.xpose.msra.mxu0 0.0
    %657 = vmatprep.subr.mxu0 0.0
    %658 = vmatpush1.xpose.msra.mxu0 0.0
    %659 = vmatprep.subr.mxu0 0.0
    %660 = vmatpush1.xpose.msra.mxu0 0.0
    %661 = vmatprep.subr.mxu0 0.0
    %662 = vmatpush1.xpose.msra.mxu0 0.0
    %663 = vmatprep.subr.mxu0 0.0
    %664 = vmatpush1.xpose.msra.mxu0 0.0
    %665 = vmatprep.subr.mxu0 0.0
    %666 = vmatpush1.xpose.msra.mxu0 0.0
    %667 = vmatprep.subr.mxu0 0.0
    %668 = vmatpush1.xpose.msra.mxu0 0.0
    %669 = vmatprep.subr.mxu0 0.0
    %670 = vmatpush1.xpose.msra.mxu0 0.0
    %671 = vmatprep.subr.mxu0 0.0
    %672 = vmatpush1.xpose.msra.mxu0 0.0
    %673 = vmatprep.subr.mxu0 0.0
    %674 = vmatpush1.xpose.msra.mxu0 0.0
    %675 = vmatprep.subr.mxu0 0.0
    %676 = vmatpush1.xpose.msra.mxu0 0.0
    %677 = vmatprep.subr.mxu0 0.0
    %678 = vmatpush1.xpose.msra.mxu0 0.0
    %679 = vmatprep.subr.mxu0 0.0
    %680 = vmatpush1.xpose.msra.mxu0 0.0
    %681 = vmatprep.subr.mxu0 0.0
    %682 = vmatpush1.xpose.msra.mxu0 0.0
    %683 = vmatprep.subr.mxu0 0.0
    %684 = vmatpush1.xpose.msra.mxu0 0.0
    %685 = vmatprep.subr.mxu0 0.0
    %686 = vmatpush1.xpose.msra.mxu0 0.0
    %687 = vmatprep.subr.mxu0 0.0
    %688 = vmatpush1.xpose.msra.mxu0 0.0
    %689 = vmatprep.subr.mxu0 0.0
    %690 = vmatpush1.xpose.msra.mxu0 0.0
    %691 = vmatprep.subr.mxu0 0.0
    %692 = vmatpush1.xpose.msra.mxu0 0.0
    %693 = vmatprep.subr.mxu0 0.0
    %694 = vmatpush1.xpose.msra.mxu0 0.0
    %695 = vmatprep.subr.mxu0 0.0
    %696 = vmatpush1.xpose.msra.mxu0 0.0
    %697 = vmatprep.subr.mxu0 0.0
    %698 = vmatpush1.xpose.msra.mxu0 0.0
    %699 = vmatprep.subr.mxu0 0.0
    %700 = vmatpush1.xpose.msra.mxu0 0.0
    %701 = vmatprep.subr.mxu0 0.0
    %702 = vmatpush1.xpose.msra.mxu0 0.0
    %703 = vmatprep.subr.mxu0 0.0
    %704 = vmatpush1.xpose.msra.mxu0 0.0
    %705 = vmatprep.subr.mxu0 0.0
    %706 = vmatpush1.xpose.msra.mxu0 0.0
    %707 = vmatprep.mubr.f32.mxu0 0.0
    %708 = vmatmul.mubr.f32.gmra.mrb[0].mxu0 %v632
    %v709 = vpop.f32.mrb[0].mxu0
    %v710 = vadd.f32 0.0, %v709
    %v711 = vpop.f32.mrb[0].mxu0
    %712 = vmatprep.mubr.f32.mxu0 0.0
    %713 = vmatmul.mubr.f32.gmra.mrb[0].mxu0 %v635
    %v714 = vpop.f32.mrb[0].mxu0
    %v715 = vadd.f32 0.0, %v714
    %v716 = vpop.f32.mrb[0].mxu0
    %717 = vdwg.mxu0
    %v719 = vsel %vm205, %v534, 0
    %v722 = vsel %vm205, %v539, 0
    %v725 = vsel %vm205, %v623, 0
    %v728 = vsel %vm205, %v628, 0
    %730 = vmatprep.subr.mxu0 0.0
    %731 = vmatpush1.xpose.msra.mxu0 %v725
    %732 = vmatprep.subr.mxu0 0.0
    %733 = vmatpush1.xpose.msra.mxu0 %v728
    %734 = vmatprep.subr.mxu0 0.0
    %735 = vmatpush1.xpose.msra.mxu0 0.0
    %736 = vmatprep.subr.mxu0 0.0
    %737 = vmatpush1.xpose.msra.mxu0 0.0
    %738 = vmatprep.subr.mxu0 0.0
    %739 = vmatpush1.xpose.msra.mxu0 0.0
    %740 = vmatprep.subr.mxu0 0.0
    %741 = vmatpush1.xpose.msra.mxu0 0.0
    %742 = vmatprep.subr.mxu0 0.0
    %743 = vmatpush1.xpose.msra.mxu0 0.0
    %744 = vmatprep.subr.mxu0 0.0
    %745 = vmatpush1.xpose.msra.mxu0 0.0
    %746 = vmatprep.subr.mxu0 0.0
    %747 = vmatpush1.xpose.msra.mxu0 0.0
    %748 = vmatprep.subr.mxu0 0.0
    %749 = vmatpush1.xpose.msra.mxu0 0.0
    %750 = vmatprep.subr.mxu0 0.0
    %751 = vmatpush1.xpose.msra.mxu0 0.0
    %752 = vmatprep.subr.mxu0 0.0
    %753 = vmatpush1.xpose.msra.mxu0 0.0
    %754 = vmatprep.subr.mxu0 0.0
    %755 = vmatpush1.xpose.msra.mxu0 0.0
    %756 = vmatprep.subr.mxu0 0.0
    %757 = vmatpush1.xpose.msra.mxu0 0.0
    %758 = vmatprep.subr.mxu0 0.0
    %759 = vmatpush1.xpose.msra.mxu0 0.0
    %760 = vmatprep.subr.mxu0 0.0
    %761 = vmatpush1.xpose.msra.mxu0 0.0
    %762 = vmatprep.subr.mxu0 0.0
    %763 = vmatpush1.xpose.msra.mxu0 0.0
    %764 = vmatprep.subr.mxu0 0.0
    %765 = vmatpush1.xpose.msra.mxu0 0.0
    %766 = vmatprep.subr.mxu0 0.0
    %767 = vmatpush1.xpose.msra.mxu0 0.0
    %768 = vmatprep.subr.mxu0 0.0
    %769 = vmatpush1.xpose.msra.mxu0 0.0
    %770 = vmatprep.subr.mxu0 0.0
    %771 = vmatpush1.xpose.msra.mxu0 0.0
    %772 = vmatprep.subr.mxu0 0.0
    %773 = vmatpush1.xpose.msra.mxu0 0.0
    %774 = vmatprep.subr.mxu0 0.0
    %775 = vmatpush1.xpose.msra.mxu0 0.0
    %776 = vmatprep.subr.mxu0 0.0
    %777 = vmatpush1.xpose.msra.mxu0 0.0
    %778 = vmatprep.subr.mxu0 0.0
    %779 = vmatpush1.xpose.msra.mxu0 0.0
    %780 = vmatprep.subr.mxu0 0.0
    %781 = vmatpush1.xpose.msra.mxu0 0.0
    %782 = vmatprep.subr.mxu0 0.0
    %783 = vmatpush1.xpose.msra.mxu0 0.0
    %784 = vmatprep.subr.mxu0 0.0
    %785 = vmatpush1.xpose.msra.mxu0 0.0
    %786 = vmatprep.subr.mxu0 0.0
    %787 = vmatpush1.xpose.msra.mxu0 0.0
    %788 = vmatprep.subr.mxu0 0.0
    %789 = vmatpush1.xpose.msra.mxu0 0.0
    %790 = vmatprep.subr.mxu0 0.0
    %791 = vmatpush1.xpose.msra.mxu0 0.0
    %792 = vmatprep.subr.mxu0 0.0
    %793 = vmatpush1.xpose.msra.mxu0 0.0
    %794 = vmatprep.mubr.f32.mxu0 0.0
    %795 = vmatmul.mubr.f32.gmra.mrb[0].mxu0 %v719
    %v796 = vpop.f32.mrb[0].mxu0
    %v797 = vadd.f32 0.0, %v796
    %v798 = vpop.f32.mrb[0].mxu0
    %799 = vmatprep.mubr.f32.mxu0 0.0
    %800 = vmatmul.mubr.f32.gmra.mrb[0].mxu0 %v722
    %v801 = vpop.f32.mrb[0].mxu0
    %v802 = vadd.f32 0.0, %v801
    %v803 = vpop.f32.mrb[0].mxu0
    %804 = vdwg.mxu0
    %v805 = vmul.f32 %v710, 0.35355338
    %v806 = vmul.f32 %v715, 0.35355338
    %v807 = vmul.f32 %v797, 0.35355338
    %v808 = vmul.f32 %v802, 0.35355338
    %809 = vrot.lane.b32.xlu0 %v524, 120
    %v810 = vpop.permute.xlu0 %809
    %811 = vrot.lane.b32.xlu0 %v529, 120
    %v812 = vpop.permute.xlu0 %811
    %813 = vrot.lane.b32.xlu0 %v613, 120
    %v814 = vpop.permute.xlu0 %813
    %815 = vrot.lane.b32.xlu0 %v618, 120
    %v816 = vpop.permute.xlu0 %815
    %v817 = vsel %vm205, %v810, 0
    %v819 = vsel %vm205, %v812, 0
    %v821 = vsel %vm205, %v814, 0
    %v823 = vsel %vm205, %v816, 0
    %825 = vmatprep.subr.mxu0 0.0
    %826 = vmatpush1.xpose.msra.mxu0 %v821
    %827 = vmatprep.subr.mxu0 0.0
    %828 = vmatpush1.xpose.msra.mxu0 %v823
    %829 = vmatprep.subr.mxu0 0.0
    %830 = vmatpush1.xpose.msra.mxu0 0.0
    %831 = vmatprep.subr.mxu0 0.0
    %832 = vmatpush1.xpose.msra.mxu0 0.0
    %833 = vmatprep.subr.mxu0 0.0
    %834 = vmatpush1.xpose.msra.mxu0 0.0
    %835 = vmatprep.subr.mxu0 0.0
    %836 = vmatpush1.xpose.msra.mxu0 0.0
    %837 = vmatprep.subr.mxu0 0.0
    %838 = vmatpush1.xpose.msra.mxu0 0.0
    %839 = vmatprep.subr.mxu0 0.0
    %840 = vmatpush1.xpose.msra.mxu0 0.0
    %841 = vmatprep.subr.mxu0 0.0
    %842 = vmatpush1.xpose.msra.mxu0 0.0
    %843 = vmatprep.subr.mxu0 0.0
    %844 = vmatpush1.xpose.msra.mxu0 0.0
    %845 = vmatprep.subr.mxu0 0.0
    %846 = vmatpush1.xpose.msra.mxu0 0.0
    %847 = vmatprep.subr.mxu0 0.0
    %848 = vmatpush1.xpose.msra.mxu0 0.0
    %849 = vmatprep.subr.mxu0 0.0
    %850 = vmatpush1.xpose.msra.mxu0 0.0
    %851 = vmatprep.subr.mxu0 0.0
    %852 = vmatpush1.xpose.msra.mxu0 0.0
    %853 = vmatprep.subr.mxu0 0.0
    %854 = vmatpush1.xpose.msra.mxu0 0.0
    %855 = vmatprep.subr.mxu0 0.0
    %856 = vmatpush1.xpose.msra.mxu0 0.0
    %857 = vmatprep.subr.mxu0 0.0
    %858 = vmatpush1.xpose.msra.mxu0 0.0
    %859 = vmatprep.subr.mxu0 0.0
    %860 = vmatpush1.xpose.msra.mxu0 0.0
    %861 = vmatprep.subr.mxu0 0.0
    %862 = vmatpush1.xpose.msra.mxu0 0.0
    %863 = vmatprep.subr.mxu0 0.0
    %864 = vmatpush1.xpose.msra.mxu0 0.0
    %865 = vmatprep.subr.mxu0 0.0
    %866 = vmatpush1.xpose.msra.mxu0 0.0
    %867 = vmatprep.subr.mxu0 0.0
    %868 = vmatpush1.xpose.msra.mxu0 0.0
    %869 = vmatprep.subr.mxu0 0.0
    %870 = vmatpush1.xpose.msra.mxu0 0.0
    %871 = vmatprep.subr.mxu0 0.0
    %872 = vmatpush1.xpose.msra.mxu0 0.0
    %873 = vmatprep.subr.mxu0 0.0
    %874 = vmatpush1.xpose.msra.mxu0 0.0
    %875 = vmatprep.subr.mxu0 0.0
    %876 = vmatpush1.xpose.msra.mxu0 0.0
    %877 = vmatprep.subr.mxu0 0.0
    %878 = vmatpush1.xpose.msra.mxu0 0.0
    %879 = vmatprep.subr.mxu0 0.0
    %880 = vmatpush1.xpose.msra.mxu0 0.0
    %881 = vmatprep.subr.mxu0 0.0
    %882 = vmatpush1.xpose.msra.mxu0 0.0
    %883 = vmatprep.subr.mxu0 0.0
    %884 = vmatpush1.xpose.msra.mxu0 0.0
    %885 = vmatprep.subr.mxu0 0.0
    %886 = vmatpush1.xpose.msra.mxu0 0.0
    %887 = vmatprep.subr.mxu0 0.0
    %888 = vmatpush1.xpose.msra.mxu0 0.0
    %889 = vmatprep.mubr.f32.mxu0 0.0
    %890 = vmatmul.mubr.f32.gmra.mrb[0].mxu0 %v817
    %v891 = vpop.f32.mrb[0].mxu0
    %v892 = vadd.f32 0.0, %v891
    %v893 = vpop.f32.mrb[0].mxu0
    %894 = vmatprep.mubr.f32.mxu0 0.0
    %895 = vmatmul.mubr.f32.gmra.mrb[0].mxu0 %v819
    %v896 = vpop.f32.mrb[0].mxu0
    %v897 = vadd.f32 0.0, %v896
    %v898 = vpop.f32.mrb[0].mxu0
    %899 = vdwg.mxu0
    %900 = vrot.lane.b32.xlu0 %v534, 120
    %v901 = vpop.permute.xlu0 %900
    %902 = vrot.lane.b32.xlu0 %v539, 120
    %v903 = vpop.permute.xlu0 %902
    %904 = vrot.lane.b32.xlu0 %v623, 120
    %v905 = vpop.permute.xlu0 %904
    %906 = vrot.lane.b32.xlu0 %v628, 120
    %v907 = vpop.permute.xlu0 %906
    %v908 = vsel %vm205, %v901, 0
    %v910 = vsel %vm205, %v903, 0
    %v912 = vsel %vm205, %v905, 0
    %v914 = vsel %vm205, %v907, 0
    %916 = vmatprep.subr.mxu0 0.0
    %917 = vmatpush1.xpose.msra.mxu0 %v912
    %918 = vmatprep.subr.mxu0 0.0
    %919 = vmatpush1.xpose.msra.mxu0 %v914
    %920 = vmatprep.subr.mxu0 0.0
    %921 = vmatpush1.xpose.msra.mxu0 0.0
    %922 = vmatprep.subr.mxu0 0.0
    %923 = vmatpush1.xpose.msra.mxu0 0.0
    %924 = vmatprep.subr.mxu0 0.0
    %925 = vmatpush1.xpose.msra.mxu0 0.0
    %926 = vmatprep.subr.mxu0 0.0
    %927 = vmatpush1.xpose.msra.mxu0 0.0
    %928 = vmatprep.subr.mxu0 0.0
    %929 = vmatpush1.xpose.msra.mxu0 0.0
    %930 = vmatprep.subr.mxu0 0.0
    %931 = vmatpush1.xpose.msra.mxu0 0.0
    %932 = vmatprep.subr.mxu0 0.0
    %933 = vmatpush1.xpose.msra.mxu0 0.0
    %934 = vmatprep.subr.mxu0 0.0
    %935 = vmatpush1.xpose.msra.mxu0 0.0
    %936 = vmatprep.subr.mxu0 0.0
    %937 = vmatpush1.xpose.msra.mxu0 0.0
    %938 = vmatprep.subr.mxu0 0.0
    %939 = vmatpush1.xpose.msra.mxu0 0.0
    %940 = vmatprep.subr.mxu0 0.0
    %941 = vmatpush1.xpose.msra.mxu0 0.0
    %942 = vmatprep.subr.mxu0 0.0
    %943 = vmatpush1.xpose.msra.mxu0 0.0
    %944 = vmatprep.subr.mxu0 0.0
    %945 = vmatpush1.xpose.msra.mxu0 0.0
    %946 = vmatprep.subr.mxu0 0.0
    %947 = vmatpush1.xpose.msra.mxu0 0.0
    %948 = vmatprep.subr.mxu0 0.0
    %949 = vmatpush1.xpose.msra.mxu0 0.0
    %950 = vmatprep.subr.mxu0 0.0
    %951 = vmatpush1.xpose.msra.mxu0 0.0
    %952 = vmatprep.subr.mxu0 0.0
    %953 = vmatpush1.xpose.msra.mxu0 0.0
    %954 = vmatprep.subr.mxu0 0.0
    %955 = vmatpush1.xpose.msra.mxu0 0.0
    %956 = vmatprep.subr.mxu0 0.0
    %957 = vmatpush1.xpose.msra.mxu0 0.0
    %958 = vmatprep.subr.mxu0 0.0
    %959 = vmatpush1.xpose.msra.mxu0 0.0
    %960 = vmatprep.subr.mxu0 0.0
    %961 = vmatpush1.xpose.msra.mxu0 0.0
    %962 = vmatprep.subr.mxu0 0.0
    %963 = vmatpush1.xpose.msra.mxu0 0.0
    %964 = vmatprep.subr.mxu0 0.0
    %965 = vmatpush1.xpose.msra.mxu0 0.0
    %966 = vmatprep.subr.mxu0 0.0
    %967 = vmatpush1.xpose.msra.mxu0 0.0
    %968 = vmatprep.subr.mxu0 0.0
    %969 = vmatpush1.xpose.msra.mxu0 0.0
    %970 = vmatprep.subr.mxu0 0.0
    %971 = vmatpush1.xpose.msra.mxu0 0.0
    %972 = vmatprep.subr.mxu0 0.0
    %973 = vmatpush1.xpose.msra.mxu0 0.0
    %974 = vmatprep.subr.mxu0 0.0
    %975 = vmatpush1.xpose.msra.mxu0 0.0
    %976 = vmatprep.subr.mxu0 0.0
    %977 = vmatpush1.xpose.msra.mxu0 0.0
    %978 = vmatprep.subr.mxu0 0.0
    %979 = vmatpush1.xpose.msra.mxu0 0.0
    %980 = vmatprep.mubr.f32.mxu0 0.0
    %981 = vmatmul.mubr.f32.gmra.mrb[0].mxu0 %v908
    %v982 = vpop.f32.mrb[0].mxu0
    %v983 = vadd.f32 0.0, %v982
    %v984 = vpop.f32.mrb[0].mxu0
    %985 = vmatprep.mubr.f32.mxu0 0.0
    %986 = vmatmul.mubr.f32.gmra.mrb[0].mxu0 %v910
    %v987 = vpop.f32.mrb[0].mxu0
    %v988 = vadd.f32 0.0, %v987
    %v989 = vpop.f32.mrb[0].mxu0
    %990 = vdwg.mxu0
    %v991 = vmul.f32 %v892, 0.35355338
    %v992 = vmul.f32 %v897, 0.35355338
    %v993 = vmul.f32 %v983, 0.35355338
    %v994 = vmul.f32 %v988, 0.35355338
    %995 = vrot.lane.b32.xlu0 %v524, 112
    %v996 = vpop.permute.xlu0 %995
    %997 = vrot.lane.b32.xlu0 %v529, 112
    %v998 = vpop.permute.xlu0 %997
    %999 = vrot.lane.b32.xlu0 %v613, 112
    %v1000 = vpop.permute.xlu0 %999
    %1001 = vrot.lane.b32.xlu0 %v618, 112
    %v1002 = vpop.permute.xlu0 %1001
    %v1003 = vsel %vm205, %v996, 0
    %v1005 = vsel %vm205, %v998, 0
    %v1007 = vsel %vm205, %v1000, 0
    %v1009 = vsel %vm205, %v1002, 0
    %1011 = vmatprep.subr.mxu0 0.0
    %1012 = vmatpush1.xpose.msra.mxu0 %v1007
    %1013 = vmatprep.subr.mxu0 0.0
    %1014 = vmatpush1.xpose.msra.mxu0 %v1009
    %1015 = vmatprep.subr.mxu0 0.0
    %1016 = vmatpush1.xpose.msra.mxu0 0.0
    %1017 = vmatprep.subr.mxu0 0.0
    %1018 = vmatpush1.xpose.msra.mxu0 0.0
    %1019 = vmatprep.subr.mxu0 0.0
    %1020 = vmatpush1.xpose.msra.mxu0 0.0
    %1021 = vmatprep.subr.mxu0 0.0
    %1022 = vmatpush1.xpose.msra.mxu0 0.0
    %1023 = vmatprep.subr.mxu0 0.0
    %1024 = vmatpush1.xpose.msra.mxu0 0.0
    %1025 = vmatprep.subr.mxu0 0.0
    %1026 = vmatpush1.xpose.msra.mxu0 0.0
    %1027 = vmatprep.subr.mxu0 0.0
    %1028 = vmatpush1.xpose.msra.mxu0 0.0
    %1029 = vmatprep.subr.mxu0 0.0
    %1030 = vmatpush1.xpose.msra.mxu0 0.0
    %1031 = vmatprep.subr.mxu0 0.0
    %1032 = vmatpush1.xpose.msra.mxu0 0.0
    %1033 = vmatprep.subr.mxu0 0.0
    %1034 = vmatpush1.xpose.msra.mxu0 0.0
    %1035 = vmatprep.subr.mxu0 0.0
    %1036 = vmatpush1.xpose.msra.mxu0 0.0
    %1037 = vmatprep.subr.mxu0 0.0
    %1038 = vmatpush1.xpose.msra.mxu0 0.0
    %1039 = vmatprep.subr.mxu0 0.0
    %1040 = vmatpush1.xpose.msra.mxu0 0.0
    %1041 = vmatprep.subr.mxu0 0.0
    %1042 = vmatpush1.xpose.msra.mxu0 0.0
    %1043 = vmatprep.subr.mxu0 0.0
    %1044 = vmatpush1.xpose.msra.mxu0 0.0
    %1045 = vmatprep.subr.mxu0 0.0
    %1046 = vmatpush1.xpose.msra.mxu0 0.0
    %1047 = vmatprep.subr.mxu0 0.0
    %1048 = vmatpush1.xpose.msra.mxu0 0.0
    %1049 = vmatprep.subr.mxu0 0.0
    %1050 = vmatpush1.xpose.msra.mxu0 0.0
    %1051 = vmatprep.subr.mxu0 0.0
    %1052 = vmatpush1.xpose.msra.mxu0 0.0
    %1053 = vmatprep.subr.mxu0 0.0
    %1054 = vmatpush1.xpose.msra.mxu0 0.0
    %1055 = vmatprep.subr.mxu0 0.0
    %1056 = vmatpush1.xpose.msra.mxu0 0.0
    %1057 = vmatprep.subr.mxu0 0.0
    %1058 = vmatpush1.xpose.msra.mxu0 0.0
    %1059 = vmatprep.subr.mxu0 0.0
    %1060 = vmatpush1.xpose.msra.mxu0 0.0
    %1061 = vmatprep.subr.mxu0 0.0
    %1062 = vmatpush1.xpose.msra.mxu0 0.0
    %1063 = vmatprep.subr.mxu0 0.0
    %1064 = vmatpush1.xpose.msra.mxu0 0.0
    %1065 = vmatprep.subr.mxu0 0.0
    %1066 = vmatpush1.xpose.msra.mxu0 0.0
    %1067 = vmatprep.subr.mxu0 0.0
    %1068 = vmatpush1.xpose.msra.mxu0 0.0
    %1069 = vmatprep.subr.mxu0 0.0
    %1070 = vmatpush1.xpose.msra.mxu0 0.0
    %1071 = vmatprep.subr.mxu0 0.0
    %1072 = vmatpush1.xpose.msra.mxu0 0.0
    %1073 = vmatprep.subr.mxu0 0.0
    %1074 = vmatpush1.xpose.msra.mxu0 0.0
    %1075 = vmatprep.mubr.f32.mxu0 0.0
    %1076 = vmatmul.mubr.f32.gmra.mrb[0].mxu0 %v1003
    %v1077 = vpop.f32.mrb[0].mxu0
    %v1078 = vadd.f32 0.0, %v1077
    %v1079 = vpop.f32.mrb[0].mxu0
    %1080 = vmatprep.mubr.f32.mxu0 0.0
    %1081 = vmatmul.mubr.f32.gmra.mrb[0].mxu0 %v1005
    %v1082 = vpop.f32.mrb[0].mxu0
    %v1083 = vadd.f32 0.0, %v1082
    %v1084 = vpop.f32.mrb[0].mxu0
    %1085 = vdwg.mxu0
    %1086 = vrot.lane.b32.xlu0 %v534, 112
    %v1087 = vpop.permute.xlu0 %1086
    %1088 = vrot.lane.b32.xlu0 %v539, 112
    %v1089 = vpop.permute.xlu0 %1088
    %1090 = vrot.lane.b32.xlu0 %v623, 112
    %v1091 = vpop.permute.xlu0 %1090
    %1092 = vrot.lane.b32.xlu0 %v628, 112
    %v1093 = vpop.permute.xlu0 %1092
    %v1094 = vsel %vm205, %v1087, 0
    %v1096 = vsel %vm205, %v1089, 0
    %v1098 = vsel %vm205, %v1091, 0
    %v1100 = vsel %vm205, %v1093, 0
    %1102 = vmatprep.subr.mxu0 0.0
    %1103 = vmatpush1.xpose.msra.mxu0 %v1098
    %1104 = vmatprep.subr.mxu0 0.0
    %1105 = vmatpush1.xpose.msra.mxu0 %v1100
    %1106 = vmatprep.subr.mxu0 0.0
    %1107 = vmatpush1.xpose.msra.mxu0 0.0
    %1108 = vmatprep.subr.mxu0 0.0
    %1109 = vmatpush1.xpose.msra.mxu0 0.0
    %1110 = vmatprep.subr.mxu0 0.0
    %1111 = vmatpush1.xpose.msra.mxu0 0.0
    %1112 = vmatprep.subr.mxu0 0.0
    %1113 = vmatpush1.xpose.msra.mxu0 0.0
    %1114 = vmatprep.subr.mxu0 0.0
    %1115 = vmatpush1.xpose.msra.mxu0 0.0
    %1116 = vmatprep.subr.mxu0 0.0
    %1117 = vmatpush1.xpose.msra.mxu0 0.0
    %1118 = vmatprep.subr.mxu0 0.0
    %1119 = vmatpush1.xpose.msra.mxu0 0.0
    %1120 = vmatprep.subr.mxu0 0.0
    %1121 = vmatpush1.xpose.msra.mxu0 0.0
    %1122 = vmatprep.subr.mxu0 0.0
    %1123 = vmatpush1.xpose.msra.mxu0 0.0
    %1124 = vmatprep.subr.mxu0 0.0
    %1125 = vmatpush1.xpose.msra.mxu0 0.0
    %1126 = vmatprep.subr.mxu0 0.0
    %1127 = vmatpush1.xpose.msra.mxu0 0.0
    %1128 = vmatprep.subr.mxu0 0.0
    %1129 = vmatpush1.xpose.msra.mxu0 0.0
    %1130 = vmatprep.subr.mxu0 0.0
    %1131 = vmatpush1.xpose.msra.mxu0 0.0
    %1132 = vmatprep.subr.mxu0 0.0
    %1133 = vmatpush1.xpose.msra.mxu0 0.0
    %1134 = vmatprep.subr.mxu0 0.0
    %1135 = vmatpush1.xpose.msra.mxu0 0.0
    %1136 = vmatprep.subr.mxu0 0.0
    %1137 = vmatpush1.xpose.msra.mxu0 0.0
    %1138 = vmatprep.subr.mxu0 0.0
    %1139 = vmatpush1.xpose.msra.mxu0 0.0
    %1140 = vmatprep.subr.mxu0 0.0
    %1141 = vmatpush1.xpose.msra.mxu0 0.0
    %1142 = vmatprep.subr.mxu0 0.0
    %1143 = vmatpush1.xpose.msra.mxu0 0.0
    %1144 = vmatprep.subr.mxu0 0.0
    %1145 = vmatpush1.xpose.msra.mxu0 0.0
    %1146 = vmatprep.subr.mxu0 0.0
    %1147 = vmatpush1.xpose.msra.mxu0 0.0
    %1148 = vmatprep.subr.mxu0 0.0
    %1149 = vmatpush1.xpose.msra.mxu0 0.0
    %1150 = vmatprep.subr.mxu0 0.0
    %1151 = vmatpush1.xpose.msra.mxu0 0.0
    %1152 = vmatprep.subr.mxu0 0.0
    %1153 = vmatpush1.xpose.msra.mxu0 0.0
    %1154 = vmatprep.subr.mxu0 0.0
    %1155 = vmatpush1.xpose.msra.mxu0 0.0
    %1156 = vmatprep.subr.mxu0 0.0
    %1157 = vmatpush1.xpose.msra.mxu0 0.0
    %1158 = vmatprep.subr.mxu0 0.0
    %1159 = vmatpush1.xpose.msra.mxu0 0.0
    %1160 = vmatprep.subr.mxu0 0.0
    %1161 = vmatpush1.xpose.msra.mxu0 0.0
    %1162 = vmatprep.subr.mxu0 0.0
    %1163 = vmatpush1.xpose.msra.mxu0 0.0
    %1164 = vmatprep.subr.mxu0 0.0
    %1165 = vmatpush1.xpose.msra.mxu0 0.0
    %1166 = vmatprep.mubr.f32.mxu0 0.0
    %1167 = vmatmul.mubr.f32.gmra.mrb[0].mxu0 %v1094
    %v1168 = vpop.f32.mrb[0].mxu0
    %v1169 = vadd.f32 0.0, %v1168
    %v1170 = vpop.f32.mrb[0].mxu0
    %1171 = vmatprep.mubr.f32.mxu0 0.0
    %1172 = vmatmul.mubr.f32.gmra.mrb[0].mxu0 %v1096
    %v1173 = vpop.f32.mrb[0].mxu0
    %v1174 = vadd.f32 0.0, %v1173
    %v1175 = vpop.f32.mrb[0].mxu0
    %1176 = vdwg.mxu0
    %v1177 = vmul.f32 %v1078, 0.35355338
    %v1178 = vmul.f32 %v1083, 0.35355338
    %v1179 = vmul.f32 %v1169, 0.35355338
    %v1180 = vmul.f32 %v1174, 0.35355338
    %1181 = vrot.lane.b32.xlu0 %v524, 104
    %v1182 = vpop.permute.xlu0 %1181
    %1183 = vrot.lane.b32.xlu0 %v529, 104
    %v1184 = vpop.permute.xlu0 %1183
    %1185 = vrot.lane.b32.xlu0 %v613, 104
    %v1186 = vpop.permute.xlu0 %1185
    %1187 = vrot.lane.b32.xlu0 %v618, 104
    %v1188 = vpop.permute.xlu0 %1187
    %v1189 = vsel %vm205, %v1182, 0
    %v1191 = vsel %vm205, %v1184, 0
    %v1193 = vsel %vm205, %v1186, 0
    %v1195 = vsel %vm205, %v1188, 0
    %1197 = vmatprep.subr.mxu0 0.0
    %1198 = vmatpush1.xpose.msra.mxu0 %v1193
    %1199 = vmatprep.subr.mxu0 0.0
    %1200 = vmatpush1.xpose.msra.mxu0 %v1195
    %1201 = vmatprep.subr.mxu0 0.0
    %1202 = vmatpush1.xpose.msra.mxu0 0.0
    %1203 = vmatprep.subr.mxu0 0.0
    %1204 = vmatpush1.xpose.msra.mxu0 0.0
    %1205 = vmatprep.subr.mxu0 0.0
    %1206 = vmatpush1.xpose.msra.mxu0 0.0
    %1207 = vmatprep.subr.mxu0 0.0
    %1208 = vmatpush1.xpose.msra.mxu0 0.0
    %1209 = vmatprep.subr.mxu0 0.0
    %1210 = vmatpush1.xpose.msra.mxu0 0.0
    %1211 = vmatprep.subr.mxu0 0.0
    %1212 = vmatpush1.xpose.msra.mxu0 0.0
    %1213 = vmatprep.subr.mxu0 0.0
    %1214 = vmatpush1.xpose.msra.mxu0 0.0
    %1215 = vmatprep.subr.mxu0 0.0
    %1216 = vmatpush1.xpose.msra.mxu0 0.0
    %1217 = vmatprep.subr.mxu0 0.0
    %1218 = vmatpush1.xpose.msra.mxu0 0.0
    %1219 = vmatprep.subr.mxu0 0.0
    %1220 = vmatpush1.xpose.msra.mxu0 0.0
    %1221 = vmatprep.subr.mxu0 0.0
    %1222 = vmatpush1.xpose.msra.mxu0 0.0
    %1223 = vmatprep.subr.mxu0 0.0
    %1224 = vmatpush1.xpose.msra.mxu0 0.0
    %1225 = vmatprep.subr.mxu0 0.0
    %1226 = vmatpush1.xpose.msra.mxu0 0.0
    %1227 = vmatprep.subr.mxu0 0.0
    %1228 = vmatpush1.xpose.msra.mxu0 0.0
    %1229 = vmatprep.subr.mxu0 0.0
    %1230 = vmatpush1.xpose.msra.mxu0 0.0
    %1231 = vmatprep.subr.mxu0 0.0
    %1232 = vmatpush1.xpose.msra.mxu0 0.0
    %1233 = vmatprep.subr.mxu0 0.0
    %1234 = vmatpush1.xpose.msra.mxu0 0.0
    %1235 = vmatprep.subr.mxu0 0.0
    %1236 = vmatpush1.xpose.msra.mxu0 0.0
    %1237 = vmatprep.subr.mxu0 0.0
    %1238 = vmatpush1.xpose.msra.mxu0 0.0
    %1239 = vmatprep.subr.mxu0 0.0
    %1240 = vmatpush1.xpose.msra.mxu0 0.0
    %1241 = vmatprep.subr.mxu0 0.0
    %1242 = vmatpush1.xpose.msra.mxu0 0.0
    %1243 = vmatprep.subr.mxu0 0.0
    %1244 = vmatpush1.xpose.msra.mxu0 0.0
    %1245 = vmatprep.subr.mxu0 0.0
    %1246 = vmatpush1.xpose.msra.mxu0 0.0
    %1247 = vmatprep.subr.mxu0 0.0
    %1248 = vmatpush1.xpose.msra.mxu0 0.0
    %1249 = vmatprep.subr.mxu0 0.0
    %1250 = vmatpush1.xpose.msra.mxu0 0.0
    %1251 = vmatprep.subr.mxu0 0.0
    %1252 = vmatpush1.xpose.msra.mxu0 0.0
    %1253 = vmatprep.subr.mxu0 0.0
    %1254 = vmatpush1.xpose.msra.mxu0 0.0
    %1255 = vmatprep.subr.mxu0 0.0
    %1256 = vmatpush1.xpose.msra.mxu0 0.0
    %1257 = vmatprep.subr.mxu0 0.0
    %1258 = vmatpush1.xpose.msra.mxu0 0.0
    %1259 = vmatprep.subr.mxu0 0.0
    %1260 = vmatpush1.xpose.msra.mxu0 0.0
    %1261 = vmatprep.mubr.f32.mxu0 0.0
    %1262 = vmatmul.mubr.f32.gmra.mrb[0].mxu0 %v1189
    %v1263 = vpop.f32.mrb[0].mxu0
    %v1264 = vadd.f32 0.0, %v1263
    %v1265 = vpop.f32.mrb[0].mxu0
    %1266 = vmatprep.mubr.f32.mxu0 0.0
    %1267 = vmatmul.mubr.f32.gmra.mrb[0].mxu0 %v1191
    %v1268 = vpop.f32.mrb[0].mxu0
    %v1269 = vadd.f32 0.0, %v1268
    %v1270 = vpop.f32.mrb[0].mxu0
    %1271 = vdwg.mxu0
    %1272 = vrot.lane.b32.xlu0 %v534, 104
    %v1273 = vpop.permute.xlu0 %1272
    %1274 = vrot.lane.b32.xlu0 %v539, 104
    %v1275 = vpop.permute.xlu0 %1274
    %1276 = vrot.lane.b32.xlu0 %v623, 104
    %v1277 = vpop.permute.xlu0 %1276
    %1278 = vrot.lane.b32.xlu0 %v628, 104
    %v1279 = vpop.permute.xlu0 %1278
    %v1280 = vsel %vm205, %v1273, 0
    %v1282 = vsel %vm205, %v1275, 0
    %v1284 = vsel %vm205, %v1277, 0
    %v1286 = vsel %vm205, %v1279, 0
    %1288 = vmatprep.subr.mxu0 0.0
    %1289 = vmatpush1.xpose.msra.mxu0 %v1284
    %1290 = vmatprep.subr.mxu0 0.0
    %1291 = vmatpush1.xpose.msra.mxu0 %v1286
    %1292 = vmatprep.subr.mxu0 0.0
    %1293 = vmatpush1.xpose.msra.mxu0 0.0
    %1294 = vmatprep.subr.mxu0 0.0
    %1295 = vmatpush1.xpose.msra.mxu0 0.0
    %1296 = vmatprep.subr.mxu0 0.0
    %1297 = vmatpush1.xpose.msra.mxu0 0.0
    %1298 = vmatprep.subr.mxu0 0.0
    %1299 = vmatpush1.xpose.msra.mxu0 0.0
    %1300 = vmatprep.subr.mxu0 0.0
    %1301 = vmatpush1.xpose.msra.mxu0 0.0
    %1302 = vmatprep.subr.mxu0 0.0
    %1303 = vmatpush1.xpose.msra.mxu0 0.0
    %1304 = vmatprep.subr.mxu0 0.0
    %1305 = vmatpush1.xpose.msra.mxu0 0.0
    %1306 = vmatprep.subr.mxu0 0.0
    %1307 = vmatpush1.xpose.msra.mxu0 0.0
    %1308 = vmatprep.subr.mxu0 0.0
    %1309 = vmatpush1.xpose.msra.mxu0 0.0
    %1310 = vmatprep.subr.mxu0 0.0
    %1311 = vmatpush1.xpose.msra.mxu0 0.0
    %1312 = vmatprep.subr.mxu0 0.0
    %1313 = vmatpush1.xpose.msra.mxu0 0.0
    %1314 = vmatprep.subr.mxu0 0.0
    %1315 = vmatpush1.xpose.msra.mxu0 0.0
    %1316 = vmatprep.subr.mxu0 0.0
    %1317 = vmatpush1.xpose.msra.mxu0 0.0
    %1318 = vmatprep.subr.mxu0 0.0
    %1319 = vmatpush1.xpose.msra.mxu0 0.0
    %1320 = vmatprep.subr.mxu0 0.0
    %1321 = vmatpush1.xpose.msra.mxu0 0.0
    %1322 = vmatprep.subr.mxu0 0.0
    %1323 = vmatpush1.xpose.msra.mxu0 0.0
    %1324 = vmatprep.subr.mxu0 0.0
    %1325 = vmatpush1.xpose.msra.mxu0 0.0
    %1326 = vmatprep.subr.mxu0 0.0
    %1327 = vmatpush1.xpose.msra.mxu0 0.0
    %1328 = vmatprep.subr.mxu0 0.0
    %1329 = vmatpush1.xpose.msra.mxu0 0.0
    %1330 = vmatprep.subr.mxu0 0.0
    %1331 = vmatpush1.xpose.msra.mxu0 0.0
    %1332 = vmatprep.subr.mxu0 0.0
    %1333 = vmatpush1.xpose.msra.mxu0 0.0
    %1334 = vmatprep.subr.mxu0 0.0
    %1335 = vmatpush1.xpose.msra.mxu0 0.0
    %1336 = vmatprep.subr.mxu0 0.0
    %1337 = vmatpush1.xpose.msra.mxu0 0.0
    %1338 = vmatprep.subr.mxu0 0.0
    %1339 = vmatpush1.xpose.msra.mxu0 0.0
    %1340 = vmatprep.subr.mxu0 0.0
    %1341 = vmatpush1.xpose.msra.mxu0 0.0
    %1342 = vmatprep.subr.mxu0 0.0
    %1343 = vmatpush1.xpose.msra.mxu0 0.0
    %1344 = vmatprep.subr.mxu0 0.0
    %1345 = vmatpush1.xpose.msra.mxu0 0.0
    %1346 = vmatprep.subr.mxu0 0.0
    %1347 = vmatpush1.xpose.msra.mxu0 0.0
    %1348 = vmatprep.subr.mxu0 0.0
    %1349 = vmatpush1.xpose.msra.mxu0 0.0
    %1350 = vmatprep.subr.mxu0 0.0
    %1351 = vmatpush1.xpose.msra.mxu0 0.0
    %1352 = vmatprep.mubr.f32.mxu0 0.0
    %1353 = vmatmul.mubr.f32.gmra.mrb[0].mxu0 %v1280
    %v1354 = vpop.f32.mrb[0].mxu0
    %v1355 = vadd.f32 0.0, %v1354
    %v1356 = vpop.f32.mrb[0].mxu0
    %1357 = vmatprep.mubr.f32.mxu0 0.0
    %1358 = vmatmul.mubr.f32.gmra.mrb[0].mxu0 %v1282
    %v1359 = vpop.f32.mrb[0].mxu0
    %v1360 = vadd.f32 0.0, %v1359
    %v1361 = vpop.f32.mrb[0].mxu0
    %1362 = vdwg.mxu0
    %v1363 = vmul.f32 %v1264, 0.35355338
    %v1364 = vmul.f32 %v1269, 0.35355338
    %v1365 = vmul.f32 %v1355, 0.35355338
    %v1366 = vmul.f32 %v1360, 0.35355338
    %v1367 = vld [vmem:[#allocation11] sm:$0xf]
    %v1368 = vld [vmem:[%s7] sm:$0xff]
    %v1369 = vld [vmem:[%s7 + $0x8] sm:$0xff]
    %v1370 = vld [vmem:[%s7 + $0x10] sm:$0xff]
    %v1371 = vld [vmem:[%s7 + $0x18] sm:$0xff]
    %v1373 = vsel %vm444, %v285, 0
    %v1376 = vsel %vm444, %v290, 0
    %v1379 = vsel %vm444, %v295, 0
    %v1382 = vsel %vm444, %v300, 0
    %1384 = vmatprep.subr.mxu0 0.0
    %1385 = vmatpush1.msra.mxu0 %v1368
    %1386 = vmatprep.subr.mxu0 0.0
    %1387 = vmatpush1.msra.mxu0 %v1369
    %1388 = vmatprep.subr.mxu0 0.0
    %1389 = vmatpush1.msra.mxu0 %v1370
    %1390 = vmatprep.subr.mxu0 0.0
    %1391 = vmatpush1.msra.mxu0 %v1371
    %1392 = vmatprep.subr.mxu0 0.0
    %1393 = vmatpush1.msra.mxu0 0.0
    %1394 = vmatprep.subr.mxu0 0.0
    %1395 = vmatpush1.msra.mxu0 0.0
    %1396 = vmatprep.subr.mxu0 0.0
    %1397 = vmatpush1.msra.mxu0 0.0
    %1398 = vmatprep.subr.mxu0 0.0
    %1399 = vmatpush1.msra.mxu0 0.0
    %1400 = vmatprep.subr.mxu0 0.0
    %1401 = vmatpush1.msra.mxu0 0.0
    %1402 = vmatprep.subr.mxu0 0.0
    %1403 = vmatpush1.msra.mxu0 0.0
    %1404 = vmatprep.subr.mxu0 0.0
    %1405 = vmatpush1.msra.mxu0 0.0
    %1406 = vmatprep.subr.mxu0 0.0
    %1407 = vmatpush1.msra.mxu0 0.0
    %1408 = vmatprep.subr.mxu0 0.0
    %1409 = vmatpush1.msra.mxu0 0.0
    %1410 = vmatprep.subr.mxu0 0.0
    %1411 = vmatpush1.msra.mxu0 0.0
    %1412 = vmatprep.subr.mxu0 0.0
    %1413 = vmatpush1.msra.mxu0 0.0
    %1414 = vmatprep.subr.mxu0 0.0
    %1415 = vmatpush1.msra.mxu0 0.0
    %1416 = vmatprep.subr.mxu0 0.0
    %1417 = vmatpush1.msra.mxu0 0.0
    %1418 = vmatprep.subr.mxu0 0.0
    %1419 = vmatpush1.msra.mxu0 0.0
    %1420 = vmatprep.subr.mxu0 0.0
    %1421 = vmatpush1.msra.mxu0 0.0
    %1422 = vmatprep.subr.mxu0 0.0
    %1423 = vmatpush1.msra.mxu0 0.0
    %1424 = vmatprep.subr.mxu0 0.0
    %1425 = vmatpush1.msra.mxu0 0.0
    %1426 = vmatprep.subr.mxu0 0.0
    %1427 = vmatpush1.msra.mxu0 0.0
    %1428 = vmatprep.subr.mxu0 0.0
    %1429 = vmatpush1.msra.mxu0 0.0
    %1430 = vmatprep.subr.mxu0 0.0
    %1431 = vmatpush1.msra.mxu0 0.0
    %1432 = vmatprep.subr.mxu0 0.0
    %1433 = vmatpush1.msra.mxu0 0.0
    %1434 = vmatprep.subr.mxu0 0.0
    %1435 = vmatpush1.msra.mxu0 0.0
    %1436 = vmatprep.subr.mxu0 0.0
    %1437 = vmatpush1.msra.mxu0 0.0
    %1438 = vmatprep.subr.mxu0 0.0
    %1439 = vmatpush1.msra.mxu0 0.0
    %1440 = vmatprep.subr.mxu0 0.0
    %1441 = vmatpush1.msra.mxu0 0.0
    %1442 = vmatprep.subr.mxu0 0.0
    %1443 = vmatpush1.msra.mxu0 0.0
    %1444 = vmatprep.subr.mxu0 0.0
    %1445 = vmatpush1.msra.mxu0 0.0
    %1446 = vmatprep.subr.mxu0 0.0
    %1447 = vmatpush1.msra.mxu0 0.0
    %1448 = vmatprep.mubr.f32.mxu0 0.0
    %1449 = vmatmul.mubr.f32.gmra.mrb[0].mxu0 %v1373
    %v1450 = vpop.f32.mrb[0].mxu0
    %v1451 = vadd.f32 0.0, %v1450
    %v1452 = vpop.f32.mrb[0].mxu0
    %1453 = vmatprep.mubr.f32.mxu0 0.0
    %1454 = vmatmul.mubr.f32.gmra.mrb[0].mxu0 %v1376
    %v1455 = vpop.f32.mrb[0].mxu0
    %v1456 = vadd.f32 0.0, %v1455
    %v1457 = vpop.f32.mrb[0].mxu0
    %1458 = vmatprep.mubr.f32.mxu0 0.0
    %1459 = vmatmul.mubr.f32.gmra.mrb[0].mxu0 %v1379
    %v1460 = vpop.f32.mrb[0].mxu0
    %v1461 = vadd.f32 0.0, %v1460
    %v1462 = vpop.f32.mrb[0].mxu0
    %1463 = vmatprep.mubr.f32.mxu0 0.0
    %1464 = vmatmul.mubr.f32.gmra.mrb[0].mxu0 %v1382
    %v1465 = vpop.f32.mrb[0].mxu0
    %v1466 = vadd.f32 0.0, %v1465
    %v1467 = vpop.f32.mrb[0].mxu0
    %1468 = vdwg.mxu0
    %1471 = vrot.lane.b32.xlu0 %v1451, 96
    %v1472 = vpop.permute.xlu0 %1471
    %1473 = vrot.lane.b32.xlu0 %v1456, 96
    %v1474 = vpop.permute.xlu0 %1473
    %v1475 = vsel %vm205, %v1451, 0
    %v1477 = vsel %vm205, %v1456, 0
    %v1479 = vsel %vm205, %v1472, 0
    %v1481 = vsel %vm205, %v1474, 0
    %1483 = vmatprep.subr.mxu0 0.0
    %1484 = vmatpush1.xpose.msra.mxu0 %v1479
    %1485 = vmatprep.subr.mxu0 0.0
    %1486 = vmatpush1.xpose.msra.mxu0 %v1481
    %1487 = vmatprep.subr.mxu0 0.0
    %1488 = vmatpush1.xpose.msra.mxu0 0.0
    %1489 = vmatprep.subr.mxu0 0.0
    %1490 = vmatpush1.xpose.msra.mxu0 0.0
    %1491 = vmatprep.subr.mxu0 0.0
    %1492 = vmatpush1.xpose.msra.mxu0 0.0
    %1493 = vmatprep.subr.mxu0 0.0
    %1494 = vmatpush1.xpose.msra.mxu0 0.0
    %1495 = vmatprep.subr.mxu0 0.0
    %1496 = vmatpush1.xpose.msra.mxu0 0.0
    %1497 = vmatprep.subr.mxu0 0.0
    %1498 = vmatpush1.xpose.msra.mxu0 0.0
    %1499 = vmatprep.subr.mxu0 0.0
    %1500 = vmatpush1.xpose.msra.mxu0 0.0
    %1501 = vmatprep.subr.mxu0 0.0
    %1502 = vmatpush1.xpose.msra.mxu0 0.0
    %1503 = vmatprep.subr.mxu0 0.0
    %1504 = vmatpush1.xpose.msra.mxu0 0.0
    %1505 = vmatprep.subr.mxu0 0.0
    %1506 = vmatpush1.xpose.msra.mxu0 0.0
    %1507 = vmatprep.subr.mxu0 0.0
    %1508 = vmatpush1.xpose.msra.mxu0 0.0
    %1509 = vmatprep.subr.mxu0 0.0
    %1510 = vmatpush1.xpose.msra.mxu0 0.0
    %1511 = vmatprep.subr.mxu0 0.0
    %1512 = vmatpush1.xpose.msra.mxu0 0.0
    %1513 = vmatprep.subr.mxu0 0.0
    %1514 = vmatpush1.xpose.msra.mxu0 0.0
    %1515 = vmatprep.subr.mxu0 0.0
    %1516 = vmatpush1.xpose.msra.mxu0 0.0
    %1517 = vmatprep.subr.mxu0 0.0
    %1518 = vmatpush1.xpose.msra.mxu0 0.0
    %1519 = vmatprep.subr.mxu0 0.0
    %1520 = vmatpush1.xpose.msra.mxu0 0.0
    %1521 = vmatprep.subr.mxu0 0.0
    %1522 = vmatpush1.xpose.msra.mxu0 0.0
    %1523 = vmatprep.subr.mxu0 0.0
    %1524 = vmatpush1.xpose.msra.mxu0 0.0
    %1525 = vmatprep.subr.mxu0 0.0
    %1526 = vmatpush1.xpose.msra.mxu0 0.0
    %1527 = vmatprep.subr.mxu0 0.0
    %1528 = vmatpush1.xpose.msra.mxu0 0.0
    %1529 = vmatprep.subr.mxu0 0.0
    %1530 = vmatpush1.xpose.msra.mxu0 0.0
    %1531 = vmatprep.subr.mxu0 0.0
    %1532 = vmatpush1.xpose.msra.mxu0 0.0
    %1533 = vmatprep.subr.mxu0 0.0
    %1534 = vmatpush1.xpose.msra.mxu0 0.0
    %1535 = vmatprep.subr.mxu0 0.0
    %1536 = vmatpush1.xpose.msra.mxu0 0.0
    %1537 = vmatprep.subr.mxu0 0.0
    %1538 = vmatpush1.xpose.msra.mxu0 0.0
    %1539 = vmatprep.subr.mxu0 0.0
    %1540 = vmatpush1.xpose.msra.mxu0 0.0
    %1541 = vmatprep.subr.mxu0 0.0
    %1542 = vmatpush1.xpose.msra.mxu0 0.0
    %1543 = vmatprep.subr.mxu0 0.0
    %1544 = vmatpush1.xpose.msra.mxu0 0.0
    %1545 = vmatprep.subr.mxu0 0.0
    %1546 = vmatpush1.xpose.msra.mxu0 0.0
    %1547 = vmatprep.mubr.f32.mxu0 0.0
    %1548 = vmatmul.mubr.f32.gmra.mrb[0].mxu0 %v1475
    %v1549 = vpop.f32.mrb[0].mxu0
    %v1550 = vadd.f32 0.0, %v1549
    %v1551 = vpop.f32.mrb[0].mxu0
    %1552 = vmatprep.mubr.f32.mxu0 0.0
    %1553 = vmatmul.mubr.f32.gmra.mrb[0].mxu0 %v1477
    %v1554 = vpop.f32.mrb[0].mxu0
    %v1555 = vadd.f32 0.0, %v1554
    %v1556 = vpop.f32.mrb[0].mxu0
    %1557 = vdwg.mxu0
    %1560 = vrot.lane.b32.xlu0 %v1461, 96
    %v1561 = vpop.permute.xlu0 %1560
    %1562 = vrot.lane.b32.xlu0 %v1466, 96
    %v1563 = vpop.permute.xlu0 %1562
    %v1564 = vsel %vm205, %v1461, 0
    %v1566 = vsel %vm205, %v1466, 0
    %v1568 = vsel %vm205, %v1561, 0
    %v1570 = vsel %vm205, %v1563, 0
    %1572 = vmatprep.subr.mxu0 0.0
    %1573 = vmatpush1.xpose.msra.mxu0 %v1568
    %1574 = vmatprep.subr.mxu0 0.0
    %1575 = vmatpush1.xpose.msra.mxu0 %v1570
    %1576 = vmatprep.subr.mxu0 0.0
    %1577 = vmatpush1.xpose.msra.mxu0 0.0
    %1578 = vmatprep.subr.mxu0 0.0
    %1579 = vmatpush1.xpose.msra.mxu0 0.0
    %1580 = vmatprep.subr.mxu0 0.0
    %1581 = vmatpush1.xpose.msra.mxu0 0.0
    %1582 = vmatprep.subr.mxu0 0.0
    %1583 = vmatpush1.xpose.msra.mxu0 0.0
    %1584 = vmatprep.subr.mxu0 0.0
    %1585 = vmatpush1.xpose.msra.mxu0 0.0
    %1586 = vmatprep.subr.mxu0 0.0
    %1587 = vmatpush1.xpose.msra.mxu0 0.0
    %1588 = vmatprep.subr.mxu0 0.0
    %1589 = vmatpush1.xpose.msra.mxu0 0.0
    %1590 = vmatprep.subr.mxu0 0.0
    %1591 = vmatpush1.xpose.msra.mxu0 0.0
    %1592 = vmatprep.subr.mxu0 0.0
    %1593 = vmatpush1.xpose.msra.mxu0 0.0
    %1594 = vmatprep.subr.mxu0 0.0
    %1595 = vmatpush1.xpose.msra.mxu0 0.0
    %1596 = vmatprep.subr.mxu0 0.0
    %1597 = vmatpush1.xpose.msra.mxu0 0.0
    %1598 = vmatprep.subr.mxu0 0.0
    %1599 = vmatpush1.xpose.msra.mxu0 0.0
    %1600 = vmatprep.subr.mxu0 0.0
    %1601 = vmatpush1.xpose.msra.mxu0 0.0
    %1602 = vmatprep.subr.mxu0 0.0
    %1603 = vmatpush1.xpose.msra.mxu0 0.0
    %1604 = vmatprep.subr.mxu0 0.0
    %1605 = vmatpush1.xpose.msra.mxu0 0.0
    %1606 = vmatprep.subr.mxu0 0.0
    %1607 = vmatpush1.xpose.msra.mxu0 0.0
    %1608 = vmatprep.subr.mxu0 0.0
    %1609 = vmatpush1.xpose.msra.mxu0 0.0
    %1610 = vmatprep.subr.mxu0 0.0
    %1611 = vmatpush1.xpose.msra.mxu0 0.0
    %1612 = vmatprep.subr.mxu0 0.0
    %1613 = vmatpush1.xpose.msra.mxu0 0.0
    %1614 = vmatprep.subr.mxu0 0.0
    %1615 = vmatpush1.xpose.msra.mxu0 0.0
    %1616 = vmatprep.subr.mxu0 0.0
    %1617 = vmatpush1.xpose.msra.mxu0 0.0
    %1618 = vmatprep.subr.mxu0 0.0
    %1619 = vmatpush1.xpose.msra.mxu0 0.0
    %1620 = vmatprep.subr.mxu0 0.0
    %1621 = vmatpush1.xpose.msra.mxu0 0.0
    %1622 = vmatprep.subr.mxu0 0.0
    %1623 = vmatpush1.xpose.msra.mxu0 0.0
    %1624 = vmatprep.subr.mxu0 0.0
    %1625 = vmatpush1.xpose.msra.mxu0 0.0
    %1626 = vmatprep.subr.mxu0 0.0
    %1627 = vmatpush1.xpose.msra.mxu0 0.0
    %1628 = vmatprep.subr.mxu0 0.0
    %1629 = vmatpush1.xpose.msra.mxu0 0.0
    %1630 = vmatprep.subr.mxu0 0.0
    %1631 = vmatpush1.xpose.msra.mxu0 0.0
    %1632 = vmatprep.subr.mxu0 0.0
    %1633 = vmatpush1.xpose.msra.mxu0 0.0
    %1634 = vmatprep.subr.mxu0 0.0
    %1635 = vmatpush1.xpose.msra.mxu0 0.0
    %1636 = vmatprep.mubr.f32.mxu0 0.0
    %1637 = vmatmul.mubr.f32.gmra.mrb[0].mxu0 %v1564
    %v1638 = vpop.f32.mrb[0].mxu0
    %v1639 = vadd.f32 0.0, %v1638
    %v1640 = vpop.f32.mrb[0].mxu0
    %1641 = vmatprep.mubr.f32.mxu0 0.0
    %1642 = vmatmul.mubr.f32.gmra.mrb[0].mxu0 %v1566
    %v1643 = vpop.f32.mrb[0].mxu0
    %v1644 = vadd.f32 0.0, %v1643
    %v1645 = vpop.f32.mrb[0].mxu0
    %1646 = vdwg.mxu0
    %v1647 = vmul.f32 %v1550, 0.35355338
    %v1648 = vmul.f32 %v1555, 0.35355338
    %v1649 = vmul.f32 %v1639, 0.35355338
    %v1650 = vmul.f32 %v1644, 0.35355338
    %v1651 = vadd.f32 %v1647, %v805
    %v1652 = vadd.f32 %v1648, %v806
    %v1653 = vadd.f32 %v1649, %v807
    %v1654 = vadd.f32 %v1650, %v808
    %v1655 = vsel %vm342, %v1651, -inf
    %1656 = vmax.xlane.f32.xlu0 %v1655
    %v1657 = vpop.xlane.xlu0 %1656
    %v1658 = vsel %vm342, %v1652, -inf
    %1659 = vmax.xlane.f32.xlu0 %v1658
    %v1660 = vpop.xlane.xlu0 %1659
    %v1661 = vsel %vm342, %v1653, -inf
    %1662 = vmax.xlane.f32.xlu0 %v1661
    %v1663 = vpop.xlane.xlu0 %1662
    %v1664 = vsel %vm342, %v1654, -inf
    %1665 = vmax.xlane.f32.xlu0 %v1664
    %v1666 = vpop.xlane.xlu0 %1665
    %v1667 = vsub.f32 %v1651, %v1657
    %v1668 = vsub.f32 %v1652, %v1660
    %v1669 = vsub.f32 %v1653, %v1663
    %v1670 = vsub.f32 %v1654, %v1666
    %v1671 = vmul.f32 %v1667, 1.442695
    %v1672 = vpow.pop %v1671
    %v1673 = vmul.f32 %v1668, 1.442695
    %v1674 = vpow.pop %v1673
    %v1675 = vmul.f32 %v1669, 1.442695
    %v1676 = vpow.pop %v1675
    %v1677 = vmul.f32 %v1670, 1.442695
    %v1678 = vpow.pop %v1677
    %v1679 = vsel %vm342, %v1672, 0.0
    %1680 = vadd.xlane.f32.xlu0 %v1679
    %v1681 = vpop.xlane.xlu0 %1680
    %v1682 = vsel %vm342, %v1674, 0.0
    %1683 = vadd.xlane.f32.xlu0 %v1682
    %v1684 = vpop.xlane.xlu0 %1683
    %v1685 = vsel %vm342, %v1676, 0.0
    %1686 = vadd.xlane.f32.xlu0 %v1685
    %v1687 = vpop.xlane.xlu0 %1686
    %v1688 = vsel %vm342, %v1678, 0.0
    %1689 = vadd.xlane.f32.xlu0 %v1688
    %v1690 = vpop.xlane.xlu0 %1689
    %v1691 = vrcp.pop %v1681
    %v1692 = vrcp.pop %v1684
    %v1693 = vrcp.pop %v1687
    %v1694 = vrcp.pop %v1690
    %v1695 = vmul.f32 %v1672, %v1691
    %v1696 = vmul.f32 %v1674, %v1692
    %v1697 = vmul.f32 %v1676, %v1693
    %v1698 = vmul.f32 %v1678, %v1694
    %1699 = vrot.lane.b32.xlu0 %v1451, 64
    %v1700 = vpop.permute.xlu0 %1699
    %1701 = vrot.lane.b32.xlu0 %v1456, 64
    %v1702 = vpop.permute.xlu0 %1701
    %v1706 = vsel %vm342, %v1695, 0
    %v1709 = vsel %vm342, %v1696, 0
    %1711 = vmatprep.subr.mxu0 0.0
    %1712 = vmatpush1.msra.mxu0 %v1700
    %1713 = vmatprep.subr.mxu0 0.0
    %1714 = vmatpush1.msra.mxu0 %v1702
    %1715 = vmatprep.subr.mxu0 0.0
    %1716 = vmatpush1.msra.mxu0 0.0
    %1717 = vmatprep.subr.mxu0 0.0
    %1718 = vmatpush1.msra.mxu0 0.0
    %1719 = vmatprep.subr.mxu0 0.0
    %1720 = vmatpush1.msra.mxu0 0.0
    %1721 = vmatprep.subr.mxu0 0.0
    %1722 = vmatpush1.msra.mxu0 0.0
    %1723 = vmatprep.subr.mxu0 0.0
    %1724 = vmatpush1.msra.mxu0 0.0
    %1725 = vmatprep.subr.mxu0 0.0
    %1726 = vmatpush1.msra.mxu0 0.0
    %1727 = vmatprep.subr.mxu0 0.0
    %1728 = vmatpush1.msra.mxu0 0.0
    %1729 = vmatprep.subr.mxu0 0.0
    %1730 = vmatpush1.msra.mxu0 0.0
    %1731 = vmatprep.subr.mxu0 0.0
    %1732 = vmatpush1.msra.mxu0 0.0
    %1733 = vmatprep.subr.mxu0 0.0
    %1734 = vmatpush1.msra.mxu0 0.0
    %1735 = vmatprep.subr.mxu0 0.0
    %1736 = vmatpush1.msra.mxu0 0.0
    %1737 = vmatprep.subr.mxu0 0.0
    %1738 = vmatpush1.msra.mxu0 0.0
    %1739 = vmatprep.subr.mxu0 0.0
    %1740 = vmatpush1.msra.mxu0 0.0
    %1741 = vmatprep.subr.mxu0 0.0
    %1742 = vmatpush1.msra.mxu0 0.0
    %1743 = vmatprep.subr.mxu0 0.0
    %1744 = vmatpush1.msra.mxu0 0.0
    %1745 = vmatprep.subr.mxu0 0.0
    %1746 = vmatpush1.msra.mxu0 0.0
    %1747 = vmatprep.subr.mxu0 0.0
    %1748 = vmatpush1.msra.mxu0 0.0
    %1749 = vmatprep.subr.mxu0 0.0
    %1750 = vmatpush1.msra.mxu0 0.0
    %1751 = vmatprep.subr.mxu0 0.0
    %1752 = vmatpush1.msra.mxu0 0.0
    %1753 = vmatprep.subr.mxu0 0.0
    %1754 = vmatpush1.msra.mxu0 0.0
    %1755 = vmatprep.subr.mxu0 0.0
    %1756 = vmatpush1.msra.mxu0 0.0
    %1757 = vmatprep.subr.mxu0 0.0
    %1758 = vmatpush1.msra.mxu0 0.0
    %1759 = vmatprep.subr.mxu0 0.0
    %1760 = vmatpush1.msra.mxu0 0.0
    %1761 = vmatprep.subr.mxu0 0.0
    %1762 = vmatpush1.msra.mxu0 0.0
    %1763 = vmatprep.subr.mxu0 0.0
    %1764 = vmatpush1.msra.mxu0 0.0
    %1765 = vmatprep.subr.mxu0 0.0
    %1766 = vmatpush1.msra.mxu0 0.0
    %1767 = vmatprep.subr.mxu0 0.0
    %1768 = vmatpush1.msra.mxu0 0.0
    %1769 = vmatprep.subr.mxu0 0.0
    %1770 = vmatpush1.msra.mxu0 0.0
    %1771 = vmatprep.subr.mxu0 0.0
    %1772 = vmatpush1.msra.mxu0 0.0
    %1773 = vmatprep.subr.mxu0 0.0
    %1774 = vmatpush1.msra.mxu0 0.0
    %1775 = vmatprep.mubr.f32.mxu0 0.0
    %1776 = vmatmul.mubr.f32.gmra.mrb[0].mxu0 %v1706
    %v1777 = vpop.f32.mrb[0].mxu0
    %v1778 = vadd.f32 0.0, %v1777
    %v1779 = vpop.f32.mrb[0].mxu0
    %1780 = vmatprep.mubr.f32.mxu0 0.0
    %1781 = vmatmul.mubr.f32.gmra.mrb[0].mxu0 %v1709
    %v1782 = vpop.f32.mrb[0].mxu0
    %v1783 = vadd.f32 0.0, %v1782
    %v1784 = vpop.f32.mrb[0].mxu0
    %1785 = vdwg.mxu0
    %1786 = vrot.lane.b32.xlu0 %v1461, 64
    %v1787 = vpop.permute.xlu0 %1786
    %1788 = vrot.lane.b32.xlu0 %v1466, 64
    %v1789 = vpop.permute.xlu0 %1788
    %v1793 = vsel %vm342, %v1697, 0
    %v1796 = vsel %vm342, %v1698, 0
    %1798 = vmatprep.subr.mxu0 0.0
    %1799 = vmatpush1.msra.mxu0 %v1787
    %1800 = vmatprep.subr.mxu0 0.0
    %1801 = vmatpush1.msra.mxu0 %v1789
    %1802 = vmatprep.subr.mxu0 0.0
    %1803 = vmatpush1.msra.mxu0 0.0
    %1804 = vmatprep.subr.mxu0 0.0
    %1805 = vmatpush1.msra.mxu0 0.0
    %1806 = vmatprep.subr.mxu0 0.0
    %1807 = vmatpush1.msra.mxu0 0.0
    %1808 = vmatprep.subr.mxu0 0.0
    %1809 = vmatpush1.msra.mxu0 0.0
    %1810 = vmatprep.subr.mxu0 0.0
    %1811 = vmatpush1.msra.mxu0 0.0
    %1812 = vmatprep.subr.mxu0 0.0
    %1813 = vmatpush1.msra.mxu0 0.0
    %1814 = vmatprep.subr.mxu0 0.0
    %1815 = vmatpush1.msra.mxu0 0.0
    %1816 = vmatprep.subr.mxu0 0.0
    %1817 = vmatpush1.msra.mxu0 0.0
    %1818 = vmatprep.subr.mxu0 0.0
    %1819 = vmatpush1.msra.mxu0 0.0
    %1820 = vmatprep.subr.mxu0 0.0
    %1821 = vmatpush1.msra.mxu0 0.0
    %1822 = vmatprep.subr.mxu0 0.0
    %1823 = vmatpush1.msra.mxu0 0.0
    %1824 = vmatprep.subr.mxu0 0.0
    %1825 = vmatpush1.msra.mxu0 0.0
    %1826 = vmatprep.subr.mxu0 0.0
    %1827 = vmatpush1.msra.mxu0 0.0
    %1828 = vmatprep.subr.mxu0 0.0
    %1829 = vmatpush1.msra.mxu0 0.0
    %1830 = vmatprep.subr.mxu0 0.0
    %1831 = vmatpush1.msra.mxu0 0.0
    %1832 = vmatprep.subr.mxu0 0.0
    %1833 = vmatpush1.msra.mxu0 0.0
    %1834 = vmatprep.subr.mxu0 0.0
    %1835 = vmatpush1.msra.mxu0 0.0
    %1836 = vmatprep.subr.mxu0 0.0
    %1837 = vmatpush1.msra.mxu0 0.0
    %1838 = vmatprep.subr.mxu0 0.0
    %1839 = vmatpush1.msra.mxu0 0.0
    %1840 = vmatprep.subr.mxu0 0.0
    %1841 = vmatpush1.msra.mxu0 0.0
    %1842 = vmatprep.subr.mxu0 0.0
    %1843 = vmatpush1.msra.mxu0 0.0
    %1844 = vmatprep.subr.mxu0 0.0
    %1845 = vmatpush1.msra.mxu0 0.0
    %1846 = vmatprep.subr.mxu0 0.0
    %1847 = vmatpush1.msra.mxu0 0.0
    %1848 = vmatprep.subr.mxu0 0.0
    %1849 = vmatpush1.msra.mxu0 0.0
    %1850 = vmatprep.subr.mxu0 0.0
    %1851 = vmatpush1.msra.mxu0 0.0
    %1852 = vmatprep.subr.mxu0 0.0
    %1853 = vmatpush1.msra.mxu0 0.0
    %1854 = vmatprep.subr.mxu0 0.0
    %1855 = vmatpush1.msra.mxu0 0.0
    %1856 = vmatprep.subr.mxu0 0.0
    %1857 = vmatpush1.msra.mxu0 0.0
    %1858 = vmatprep.subr.mxu0 0.0
    %1859 = vmatpush1.msra.mxu0 0.0
    %1860 = vmatprep.subr.mxu0 0.0
    %1861 = vmatpush1.msra.mxu0 0.0
    %1862 = vmatprep.mubr.f32.mxu0 0.0
    %1863 = vmatmul.mubr.f32.gmra.mrb[0].mxu0 %v1793
    %v1864 = vpop.f32.mrb[0].mxu0
    %v1865 = vadd.f32 0.0, %v1864
    %v1866 = vpop.f32.mrb[0].mxu0
    %1867 = vmatprep.mubr.f32.mxu0 0.0
    %1868 = vmatmul.mubr.f32.gmra.mrb[0].mxu0 %v1796
    %v1869 = vpop.f32.mrb[0].mxu0
    %v1870 = vadd.f32 0.0, %v1869
    %v1871 = vpop.f32.mrb[0].mxu0
    %1872 = vdwg.mxu0
    %1873 = vrot.lane.b32.xlu0 %v1451, 120
    %v1874 = vpop.permute.xlu0 %1873
    %1875 = vrot.lane.b32.xlu0 %v1456, 120
    %v1876 = vpop.permute.xlu0 %1875
    %1877 = vrot.lane.b32.xlu0 %v1451, 88
    %v1878 = vpop.permute.xlu0 %1877
    %1879 = vrot.lane.b32.xlu0 %v1456, 88
    %v1880 = vpop.permute.xlu0 %1879
    %v1881 = vsel %vm205, %v1874, 0
    %v1883 = vsel %vm205, %v1876, 0
    %v1885 = vsel %vm205, %v1878, 0
    %v1887 = vsel %vm205, %v1880, 0
    %1889 = vmatprep.subr.mxu0 0.0
    %1890 = vmatpush1.xpose.msra.mxu0 %v1885
    %1891 = vmatprep.subr.mxu0 0.0
    %1892 = vmatpush1.xpose.msra.mxu0 %v1887
    %1893 = vmatprep.subr.mxu0 0.0
    %1894 = vmatpush1.xpose.msra.mxu0 0.0
    %1895 = vmatprep.subr.mxu0 0.0
    %1896 = vmatpush1.xpose.msra.mxu0 0.0
    %1897 = vmatprep.subr.mxu0 0.0
    %1898 = vmatpush1.xpose.msra.mxu0 0.0
    %1899 = vmatprep.subr.mxu0 0.0
    %1900 = vmatpush1.xpose.msra.mxu0 0.0
    %1901 = vmatprep.subr.mxu0 0.0
    %1902 = vmatpush1.xpose.msra.mxu0 0.0
    %1903 = vmatprep.subr.mxu0 0.0
    %1904 = vmatpush1.xpose.msra.mxu0 0.0
    %1905 = vmatprep.subr.mxu0 0.0
    %1906 = vmatpush1.xpose.msra.mxu0 0.0
    %1907 = vmatprep.subr.mxu0 0.0
    %1908 = vmatpush1.xpose.msra.mxu0 0.0
    %1909 = vmatprep.subr.mxu0 0.0
    %1910 = vmatpush1.xpose.msra.mxu0 0.0
    %1911 = vmatprep.subr.mxu0 0.0
    %1912 = vmatpush1.xpose.msra.mxu0 0.0
    %1913 = vmatprep.subr.mxu0 0.0
    %1914 = vmatpush1.xpose.msra.mxu0 0.0
    %1915 = vmatprep.subr.mxu0 0.0
    %1916 = vmatpush1.xpose.msra.mxu0 0.0
    %1917 = vmatprep.subr.mxu0 0.0
    %1918 = vmatpush1.xpose.msra.mxu0 0.0
    %1919 = vmatprep.subr.mxu0 0.0
    %1920 = vmatpush1.xpose.msra.mxu0 0.0
    %1921 = vmatprep.subr.mxu0 0.0
    %1922 = vmatpush1.xpose.msra.mxu0 0.0
    %1923 = vmatprep.subr.mxu0 0.0
    %1924 = vmatpush1.xpose.msra.mxu0 0.0
    %1925 = vmatprep.subr.mxu0 0.0
    %1926 = vmatpush1.xpose.msra.mxu0 0.0
    %1927 = vmatprep.subr.mxu0 0.0
    %1928 = vmatpush1.xpose.msra.mxu0 0.0
    %1929 = vmatprep.subr.mxu0 0.0
    %1930 = vmatpush1.xpose.msra.mxu0 0.0
    %1931 = vmatprep.subr.mxu0 0.0
    %1932 = vmatpush1.xpose.msra.mxu0 0.0
    %1933 = vmatprep.subr.mxu0 0.0
    %1934 = vmatpush1.xpose.msra.mxu0 0.0
    %1935 = vmatprep.subr.mxu0 0.0
    %1936 = vmatpush1.xpose.msra.mxu0 0.0
    %1937 = vmatprep.subr.mxu0 0.0
    %1938 = vmatpush1.xpose.msra.mxu0 0.0
    %1939 = vmatprep.subr.mxu0 0.0
    %1940 = vmatpush1.xpose.msra.mxu0 0.0
    %1941 = vmatprep.subr.mxu0 0.0
    %1942 = vmatpush1.xpose.msra.mxu0 0.0
    %1943 = vmatprep.subr.mxu0 0.0
    %1944 = vmatpush1.xpose.msra.mxu0 0.0
    %1945 = vmatprep.subr.mxu0 0.0
    %1946 = vmatpush1.xpose.msra.mxu0 0.0
    %1947 = vmatprep.subr.mxu0 0.0
    %1948 = vmatpush1.xpose.msra.mxu0 0.0
    %1949 = vmatprep.subr.mxu0 0.0
    %1950 = vmatpush1.xpose.msra.mxu0 0.0
    %1951 = vmatprep.subr.mxu0 0.0
    %1952 = vmatpush1.xpose.msra.mxu0 0.0
    %1953 = vmatprep.mubr.f32.mxu0 0.0
    %1954 = vmatmul.mubr.f32.gmra.mrb[0].mxu0 %v1881
    %v1955 = vpop.f32.mrb[0].mxu0
    %v1956 = vadd.f32 0.0, %v1955
    %v1957 = vpop.f32.mrb[0].mxu0
    %1958 = vmatprep.mubr.f32.mxu0 0.0
    %1959 = vmatmul.mubr.f32.gmra.mrb[0].mxu0 %v1883
    %v1960 = vpop.f32.mrb[0].mxu0
    %v1961 = vadd.f32 0.0, %v1960
    %v1962 = vpop.f32.mrb[0].mxu0
    %1963 = vdwg.mxu0
    %1964 = vrot.lane.b32.xlu0 %v1461, 120
    %v1965 = vpop.permute.xlu0 %1964
    %1966 = vrot.lane.b32.xlu0 %v1466, 120
    %v1967 = vpop.permute.xlu0 %1966
    %1968 = vrot.lane.b32.xlu0 %v1461, 88
    %v1969 = vpop.permute.xlu0 %1968
    %1970 = vrot.lane.b32.xlu0 %v1466, 88
    %v1971 = vpop.permute.xlu0 %1970
    %v1972 = vsel %vm205, %v1965, 0
    %v1974 = vsel %vm205, %v1967, 0
    %v1976 = vsel %vm205, %v1969, 0
    %v1978 = vsel %vm205, %v1971, 0
    %1980 = vmatprep.subr.mxu0 0.0
    %1981 = vmatpush1.xpose.msra.mxu0 %v1976
    %1982 = vmatprep.subr.mxu0 0.0
    %1983 = vmatpush1.xpose.msra.mxu0 %v1978
    %1984 = vmatprep.subr.mxu0 0.0
    %1985 = vmatpush1.xpose.msra.mxu0 0.0
    %1986 = vmatprep.subr.mxu0 0.0
    %1987 = vmatpush1.xpose.msra.mxu0 0.0
    %1988 = vmatprep.subr.mxu0 0.0
    %1989 = vmatpush1.xpose.msra.mxu0 0.0
    %1990 = vmatprep.subr.mxu0 0.0
    %1991 = vmatpush1.xpose.msra.mxu0 0.0
    %1992 = vmatprep.subr.mxu0 0.0
    %1993 = vmatpush1.xpose.msra.mxu0 0.0
    %1994 = vmatprep.subr.mxu0 0.0
    %1995 = vmatpush1.xpose.msra.mxu0 0.0
    %1996 = vmatprep.subr.mxu0 0.0
    %1997 = vmatpush1.xpose.msra.mxu0 0.0
    %1998 = vmatprep.subr.mxu0 0.0
    %1999 = vmatpush1.xpose.msra.mxu0 0.0
    %2000 = vmatprep.subr.mxu0 0.0
    %2001 = vmatpush1.xpose.msra.mxu0 0.0
    %2002 = vmatprep.subr.mxu0 0.0
    %2003 = vmatpush1.xpose.msra.mxu0 0.0
    %2004 = vmatprep.subr.mxu0 0.0
    %2005 = vmatpush1.xpose.msra.mxu0 0.0
    %2006 = vmatprep.subr.mxu0 0.0
    %2007 = vmatpush1.xpose.msra.mxu0 0.0
    %2008 = vmatprep.subr.mxu0 0.0
    %2009 = vmatpush1.xpose.msra.mxu0 0.0
    %2010 = vmatprep.subr.mxu0 0.0
    %2011 = vmatpush1.xpose.msra.mxu0 0.0
    %2012 = vmatprep.subr.mxu0 0.0
    %2013 = vmatpush1.xpose.msra.mxu0 0.0
    %2014 = vmatprep.subr.mxu0 0.0
    %2015 = vmatpush1.xpose.msra.mxu0 0.0
    %2016 = vmatprep.subr.mxu0 0.0
    %2017 = vmatpush1.xpose.msra.mxu0 0.0
    %2018 = vmatprep.subr.mxu0 0.0
    %2019 = vmatpush1.xpose.msra.mxu0 0.0
    %2020 = vmatprep.subr.mxu0 0.0
    %2021 = vmatpush1.xpose.msra.mxu0 0.0
    %2022 = vmatprep.subr.mxu0 0.0
    %2023 = vmatpush1.xpose.msra.mxu0 0.0
    %2024 = vmatprep.subr.mxu0 0.0
    %2025 = vmatpush1.xpose.msra.mxu0 0.0
    %2026 = vmatprep.subr.mxu0 0.0
    %2027 = vmatpush1.xpose.msra.mxu0 0.0
    %2028 = vmatprep.subr.mxu0 0.0
    %2029 = vmatpush1.xpose.msra.mxu0 0.0
    %2030 = vmatprep.subr.mxu0 0.0
    %2031 = vmatpush1.xpose.msra.mxu0 0.0
    %2032 = vmatprep.subr.mxu0 0.0
    %2033 = vmatpush1.xpose.msra.mxu0 0.0
    %2034 = vmatprep.subr.mxu0 0.0
    %2035 = vmatpush1.xpose.msra.mxu0 0.0
    %2036 = vmatprep.subr.mxu0 0.0
    %2037 = vmatpush1.xpose.msra.mxu0 0.0
    %2038 = vmatprep.subr.mxu0 0.0
    %2039 = vmatpush1.xpose.msra.mxu0 0.0
    %2040 = vmatprep.subr.mxu0 0.0
    %2041 = vmatpush1.xpose.msra.mxu0 0.0
    %2042 = vmatprep.subr.mxu0 0.0
    %2043 = vmatpush1.xpose.msra.mxu0 0.0
    %2044 = vmatprep.mubr.f32.mxu0 0.0
    %2045 = vmatmul.mubr.f32.gmra.mrb[0].mxu0 %v1972
    %v2046 = vpop.f32.mrb[0].mxu0
    %v2047 = vadd.f32 0.0, %v2046
    %v2048 = vpop.f32.mrb[0].mxu0
    %2049 = vmatprep.mubr.f32.mxu0 0.0
    %2050 = vmatmul.mubr.f32.gmra.mrb[0].mxu0 %v1974
    %v2051 = vpop.f32.mrb[0].mxu0
    %v2052 = vadd.f32 0.0, %v2051
    %v2053 = vpop.f32.mrb[0].mxu0
    %2054 = vdwg.mxu0
    %v2055 = vmul.f32 %v1956, 0.35355338
    %v2056 = vmul.f32 %v1961, 0.35355338
    %v2057 = vmul.f32 %v2047, 0.35355338
    %v2058 = vmul.f32 %v2052, 0.35355338
    %v2059 = vadd.f32 %v2055, %v991
    %v2060 = vadd.f32 %v2056, %v992
    %v2061 = vadd.f32 %v2057, %v993
    %v2062 = vadd.f32 %v2058, %v994
    %v2063 = vsel %vm342, %v2059, -inf
    %2064 = vmax.xlane.f32.xlu0 %v2063
    %v2065 = vpop.xlane.xlu0 %2064
    %v2066 = vsel %vm342, %v2060, -inf
    %2067 = vmax.xlane.f32.xlu0 %v2066
    %v2068 = vpop.xlane.xlu0 %2067
    %v2069 = vsel %vm342, %v2061, -inf
    %2070 = vmax.xlane.f32.xlu0 %v2069
    %v2071 = vpop.xlane.xlu0 %2070
    %v2072 = vsel %vm342, %v2062, -inf
    %2073 = vmax.xlane.f32.xlu0 %v2072
    %v2074 = vpop.xlane.xlu0 %2073
    %v2075 = vsub.f32 %v2059, %v2065
    %v2076 = vsub.f32 %v2060, %v2068
    %v2077 = vsub.f32 %v2061, %v2071
    %v2078 = vsub.f32 %v2062, %v2074
    %v2079 = vmul.f32 %v2075, 1.442695
    %v2080 = vpow.pop %v2079
    %v2081 = vmul.f32 %v2076, 1.442695
    %v2082 = vpow.pop %v2081
    %v2083 = vmul.f32 %v2077, 1.442695
    %v2084 = vpow.pop %v2083
    %v2085 = vmul.f32 %v2078, 1.442695
    %v2086 = vpow.pop %v2085
    %v2087 = vsel %vm342, %v2080, 0.0
    %2088 = vadd.xlane.f32.xlu0 %v2087
    %v2089 = vpop.xlane.xlu0 %2088
    %v2090 = vsel %vm342, %v2082, 0.0
    %2091 = vadd.xlane.f32.xlu0 %v2090
    %v2092 = vpop.xlane.xlu0 %2091
    %v2093 = vsel %vm342, %v2084, 0.0
    %2094 = vadd.xlane.f32.xlu0 %v2093
    %v2095 = vpop.xlane.xlu0 %2094
    %v2096 = vsel %vm342, %v2086, 0.0
    %2097 = vadd.xlane.f32.xlu0 %v2096
    %v2098 = vpop.xlane.xlu0 %2097
    %v2099 = vrcp.pop %v2089
    %v2100 = vrcp.pop %v2092
    %v2101 = vrcp.pop %v2095
    %v2102 = vrcp.pop %v2098
    %v2103 = vmul.f32 %v2080, %v2099
    %v2104 = vmul.f32 %v2082, %v2100
    %v2105 = vmul.f32 %v2084, %v2101
    %v2106 = vmul.f32 %v2086, %v2102
    %2107 = vrot.lane.b32.xlu0 %v1451, 56
    %v2108 = vpop.permute.xlu0 %2107
    %2109 = vrot.lane.b32.xlu0 %v1456, 56
    %v2110 = vpop.permute.xlu0 %2109
    %v2114 = vsel %vm342, %v2103, 0
    %v2117 = vsel %vm342, %v2104, 0
    %2119 = vmatprep.subr.mxu0 0.0
    %2120 = vmatpush1.msra.mxu0 %v2108
    %2121 = vmatprep.subr.mxu0 0.0
    %2122 = vmatpush1.msra.mxu0 %v2110
    %2123 = vmatprep.subr.mxu0 0.0
    %2124 = vmatpush1.msra.mxu0 0.0
    %2125 = vmatprep.subr.mxu0 0.0
    %2126 = vmatpush1.msra.mxu0 0.0
    %2127 = vmatprep.subr.mxu0 0.0
    %2128 = vmatpush1.msra.mxu0 0.0
    %2129 = vmatprep.subr.mxu0 0.0
    %2130 = vmatpush1.msra.mxu0 0.0
    %2131 = vmatprep.subr.mxu0 0.0
    %2132 = vmatpush1.msra.mxu0 0.0
    %2133 = vmatprep.subr.mxu0 0.0
    %2134 = vmatpush1.msra.mxu0 0.0
    %2135 = vmatprep.subr.mxu0 0.0
    %2136 = vmatpush1.msra.mxu0 0.0
    %2137 = vmatprep.subr.mxu0 0.0
    %2138 = vmatpush1.msra.mxu0 0.0
    %2139 = vmatprep.subr.mxu0 0.0
    %2140 = vmatpush1.msra.mxu0 0.0
    %2141 = vmatprep.subr.mxu0 0.0
    %2142 = vmatpush1.msra.mxu0 0.0
    %2143 = vmatprep.subr.mxu0 0.0
    %2144 = vmatpush1.msra.mxu0 0.0
    %2145 = vmatprep.subr.mxu0 0.0
    %2146 = vmatpush1.msra.mxu0 0.0
    %2147 = vmatprep.subr.mxu0 0.0
    %2148 = vmatpush1.msra.mxu0 0.0
    %2149 = vmatprep.subr.mxu0 0.0
    %2150 = vmatpush1.msra.mxu0 0.0
    %2151 = vmatprep.subr.mxu0 0.0
    %2152 = vmatpush1.msra.mxu0 0.0
    %2153 = vmatprep.subr.mxu0 0.0
    %2154 = vmatpush1.msra.mxu0 0.0
    %2155 = vmatprep.subr.mxu0 0.0
    %2156 = vmatpush1.msra.mxu0 0.0
    %2157 = vmatprep.subr.mxu0 0.0
    %2158 = vmatpush1.msra.mxu0 0.0
    %2159 = vmatprep.subr.mxu0 0.0
    %2160 = vmatpush1.msra.mxu0 0.0
    %2161 = vmatprep.subr.mxu0 0.0
    %2162 = vmatpush1.msra.mxu0 0.0
    %2163 = vmatprep.subr.mxu0 0.0
    %2164 = vmatpush1.msra.mxu0 0.0
    %2165 = vmatprep.subr.mxu0 0.0
    %2166 = vmatpush1.msra.mxu0 0.0
    %2167 = vmatprep.subr.mxu0 0.0
    %2168 = vmatpush1.msra.mxu0 0.0
    %2169 = vmatprep.subr.mxu0 0.0
    %2170 = vmatpush1.msra.mxu0 0.0
    %2171 = vmatprep.subr.mxu0 0.0
    %2172 = vmatpush1.msra.mxu0 0.0
    %2173 = vmatprep.subr.mxu0 0.0
    %2174 = vmatpush1.msra.mxu0 0.0
    %2175 = vmatprep.subr.mxu0 0.0
    %2176 = vmatpush1.msra.mxu0 0.0
    %2177 = vmatprep.subr.mxu0 0.0
    %2178 = vmatpush1.msra.mxu0 0.0
    %2179 = vmatprep.subr.mxu0 0.0
    %2180 = vmatpush1.msra.mxu0 0.0
    %2181 = vmatprep.subr.mxu0 0.0
    %2182 = vmatpush1.msra.mxu0 0.0
    %2183 = vmatprep.mubr.f32.mxu0 0.0
    %2184 = vmatmul.mubr.f32.gmra.mrb[0].mxu0 %v2114
    %v2185 = vpop.f32.mrb[0].mxu0
    %v2186 = vadd.f32 0.0, %v2185
    %v2187 = vpop.f32.mrb[0].mxu0
    %2188 = vmatprep.mubr.f32.mxu0 0.0
    %2189 = vmatmul.mubr.f32.gmra.mrb[0].mxu0 %v2117
    %v2190 = vpop.f32.mrb[0].mxu0
    %v2191 = vadd.f32 0.0, %v2190
    %v2192 = vpop.f32.mrb[0].mxu0
    %2193 = vdwg.mxu0
    %2194 = vrot.lane.b32.xlu0 %v1461, 56
    %v2195 = vpop.permute.xlu0 %2194
    %2196 = vrot.lane.b32.xlu0 %v1466, 56
    %v2197 = vpop.permute.xlu0 %2196
    %v2201 = vsel %vm342, %v2105, 0
    %v2204 = vsel %vm342, %v2106, 0
    %2206 = vmatprep.subr.mxu0 0.0
    %2207 = vmatpush1.msra.mxu0 %v2195
    %2208 = vmatprep.subr.mxu0 0.0
    %2209 = vmatpush1.msra.mxu0 %v2197
    %2210 = vmatprep.subr.mxu0 0.0
    %2211 = vmatpush1.msra.mxu0 0.0
    %2212 = vmatprep.subr.mxu0 0.0
    %2213 = vmatpush1.msra.mxu0 0.0
    %2214 = vmatprep.subr.mxu0 0.0
    %2215 = vmatpush1.msra.mxu0 0.0
    %2216 = vmatprep.subr.mxu0 0.0
    %2217 = vmatpush1.msra.mxu0 0.0
    %2218 = vmatprep.subr.mxu0 0.0
    %2219 = vmatpush1.msra.mxu0 0.0
    %2220 = vmatprep.subr.mxu0 0.0
    %2221 = vmatpush1.msra.mxu0 0.0
    %2222 = vmatprep.subr.mxu0 0.0
    %2223 = vmatpush1.msra.mxu0 0.0
    %2224 = vmatprep.subr.mxu0 0.0
    %2225 = vmatpush1.msra.mxu0 0.0
    %2226 = vmatprep.subr.mxu0 0.0
    %2227 = vmatpush1.msra.mxu0 0.0
    %2228 = vmatprep.subr.mxu0 0.0
    %2229 = vmatpush1.msra.mxu0 0.0
    %2230 = vmatprep.subr.mxu0 0.0
    %2231 = vmatpush1.msra.mxu0 0.0
    %2232 = vmatprep.subr.mxu0 0.0
    %2233 = vmatpush1.msra.mxu0 0.0
    %2234 = vmatprep.subr.mxu0 0.0
    %2235 = vmatpush1.msra.mxu0 0.0
    %2236 = vmatprep.subr.mxu0 0.0
    %2237 = vmatpush1.msra.mxu0 0.0
    %2238 = vmatprep.subr.mxu0 0.0
    %2239 = vmatpush1.msra.mxu0 0.0
    %2240 = vmatprep.subr.mxu0 0.0
    %2241 = vmatpush1.msra.mxu0 0.0
    %2242 = vmatprep.subr.mxu0 0.0
    %2243 = vmatpush1.msra.mxu0 0.0
    %2244 = vmatprep.subr.mxu0 0.0
    %2245 = vmatpush1.msra.mxu0 0.0
    %2246 = vmatprep.subr.mxu0 0.0
    %2247 = vmatpush1.msra.mxu0 0.0
    %2248 = vmatprep.subr.mxu0 0.0
    %2249 = vmatpush1.msra.mxu0 0.0
    %2250 = vmatprep.subr.mxu0 0.0
    %2251 = vmatpush1.msra.mxu0 0.0
    %2252 = vmatprep.subr.mxu0 0.0
    %2253 = vmatpush1.msra.mxu0 0.0
    %2254 = vmatprep.subr.mxu0 0.0
    %2255 = vmatpush1.msra.mxu0 0.0
    %2256 = vmatprep.subr.mxu0 0.0
    %2257 = vmatpush1.msra.mxu0 0.0
    %2258 = vmatprep.subr.mxu0 0.0
    %2259 = vmatpush1.msra.mxu0 0.0
    %2260 = vmatprep.subr.mxu0 0.0
    %2261 = vmatpush1.msra.mxu0 0.0
    %2262 = vmatprep.subr.mxu0 0.0
    %2263 = vmatpush1.msra.mxu0 0.0
    %2264 = vmatprep.subr.mxu0 0.0
    %2265 = vmatpush1.msra.mxu0 0.0
    %2266 = vmatprep.subr.mxu0 0.0
    %2267 = vmatpush1.msra.mxu0 0.0
    %2268 = vmatprep.subr.mxu0 0.0
    %2269 = vmatpush1.msra.mxu0 0.0
    %2270 = vmatprep.mubr.f32.mxu0 0.0
    %2271 = vmatmul.mubr.f32.gmra.mrb[0].mxu0 %v2201
    %v2272 = vpop.f32.mrb[0].mxu0
    %v2273 = vadd.f32 0.0, %v2272
    %v2274 = vpop.f32.mrb[0].mxu0
    %2275 = vmatprep.mubr.f32.mxu0 0.0
    %2276 = vmatmul.mubr.f32.gmra.mrb[0].mxu0 %v2204
    %v2277 = vpop.f32.mrb[0].mxu0
    %v2278 = vadd.f32 0.0, %v2277
    %v2279 = vpop.f32.mrb[0].mxu0
    %2280 = vdwg.mxu0
    %2281 = vrot.lane.b32.xlu0 %v1451, 112
    %v2282 = vpop.permute.xlu0 %2281
    %2283 = vrot.lane.b32.xlu0 %v1456, 112
    %v2284 = vpop.permute.xlu0 %2283
    %2285 = vrot.lane.b32.xlu0 %v1451, 80
    %v2286 = vpop.permute.xlu0 %2285
    %2287 = vrot.lane.b32.xlu0 %v1456, 80
    %v2288 = vpop.permute.xlu0 %2287
    %v2289 = vsel %vm205, %v2282, 0
    %v2291 = vsel %vm205, %v2284, 0
    %v2293 = vsel %vm205, %v2286, 0
    %v2295 = vsel %vm205, %v2288, 0
    %2297 = vmatprep.subr.mxu0 0.0
    %2298 = vmatpush1.xpose.msra.mxu0 %v2293
    %2299 = vmatprep.subr.mxu0 0.0
    %2300 = vmatpush1.xpose.msra.mxu0 %v2295
    %2301 = vmatprep.subr.mxu0 0.0
    %2302 = vmatpush1.xpose.msra.mxu0 0.0
    %2303 = vmatprep.subr.mxu0 0.0
    %2304 = vmatpush1.xpose.msra.mxu0 0.0
    %2305 = vmatprep.subr.mxu0 0.0
    %2306 = vmatpush1.xpose.msra.mxu0 0.0
    %2307 = vmatprep.subr.mxu0 0.0
    %2308 = vmatpush1.xpose.msra.mxu0 0.0
    %2309 = vmatprep.subr.mxu0 0.0
    %2310 = vmatpush1.xpose.msra.mxu0 0.0
    %2311 = vmatprep.subr.mxu0 0.0
    %2312 = vmatpush1.xpose.msra.mxu0 0.0
    %2313 = vmatprep.subr.mxu0 0.0
    %2314 = vmatpush1.xpose.msra.mxu0 0.0
    %2315 = vmatprep.subr.mxu0 0.0
    %2316 = vmatpush1.xpose.msra.mxu0 0.0
    %2317 = vmatprep.subr.mxu0 0.0
    %2318 = vmatpush1.xpose.msra.mxu0 0.0
    %2319 = vmatprep.subr.mxu0 0.0
    %2320 = vmatpush1.xpose.msra.mxu0 0.0
    %2321 = vmatprep.subr.mxu0 0.0
    %2322 = vmatpush1.xpose.msra.mxu0 0.0
    %2323 = vmatprep.subr.mxu0 0.0
    %2324 = vmatpush1.xpose.msra.mxu0 0.0
    %2325 = vmatprep.subr.mxu0 0.0
    %2326 = vmatpush1.xpose.msra.mxu0 0.0
    %2327 = vmatprep.subr.mxu0 0.0
    %2328 = vmatpush1.xpose.msra.mxu0 0.0
    %2329 = vmatprep.subr.mxu0 0.0
    %2330 = vmatpush1.xpose.msra.mxu0 0.0
    %2331 = vmatprep.subr.mxu0 0.0
    %2332 = vmatpush1.xpose.msra.mxu0 0.0
    %2333 = vmatprep.subr.mxu0 0.0
    %2334 = vmatpush1.xpose.msra.mxu0 0.0
    %2335 = vmatprep.subr.mxu0 0.0
    %2336 = vmatpush1.xpose.msra.mxu0 0.0
    %2337 = vmatprep.subr.mxu0 0.0
    %2338 = vmatpush1.xpose.msra.mxu0 0.0
    %2339 = vmatprep.subr.mxu0 0.0
    %2340 = vmatpush1.xpose.msra.mxu0 0.0
    %2341 = vmatprep.subr.mxu0 0.0
    %2342 = vmatpush1.xpose.msra.mxu0 0.0
    %2343 = vmatprep.subr.mxu0 0.0
    %2344 = vmatpush1.xpose.msra.mxu0 0.0
    %2345 = vmatprep.subr.mxu0 0.0
    %2346 = vmatpush1.xpose.msra.mxu0 0.0
    %2347 = vmatprep.subr.mxu0 0.0
    %2348 = vmatpush1.xpose.msra.mxu0 0.0
    %2349 = vmatprep.subr.mxu0 0.0
    %2350 = vmatpush1.xpose.msra.mxu0 0.0
    %2351 = vmatprep.subr.mxu0 0.0
    %2352 = vmatpush1.xpose.msra.mxu0 0.0
    %2353 = vmatprep.subr.mxu0 0.0
    %2354 = vmatpush1.xpose.msra.mxu0 0.0
    %2355 = vmatprep.subr.mxu0 0.0
    %2356 = vmatpush1.xpose.msra.mxu0 0.0
    %2357 = vmatprep.subr.mxu0 0.0
    %2358 = vmatpush1.xpose.msra.mxu0 0.0
    %2359 = vmatprep.subr.mxu0 0.0
    %2360 = vmatpush1.xpose.msra.mxu0 0.0
    %2361 = vmatprep.mubr.f32.mxu0 0.0
    %2362 = vmatmul.mubr.f32.gmra.mrb[0].mxu0 %v2289
    %v2363 = vpop.f32.mrb[0].mxu0
    %v2364 = vadd.f32 0.0, %v2363
    %v2365 = vpop.f32.mrb[0].mxu0
    %2366 = vmatprep.mubr.f32.mxu0 0.0
    %2367 = vmatmul.mubr.f32.gmra.mrb[0].mxu0 %v2291
    %v2368 = vpop.f32.mrb[0].mxu0
    %v2369 = vadd.f32 0.0, %v2368
    %v2370 = vpop.f32.mrb[0].mxu0
    %2371 = vdwg.mxu0
    %2372 = vrot.lane.b32.xlu0 %v1461, 112
    %v2373 = vpop.permute.xlu0 %2372
    %2374 = vrot.lane.b32.xlu0 %v1466, 112
    %v2375 = vpop.permute.xlu0 %2374
    %2376 = vrot.lane.b32.xlu0 %v1461, 80
    %v2377 = vpop.permute.xlu0 %2376
    %2378 = vrot.lane.b32.xlu0 %v1466, 80
    %v2379 = vpop.permute.xlu0 %2378
    %v2380 = vsel %vm205, %v2373, 0
    %v2382 = vsel %vm205, %v2375, 0
    %v2384 = vsel %vm205, %v2377, 0
    %v2386 = vsel %vm205, %v2379, 0
    %2388 = vmatprep.subr.mxu0 0.0
    %2389 = vmatpush1.xpose.msra.mxu0 %v2384
    %2390 = vmatprep.subr.mxu0 0.0
    %2391 = vmatpush1.xpose.msra.mxu0 %v2386
    %2392 = vmatprep.subr.mxu0 0.0
    %2393 = vmatpush1.xpose.msra.mxu0 0.0
    %2394 = vmatprep.subr.mxu0 0.0
    %2395 = vmatpush1.xpose.msra.mxu0 0.0
    %2396 = vmatprep.subr.mxu0 0.0
    %2397 = vmatpush1.xpose.msra.mxu0 0.0
    %2398 = vmatprep.subr.mxu0 0.0
    %2399 = vmatpush1.xpose.msra.mxu0 0.0
    %2400 = vmatprep.subr.mxu0 0.0
    %2401 = vmatpush1.xpose.msra.mxu0 0.0
    %2402 = vmatprep.subr.mxu0 0.0
    %2403 = vmatpush1.xpose.msra.mxu0 0.0
    %2404 = vmatprep.subr.mxu0 0.0
    %2405 = vmatpush1.xpose.msra.mxu0 0.0
    %2406 = vmatprep.subr.mxu0 0.0
    %2407 = vmatpush1.xpose.msra.mxu0 0.0
    %2408 = vmatprep.subr.mxu0 0.0
    %2409 = vmatpush1.xpose.msra.mxu0 0.0
    %2410 = vmatprep.subr.mxu0 0.0
    %2411 = vmatpush1.xpose.msra.mxu0 0.0
    %2412 = vmatprep.subr.mxu0 0.0
    %2413 = vmatpush1.xpose.msra.mxu0 0.0
    %2414 = vmatprep.subr.mxu0 0.0
    %2415 = vmatpush1.xpose.msra.mxu0 0.0
    %2416 = vmatprep.subr.mxu0 0.0
    %2417 = vmatpush1.xpose.msra.mxu0 0.0
    %2418 = vmatprep.subr.mxu0 0.0
    %2419 = vmatpush1.xpose.msra.mxu0 0.0
    %2420 = vmatprep.subr.mxu0 0.0
    %2421 = vmatpush1.xpose.msra.mxu0 0.0
    %2422 = vmatprep.subr.mxu0 0.0
    %2423 = vmatpush1.xpose.msra.mxu0 0.0
    %2424 = vmatprep.subr.mxu0 0.0
    %2425 = vmatpush1.xpose.msra.mxu0 0.0
    %2426 = vmatprep.subr.mxu0 0.0
    %2427 = vmatpush1.xpose.msra.mxu0 0.0
    %2428 = vmatprep.subr.mxu0 0.0
    %2429 = vmatpush1.xpose.msra.mxu0 0.0
    %2430 = vmatprep.subr.mxu0 0.0
    %2431 = vmatpush1.xpose.msra.mxu0 0.0
    %2432 = vmatprep.subr.mxu0 0.0
    %2433 = vmatpush1.xpose.msra.mxu0 0.0
    %2434 = vmatprep.subr.mxu0 0.0
    %2435 = vmatpush1.xpose.msra.mxu0 0.0
    %2436 = vmatprep.subr.mxu0 0.0
    %2437 = vmatpush1.xpose.msra.mxu0 0.0
    %2438 = vmatprep.subr.mxu0 0.0
    %2439 = vmatpush1.xpose.msra.mxu0 0.0
    %2440 = vmatprep.subr.mxu0 0.0
    %2441 = vmatpush1.xpose.msra.mxu0 0.0
    %2442 = vmatprep.subr.mxu0 0.0
    %2443 = vmatpush1.xpose.msra.mxu0 0.0
    %2444 = vmatprep.subr.mxu0 0.0
    %2445 = vmatpush1.xpose.msra.mxu0 0.0
    %2446 = vmatprep.subr.mxu0 0.0
    %2447 = vmatpush1.xpose.msra.mxu0 0.0
    %2448 = vmatprep.subr.mxu0 0.0
    %2449 = vmatpush1.xpose.msra.mxu0 0.0
    %2450 = vmatprep.subr.mxu0 0.0
    %2451 = vmatpush1.xpose.msra.mxu0 0.0
    %2452 = vmatprep.mubr.f32.mxu0 0.0
    %2453 = vmatmul.mubr.f32.gmra.mrb[0].mxu0 %v2380
    %v2454 = vpop.f32.mrb[0].mxu0
    %v2455 = vadd.f32 0.0, %v2454
    %v2456 = vpop.f32.mrb[0].mxu0
    %2457 = vmatprep.mubr.f32.mxu0 0.0
    %2458 = vmatmul.mubr.f32.gmra.mrb[0].mxu0 %v2382
    %v2459 = vpop.f32.mrb[0].mxu0
    %v2460 = vadd.f32 0.0, %v2459
    %v2461 = vpop.f32.mrb[0].mxu0
    %2462 = vdwg.mxu0
    %v2463 = vmul.f32 %v2364, 0.35355338
    %v2464 = vmul.f32 %v2369, 0.35355338
    %v2465 = vmul.f32 %v2455, 0.35355338
    %v2466 = vmul.f32 %v2460, 0.35355338
    %v2467 = vadd.f32 %v2463, %v1177
    %v2468 = vadd.f32 %v2464, %v1178
    %v2469 = vadd.f32 %v2465, %v1179
    %v2470 = vadd.f32 %v2466, %v1180
    %v2471 = vsel %vm342, %v2467, -inf
    %2472 = vmax.xlane.f32.xlu0 %v2471
    %v2473 = vpop.xlane.xlu0 %2472
    %v2474 = vsel %vm342, %v2468, -inf
    %2475 = vmax.xlane.f32.xlu0 %v2474
    %v2476 = vpop.xlane.xlu0 %2475
    %v2477 = vsel %vm342, %v2469, -inf
    %2478 = vmax.xlane.f32.xlu0 %v2477
    %v2479 = vpop.xlane.xlu0 %2478
    %v2480 = vsel %vm342, %v2470, -inf
    %2481 = vmax.xlane.f32.xlu0 %v2480
    %v2482 = vpop.xlane.xlu0 %2481
    %v2483 = vsub.f32 %v2467, %v2473
    %v2484 = vsub.f32 %v2468, %v2476
    %v2485 = vsub.f32 %v2469, %v2479
    %v2486 = vsub.f32 %v2470, %v2482
    %v2487 = vmul.f32 %v2483, 1.442695
    %v2488 = vpow.pop %v2487
    %v2489 = vmul.f32 %v2484, 1.442695
    %v2490 = vpow.pop %v2489
    %v2491 = vmul.f32 %v2485, 1.442695
    %v2492 = vpow.pop %v2491
    %v2493 = vmul.f32 %v2486, 1.442695
    %v2494 = vpow.pop %v2493
    %v2495 = vsel %vm342, %v2488, 0.0
    %2496 = vadd.xlane.f32.xlu0 %v2495
    %v2497 = vpop.xlane.xlu0 %2496
    %v2498 = vsel %vm342, %v2490, 0.0
    %2499 = vadd.xlane.f32.xlu0 %v2498
    %v2500 = vpop.xlane.xlu0 %2499
    %v2501 = vsel %vm342, %v2492, 0.0
    %2502 = vadd.xlane.f32.xlu0 %v2501
    %v2503 = vpop.xlane.xlu0 %2502
    %v2504 = vsel %vm342, %v2494, 0.0
    %2505 = vadd.xlane.f32.xlu0 %v2504
    %v2506 = vpop.xlane.xlu0 %2505
    %v2507 = vrcp.pop %v2497
    %v2508 = vrcp.pop %v2500
    %v2509 = vrcp.pop %v2503
    %v2510 = vrcp.pop %v2506
    %v2511 = vmul.f32 %v2488, %v2507
    %v2512 = vmul.f32 %v2490, %v2508
    %v2513 = vmul.f32 %v2492, %v2509
    %v2514 = vmul.f32 %v2494, %v2510
    %2515 = vrot.lane.b32.xlu0 %v1451, 48
    %v2516 = vpop.permute.xlu0 %2515
    %2517 = vrot.lane.b32.xlu0 %v1456, 48
    %v2518 = vpop.permute.xlu0 %2517
    %v2522 = vsel %vm342, %v2511, 0
    %v2525 = vsel %vm342, %v2512, 0
    %2527 = vmatprep.subr.mxu0 0.0
    %2528 = vmatpush1.msra.mxu0 %v2516
    %2529 = vmatprep.subr.mxu0 0.0
    %2530 = vmatpush1.msra.mxu0 %v2518
    %2531 = vmatprep.subr.mxu0 0.0
    %2532 = vmatpush1.msra.mxu0 0.0
    %2533 = vmatprep.subr.mxu0 0.0
    %2534 = vmatpush1.msra.mxu0 0.0
    %2535 = vmatprep.subr.mxu0 0.0
    %2536 = vmatpush1.msra.mxu0 0.0
    %2537 = vmatprep.subr.mxu0 0.0
    %2538 = vmatpush1.msra.mxu0 0.0
    %2539 = vmatprep.subr.mxu0 0.0
    %2540 = vmatpush1.msra.mxu0 0.0
    %2541 = vmatprep.subr.mxu0 0.0
    %2542 = vmatpush1.msra.mxu0 0.0
    %2543 = vmatprep.subr.mxu0 0.0
    %2544 = vmatpush1.msra.mxu0 0.0
    %2545 = vmatprep.subr.mxu0 0.0
    %2546 = vmatpush1.msra.mxu0 0.0
    %2547 = vmatprep.subr.mxu0 0.0
    %2548 = vmatpush1.msra.mxu0 0.0
    %2549 = vmatprep.subr.mxu0 0.0
    %2550 = vmatpush1.msra.mxu0 0.0
    %2551 = vmatprep.subr.mxu0 0.0
    %2552 = vmatpush1.msra.mxu0 0.0
    %2553 = vmatprep.subr.mxu0 0.0
    %2554 = vmatpush1.msra.mxu0 0.0
    %2555 = vmatprep.subr.mxu0 0.0
    %2556 = vmatpush1.msra.mxu0 0.0
    %2557 = vmatprep.subr.mxu0 0.0
    %2558 = vmatpush1.msra.mxu0 0.0
    %2559 = vmatprep.subr.mxu0 0.0
    %2560 = vmatpush1.msra.mxu0 0.0
    %2561 = vmatprep.subr.mxu0 0.0
    %2562 = vmatpush1.msra.mxu0 0.0
    %2563 = vmatprep.subr.mxu0 0.0
    %2564 = vmatpush1.msra.mxu0 0.0
    %2565 = vmatprep.subr.mxu0 0.0
    %2566 = vmatpush1.msra.mxu0 0.0
    %2567 = vmatprep.subr.mxu0 0.0
    %2568 = vmatpush1.msra.mxu0 0.0
    %2569 = vmatprep.subr.mxu0 0.0
    %2570 = vmatpush1.msra.mxu0 0.0
    %2571 = vmatprep.subr.mxu0 0.0
    %2572 = vmatpush1.msra.mxu0 0.0
    %2573 = vmatprep.subr.mxu0 0.0
    %2574 = vmatpush1.msra.mxu0 0.0
    %2575 = vmatprep.subr.mxu0 0.0
    %2576 = vmatpush1.msra.mxu0 0.0
    %2577 = vmatprep.subr.mxu0 0.0
    %2578 = vmatpush1.msra.mxu0 0.0
    %2579 = vmatprep.subr.mxu0 0.0
    %2580 = vmatpush1.msra.mxu0 0.0
    %2581 = vmatprep.subr.mxu0 0.0
    %2582 = vmatpush1.msra.mxu0 0.0
    %2583 = vmatprep.subr.mxu0 0.0
    %2584 = vmatpush1.msra.mxu0 0.0
    %2585 = vmatprep.subr.mxu0 0.0
    %2586 = vmatpush1.msra.mxu0 0.0
    %2587 = vmatprep.subr.mxu0 0.0
    %2588 = vmatpush1.msra.mxu0 0.0
    %2589 = vmatprep.subr.mxu0 0.0
    %2590 = vmatpush1.msra.mxu0 0.0
    %2591 = vmatprep.mubr.f32.mxu0 0.0
    %2592 = vmatmul.mubr.f32.gmra.mrb[0].mxu0 %v2522
    %v2593 = vpop.f32.mrb[0].mxu0
    %v2594 = vadd.f32 0.0, %v2593
    %v2595 = vpop.f32.mrb[0].mxu0
    %2596 = vmatprep.mubr.f32.mxu0 0.0
    %2597 = vmatmul.mubr.f32.gmra.mrb[0].mxu0 %v2525
    %v2598 = vpop.f32.mrb[0].mxu0
    %v2599 = vadd.f32 0.0, %v2598
    %v2600 = vpop.f32.mrb[0].mxu0
    %2601 = vdwg.mxu0
    %2602 = vrot.lane.b32.xlu0 %v1461, 48
    %v2603 = vpop.permute.xlu0 %2602
    %2604 = vrot.lane.b32.xlu0 %v1466, 48
    %v2605 = vpop.permute.xlu0 %2604
    %v2609 = vsel %vm342, %v2513, 0
    %v2612 = vsel %vm342, %v2514, 0
    %2614 = vmatprep.subr.mxu0 0.0
    %2615 = vmatpush1.msra.mxu0 %v2603
    %2616 = vmatprep.subr.mxu0 0.0
    %2617 = vmatpush1.msra.mxu0 %v2605
    %2618 = vmatprep.subr.mxu0 0.0
    %2619 = vmatpush1.msra.mxu0 0.0
    %2620 = vmatprep.subr.mxu0 0.0
    %2621 = vmatpush1.msra.mxu0 0.0
    %2622 = vmatprep.subr.mxu0 0.0
    %2623 = vmatpush1.msra.mxu0 0.0
    %2624 = vmatprep.subr.mxu0 0.0
    %2625 = vmatpush1.msra.mxu0 0.0
    %2626 = vmatprep.subr.mxu0 0.0
    %2627 = vmatpush1.msra.mxu0 0.0
    %2628 = vmatprep.subr.mxu0 0.0
    %2629 = vmatpush1.msra.mxu0 0.0
    %2630 = vmatprep.subr.mxu0 0.0
    %2631 = vmatpush1.msra.mxu0 0.0
    %2632 = vmatprep.subr.mxu0 0.0
    %2633 = vmatpush1.msra.mxu0 0.0
    %2634 = vmatprep.subr.mxu0 0.0
    %2635 = vmatpush1.msra.mxu0 0.0
    %2636 = vmatprep.subr.mxu0 0.0
    %2637 = vmatpush1.msra.mxu0 0.0
    %2638 = vmatprep.subr.mxu0 0.0
    %2639 = vmatpush1.msra.mxu0 0.0
    %2640 = vmatprep.subr.mxu0 0.0
    %2641 = vmatpush1.msra.mxu0 0.0
    %2642 = vmatprep.subr.mxu0 0.0
    %2643 = vmatpush1.msra.mxu0 0.0
    %2644 = vmatprep.subr.mxu0 0.0
    %2645 = vmatpush1.msra.mxu0 0.0
    %2646 = vmatprep.subr.mxu0 0.0
    %2647 = vmatpush1.msra.mxu0 0.0
    %2648 = vmatprep.subr.mxu0 0.0
    %2649 = vmatpush1.msra.mxu0 0.0
    %2650 = vmatprep.subr.mxu0 0.0
    %2651 = vmatpush1.msra.mxu0 0.0
    %2652 = vmatprep.subr.mxu0 0.0
    %2653 = vmatpush1.msra.mxu0 0.0
    %2654 = vmatprep.subr.mxu0 0.0
    %2655 = vmatpush1.msra.mxu0 0.0
    %2656 = vmatprep.subr.mxu0 0.0
    %2657 = vmatpush1.msra.mxu0 0.0
    %2658 = vmatprep.subr.mxu0 0.0
    %2659 = vmatpush1.msra.mxu0 0.0
    %2660 = vmatprep.subr.mxu0 0.0
    %2661 = vmatpush1.msra.mxu0 0.0
    %2662 = vmatprep.subr.mxu0 0.0
    %2663 = vmatpush1.msra.mxu0 0.0
    %2664 = vmatprep.subr.mxu0 0.0
    %2665 = vmatpush1.msra.mxu0 0.0
    %2666 = vmatprep.subr.mxu0 0.0
    %2667 = vmatpush1.msra.mxu0 0.0
    %2668 = vmatprep.subr.mxu0 0.0
    %2669 = vmatpush1.msra.mxu0 0.0
    %2670 = vmatprep.subr.mxu0 0.0
    %2671 = vmatpush1.msra.mxu0 0.0
    %2672 = vmatprep.subr.mxu0 0.0
    %2673 = vmatpush1.msra.mxu0 0.0
    %2674 = vmatprep.subr.mxu0 0.0
    %2675 = vmatpush1.msra.mxu0 0.0
    %2676 = vmatprep.subr.mxu0 0.0
    %2677 = vmatpush1.msra.mxu0 0.0
    %2678 = vmatprep.mubr.f32.mxu0 0.0
    %2679 = vmatmul.mubr.f32.gmra.mrb[0].mxu0 %v2609
    %v2680 = vpop.f32.mrb[0].mxu0
    %v2681 = vadd.f32 0.0, %v2680
    %v2682 = vpop.f32.mrb[0].mxu0
    %2683 = vmatprep.mubr.f32.mxu0 0.0
    %2684 = vmatmul.mubr.f32.gmra.mrb[0].mxu0 %v2612
    %v2685 = vpop.f32.mrb[0].mxu0
    %v2686 = vadd.f32 0.0, %v2685
    %v2687 = vpop.f32.mrb[0].mxu0
    %2688 = vdwg.mxu0
    %2689 = vrot.lane.b32.xlu0 %v1451, 104
    %v2690 = vpop.permute.xlu0 %2689
    %2691 = vrot.lane.b32.xlu0 %v1456, 104
    %v2692 = vpop.permute.xlu0 %2691
    %2693 = vrot.lane.b32.xlu0 %v1451, 72
    %v2694 = vpop.permute.xlu0 %2693
    %2695 = vrot.lane.b32.xlu0 %v1456, 72
    %v2696 = vpop.permute.xlu0 %2695
    %v2697 = vsel %vm205, %v2690, 0
    %v2699 = vsel %vm205, %v2692, 0
    %v2701 = vsel %vm205, %v2694, 0
    %v2703 = vsel %vm205, %v2696, 0
    %2705 = vmatprep.subr.mxu0 0.0
    %2706 = vmatpush1.xpose.msra.mxu0 %v2701
    %2707 = vmatprep.subr.mxu0 0.0
    %2708 = vmatpush1.xpose.msra.mxu0 %v2703
    %2709 = vmatprep.subr.mxu0 0.0
    %2710 = vmatpush1.xpose.msra.mxu0 0.0
    %2711 = vmatprep.subr.mxu0 0.0
    %2712 = vmatpush1.xpose.msra.mxu0 0.0
    %2713 = vmatprep.subr.mxu0 0.0
    %2714 = vmatpush1.xpose.msra.mxu0 0.0
    %2715 = vmatprep.subr.mxu0 0.0
    %2716 = vmatpush1.xpose.msra.mxu0 0.0
    %2717 = vmatprep.subr.mxu0 0.0
    %2718 = vmatpush1.xpose.msra.mxu0 0.0
    %2719 = vmatprep.subr.mxu0 0.0
    %2720 = vmatpush1.xpose.msra.mxu0 0.0
    %2721 = vmatprep.subr.mxu0 0.0
    %2722 = vmatpush1.xpose.msra.mxu0 0.0
    %2723 = vmatprep.subr.mxu0 0.0
    %2724 = vmatpush1.xpose.msra.mxu0 0.0
    %2725 = vmatprep.subr.mxu0 0.0
    %2726 = vmatpush1.xpose.msra.mxu0 0.0
    %2727 = vmatprep.subr.mxu0 0.0
    %2728 = vmatpush1.xpose.msra.mxu0 0.0
    %2729 = vmatprep.subr.mxu0 0.0
    %2730 = vmatpush1.xpose.msra.mxu0 0.0
    %2731 = vmatprep.subr.mxu0 0.0
    %2732 = vmatpush1.xpose.msra.mxu0 0.0
    %2733 = vmatprep.subr.mxu0 0.0
    %2734 = vmatpush1.xpose.msra.mxu0 0.0
    %2735 = vmatprep.subr.mxu0 0.0
    %2736 = vmatpush1.xpose.msra.mxu0 0.0
    %2737 = vmatprep.subr.mxu0 0.0
    %2738 = vmatpush1.xpose.msra.mxu0 0.0
    %2739 = vmatprep.subr.mxu0 0.0
    %2740 = vmatpush1.xpose.msra.mxu0 0.0
    %2741 = vmatprep.subr.mxu0 0.0
    %2742 = vmatpush1.xpose.msra.mxu0 0.0
    %2743 = vmatprep.subr.mxu0 0.0
    %2744 = vmatpush1.xpose.msra.mxu0 0.0
    %2745 = vmatprep.subr.mxu0 0.0
    %2746 = vmatpush1.xpose.msra.mxu0 0.0
    %2747 = vmatprep.subr.mxu0 0.0
    %2748 = vmatpush1.xpose.msra.mxu0 0.0
    %2749 = vmatprep.subr.mxu0 0.0
    %2750 = vmatpush1.xpose.msra.mxu0 0.0
    %2751 = vmatprep.subr.mxu0 0.0
    %2752 = vmatpush1.xpose.msra.mxu0 0.0
    %2753 = vmatprep.subr.mxu0 0.0
    %2754 = vmatpush1.xpose.msra.mxu0 0.0
    %2755 = vmatprep.subr.mxu0 0.0
    %2756 = vmatpush1.xpose.msra.mxu0 0.0
    %2757 = vmatprep.subr.mxu0 0.0
    %2758 = vmatpush1.xpose.msra.mxu0 0.0
    %2759 = vmatprep.subr.mxu0 0.0
    %2760 = vmatpush1.xpose.msra.mxu0 0.0
    %2761 = vmatprep.subr.mxu0 0.0
    %2762 = vmatpush1.xpose.msra.mxu0 0.0
    %2763 = vmatprep.subr.mxu0 0.0
    %2764 = vmatpush1.xpose.msra.mxu0 0.0
    %2765 = vmatprep.subr.mxu0 0.0
    %2766 = vmatpush1.xpose.msra.mxu0 0.0
    %2767 = vmatprep.subr.mxu0 0.0
    %2768 = vmatpush1.xpose.msra.mxu0 0.0
    %2769 = vmatprep.mubr.f32.mxu0 0.0
    %2770 = vmatmul.mubr.f32.gmra.mrb[0].mxu0 %v2697
    %v2771 = vpop.f32.mrb[0].mxu0
    %v2772 = vadd.f32 0.0, %v2771
    %v2773 = vpop.f32.mrb[0].mxu0
    %2774 = vmatprep.mubr.f32.mxu0 0.0
    %2775 = vmatmul.mubr.f32.gmra.mrb[0].mxu0 %v2699
    %v2776 = vpop.f32.mrb[0].mxu0
    %v2777 = vadd.f32 0.0, %v2776
    %v2778 = vpop.f32.mrb[0].mxu0
    %2779 = vdwg.mxu0
    %2780 = vrot.lane.b32.xlu0 %v1461, 104
    %v2781 = vpop.permute.xlu0 %2780
    %2782 = vrot.lane.b32.xlu0 %v1466, 104
    %v2783 = vpop.permute.xlu0 %2782
    %2784 = vrot.lane.b32.xlu0 %v1461, 72
    %v2785 = vpop.permute.xlu0 %2784
    %2786 = vrot.lane.b32.xlu0 %v1466, 72
    %v2787 = vpop.permute.xlu0 %2786
    %v2788 = vsel %vm205, %v2781, 0
    %v2790 = vsel %vm205, %v2783, 0
    %v2792 = vsel %vm205, %v2785, 0
    %v2794 = vsel %vm205, %v2787, 0
    %2796 = vmatprep.subr.mxu0 0.0
    %2797 = vmatpush1.xpose.msra.mxu0 %v2792
    %2798 = vmatprep.subr.mxu0 0.0
    %2799 = vmatpush1.xpose.msra.mxu0 %v2794
    %2800 = vmatprep.subr.mxu0 0.0
    %2801 = vmatpush1.xpose.msra.mxu0 0.0
    %2802 = vmatprep.subr.mxu0 0.0
    %2803 = vmatpush1.xpose.msra.mxu0 0.0
    %2804 = vmatprep.subr.mxu0 0.0
    %2805 = vmatpush1.xpose.msra.mxu0 0.0
    %2806 = vmatprep.subr.mxu0 0.0
    %2807 = vmatpush1.xpose.msra.mxu0 0.0
    %2808 = vmatprep.subr.mxu0 0.0
    %2809 = vmatpush1.xpose.msra.mxu0 0.0
    %2810 = vmatprep.subr.mxu0 0.0
    %2811 = vmatpush1.xpose.msra.mxu0 0.0
    %2812 = vmatprep.subr.mxu0 0.0
    %2813 = vmatpush1.xpose.msra.mxu0 0.0
    %2814 = vmatprep.subr.mxu0 0.0
    %2815 = vmatpush1.xpose.msra.mxu0 0.0
    %2816 = vmatprep.subr.mxu0 0.0
    %2817 = vmatpush1.xpose.msra.mxu0 0.0
    %2818 = vmatprep.subr.mxu0 0.0
    %2819 = vmatpush1.xpose.msra.mxu0 0.0
    %2820 = vmatprep.subr.mxu0 0.0
    %2821 = vmatpush1.xpose.msra.mxu0 0.0
    %2822 = vmatprep.subr.mxu0 0.0
    %2823 = vmatpush1.xpose.msra.mxu0 0.0
    %2824 = vmatprep.subr.mxu0 0.0
    %2825 = vmatpush1.xpose.msra.mxu0 0.0
    %2826 = vmatprep.subr.mxu0 0.0
    %2827 = vmatpush1.xpose.msra.mxu0 0.0
    %2828 = vmatprep.subr.mxu0 0.0
    %2829 = vmatpush1.xpose.msra.mxu0 0.0
    %2830 = vmatprep.subr.mxu0 0.0
    %2831 = vmatpush1.xpose.msra.mxu0 0.0
    %2832 = vmatprep.subr.mxu0 0.0
    %2833 = vmatpush1.xpose.msra.mxu0 0.0
    %2834 = vmatprep.subr.mxu0 0.0
    %2835 = vmatpush1.xpose.msra.mxu0 0.0
    %2836 = vmatprep.subr.mxu0 0.0
    %2837 = vmatpush1.xpose.msra.mxu0 0.0
    %2838 = vmatprep.subr.mxu0 0.0
    %2839 = vmatpush1.xpose.msra.mxu0 0.0
    %2840 = vmatprep.subr.mxu0 0.0
    %2841 = vmatpush1.xpose.msra.mxu0 0.0
    %2842 = vmatprep.subr.mxu0 0.0
    %2843 = vmatpush1.xpose.msra.mxu0 0.0
    %2844 = vmatprep.subr.mxu0 0.0
    %2845 = vmatpush1.xpose.msra.mxu0 0.0
    %2846 = vmatprep.subr.mxu0 0.0
    %2847 = vmatpush1.xpose.msra.mxu0 0.0
    %2848 = vmatprep.subr.mxu0 0.0
    %2849 = vmatpush1.xpose.msra.mxu0 0.0
    %2850 = vmatprep.subr.mxu0 0.0
    %2851 = vmatpush1.xpose.msra.mxu0 0.0
    %2852 = vmatprep.subr.mxu0 0.0
    %2853 = vmatpush1.xpose.msra.mxu0 0.0
    %2854 = vmatprep.subr.mxu0 0.0
    %2855 = vmatpush1.xpose.msra.mxu0 0.0
    %2856 = vmatprep.subr.mxu0 0.0
    %2857 = vmatpush1.xpose.msra.mxu0 0.0
    %2858 = vmatprep.subr.mxu0 0.0
    %2859 = vmatpush1.xpose.msra.mxu0 0.0
    %2860 = vmatprep.mubr.f32.mxu0 0.0
    %2861 = vmatmul.mubr.f32.gmra.mrb[0].mxu0 %v2788
    %v2862 = vpop.f32.mrb[0].mxu0
    %v2863 = vadd.f32 0.0, %v2862
    %v2864 = vpop.f32.mrb[0].mxu0
    %2865 = vmatprep.mubr.f32.mxu0 0.0
    %2866 = vmatmul.mubr.f32.gmra.mrb[0].mxu0 %v2790
    %v2867 = vpop.f32.mrb[0].mxu0
    %v2868 = vadd.f32 0.0, %v2867
    %v2869 = vpop.f32.mrb[0].mxu0
    %2870 = vdwg.mxu0
    %v2871 = vmul.f32 %v2772, 0.35355338
    %v2872 = vmul.f32 %v2777, 0.35355338
    %v2873 = vmul.f32 %v2863, 0.35355338
    %v2874 = vmul.f32 %v2868, 0.35355338
    %v2875 = vadd.f32 %v2871, %v1363
    %v2876 = vadd.f32 %v2872, %v1364
    %v2877 = vadd.f32 %v2873, %v1365
    %v2878 = vadd.f32 %v2874, %v1366
    %v2879 = vsel %vm342, %v2875, -inf
    %2880 = vmax.xlane.f32.xlu0 %v2879
    %v2881 = vpop.xlane.xlu0 %2880
    %v2882 = vsel %vm342, %v2876, -inf
    %2883 = vmax.xlane.f32.xlu0 %v2882
    %v2884 = vpop.xlane.xlu0 %2883
    %v2885 = vsel %vm342, %v2877, -inf
    %2886 = vmax.xlane.f32.xlu0 %v2885
    %v2887 = vpop.xlane.xlu0 %2886
    %v2888 = vsel %vm342, %v2878, -inf
    %2889 = vmax.xlane.f32.xlu0 %v2888
    %v2890 = vpop.xlane.xlu0 %2889
    %v2891 = vsub.f32 %v2875, %v2881
    %v2892 = vsub.f32 %v2876, %v2884
    %v2893 = vsub.f32 %v2877, %v2887
    %v2894 = vsub.f32 %v2878, %v2890
    %v2895 = vmul.f32 %v2891, 1.442695
    %v2896 = vpow.pop %v2895
    %v2897 = vmul.f32 %v2892, 1.442695
    %v2898 = vpow.pop %v2897
    %v2899 = vmul.f32 %v2893, 1.442695
    %v2900 = vpow.pop %v2899
    %v2901 = vmul.f32 %v2894, 1.442695
    %v2902 = vpow.pop %v2901
    %v2903 = vsel %vm342, %v2896, 0.0
    %2904 = vadd.xlane.f32.xlu0 %v2903
    %v2905 = vpop.xlane.xlu0 %2904
    %v2906 = vsel %vm342, %v2898, 0.0
    %2907 = vadd.xlane.f32.xlu0 %v2906
    %v2908 = vpop.xlane.xlu0 %2907
    %v2909 = vsel %vm342, %v2900, 0.0
    %2910 = vadd.xlane.f32.xlu0 %v2909
    %v2911 = vpop.xlane.xlu0 %2910
    %v2912 = vsel %vm342, %v2902, 0.0
    %2913 = vadd.xlane.f32.xlu0 %v2912
    %v2914 = vpop.xlane.xlu0 %2913
    %v2915 = vrcp.pop %v2905
    %v2916 = vrcp.pop %v2908
    %v2917 = vrcp.pop %v2911
    %v2918 = vrcp.pop %v2914
    %v2919 = vmul.f32 %v2896, %v2915
    %v2920 = vmul.f32 %v2898, %v2916
    %v2921 = vmul.f32 %v2900, %v2917
    %v2922 = vmul.f32 %v2902, %v2918
    %2923 = vrot.lane.b32.xlu0 %v1451, 40
    %v2924 = vpop.permute.xlu0 %2923
    %2925 = vrot.lane.b32.xlu0 %v1456, 40
    %v2926 = vpop.permute.xlu0 %2925
    %v2930 = vsel %vm342, %v2919, 0
    %v2933 = vsel %vm342, %v2920, 0
    %2935 = vmatprep.subr.mxu0 0.0
    %2936 = vmatpush1.msra.mxu0 %v2924
    %2937 = vmatprep.subr.mxu0 0.0
    %2938 = vmatpush1.msra.mxu0 %v2926
    %2939 = vmatprep.subr.mxu0 0.0
    %2940 = vmatpush1.msra.mxu0 0.0
    %2941 = vmatprep.subr.mxu0 0.0
    %2942 = vmatpush1.msra.mxu0 0.0
    %2943 = vmatprep.subr.mxu0 0.0
    %2944 = vmatpush1.msra.mxu0 0.0
    %2945 = vmatprep.subr.mxu0 0.0
    %2946 = vmatpush1.msra.mxu0 0.0
    %2947 = vmatprep.subr.mxu0 0.0
    %2948 = vmatpush1.msra.mxu0 0.0
    %2949 = vmatprep.subr.mxu0 0.0
    %2950 = vmatpush1.msra.mxu0 0.0
    %2951 = vmatprep.subr.mxu0 0.0
    %2952 = vmatpush1.msra.mxu0 0.0
    %2953 = vmatprep.subr.mxu0 0.0
    %2954 = vmatpush1.msra.mxu0 0.0
    %2955 = vmatprep.subr.mxu0 0.0
    %2956 = vmatpush1.msra.mxu0 0.0
    %2957 = vmatprep.subr.mxu0 0.0
    %2958 = vmatpush1.msra.mxu0 0.0
    %2959 = vmatprep.subr.mxu0 0.0
    %2960 = vmatpush1.msra.mxu0 0.0
    %2961 = vmatprep.subr.mxu0 0.0
    %2962 = vmatpush1.msra.mxu0 0.0
    %2963 = vmatprep.subr.mxu0 0.0
    %2964 = vmatpush1.msra.mxu0 0.0
    %2965 = vmatprep.subr.mxu0 0.0
    %2966 = vmatpush1.msra.mxu0 0.0
    %2967 = vmatprep.subr.mxu0 0.0
    %2968 = vmatpush1.msra.mxu0 0.0
    %2969 = vmatprep.subr.mxu0 0.0
    %2970 = vmatpush1.msra.mxu0 0.0
    %2971 = vmatprep.subr.mxu0 0.0
    %2972 = vmatpush1.msra.mxu0 0.0
    %2973 = vmatprep.subr.mxu0 0.0
    %2974 = vmatpush1.msra.mxu0 0.0
    %2975 = vmatprep.subr.mxu0 0.0
    %2976 = vmatpush1.msra.mxu0 0.0
    %2977 = vmatprep.subr.mxu0 0.0
    %2978 = vmatpush1.msra.mxu0 0.0
    %2979 = vmatprep.subr.mxu0 0.0
    %2980 = vmatpush1.msra.mxu0 0.0
    %2981 = vmatprep.subr.mxu0 0.0
    %2982 = vmatpush1.msra.mxu0 0.0
    %2983 = vmatprep.subr.mxu0 0.0
    %2984 = vmatpush1.msra.mxu0 0.0
    %2985 = vmatprep.subr.mxu0 0.0
    %2986 = vmatpush1.msra.mxu0 0.0
    %2987 = vmatprep.subr.mxu0 0.0
    %2988 = vmatpush1.msra.mxu0 0.0
    %2989 = vmatprep.subr.mxu0 0.0
    %2990 = vmatpush1.msra.mxu0 0.0
    %2991 = vmatprep.subr.mxu0 0.0
    %2992 = vmatpush1.msra.mxu0 0.0
    %2993 = vmatprep.subr.mxu0 0.0
    %2994 = vmatpush1.msra.mxu0 0.0
    %2995 = vmatprep.subr.mxu0 0.0
    %2996 = vmatpush1.msra.mxu0 0.0
    %2997 = vmatprep.subr.mxu0 0.0
    %2998 = vmatpush1.msra.mxu0 0.0
    %2999 = vmatprep.mubr.f32.mxu0 0.0
    %3000 = vmatmul.mubr.f32.gmra.mrb[0].mxu0 %v2930
    %v3001 = vpop.f32.mrb[0].mxu0
    %v3002 = vadd.f32 0.0, %v3001
    %v3003 = vpop.f32.mrb[0].mxu0
    %3004 = vmatprep.mubr.f32.mxu0 0.0
    %3005 = vmatmul.mubr.f32.gmra.mrb[0].mxu0 %v2933
    %v3006 = vpop.f32.mrb[0].mxu0
    %v3007 = vadd.f32 0.0, %v3006
    %v3008 = vpop.f32.mrb[0].mxu0
    %3009 = vdwg.mxu0
    %3010 = vrot.lane.b32.xlu0 %v1461, 40
    %v3011 = vpop.permute.xlu0 %3010
    %3012 = vrot.lane.b32.xlu0 %v1466, 40
    %v3013 = vpop.permute.xlu0 %3012
    %v3017 = vsel %vm342, %v2921, 0
    %v3020 = vsel %vm342, %v2922, 0
    %3022 = vmatprep.subr.mxu0 0.0
    %3023 = vmatpush1.msra.mxu0 %v3011
    %3024 = vmatprep.subr.mxu0 0.0
    %3025 = vmatpush1.msra.mxu0 %v3013
    %3026 = vmatprep.subr.mxu0 0.0
    %3027 = vmatpush1.msra.mxu0 0.0
    %3028 = vmatprep.subr.mxu0 0.0
    %3029 = vmatpush1.msra.mxu0 0.0
    %3030 = vmatprep.subr.mxu0 0.0
    %3031 = vmatpush1.msra.mxu0 0.0
    %3032 = vmatprep.subr.mxu0 0.0
    %3033 = vmatpush1.msra.mxu0 0.0
    %3034 = vmatprep.subr.mxu0 0.0
    %3035 = vmatpush1.msra.mxu0 0.0
    %3036 = vmatprep.subr.mxu0 0.0
    %3037 = vmatpush1.msra.mxu0 0.0
    %3038 = vmatprep.subr.mxu0 0.0
    %3039 = vmatpush1.msra.mxu0 0.0
    %3040 = vmatprep.subr.mxu0 0.0
    %3041 = vmatpush1.msra.mxu0 0.0
    %3042 = vmatprep.subr.mxu0 0.0
    %3043 = vmatpush1.msra.mxu0 0.0
    %3044 = vmatprep.subr.mxu0 0.0
    %3045 = vmatpush1.msra.mxu0 0.0
    %3046 = vmatprep.subr.mxu0 0.0
    %3047 = vmatpush1.msra.mxu0 0.0
    %3048 = vmatprep.subr.mxu0 0.0
    %3049 = vmatpush1.msra.mxu0 0.0
    %3050 = vmatprep.subr.mxu0 0.0
    %3051 = vmatpush1.msra.mxu0 0.0
    %3052 = vmatprep.subr.mxu0 0.0
    %3053 = vmatpush1.msra.mxu0 0.0
    %3054 = vmatprep.subr.mxu0 0.0
    %3055 = vmatpush1.msra.mxu0 0.0
    %3056 = vmatprep.subr.mxu0 0.0
    %3057 = vmatpush1.msra.mxu0 0.0
    %3058 = vmatprep.subr.mxu0 0.0
    %3059 = vmatpush1.msra.mxu0 0.0
    %3060 = vmatprep.subr.mxu0 0.0
    %3061 = vmatpush1.msra.mxu0 0.0
    %3062 = vmatprep.subr.mxu0 0.0
    %3063 = vmatpush1.msra.mxu0 0.0
    %3064 = vmatprep.subr.mxu0 0.0
    %3065 = vmatpush1.msra.mxu0 0.0
    %3066 = vmatprep.subr.mxu0 0.0
    %3067 = vmatpush1.msra.mxu0 0.0
    %3068 = vmatprep.subr.mxu0 0.0
    %3069 = vmatpush1.msra.mxu0 0.0
    %3070 = vmatprep.subr.mxu0 0.0
    %3071 = vmatpush1.msra.mxu0 0.0
    %3072 = vmatprep.subr.mxu0 0.0
    %3073 = vmatpush1.msra.mxu0 0.0
    %3074 = vmatprep.subr.mxu0 0.0
    %3075 = vmatpush1.msra.mxu0 0.0
    %3076 = vmatprep.subr.mxu0 0.0
    %3077 = vmatpush1.msra.mxu0 0.0
    %3078 = vmatprep.subr.mxu0 0.0
    %3079 = vmatpush1.msra.mxu0 0.0
    %3080 = vmatprep.subr.mxu0 0.0
    %3081 = vmatpush1.msra.mxu0 0.0
    %3082 = vmatprep.subr.mxu0 0.0
    %3083 = vmatpush1.msra.mxu0 0.0
    %3084 = vmatprep.subr.mxu0 0.0
    %3085 = vmatpush1.msra.mxu0 0.0
    %3086 = vmatprep.mubr.f32.mxu0 0.0
    %3087 = vmatmul.mubr.f32.gmra.mrb[0].mxu0 %v3017
    %v3088 = vpop.f32.mrb[0].mxu0
    %v3089 = vadd.f32 0.0, %v3088
    %v3090 = vpop.f32.mrb[0].mxu0
    %3091 = vmatprep.mubr.f32.mxu0 0.0
    %3092 = vmatmul.mubr.f32.gmra.mrb[0].mxu0 %v3020
    %v3093 = vpop.f32.mrb[0].mxu0
    %v3094 = vadd.f32 0.0, %v3093
    %v3095 = vpop.f32.mrb[0].mxu0
    %3096 = vdwg.mxu0
    %3101 = vrot.lane.b32.xlu0 %v2186, 8
    %v3102 = vpop.permute.xlu0 %3101
    %3103 = vrot.lane.b32.xlu0 %v2191, 8
    %v3104 = vpop.permute.xlu0 %3103
    %3105 = vrot.lane.b32.xlu0 %v2273, 8
    %v3106 = vpop.permute.xlu0 %3105
    %3107 = vrot.lane.b32.xlu0 %v2278, 8
    %v3108 = vpop.permute.xlu0 %3107
    %3117 = vrot.lane.b32.xlu0 %v2594, 16
    %v3118 = vpop.permute.xlu0 %3117
    %3119 = vrot.lane.b32.xlu0 %v2599, 16
    %v3120 = vpop.permute.xlu0 %3119
    %3121 = vrot.lane.b32.xlu0 %v2681, 16
    %v3122 = vpop.permute.xlu0 %3121
    %3123 = vrot.lane.b32.xlu0 %v2686, 16
    %v3124 = vpop.permute.xlu0 %3123
    %3133 = vrot.lane.b32.xlu0 %v3002, 24
    %v3134 = vpop.permute.xlu0 %3133
    %3135 = vrot.lane.b32.xlu0 %v3007, 24
    %v3136 = vpop.permute.xlu0 %3135
    %3137 = vrot.lane.b32.xlu0 %v3089, 24
    %v3138 = vpop.permute.xlu0 %3137
    %3139 = vrot.lane.b32.xlu0 %v3094, 24
    %v3140 = vpop.permute.xlu0 %3139
    %v3145 = vsel %vm205, %v1778, %v3102
    %v3146 = vsel %vm205, %v1783, %v3104
    %v3147 = vsel %vm205, %v1865, %v3106
    %v3148 = vsel %vm205, %v1870, %v3108
    %v3149 = vsel %vm342, %v3145, %v3118
    %v3150 = vsel %vm342, %v3146, %v3120
    %v3151 = vsel %vm342, %v3147, %v3122
    %v3152 = vsel %vm342, %v3148, %v3124
    %vm3153 = vcmask 195584
    %v3154 = vsel %vm3153, %v3149, %v3134
    %v3155 = vsel %vm3153, %v3150, %v3136
    %v3156 = vsel %vm3153, %v3151, %v3138
    %v3157 = vsel %vm3153, %v3152, %v3140
    %v3158 = vld [vmem:[%s8] sm:$0xff]
    %v3159 = vld [vmem:[%s8 + $0x8] sm:$0xff]
    %v3160 = vld [vmem:[%s8 + $0x10] sm:$0xff]
    %v3161 = vld [vmem:[%s8 + $0x18] sm:$0xff]
    %v3163 = vsel %vm444, %v3154, 0
    %v3166 = vsel %vm444, %v3155, 0
    %v3169 = vsel %vm444, %v3156, 0
    %v3172 = vsel %vm444, %v3157, 0
    %3174 = vmatprep.subr.mxu0 0.0
    %3175 = vmatpush1.msra.mxu0 %v3158
    %3176 = vmatprep.subr.mxu0 0.0
    %3177 = vmatpush1.msra.mxu0 %v3159
    %3178 = vmatprep.subr.mxu0 0.0
    %3179 = vmatpush1.msra.mxu0 %v3160
    %3180 = vmatprep.subr.mxu0 0.0
    %3181 = vmatpush1.msra.mxu0 %v3161
    %3182 = vmatprep.subr.mxu0 0.0
    %3183 = vmatpush1.msra.mxu0 0.0
    %3184 = vmatprep.subr.mxu0 0.0
    %3185 = vmatpush1.msra.mxu0 0.0
    %3186 = vmatprep.subr.mxu0 0.0
    %3187 = vmatpush1.msra.mxu0 0.0
    %3188 = vmatprep.subr.mxu0 0.0
    %3189 = vmatpush1.msra.mxu0 0.0
    %3190 = vmatprep.subr.mxu0 0.0
    %3191 = vmatpush1.msra.mxu0 0.0
    %3192 = vmatprep.subr.mxu0 0.0
    %3193 = vmatpush1.msra.mxu0 0.0
    %3194 = vmatprep.subr.mxu0 0.0
    %3195 = vmatpush1.msra.mxu0 0.0
    %3196 = vmatprep.subr.mxu0 0.0
    %3197 = vmatpush1.msra.mxu0 0.0
    %3198 = vmatprep.subr.mxu0 0.0
    %3199 = vmatpush1.msra.mxu0 0.0
    %3200 = vmatprep.subr.mxu0 0.0
    %3201 = vmatpush1.msra.mxu0 0.0
    %3202 = vmatprep.subr.mxu0 0.0
    %3203 = vmatpush1.msra.mxu0 0.0
    %3204 = vmatprep.subr.mxu0 0.0
    %3205 = vmatpush1.msra.mxu0 0.0
    %3206 = vmatprep.subr.mxu0 0.0
    %3207 = vmatpush1.msra.mxu0 0.0
    %3208 = vmatprep.subr.mxu0 0.0
    %3209 = vmatpush1.msra.mxu0 0.0
    %3210 = vmatprep.subr.mxu0 0.0
    %3211 = vmatpush1.msra.mxu0 0.0
    %3212 = vmatprep.subr.mxu0 0.0
    %3213 = vmatpush1.msra.mxu0 0.0
    %3214 = vmatprep.subr.mxu0 0.0
    %3215 = vmatpush1.msra.mxu0 0.0
    %3216 = vmatprep.subr.mxu0 0.0
    %3217 = vmatpush1.msra.mxu0 0.0
    %3218 = vmatprep.subr.mxu0 0.0
    %3219 = vmatpush1.msra.mxu0 0.0
    %3220 = vmatprep.subr.mxu0 0.0
    %3221 = vmatpush1.msra.mxu0 0.0
    %3222 = vmatprep.subr.mxu0 0.0
    %3223 = vmatpush1.msra.mxu0 0.0
    %3224 = vmatprep.subr.mxu0 0.0
    %3225 = vmatpush1.msra.mxu0 0.0
    %3226 = vmatprep.subr.mxu0 0.0
    %3227 = vmatpush1.msra.mxu0 0.0
    %3228 = vmatprep.subr.mxu0 0.0
    %3229 = vmatpush1.msra.mxu0 0.0
    %3230 = vmatprep.subr.mxu0 0.0
    %3231 = vmatpush1.msra.mxu0 0.0
    %3232 = vmatprep.subr.mxu0 0.0
    %3233 = vmatpush1.msra.mxu0 0.0
    %3234 = vmatprep.subr.mxu0 0.0
    %3235 = vmatpush1.msra.mxu0 0.0
    %3236 = vmatprep.subr.mxu0 0.0
    %3237 = vmatpush1.msra.mxu0 0.0
    %3238 = vmatprep.mubr.f32.mxu0 0.0
    %3239 = vmatmul.mubr.f32.gmra.mrb[0].mxu0 %v3163
    %v3240 = vpop.f32.mrb[0].mxu0
    %v3241 = vadd.f32 0.0, %v3240
    %v3242 = vpop.f32.mrb[0].mxu0
    %3243 = vmatprep.mubr.f32.mxu0 0.0
    %3244 = vmatmul.mubr.f32.gmra.mrb[0].mxu0 %v3166
    %v3245 = vpop.f32.mrb[0].mxu0
    %v3246 = vadd.f32 0.0, %v3245
    %v3247 = vpop.f32.mrb[0].mxu0
    %3248 = vmatprep.mubr.f32.mxu0 0.0
    %3249 = vmatmul.mubr.f32.gmra.mrb[0].mxu0 %v3169
    %v3250 = vpop.f32.mrb[0].mxu0
    %v3251 = vadd.f32 0.0, %v3250
    %v3252 = vpop.f32.mrb[0].mxu0
    %3253 = vmatprep.mubr.f32.mxu0 0.0
    %3254 = vmatmul.mubr.f32.gmra.mrb[0].mxu0 %v3172
    %v3255 = vpop.f32.mrb[0].mxu0
    %v3256 = vadd.f32 0.0, %v3255
    %v3257 = vpop.f32.mrb[0].mxu0
    %3258 = vdwg.mxu0
    %v3259 = vadd.f32 %v285, %v3241
    %v3260 = vadd.f32 %v290, %v3246
    %v3261 = vadd.f32 %v295, %v3251
    %v3262 = vadd.f32 %v300, %v3256
    %v3263 = vsel %vm444, %v3259, 0.0
    %3264 = vadd.xlane.f32.xlu0 %v3263
    %v3265 = vpop.xlane.xlu0 %3264
    %v3266 = vsel %vm444, %v3260, 0.0
    %3267 = vadd.xlane.f32.xlu0 %v3266
    %v3268 = vpop.xlane.xlu0 %3267
    %v3269 = vsel %vm444, %v3261, 0.0
    %3270 = vadd.xlane.f32.xlu0 %v3269
    %v3271 = vpop.xlane.xlu0 %3270
    %v3272 = vsel %vm444, %v3262, 0.0
    %3273 = vadd.xlane.f32.xlu0 %v3272
    %v3274 = vpop.xlane.xlu0 %3273
    %v3275 = vrcp.pop 32.0
    %v3276 = vmul.f32 %v3265, %v3275
    %v3277 = vmul.f32 %v3268, %v3275
    %v3278 = vmul.f32 %v3271, %v3275
    %v3279 = vmul.f32 %v3274, %v3275
    %v3280 = vsub.f32 %v3259, %v3276
    %v3281 = vsub.f32 %v3260, %v3277
    %v3282 = vsub.f32 %v3261, %v3278
    %v3283 = vsub.f32 %v3262, %v3279
    %v3284 = vmul.f32 %v3280, %v3280
    %v3285 = vmul.f32 %v3281, %v3281
    %v3286 = vmul.f32 %v3282, %v3282
    %v3287 = vmul.f32 %v3283, %v3283
    %v3288 = vsel %vm444, %v3284, 0.0
    %3289 = vadd.xlane.f32.xlu0 %v3288
    %v3290 = vpop.xlane.xlu0 %3289
    %v3291 = vsel %vm444, %v3285, 0.0
    %3292 = vadd.xlane.f32.xlu0 %v3291
    %v3293 = vpop.xlane.xlu0 %3292
    %v3294 = vsel %vm444, %v3286, 0.0
    %3295 = vadd.xlane.f32.xlu0 %v3294
    %v3296 = vpop.xlane.xlu0 %3295
    %v3297 = vsel %vm444, %v3287, 0.0
    %3298 = vadd.xlane.f32.xlu0 %v3297
    %v3299 = vpop.xlane.xlu0 %3298
    %v3300 = vmul.f32 %v3290, %v3275
    %v3301 = vmul.f32 %v3293, %v3275
    %v3302 = vmul.f32 %v3296, %v3275
    %v3303 = vmul.f32 %v3299, %v3275
    %v3304 = vadd.f32 %v3300, 1e-05
    %v3305 = vadd.f32 %v3301, 1e-05
    %v3306 = vadd.f32 %v3302, 1e-05
    %v3307 = vadd.f32 %v3303, 1e-05
    %v3308 = vrsqrt.pop %v3304
    %v3309 = vrsqrt.pop %v3305
    %v3310 = vrsqrt.pop %v3306
    %v3311 = vrsqrt.pop %v3307
    %v3312 = vmul.f32 %v3280, %v3308
    %v3313 = vmul.f32 %v3281, %v3309
    %v3314 = vmul.f32 %v3282, %v3310
    %v3315 = vmul.f32 %v3283, %v3311
    %v3316 = vlaneseq
    %v3317 = vshrl.u32 %v3316, 7
    %v3318 = vsub.s32 0, %v3317
    %v3319 = vrot.slane %v1367, %v3318
    %v3320 = vmul.f32 %v3312, %v3319
    %v3321 = vmul.f32 %v3313, %v3319
    %v3322 = vmul.f32 %v3314, %v3319
    %v3323 = vmul.f32 %v3315, %v3319
    %v3324 = vlaneseq
    %v3325 = vshrl.u32 %v3324, 7
    %v3326 = vsub.s32 1, %v3325
    %v3327 = vrot.slane %v1367, %v3326
    %v3328 = vadd.f32 %v3320, %v3327
    %v3329 = vadd.f32 %v3321, %v3327
    %v3330 = vadd.f32 %v3322, %v3327
    %v3331 = vadd.f32 %v3323, %v3327
    %v3332 = vld [vmem:[%s10] sm:$0xff]
    %v3333 = vld [vmem:[%s10 + $0x8] sm:$0xff]
    %v3334 = vld [vmem:[%s10 + $0x10] sm:$0xff]
    %v3335 = vld [vmem:[%s10 + $0x18] sm:$0xff]
    %v3336 = vld [vmem:[#allocation13] sm:$0x1]
    %v3338 = vlaneseq
    %v3339 = vshrl.u32 %v3338, 7
    %v3340 = vsub.s32 0, %v3339
    %v3341 = vrot.slane %v3336, %v3340
    %v3344 = vsel %vm444, %v3328, 0
    %v3347 = vsel %vm444, %v3329, 0
    %v3350 = vsel %vm444, %v3330, 0
    %v3353 = vsel %vm444, %v3331, 0
    %3355 = vmatprep.subr.mxu0 0.0
    %3356 = vmatpush1.msra.mxu0 %v3332
    %3357 = vmatprep.subr.mxu0 0.0
    %3358 = vmatpush1.msra.mxu0 %v3333
    %3359 = vmatprep.subr.mxu0 0.0
    %3360 = vmatpush1.msra.mxu0 %v3334
    %3361 = vmatprep.subr.mxu0 0.0
    %3362 = vmatpush1.msra.mxu0 %v3335
    %3363 = vmatprep.subr.mxu0 0.0
    %3364 = vmatpush1.msra.mxu0 0.0
    %3365 = vmatprep.subr.mxu0 0.0
    %3366 = vmatpush1.msra.mxu0 0.0
    %3367 = vmatprep.subr.mxu0 0.0
    %3368 = vmatpush1.msra.mxu0 0.0
    %3369 = vmatprep.subr.mxu0 0.0
    %3370 = vmatpush1.msra.mxu0 0.0
    %3371 = vmatprep.subr.mxu0 0.0
    %3372 = vmatpush1.msra.mxu0 0.0
    %3373 = vmatprep.subr.mxu0 0.0
    %3374 = vmatpush1.msra.mxu0 0.0
    %3375 = vmatprep.subr.mxu0 0.0
    %3376 = vmatpush1.msra.mxu0 0.0
    %3377 = vmatprep.subr.mxu0 0.0
    %3378 = vmatpush1.msra.mxu0 0.0
    %3379 = vmatprep.subr.mxu0 0.0
    %3380 = vmatpush1.msra.mxu0 0.0
    %3381 = vmatprep.subr.mxu0 0.0
    %3382 = vmatpush1.msra.mxu0 0.0
    %3383 = vmatprep.subr.mxu0 0.0
    %3384 = vmatpush1.msra.mxu0 0.0
    %3385 = vmatprep.subr.mxu0 0.0
    %3386 = vmatpush1.msra.mxu0 0.0
    %3387 = vmatprep.subr.mxu0 0.0
    %3388 = vmatpush1.msra.mxu0 0.0
    %3389 = vmatprep.subr.mxu0 0.0
    %3390 = vmatpush1.msra.mxu0 0.0
    %3391 = vmatprep.subr.mxu0 0.0
    %3392 = vmatpush1.msra.mxu0 0.0
    %3393 = vmatprep.subr.mxu0 0.0
    %3394 = vmatpush1.msra.mxu0 0.0
    %3395 = vmatprep.subr.mxu0 0.0
    %3396 = vmatpush1.msra.mxu0 0.0
    %3397 = vmatprep.subr.mxu0 0.0
    %3398 = vmatpush1.msra.mxu0 0.0
    %3399 = vmatprep.subr.mxu0 0.0
    %3400 = vmatpush1.msra.mxu0 0.0
    %3401 = vmatprep.subr.mxu0 0.0
    %3402 = vmatpush1.msra.mxu0 0.0
    %3403 = vmatprep.subr.mxu0 0.0
    %3404 = vmatpush1.msra.mxu0 0.0
    %3405 = vmatprep.subr.mxu0 0.0
    %3406 = vmatpush1.msra.mxu0 0.0
    %3407 = vmatprep.subr.mxu0 0.0
    %3408 = vmatpush1.msra.mxu0 0.0
    %3409 = vmatprep.subr.mxu0 0.0
    %3410 = vmatpush1.msra.mxu0 0.0
    %3411 = vmatprep.subr.mxu0 0.0
    %3412 = vmatpush1.msra.mxu0 0.0
    %3413 = vmatprep.subr.mxu0 0.0
    %3414 = vmatpush1.msra.mxu0 0.0
    %3415 = vmatprep.subr.mxu0 0.0
    %3416 = vmatpush1.msra.mxu0 0.0
    %3417 = vmatprep.subr.mxu0 0.0
    %3418 = vmatpush1.msra.mxu0 0.0
    %3419 = vmatprep.mubr.f32.mxu0 0.0
    %3420 = vmatmul.mubr.f32.gmra.mrb[0].mxu0 %v3344
    %v3421 = vpop.f32.mrb[0].mxu0
    %v3422 = vadd.f32 %v3341, %v3421
    %v3423 = vpop.f32.mrb[0].mxu0
    %3424 = vmatprep.mubr.f32.mxu0 0.0
    %3425 = vmatmul.mubr.f32.gmra.mrb[0].mxu0 %v3347
    %v3426 = vpop.f32.mrb[0].mxu0
    %v3427 = vadd.f32 %v3341, %v3426
    %v3428 = vpop.f32.mrb[0].mxu0
    %3429 = vmatprep.mubr.f32.mxu0 0.0
    %3430 = vmatmul.mubr.f32.gmra.mrb[0].mxu0 %v3350
    %v3431 = vpop.f32.mrb[0].mxu0
    %v3432 = vadd.f32 %v3341, %v3431
    %v3433 = vpop.f32.mrb[0].mxu0
    %3434 = vmatprep.mubr.f32.mxu0 0.0
    %3435 = vmatmul.mubr.f32.gmra.mrb[0].mxu0 %v3353
    %v3436 = vpop.f32.mrb[0].mxu0
    %v3437 = vadd.f32 %v3341, %v3436
    %v3438 = vpop.f32.mrb[0].mxu0
    %3439 = vdwg.mxu0
    %v3440 = vmax.f32 %v3422, 0.0
    %v3441 = vmax.f32 %v3427, 0.0
    %v3442 = vmax.f32 %v3432, 0.0
    %v3443 = vmax.f32 %v3437, 0.0
    %v3444 = vld [vmem:[%s12] sm:$0xff]
    %v3445 = vld [vmem:[%s12 + $0x8] sm:$0xff]
    %v3446 = vld [vmem:[%s12 + $0x10] sm:$0xff]
    %v3447 = vld [vmem:[%s12 + $0x18] sm:$0xff]
    %v3448 = vld [vmem:[%s12 + $0x20] sm:$0xff]
    %v3449 = vld [vmem:[%s12 + $0x28] sm:$0xff]
    %v3450 = vld [vmem:[%s12 + $0x30] sm:$0xff]
    %v3451 = vld [vmem:[%s12 + $0x38] sm:$0xff]
    %v3452 = vld [vmem:[#allocation14] sm:$0x1]
    %v3454 = vlaneseq
    %v3455 = vshrl.u32 %v3454, 7
    %v3456 = vsub.s32 0, %v3455
    %v3457 = vrot.slane %v3452, %v3456
    %vm3459 = vcmask 523264
    %v3461 = vsel %vm3459, %v3440, 0
    %v3464 = vsel %vm3459, %v3441, 0
    %v3467 = vsel %vm3459, %v3442, 0
    %v3470 = vsel %vm3459, %v3443, 0
    %3472 = vmatprep.subr.mxu0 0.0
    %3473 = vmatpush1.msra.mxu0 %v3444
    %3474 = vmatprep.subr.mxu0 0.0
    %3475 = vmatpush1.msra.mxu0 %v3445
    %3476 = vmatprep.subr.mxu0 0.0
    %3477 = vmatpush1.msra.mxu0 %v3446
    %3478 = vmatprep.subr.mxu0 0.0
    %3479 = vmatpush1.msra.mxu0 %v3447
    %3480 = vmatprep.subr.mxu0 0.0
    %3481 = vmatpush1.msra.mxu0 %v3448
    %3482 = vmatprep.subr.mxu0 0.0
    %3483 = vmatpush1.msra.mxu0 %v3449
    %3484 = vmatprep.subr.mxu0 0.0
    %3485 = vmatpush1.msra.mxu0 %v3450
    %3486 = vmatprep.subr.mxu0 0.0
    %3487 = vmatpush1.msra.mxu0 %v3451
    %3488 = vmatprep.subr.mxu0 0.0
    %3489 = vmatpush1.msra.mxu0 0.0
    %3490 = vmatprep.subr.mxu0 0.0
    %3491 = vmatpush1.msra.mxu0 0.0
    %3492 = vmatprep.subr.mxu0 0.0
    %3493 = vmatpush1.msra.mxu0 0.0
    %3494 = vmatprep.subr.mxu0 0.0
    %3495 = vmatpush1.msra.mxu0 0.0
    %3496 = vmatprep.subr.mxu0 0.0
    %3497 = vmatpush1.msra.mxu0 0.0
    %3498 = vmatprep.subr.mxu0 0.0
    %3499 = vmatpush1.msra.mxu0 0.0
    %3500 = vmatprep.subr.mxu0 0.0
    %3501 = vmatpush1.msra.mxu0 0.0
    %3502 = vmatprep.subr.mxu0 0.0
    %3503 = vmatpush1.msra.mxu0 0.0
    %3504 = vmatprep.subr.mxu0 0.0
    %3505 = vmatpush1.msra.mxu0 0.0
    %3506 = vmatprep.subr.mxu0 0.0
    %3507 = vmatpush1.msra.mxu0 0.0
    %3508 = vmatprep.subr.mxu0 0.0
    %3509 = vmatpush1.msra.mxu0 0.0
    %3510 = vmatprep.subr.mxu0 0.0
    %3511 = vmatpush1.msra.mxu0 0.0
    %3512 = vmatprep.subr.mxu0 0.0
    %3513 = vmatpush1.msra.mxu0 0.0
    %3514 = vmatprep.subr.mxu0 0.0
    %3515 = vmatpush1.msra.mxu0 0.0
    %3516 = vmatprep.subr.mxu0 0.0
    %3517 = vmatpush1.msra.mxu0 0.0
    %3518 = vmatprep.subr.mxu0 0.0
    %3519 = vmatpush1.msra.mxu0 0.0
    %3520 = vmatprep.subr.mxu0 0.0
    %3521 = vmatpush1.msra.mxu0 0.0
    %3522 = vmatprep.subr.mxu0 0.0
    %3523 = vmatpush1.msra.mxu0 0.0
    %3524 = vmatprep.subr.mxu0 0.0
    %3525 = vmatpush1.msra.mxu0 0.0
    %3526 = vmatprep.subr.mxu0 0.0
    %3527 = vmatpush1.msra.mxu0 0.0
    %3528 = vmatprep.subr.mxu0 0.0
    %3529 = vmatpush1.msra.mxu0 0.0
    %3530 = vmatprep.subr.mxu0 0.0
    %3531 = vmatpush1.msra.mxu0 0.0
    %3532 = vmatprep.subr.mxu0 0.0
    %3533 = vmatpush1.msra.mxu0 0.0
    %3534 = vmatprep.subr.mxu0 0.0
    %3535 = vmatpush1.msra.mxu0 0.0
    %3536 = vmatprep.mubr.f32.mxu0 0.0
    %3537 = vmatmul.mubr.f32.gmra.mrb[0].mxu0 %v3461
    %v3538 = vpop.f32.mrb[0].mxu0
    %v3539 = vadd.f32 %v3457, %v3538
    %v3540 = vpop.f32.mrb[0].mxu0
    %3541 = vmatprep.mubr.f32.mxu0 0.0
    %3542 = vmatmul.mubr.f32.gmra.mrb[0].mxu0 %v3464
    %v3543 = vpop.f32.mrb[0].mxu0
    %v3544 = vadd.f32 %v3457, %v3543
    %v3545 = vpop.f32.mrb[0].mxu0
    %3546 = vmatprep.mubr.f32.mxu0 0.0
    %3547 = vmatmul.mubr.f32.gmra.mrb[0].mxu0 %v3467
    %v3548 = vpop.f32.mrb[0].mxu0
    %v3549 = vadd.f32 %v3457, %v3548
    %v3550 = vpop.f32.mrb[0].mxu0
    %3551 = vmatprep.mubr.f32.mxu0 0.0
    %3552 = vmatmul.mubr.f32.gmra.mrb[0].mxu0 %v3470
    %v3553 = vpop.f32.mrb[0].mxu0
    %v3554 = vadd.f32 %v3457, %v3553
    %v3555 = vpop.f32.mrb[0].mxu0
    %3556 = vdwg.mxu0
    %v3557 = vadd.f32 %v3328, %v3539
    %v3558 = vadd.f32 %v3329, %v3544
    %v3559 = vadd.f32 %v3330, %v3549
    %v3560 = vadd.f32 %v3331, %v3554
    %v3561 = vsel %vm444, %v3557, 0.0
    %3562 = vadd.xlane.f32.xlu0 %v3561
    %v3563 = vpop.xlane.xlu0 %3562
    %v3564 = vsel %vm444, %v3558, 0.0
    %3565 = vadd.xlane.f32.xlu0 %v3564
    %v3566 = vpop.xlane.xlu0 %3565
    %v3567 = vsel %vm444, %v3559, 0.0
    %3568 = vadd.xlane.f32.xlu0 %v3567
    %v3569 = vpop.xlane.xlu0 %3568
    %v3570 = vsel %vm444, %v3560, 0.0
    %3571 = vadd.xlane.f32.xlu0 %v3570
    %v3572 = vpop.xlane.xlu0 %3571
    %v3573 = vmul.f32 %v3563, %v3275
    %v3574 = vmul.f32 %v3566, %v3275
    %v3575 = vmul.f32 %v3569, %v3275
    %v3576 = vmul.f32 %v3572, %v3275
    %v3577 = vsub.f32 %v3557, %v3573
    %v3578 = vsub.f32 %v3558, %v3574
    %v3579 = vsub.f32 %v3559, %v3575
    %v3580 = vsub.f32 %v3560, %v3576
    %v3581 = vmul.f32 %v3577, %v3577
    %v3582 = vmul.f32 %v3578, %v3578
    %v3583 = vmul.f32 %v3579, %v3579
    %v3584 = vmul.f32 %v3580, %v3580
    %v3585 = vsel %vm444, %v3581, 0.0
    %3586 = vadd.xlane.f32.xlu0 %v3585
    %v3587 = vpop.xlane.xlu0 %3586
    %v3588 = vsel %vm444, %v3582, 0.0
    %3589 = vadd.xlane.f32.xlu0 %v3588
    %v3590 = vpop.xlane.xlu0 %3589
    %v3591 = vsel %vm444, %v3583, 0.0
    %3592 = vadd.xlane.f32.xlu0 %v3591
    %v3593 = vpop.xlane.xlu0 %3592
    %v3594 = vsel %vm444, %v3584, 0.0
    %3595 = vadd.xlane.f32.xlu0 %v3594
    %v3596 = vpop.xlane.xlu0 %3595
    %v3597 = vmul.f32 %v3587, %v3275
    %v3598 = vmul.f32 %v3590, %v3275
    %v3599 = vmul.f32 %v3593, %v3275
    %v3600 = vmul.f32 %v3596, %v3275
    %v3601 = vadd.f32 %v3597, 1e-05
    %v3602 = vadd.f32 %v3598, 1e-05
    %v3603 = vadd.f32 %v3599, 1e-05
    %v3604 = vadd.f32 %v3600, 1e-05
    %v3605 = vrsqrt.pop %v3601
    %v3606 = vrsqrt.pop %v3602
    %v3607 = vrsqrt.pop %v3603
    %v3608 = vrsqrt.pop %v3604
    %v3609 = vmul.f32 %v3577, %v3605
    %v3610 = vmul.f32 %v3578, %v3606
    %v3611 = vmul.f32 %v3579, %v3607
    %v3612 = vmul.f32 %v3580, %v3608
    %v3613 = vlaneseq
    %v3614 = vshrl.u32 %v3613, 7
    %v3615 = vsub.s32 2, %v3614
    %v3616 = vrot.slane %v1367, %v3615
    %v3617 = vmul.f32 %v3609, %v3616
    %v3618 = vmul.f32 %v3610, %v3616
    %v3619 = vmul.f32 %v3611, %v3616
    %v3620 = vmul.f32 %v3612, %v3616
    %v3621 = vlaneseq
    %v3622 = vshrl.u32 %v3621, 7
    %v3623 = vsub.s32 3, %v3622
    %v3624 = vrot.slane %v1367, %v3623
    %v3625 = vadd.f32 %v3617, %v3624
    %v3626 = vadd.f32 %v3618, %v3624
    %v3627 = vadd.f32 %v3619, %v3624
    %v3628 = vadd.f32 %v3620, %v3624
    %s3629 = scalar_lea.vmem [#allocation11], 4
    %v3630 = vld [vmem:[%s3629] sm:$0xf]
    %s3631 = scalar_lea.vmem %s7, 32
    %v3632 = vld [vmem:[%s3631] sm:$0xff]
    %v3633 = vld [vmem:[%s3631 + $0x8] sm:$0xff]
    %v3634 = vld [vmem:[%s3631 + $0x10] sm:$0xff]
    %v3635 = vld [vmem:[%s3631 + $0x18] sm:$0xff]
    %v3637 = vsel %vm444, %v3625, 0
    %v3640 = vsel %vm444, %v3626, 0
    %v3643 = vsel %vm444, %v3627, 0
    %v3646 = vsel %vm444, %v3628, 0
    %3648 = vmatprep.subr.mxu0 0.0
    %3649 = vmatpush1.msra.mxu0 %v3632
    %3650 = vmatprep.subr.mxu0 0.0
    %3651 = vmatpush1.msra.mxu0 %v3633
    %3652 = vmatprep.subr.mxu0 0.0
    %3653 = vmatpush1.msra.mxu0 %v3634
    %3654 = vmatprep.subr.mxu0 0.0
    %3655 = vmatpush1.msra.mxu0 %v3635
    %3656 = vmatprep.subr.mxu0 0.0
    %3657 = vmatpush1.msra.mxu0 0.0
    %3658 = vmatprep.subr.mxu0 0.0
    %3659 = vmatpush1.msra.mxu0 0.0
    %3660 = vmatprep.subr.mxu0 0.0
    %3661 = vmatpush1.msra.mxu0 0.0
    %3662 = vmatprep.subr.mxu0 0.0
    %3663 = vmatpush1.msra.mxu0 0.0
    %3664 = vmatprep.subr.mxu0 0.0
    %3665 = vmatpush1.msra.mxu0 0.0
    %3666 = vmatprep.subr.mxu0 0.0
    %3667 = vmatpush1.msra.mxu0 0.0
    %3668 = vmatprep.subr.mxu0 0.0
    %3669 = vmatpush1.msra.mxu0 0.0
    %3670 = vmatprep.subr.mxu0 0.0
    %3671 = vmatpush1.msra.mxu0 0.0
    %3672 = vmatprep.subr.mxu0 0.0
    %3673 = vmatpush1.msra.mxu0 0.0
    %3674 = vmatprep.subr.mxu0 0.0
    %3675 = vmatpush1.msra.mxu0 0.0
    %3676 = vmatprep.subr.mxu0 0.0
    %3677 = vmatpush1.msra.mxu0 0.0
    %3678 = vmatprep.subr.mxu0 0.0
    %3679 = vmatpush1.msra.mxu0 0.0
    %3680 = vmatprep.subr.mxu0 0.0
    %3681 = vmatpush1.msra.mxu0 0.0
    %3682 = vmatprep.subr.mxu0 0.0
    %3683 = vmatpush1.msra.mxu0 0.0
    %3684 = vmatprep.subr.mxu0 0.0
    %3685 = vmatpush1.msra.mxu0 0.0
    %3686 = vmatprep.subr.mxu0 0.0
    %3687 = vmatpush1.msra.mxu0 0.0
    %3688 = vmatprep.subr.mxu0 0.0
    %3689 = vmatpush1.msra.mxu0 0.0
    %3690 = vmatprep.subr.mxu0 0.0
    %3691 = vmatpush1.msra.mxu0 0.0
    %3692 = vmatprep.subr.mxu0 0.0
    %3693 = vmatpush1.msra.mxu0 0.0
    %3694 = vmatprep.subr.mxu0 0.0
    %3695 = vmatpush1.msra.mxu0 0.0
    %3696 = vmatprep.subr.mxu0 0.0
    %3697 = vmatpush1.msra.mxu0 0.0
    %3698 = vmatprep.subr.mxu0 0.0
    %3699 = vmatpush1.msra.mxu0 0.0
    %3700 = vmatprep.subr.mxu0 0.0
    %3701 = vmatpush1.msra.mxu0 0.0
    %3702 = vmatprep.subr.mxu0 0.0
    %3703 = vmatpush1.msra.mxu0 0.0
    %3704 = vmatprep.subr.mxu0 0.0
    %3705 = vmatpush1.msra.mxu0 0.0
    %3706 = vmatprep.subr.mxu0 0.0
    %3707 = vmatpush1.msra.mxu0 0.0
    %3708 = vmatprep.subr.mxu0 0.0
    %3709 = vmatpush1.msra.mxu0 0.0
    %3710 = vmatprep.subr.mxu0 0.0
    %3711 = vmatpush1.msra.mxu0 0.0
    %3712 = vmatprep.mubr.f32.mxu0 0.0
    %3713 = vmatmul.mubr.f32.gmra.mrb[0].mxu0 %v3637
    %v3714 = vpop.f32.mrb[0].mxu0
    %v3715 = vadd.f32 0.0, %v3714
    %v3716 = vpop.f32.mrb[0].mxu0
    %3717 = vmatprep.mubr.f32.mxu0 0.0
    %3718 = vmatmul.mubr.f32.gmra.mrb[0].mxu0 %v3640
    %v3719 = vpop.f32.mrb[0].mxu0
    %v3720 = vadd.f32 0.0, %v3719
    %v3721 = vpop.f32.mrb[0].mxu0
    %3722 = vmatprep.mubr.f32.mxu0 0.0
    %3723 = vmatmul.mubr.f32.gmra.mrb[0].mxu0 %v3643
    %v3724 = vpop.f32.mrb[0].mxu0
    %v3725 = vadd.f32 0.0, %v3724
    %v3726 = vpop.f32.mrb[0].mxu0
    %3727 = vmatprep.mubr.f32.mxu0 0.0
    %3728 = vmatmul.mubr.f32.gmra.mrb[0].mxu0 %v3646
    %v3729 = vpop.f32.mrb[0].mxu0
    %v3730 = vadd.f32 0.0, %v3729
    %v3731 = vpop.f32.mrb[0].mxu0
    %3732 = vdwg.mxu0
    %3735 = vrot.lane.b32.xlu0 %v3715, 96
    %v3736 = vpop.permute.xlu0 %3735
    %3737 = vrot.lane.b32.xlu0 %v3720, 96
    %v3738 = vpop.permute.xlu0 %3737
    %v3739 = vsel %vm205, %v3715, 0
    %v3741 = vsel %vm205, %v3720, 0
    %v3743 = vsel %vm205, %v3736, 0
    %v3745 = vsel %vm205, %v3738, 0
    %3747 = vmatprep.subr.mxu0 0.0
    %3748 = vmatpush1.xpose.msra.mxu0 %v3743
    %3749 = vmatprep.subr.mxu0 0.0
    %3750 = vmatpush1.xpose.msra.mxu0 %v3745
    %3751 = vmatprep.subr.mxu0 0.0
    %3752 = vmatpush1.xpose.msra.mxu0 0.0
    %3753 = vmatprep.subr.mxu0 0.0
    %3754 = vmatpush1.xpose.msra.mxu0 0.0
    %3755 = vmatprep.subr.mxu0 0.0
    %3756 = vmatpush1.xpose.msra.mxu0 0.0
    %3757 = vmatprep.subr.mxu0 0.0
    %3758 = vmatpush1.xpose.msra.mxu0 0.0
    %3759 = vmatprep.subr.mxu0 0.0
    %3760 = vmatpush1.xpose.msra.mxu0 0.0
    %3761 = vmatprep.subr.mxu0 0.0
    %3762 = vmatpush1.xpose.msra.mxu0 0.0
    %3763 = vmatprep.subr.mxu0 0.0
    %3764 = vmatpush1.xpose.msra.mxu0 0.0
    %3765 = vmatprep.subr.mxu0 0.0
    %3766 = vmatpush1.xpose.msra.mxu0 0.0
    %3767 = vmatprep.subr.mxu0 0.0
    %3768 = vmatpush1.xpose.msra.mxu0 0.0
    %3769 = vmatprep.subr.mxu0 0.0
    %3770 = vmatpush1.xpose.msra.mxu0 0.0
    %3771 = vmatprep.subr.mxu0 0.0
    %3772 = vmatpush1.xpose.msra.mxu0 0.0
    %3773 = vmatprep.subr.mxu0 0.0
    %3774 = vmatpush1.xpose.msra.mxu0 0.0
    %3775 = vmatprep.subr.mxu0 0.0
    %3776 = vmatpush1.xpose.msra.mxu0 0.0
    %3777 = vmatprep.subr.mxu0 0.0
    %3778 = vmatpush1.xpose.msra.mxu0 0.0
    %3779 = vmatprep.subr.mxu0 0.0
    %3780 = vmatpush1.xpose.msra.mxu0 0.0
    %3781 = vmatprep.subr.mxu0 0.0
    %3782 = vmatpush1.xpose.msra.mxu0 0.0
    %3783 = vmatprep.subr.mxu0 0.0
    %3784 = vmatpush1.xpose.msra.mxu0 0.0
    %3785 = vmatprep.subr.mxu0 0.0
    %3786 = vmatpush1.xpose.msra.mxu0 0.0
    %3787 = vmatprep.subr.mxu0 0.0
    %3788 = vmatpush1.xpose.msra.mxu0 0.0
    %3789 = vmatprep.subr.mxu0 0.0
    %3790 = vmatpush1.xpose.msra.mxu0 0.0
    %3791 = vmatprep.subr.mxu0 0.0
    %3792 = vmatpush1.xpose.msra.mxu0 0.0
    %3793 = vmatprep.subr.mxu0 0.0
    %3794 = vmatpush1.xpose.msra.mxu0 0.0
    %3795 = vmatprep.subr.mxu0 0.0
    %3796 = vmatpush1.xpose.msra.mxu0 0.0
    %3797 = vmatprep.subr.mxu0 0.0
    %3798 = vmatpush1.xpose.msra.mxu0 0.0
    %3799 = vmatprep.subr.mxu0 0.0
    %3800 = vmatpush1.xpose.msra.mxu0 0.0
    %3801 = vmatprep.subr.mxu0 0.0
    %3802 = vmatpush1.xpose.msra.mxu0 0.0
    %3803 = vmatprep.subr.mxu0 0.0
    %3804 = vmatpush1.xpose.msra.mxu0 0.0
    %3805 = vmatprep.subr.mxu0 0.0
    %3806 = vmatpush1.xpose.msra.mxu0 0.0
    %3807 = vmatprep.subr.mxu0 0.0
    %3808 = vmatpush1.xpose.msra.mxu0 0.0
    %3809 = vmatprep.subr.mxu0 0.0
    %3810 = vmatpush1.xpose.msra.mxu0 0.0
    %3811 = vmatprep.mubr.f32.mxu0 0.0
    %3812 = vmatmul.mubr.f32.gmra.mrb[0].mxu0 %v3739
    %v3813 = vpop.f32.mrb[0].mxu0
    %v3814 = vadd.f32 0.0, %v3813
    %v3815 = vpop.f32.mrb[0].mxu0
    %3816 = vmatprep.mubr.f32.mxu0 0.0
    %3817 = vmatmul.mubr.f32.gmra.mrb[0].mxu0 %v3741
    %v3818 = vpop.f32.mrb[0].mxu0
    %v3819 = vadd.f32 0.0, %v3818
    %v3820 = vpop.f32.mrb[0].mxu0
    %3821 = vdwg.mxu0
    %3824 = vrot.lane.b32.xlu0 %v3725, 96
    %v3825 = vpop.permute.xlu0 %3824
    %3826 = vrot.lane.b32.xlu0 %v3730, 96
    %v3827 = vpop.permute.xlu0 %3826
    %v3828 = vsel %vm205, %v3725, 0
    %v3830 = vsel %vm205, %v3730, 0
    %v3832 = vsel %vm205, %v3825, 0
    %v3834 = vsel %vm205, %v3827, 0
    %3836 = vmatprep.subr.mxu0 0.0
    %3837 = vmatpush1.xpose.msra.mxu0 %v3832
    %3838 = vmatprep.subr.mxu0 0.0
    %3839 = vmatpush1.xpose.msra.mxu0 %v3834
    %3840 = vmatprep.subr.mxu0 0.0
    %3841 = vmatpush1.xpose.msra.mxu0 0.0
    %3842 = vmatprep.subr.mxu0 0.0
    %3843 = vmatpush1.xpose.msra.mxu0 0.0
    %3844 = vmatprep.subr.mxu0 0.0
    %3845 = vmatpush1.xpose.msra.mxu0 0.0
    %3846 = vmatprep.subr.mxu0 0.0
    %3847 = vmatpush1.xpose.msra.mxu0 0.0
    %3848 = vmatprep.subr.mxu0 0.0
    %3849 = vmatpush1.xpose.msra.mxu0 0.0
    %3850 = vmatprep.subr.mxu0 0.0
    %3851 = vmatpush1.xpose.msra.mxu0 0.0
    %3852 = vmatprep.subr.mxu0 0.0
    %3853 = vmatpush1.xpose.msra.mxu0 0.0
    %3854 = vmatprep.subr.mxu0 0.0
    %3855 = vmatpush1.xpose.msra.mxu0 0.0
    %3856 = vmatprep.subr.mxu0 0.0
    %3857 = vmatpush1.xpose.msra.mxu0 0.0
    %3858 = vmatprep.subr.mxu0 0.0
    %3859 = vmatpush1.xpose.msra.mxu0 0.0
    %3860 = vmatprep.subr.mxu0 0.0
    %3861 = vmatpush1.xpose.msra.mxu0 0.0
    %3862 = vmatprep.subr.mxu0 0.0
    %3863 = vmatpush1.xpose.msra.mxu0 0.0
    %3864 = vmatprep.subr.mxu0 0.0
    %3865 = vmatpush1.xpose.msra.mxu0 0.0
    %3866 = vmatprep.subr.mxu0 0.0
    %3867 = vmatpush1.xpose.msra.mxu0 0.0
    %3868 = vmatprep.subr.mxu0 0.0
    %3869 = vmatpush1.xpose.msra.mxu0 0.0
    %3870 = vmatprep.subr.mxu0 0.0
    %3871 = vmatpush1.xpose.msra.mxu0 0.0
    %3872 = vmatprep.subr.mxu0 0.0
    %3873 = vmatpush1.xpose.msra.mxu0 0.0
    %3874 = vmatprep.subr.mxu0 0.0
    %3875 = vmatpush1.xpose.msra.mxu0 0.0
    %3876 = vmatprep.subr.mxu0 0.0
    %3877 = vmatpush1.xpose.msra.mxu0 0.0
    %3878 = vmatprep.subr.mxu0 0.0
    %3879 = vmatpush1.xpose.msra.mxu0 0.0
    %3880 = vmatprep.subr.mxu0 0.0
    %3881 = vmatpush1.xpose.msra.mxu0 0.0
    %3882 = vmatprep.subr.mxu0 0.0
    %3883 = vmatpush1.xpose.msra.mxu0 0.0
    %3884 = vmatprep.subr.mxu0 0.0
    %3885 = vmatpush1.xpose.msra.mxu0 0.0
    %3886 = vmatprep.subr.mxu0 0.0
    %3887 = vmatpush1.xpose.msra.mxu0 0.0
    %3888 = vmatprep.subr.mxu0 0.0
    %3889 = vmatpush1.xpose.msra.mxu0 0.0
    %3890 = vmatprep.subr.mxu0 0.0
    %3891 = vmatpush1.xpose.msra.mxu0 0.0
    %3892 = vmatprep.subr.mxu0 0.0
    %3893 = vmatpush1.xpose.msra.mxu0 0.0
    %3894 = vmatprep.subr.mxu0 0.0
    %3895 = vmatpush1.xpose.msra.mxu0 0.0
    %3896 = vmatprep.subr.mxu0 0.0
    %3897 = vmatpush1.xpose.msra.mxu0 0.0
    %3898 = vmatprep.subr.mxu0 0.0
    %3899 = vmatpush1.xpose.msra.mxu0 0.0
    %3900 = vmatprep.mubr.f32.mxu0 0.0
    %3901 = vmatmul.mubr.f32.gmra.mrb[0].mxu0 %v3828
    %v3902 = vpop.f32.mrb[0].mxu0
    %v3903 = vadd.f32 0.0, %v3902
    %v3904 = vpop.f32.mrb[0].mxu0
    %3905 = vmatprep.mubr.f32.mxu0 0.0
    %3906 = vmatmul.mubr.f32.gmra.mrb[0].mxu0 %v3830
    %v3907 = vpop.f32.mrb[0].mxu0
    %v3908 = vadd.f32 0.0, %v3907
    %v3909 = vpop.f32.mrb[0].mxu0
    %3910 = vdwg.mxu0
    %v3911 = vmul.f32 %v3814, 0.35355338
    %v3912 = vmul.f32 %v3819, 0.35355338
    %v3913 = vmul.f32 %v3903, 0.35355338
    %v3914 = vmul.f32 %v3908, 0.35355338
    %v3915 = vadd.f32 %v3911, %v805
    %v3916 = vadd.f32 %v3912, %v806
    %v3917 = vadd.f32 %v3913, %v807
    %v3918 = vadd.f32 %v3914, %v808
    %v3919 = vsel %vm342, %v3915, -inf
    %3920 = vmax.xlane.f32.xlu0 %v3919
    %v3921 = vpop.xlane.xlu0 %3920
    %v3922 = vsel %vm342, %v3916, -inf
    %3923 = vmax.xlane.f32.xlu0 %v3922
    %v3924 = vpop.xlane.xlu0 %3923
    %v3925 = vsel %vm342, %v3917, -inf
    %3926 = vmax.xlane.f32.xlu0 %v3925
    %v3927 = vpop.xlane.xlu0 %3926
    %v3928 = vsel %vm342, %v3918, -inf
    %3929 = vmax.xlane.f32.xlu0 %v3928
    %v3930 = vpop.xlane.xlu0 %3929
    %v3931 = vsub.f32 %v3915, %v3921
    %v3932 = vsub.f32 %v3916, %v3924
    %v3933 = vsub.f32 %v3917, %v3927
    %v3934 = vsub.f32 %v3918, %v3930
    %v3935 = vmul.f32 %v3931, 1.442695
    %v3936 = vpow.pop %v3935
    %v3937 = vmul.f32 %v3932, 1.442695
    %v3938 = vpow.pop %v3937
    %v3939 = vmul.f32 %v3933, 1.442695
    %v3940 = vpow.pop %v3939
    %v3941 = vmul.f32 %v3934, 1.442695
    %v3942 = vpow.pop %v3941
    %v3943 = vsel %vm342, %v3936, 0.0
    %3944 = vadd.xlane.f32.xlu0 %v3943
    %v3945 = vpop.xlane.xlu0 %3944
    %v3946 = vsel %vm342, %v3938, 0.0
    %3947 = vadd.xlane.f32.xlu0 %v3946
    %v3948 = vpop.xlane.xlu0 %3947
    %v3949 = vsel %vm342, %v3940, 0.0
    %3950 = vadd.xlane.f32.xlu0 %v3949
    %v3951 = vpop.xlane.xlu0 %3950
    %v3952 = vsel %vm342, %v3942, 0.0
    %3953 = vadd.xlane.f32.xlu0 %v3952
    %v3954 = vpop.xlane.xlu0 %3953
    %v3955 = vrcp.pop %v3945
    %v3956 = vrcp.pop %v3948
    %v3957 = vrcp.pop %v3951
    %v3958 = vrcp.pop %v3954
    %v3959 = vmul.f32 %v3936, %v3955
    %v3960 = vmul.f32 %v3938, %v3956
    %v3961 = vmul.f32 %v3940, %v3957
    %v3962 = vmul.f32 %v3942, %v3958
    %3963 = vrot.lane.b32.xlu0 %v3715, 64
    %v3964 = vpop.permute.xlu0 %3963
    %3965 = vrot.lane.b32.xlu0 %v3720, 64
    %v3966 = vpop.permute.xlu0 %3965
    %v3970 = vsel %vm342, %v3959, 0
    %v3973 = vsel %vm342, %v3960, 0
    %3975 = vmatprep.subr.mxu0 0.0
    %3976 = vmatpush1.msra.mxu0 %v3964
    %3977 = vmatprep.subr.mxu0 0.0
    %3978 = vmatpush1.msra.mxu0 %v3966
    %3979 = vmatprep.subr.mxu0 0.0
    %3980 = vmatpush1.msra.mxu0 0.0
    %3981 = vmatprep.subr.mxu0 0.0
    %3982 = vmatpush1.msra.mxu0 0.0
    %3983 = vmatprep.subr.mxu0 0.0
    %3984 = vmatpush1.msra.mxu0 0.0
    %3985 = vmatprep.subr.mxu0 0.0
    %3986 = vmatpush1.msra.mxu0 0.0
    %3987 = vmatprep.subr.mxu0 0.0
    %3988 = vmatpush1.msra.mxu0 0.0
    %3989 = vmatprep.subr.mxu0 0.0
    %3990 = vmatpush1.msra.mxu0 0.0
    %3991 = vmatprep.subr.mxu0 0.0
    %3992 = vmatpush1.msra.mxu0 0.0
    %3993 = vmatprep.subr.mxu0 0.0
    %3994 = vmatpush1.msra.mxu0 0.0
    %3995 = vmatprep.subr.mxu0 0.0
    %3996 = vmatpush1.msra.mxu0 0.0
    %3997 = vmatprep.subr.mxu0 0.0
    %3998 = vmatpush1.msra.mxu0 0.0
    %3999 = vmatprep.subr.mxu0 0.0
    %4000 = vmatpush1.msra.mxu0 0.0
    %4001 = vmatprep.subr.mxu0 0.0
    %4002 = vmatpush1.msra.mxu0 0.0
    %4003 = vmatprep.subr.mxu0 0.0
    %4004 = vmatpush1.msra.mxu0 0.0
    %4005 = vmatprep.subr.mxu0 0.0
    %4006 = vmatpush1.msra.mxu0 0.0
    %4007 = vmatprep.subr.mxu0 0.0
    %4008 = vmatpush1.msra.mxu0 0.0
    %4009 = vmatprep.subr.mxu0 0.0
    %4010 = vmatpush1.msra.mxu0 0.0
    %4011 = vmatprep.subr.mxu0 0.0
    %4012 = vmatpush1.msra.mxu0 0.0
    %4013 = vmatprep.subr.mxu0 0.0
    %4014 = vmatpush1.msra.mxu0 0.0
    %4015 = vmatprep.subr.mxu0 0.0
    %4016 = vmatpush1.msra.mxu0 0.0
    %4017 = vmatprep.subr.mxu0 0.0
    %4018 = vmatpush1.msra.mxu0 0.0
    %4019 = vmatprep.subr.mxu0 0.0
    %4020 = vmatpush1.msra.mxu0 0.0
    %4021 = vmatprep.subr.mxu0 0.0
    %4022 = vmatpush1.msra.mxu0 0.0
    %4023 = vmatprep.subr.mxu0 0.0
    %4024 = vmatpush1.msra.mxu0 0.0
    %4025 = vmatprep.subr.mxu0 0.0
    %4026 = vmatpush1.msra.mxu0 0.0
    %4027 = vmatprep.subr.mxu0 0.0
    %4028 = vmatpush1.msra.mxu0 0.0
    %4029 = vmatprep.subr.mxu0 0.0
    %4030 = vmatpush1.msra.mxu0 0.0
    %4031 = vmatprep.subr.mxu0 0.0
    %4032 = vmatpush1.msra.mxu0 0.0
    %4033 = vmatprep.subr.mxu0 0.0
    %4034 = vmatpush1.msra.mxu0 0.0
    %4035 = vmatprep.subr.mxu0 0.0
    %4036 = vmatpush1.msra.mxu0 0.0
    %4037 = vmatprep.subr.mxu0 0.0
    %4038 = vmatpush1.msra.mxu0 0.0
    %4039 = vmatprep.mubr.f32.mxu0 0.0
    %4040 = vmatmul.mubr.f32.gmra.mrb[0].mxu0 %v3970
    %v4041 = vpop.f32.mrb[0].mxu0
    %v4042 = vadd.f32 0.0, %v4041
    %v4043 = vpop.f32.mrb[0].mxu0
    %4044 = vmatprep.mubr.f32.mxu0 0.0
    %4045 = vmatmul.mubr.f32.gmra.mrb[0].mxu0 %v3973
    %v4046 = vpop.f32.mrb[0].mxu0
    %v4047 = vadd.f32 0.0, %v4046
    %v4048 = vpop.f32.mrb[0].mxu0
    %4049 = vdwg.mxu0
    %4050 = vrot.lane.b32.xlu0 %v3725, 64
    %v4051 = vpop.permute.xlu0 %4050
    %4052 = vrot.lane.b32.xlu0 %v3730, 64
    %v4053 = vpop.permute.xlu0 %4052
    %v4057 = vsel %vm342, %v3961, 0
    %v4060 = vsel %vm342, %v3962, 0
    %4062 = vmatprep.subr.mxu0 0.0
    %4063 = vmatpush1.msra.mxu0 %v4051
    %4064 = vmatprep.subr.mxu0 0.0
    %4065 = vmatpush1.msra.mxu0 %v4053
    %4066 = vmatprep.subr.mxu0 0.0
    %4067 = vmatpush1.msra.mxu0 0.0
    %4068 = vmatprep.subr.mxu0 0.0
    %4069 = vmatpush1.msra.mxu0 0.0
    %4070 = vmatprep.subr.mxu0 0.0
    %4071 = vmatpush1.msra.mxu0 0.0
    %4072 = vmatprep.subr.mxu0 0.0
    %4073 = vmatpush1.msra.mxu0 0.0
    %4074 = vmatprep.subr.mxu0 0.0
    %4075 = vmatpush1.msra.mxu0 0.0
    %4076 = vmatprep.subr.mxu0 0.0
    %4077 = vmatpush1.msra.mxu0 0.0
    %4078 = vmatprep.subr.mxu0 0.0
    %4079 = vmatpush1.msra.mxu0 0.0
    %4080 = vmatprep.subr.mxu0 0.0
    %4081 = vmatpush1.msra.mxu0 0.0
    %4082 = vmatprep.subr.mxu0 0.0
    %4083 = vmatpush1.msra.mxu0 0.0
    %4084 = vmatprep.subr.mxu0 0.0
    %4085 = vmatpush1.msra.mxu0 0.0
    %4086 = vmatprep.subr.mxu0 0.0
    %4087 = vmatpush1.msra.mxu0 0.0
    %4088 = vmatprep.subr.mxu0 0.0
    %4089 = vmatpush1.msra.mxu0 0.0
    %4090 = vmatprep.subr.mxu0 0.0
    %4091 = vmatpush1.msra.mxu0 0.0
    %4092 = vmatprep.subr.mxu0 0.0
    %4093 = vmatpush1.msra.mxu0 0.0
    %4094 = vmatprep.subr.mxu0 0.0
    %4095 = vmatpush1.msra.mxu0 0.0
    %4096 = vmatprep.subr.mxu0 0.0
    %4097 = vmatpush1.msra.mxu0 0.0
    %4098 = vmatprep.subr.mxu0 0.0
    %4099 = vmatpush1.msra.mxu0 0.0
    %4100 = vmatprep.subr.mxu0 0.0
    %4101 = vmatpush1.msra.mxu0 0.0
    %4102 = vmatprep.subr.mxu0 0.0
    %4103 = vmatpush1.msra.mxu0 0.0
    %4104 = vmatprep.subr.mxu0 0.0
    %4105 = vmatpush1.msra.mxu0 0.0
    %4106 = vmatprep.subr.mxu0 0.0
    %4107 = vmatpush1.msra.mxu0 0.0
    %4108 = vmatprep.subr.mxu0 0.0
    %4109 = vmatpush1.msra.mxu0 0.0
    %4110 = vmatprep.subr.mxu0 0.0
    %4111 = vmatpush1.msra.mxu0 0.0
    %4112 = vmatprep.subr.mxu0 0.0
    %4113 = vmatpush1.msra.mxu0 0.0
    %4114 = vmatprep.subr.mxu0 0.0
    %4115 = vmatpush1.msra.mxu0 0.0
    %4116 = vmatprep.subr.mxu0 0.0
    %4117 = vmatpush1.msra.mxu0 0.0
    %4118 = vmatprep.subr.mxu0 0.0
    %4119 = vmatpush1.msra.mxu0 0.0
    %4120 = vmatprep.subr.mxu0 0.0
    %4121 = vmatpush1.msra.mxu0 0.0
    %4122 = vmatprep.subr.mxu0 0.0
    %4123 = vmatpush1.msra.mxu0 0.0
    %4124 = vmatprep.subr.mxu0 0.0
    %4125 = vmatpush1.msra.mxu0 0.0
    %4126 = vmatprep.mubr.f32.mxu0 0.0
    %4127 = vmatmul.mubr.f32.gmra.mrb[0].mxu0 %v4057
    %v4128 = vpop.f32.mrb[0].mxu0
    %v4129 = vadd.f32 0.0, %v4128
    %v4130 = vpop.f32.mrb[0].mxu0
    %4131 = vmatprep.mubr.f32.mxu0 0.0
    %4132 = vmatmul.mubr.f32.gmra.mrb[0].mxu0 %v4060
    %v4133 = vpop.f32.mrb[0].mxu0
    %v4134 = vadd.f32 0.0, %v4133
    %v4135 = vpop.f32.mrb[0].mxu0
    %4136 = vdwg.mxu0
    %4137 = vrot.lane.b32.xlu0 %v3715, 120
    %v4138 = vpop.permute.xlu0 %4137
    %4139 = vrot.lane.b32.xlu0 %v3720, 120
    %v4140 = vpop.permute.xlu0 %4139
    %4141 = vrot.lane.b32.xlu0 %v3715, 88
    %v4142 = vpop.permute.xlu0 %4141
    %4143 = vrot.lane.b32.xlu0 %v3720, 88
    %v4144 = vpop.permute.xlu0 %4143
    %v4145 = vsel %vm205, %v4138, 0
    %v4147 = vsel %vm205, %v4140, 0
    %v4149 = vsel %vm205, %v4142, 0
    %v4151 = vsel %vm205, %v4144, 0
    %4153 = vmatprep.subr.mxu0 0.0
    %4154 = vmatpush1.xpose.msra.mxu0 %v4149
    %4155 = vmatprep.subr.mxu0 0.0
    %4156 = vmatpush1.xpose.msra.mxu0 %v4151
    %4157 = vmatprep.subr.mxu0 0.0
    %4158 = vmatpush1.xpose.msra.mxu0 0.0
    %4159 = vmatprep.subr.mxu0 0.0
    %4160 = vmatpush1.xpose.msra.mxu0 0.0
    %4161 = vmatprep.subr.mxu0 0.0
    %4162 = vmatpush1.xpose.msra.mxu0 0.0
    %4163 = vmatprep.subr.mxu0 0.0
    %4164 = vmatpush1.xpose.msra.mxu0 0.0
    %4165 = vmatprep.subr.mxu0 0.0
    %4166 = vmatpush1.xpose.msra.mxu0 0.0
    %4167 = vmatprep.subr.mxu0 0.0
    %4168 = vmatpush1.xpose.msra.mxu0 0.0
    %4169 = vmatprep.subr.mxu0 0.0
    %4170 = vmatpush1.xpose.msra.mxu0 0.0
    %4171 = vmatprep.subr.mxu0 0.0
    %4172 = vmatpush1.xpose.msra.mxu0 0.0
    %4173 = vmatprep.subr.mxu0 0.0
    %4174 = vmatpush1.xpose.msra.mxu0 0.0
    %4175 = vmatprep.subr.mxu0 0.0
    %4176 = vmatpush1.xpose.msra.mxu0 0.0
    %4177 = vmatprep.subr.mxu0 0.0
    %4178 = vmatpush1.xpose.msra.mxu0 0.0
    %4179 = vmatprep.subr.mxu0 0.0
    %4180 = vmatpush1.xpose.msra.mxu0 0.0
    %4181 = vmatprep.subr.mxu0 0.0
    %4182 = vmatpush1.xpose.msra.mxu0 0.0
    %4183 = vmatprep.subr.mxu0 0.0
    %4184 = vmatpush1.xpose.msra.mxu0 0.0
    %4185 = vmatprep.subr.mxu0 0.0
    %4186 = vmatpush1.xpose.msra.mxu0 0.0
    %4187 = vmatprep.subr.mxu0 0.0
    %4188 = vmatpush1.xpose.msra.mxu0 0.0
    %4189 = vmatprep.subr.mxu0 0.0
    %4190 = vmatpush1.xpose.msra.mxu0 0.0
    %4191 = vmatprep.subr.mxu0 0.0
    %4192 = vmatpush1.xpose.msra.mxu0 0.0
    %4193 = vmatprep.subr.mxu0 0.0
    %4194 = vmatpush1.xpose.msra.mxu0 0.0
    %4195 = vmatprep.subr.mxu0 0.0
    %4196 = vmatpush1.xpose.msra.mxu0 0.0
    %4197 = vmatprep.subr.mxu0 0.0
    %4198 = vmatpush1.xpose.msra.mxu0 0.0
    %4199 = vmatprep.subr.mxu0 0.0
    %4200 = vmatpush1.xpose.msra.mxu0 0.0
    %4201 = vmatprep.subr.mxu0 0.0
    %4202 = vmatpush1.xpose.msra.mxu0 0.0
    %4203 = vmatprep.subr.mxu0 0.0
    %4204 = vmatpush1.xpose.msra.mxu0 0.0
    %4205 = vmatprep.subr.mxu0 0.0
    %4206 = vmatpush1.xpose.msra.mxu0 0.0
    %4207 = vmatprep.subr.mxu0 0.0
    %4208 = vmatpush1.xpose.msra.mxu0 0.0
    %4209 = vmatprep.subr.mxu0 0.0
    %4210 = vmatpush1.xpose.msra.mxu0 0.0
    %4211 = vmatprep.subr.mxu0 0.0
    %4212 = vmatpush1.xpose.msra.mxu0 0.0
    %4213 = vmatprep.subr.mxu0 0.0
    %4214 = vmatpush1.xpose.msra.mxu0 0.0
    %4215 = vmatprep.subr.mxu0 0.0
    %4216 = vmatpush1.xpose.msra.mxu0 0.0
    %4217 = vmatprep.mubr.f32.mxu0 0.0
    %4218 = vmatmul.mubr.f32.gmra.mrb[0].mxu0 %v4145
    %v4219 = vpop.f32.mrb[0].mxu0
    %v4220 = vadd.f32 0.0, %v4219
    %v4221 = vpop.f32.mrb[0].mxu0
    %4222 = vmatprep.mubr.f32.mxu0 0.0
    %4223 = vmatmul.mubr.f32.gmra.mrb[0].mxu0 %v4147
    %v4224 = vpop.f32.mrb[0].mxu0
    %v4225 = vadd.f32 0.0, %v4224
    %v4226 = vpop.f32.mrb[0].mxu0
    %4227 = vdwg.mxu0
    %4228 = vrot.lane.b32.xlu0 %v3725, 120
    %v4229 = vpop.permute.xlu0 %4228
    %4230 = vrot.lane.b32.xlu0 %v3730, 120
    %v4231 = vpop.permute.xlu0 %4230
    %4232 = vrot.lane.b32.xlu0 %v3725, 88
    %v4233 = vpop.permute.xlu0 %4232
    %4234 = vrot.lane.b32.xlu0 %v3730, 88
    %v4235 = vpop.permute.xlu0 %4234
    %v4236 = vsel %vm205, %v4229, 0
    %v4238 = vsel %vm205, %v4231, 0
    %v4240 = vsel %vm205, %v4233, 0
    %v4242 = vsel %vm205, %v4235, 0
    %4244 = vmatprep.subr.mxu0 0.0
    %4245 = vmatpush1.xpose.msra.mxu0 %v4240
    %4246 = vmatprep.subr.mxu0 0.0
    %4247 = vmatpush1.xpose.msra.mxu0 %v4242
    %4248 = vmatprep.subr.mxu0 0.0
    %4249 = vmatpush1.xpose.msra.mxu0 0.0
    %4250 = vmatprep.subr.mxu0 0.0
    %4251 = vmatpush1.xpose.msra.mxu0 0.0
    %4252 = vmatprep.subr.mxu0 0.0
    %4253 = vmatpush1.xpose.msra.mxu0 0.0
    %4254 = vmatprep.subr.mxu0 0.0
    %4255 = vmatpush1.xpose.msra.mxu0 0.0
    %4256 = vmatprep.subr.mxu0 0.0
    %4257 = vmatpush1.xpose.msra.mxu0 0.0
    %4258 = vmatprep.subr.mxu0 0.0
    %4259 = vmatpush1.xpose.msra.mxu0 0.0
    %4260 = vmatprep.subr.mxu0 0.0
    %4261 = vmatpush1.xpose.msra.mxu0 0.0
    %4262 = vmatprep.subr.mxu0 0.0
    %4263 = vmatpush1.xpose.msra.mxu0 0.0
    %4264 = vmatprep.subr.mxu0 0.0
    %4265 = vmatpush1.xpose.msra.mxu0 0.0
    %4266 = vmatprep.subr.mxu0 0.0
    %4267 = vmatpush1.xpose.msra.mxu0 0.0
    %4268 = vmatprep.subr.mxu0 0.0
    %4269 = vmatpush1.xpose.msra.mxu0 0.0
    %4270 = vmatprep.subr.mxu0 0.0
    %4271 = vmatpush1.xpose.msra.mxu0 0.0
    %4272 = vmatprep.subr.mxu0 0.0
    %4273 = vmatpush1.xpose.msra.mxu0 0.0
    %4274 = vmatprep.subr.mxu0 0.0
    %4275 = vmatpush1.xpose.msra.mxu0 0.0
    %4276 = vmatprep.subr.mxu0 0.0
    %4277 = vmatpush1.xpose.msra.mxu0 0.0
    %4278 = vmatprep.subr.mxu0 0.0
    %4279 = vmatpush1.xpose.msra.mxu0 0.0
    %4280 = vmatprep.subr.mxu0 0.0
    %4281 = vmatpush1.xpose.msra.mxu0 0.0
    %4282 = vmatprep.subr.mxu0 0.0
    %4283 = vmatpush1.xpose.msra.mxu0 0.0
    %4284 = vmatprep.subr.mxu0 0.0
    %4285 = vmatpush1.xpose.msra.mxu0 0.0
    %4286 = vmatprep.subr.mxu0 0.0
    %4287 = vmatpush1.xpose.msra.mxu0 0.0
    %4288 = vmatprep.subr.mxu0 0.0
    %4289 = vmatpush1.xpose.msra.mxu0 0.0
    %4290 = vmatprep.subr.mxu0 0.0
    %4291 = vmatpush1.xpose.msra.mxu0 0.0
    %4292 = vmatprep.subr.mxu0 0.0
    %4293 = vmatpush1.xpose.msra.mxu0 0.0
    %4294 = vmatprep.subr.mxu0 0.0
    %4295 = vmatpush1.xpose.msra.mxu0 0.0
    %4296 = vmatprep.subr.mxu0 0.0
    %4297 = vmatpush1.xpose.msra.mxu0 0.0
    %4298 = vmatprep.subr.mxu0 0.0
    %4299 = vmatpush1.xpose.msra.mxu0 0.0
    %4300 = vmatprep.subr.mxu0 0.0
    %4301 = vmatpush1.xpose.msra.mxu0 0.0
    %4302 = vmatprep.subr.mxu0 0.0
    %4303 = vmatpush1.xpose.msra.mxu0 0.0
    %4304 = vmatprep.subr.mxu0 0.0
    %4305 = vmatpush1.xpose.msra.mxu0 0.0
    %4306 = vmatprep.subr.mxu0 0.0
    %4307 = vmatpush1.xpose.msra.mxu0 0.0
    %4308 = vmatprep.mubr.f32.mxu0 0.0
    %4309 = vmatmul.mubr.f32.gmra.mrb[0].mxu0 %v4236
    %v4310 = vpop.f32.mrb[0].mxu0
    %v4311 = vadd.f32 0.0, %v4310
    %v4312 = vpop.f32.mrb[0].mxu0
    %4313 = vmatprep.mubr.f32.mxu0 0.0
    %4314 = vmatmul.mubr.f32.gmra.mrb[0].mxu0 %v4238
    %v4315 = vpop.f32.mrb[0].mxu0
    %v4316 = vadd.f32 0.0, %v4315
    %v4317 = vpop.f32.mrb[0].mxu0
    %4318 = vdwg.mxu0
    %v4319 = vmul.f32 %v4220, 0.35355338
    %v4320 = vmul.f32 %v4225, 0.35355338
    %v4321 = vmul.f32 %v4311, 0.35355338
    %v4322 = vmul.f32 %v4316, 0.35355338
    %v4323 = vadd.f32 %v4319, %v991
    %v4324 = vadd.f32 %v4320, %v992
    %v4325 = vadd.f32 %v4321, %v993
    %v4326 = vadd.f32 %v4322, %v994
    %v4327 = vsel %vm342, %v4323, -inf
    %4328 = vmax.xlane.f32.xlu0 %v4327
    %v4329 = vpop.xlane.xlu0 %4328
    %v4330 = vsel %vm342, %v4324, -inf
    %4331 = vmax.xlane.f32.xlu0 %v4330
    %v4332 = vpop.xlane.xlu0 %4331
    %v4333 = vsel %vm342, %v4325, -inf
    %4334 = vmax.xlane.f32.xlu0 %v4333
    %v4335 = vpop.xlane.xlu0 %4334
    %v4336 = vsel %vm342, %v4326, -inf
    %4337 = vmax.xlane.f32.xlu0 %v4336
    %v4338 = vpop.xlane.xlu0 %4337
    %v4339 = vsub.f32 %v4323, %v4329
    %v4340 = vsub.f32 %v4324, %v4332
    %v4341 = vsub.f32 %v4325, %v4335
    %v4342 = vsub.f32 %v4326, %v4338
    %v4343 = vmul.f32 %v4339, 1.442695
    %v4344 = vpow.pop %v4343
    %v4345 = vmul.f32 %v4340, 1.442695
    %v4346 = vpow.pop %v4345
    %v4347 = vmul.f32 %v4341, 1.442695
    %v4348 = vpow.pop %v4347
    %v4349 = vmul.f32 %v4342, 1.442695
    %v4350 = vpow.pop %v4349
    %v4351 = vsel %vm342, %v4344, 0.0
    %4352 = vadd.xlane.f32.xlu0 %v4351
    %v4353 = vpop.xlane.xlu0 %4352
    %v4354 = vsel %vm342, %v4346, 0.0
    %4355 = vadd.xlane.f32.xlu0 %v4354
    %v4356 = vpop.xlane.xlu0 %4355
    %v4357 = vsel %vm342, %v4348, 0.0
    %4358 = vadd.xlane.f32.xlu0 %v4357
    %v4359 = vpop.xlane.xlu0 %4358
    %v4360 = vsel %vm342, %v4350, 0.0
    %4361 = vadd.xlane.f32.xlu0 %v4360
    %v4362 = vpop.xlane.xlu0 %4361
    %v4363 = vrcp.pop %v4353
    %v4364 = vrcp.pop %v4356
    %v4365 = vrcp.pop %v4359
    %v4366 = vrcp.pop %v4362
    %v4367 = vmul.f32 %v4344, %v4363
    %v4368 = vmul.f32 %v4346, %v4364
    %v4369 = vmul.f32 %v4348, %v4365
    %v4370 = vmul.f32 %v4350, %v4366
    %4371 = vrot.lane.b32.xlu0 %v3715, 56
    %v4372 = vpop.permute.xlu0 %4371
    %4373 = vrot.lane.b32.xlu0 %v3720, 56
    %v4374 = vpop.permute.xlu0 %4373
    %v4378 = vsel %vm342, %v4367, 0
    %v4381 = vsel %vm342, %v4368, 0
    %4383 = vmatprep.subr.mxu0 0.0
    %4384 = vmatpush1.msra.mxu0 %v4372
    %4385 = vmatprep.subr.mxu0 0.0
    %4386 = vmatpush1.msra.mxu0 %v4374
    %4387 = vmatprep.subr.mxu0 0.0
    %4388 = vmatpush1.msra.mxu0 0.0
    %4389 = vmatprep.subr.mxu0 0.0
    %4390 = vmatpush1.msra.mxu0 0.0
    %4391 = vmatprep.subr.mxu0 0.0
    %4392 = vmatpush1.msra.mxu0 0.0
    %4393 = vmatprep.subr.mxu0 0.0
    %4394 = vmatpush1.msra.mxu0 0.0
    %4395 = vmatprep.subr.mxu0 0.0
    %4396 = vmatpush1.msra.mxu0 0.0
    %4397 = vmatprep.subr.mxu0 0.0
    %4398 = vmatpush1.msra.mxu0 0.0
    %4399 = vmatprep.subr.mxu0 0.0
    %4400 = vmatpush1.msra.mxu0 0.0
    %4401 = vmatprep.subr.mxu0 0.0
    %4402 = vmatpush1.msra.mxu0 0.0
    %4403 = vmatprep.subr.mxu0 0.0
    %4404 = vmatpush1.msra.mxu0 0.0
    %4405 = vmatprep.subr.mxu0 0.0
    %4406 = vmatpush1.msra.mxu0 0.0
    %4407 = vmatprep.subr.mxu0 0.0
    %4408 = vmatpush1.msra.mxu0 0.0
    %4409 = vmatprep.subr.mxu0 0.0
    %4410 = vmatpush1.msra.mxu0 0.0
    %4411 = vmatprep.subr.mxu0 0.0
    %4412 = vmatpush1.msra.mxu0 0.0
    %4413 = vmatprep.subr.mxu0 0.0
    %4414 = vmatpush1.msra.mxu0 0.0
    %4415 = vmatprep.subr.mxu0 0.0
    %4416 = vmatpush1.msra.mxu0 0.0
    %4417 = vmatprep.subr.mxu0 0.0
    %4418 = vmatpush1.msra.mxu0 0.0
    %4419 = vmatprep.subr.mxu0 0.0
    %4420 = vmatpush1.msra.mxu0 0.0
    %4421 = vmatprep.subr.mxu0 0.0
    %4422 = vmatpush1.msra.mxu0 0.0
    %4423 = vmatprep.subr.mxu0 0.0
    %4424 = vmatpush1.msra.mxu0 0.0
    %4425 = vmatprep.subr.mxu0 0.0
    %4426 = vmatpush1.msra.mxu0 0.0
    %4427 = vmatprep.subr.mxu0 0.0
    %4428 = vmatpush1.msra.mxu0 0.0
    %4429 = vmatprep.subr.mxu0 0.0
    %4430 = vmatpush1.msra.mxu0 0.0
    %4431 = vmatprep.subr.mxu0 0.0
    %4432 = vmatpush1.msra.mxu0 0.0
    %4433 = vmatprep.subr.mxu0 0.0
    %4434 = vmatpush1.msra.mxu0 0.0
    %4435 = vmatprep.subr.mxu0 0.0
    %4436 = vmatpush1.msra.mxu0 0.0
    %4437 = vmatprep.subr.mxu0 0.0
    %4438 = vmatpush1.msra.mxu0 0.0
    %4439 = vmatprep.subr.mxu0 0.0
    %4440 = vmatpush1.msra.mxu0 0.0
    %4441 = vmatprep.subr.mxu0 0.0
    %4442 = vmatpush1.msra.mxu0 0.0
    %4443 = vmatprep.subr.mxu0 0.0
    %4444 = vmatpush1.msra.mxu0 0.0
    %4445 = vmatprep.subr.mxu0 0.0
    %4446 = vmatpush1.msra.mxu0 0.0
    %4447 = vmatprep.mubr.f32.mxu0 0.0
    %4448 = vmatmul.mubr.f32.gmra.mrb[0].mxu0 %v4378
    %v4449 = vpop.f32.mrb[0].mxu0
    %v4450 = vadd.f32 0.0, %v4449
    %v4451 = vpop.f32.mrb[0].mxu0
    %4452 = vmatprep.mubr.f32.mxu0 0.0
    %4453 = vmatmul.mubr.f32.gmra.mrb[0].mxu0 %v4381
    %v4454 = vpop.f32.mrb[0].mxu0
    %v4455 = vadd.f32 0.0, %v4454
    %v4456 = vpop.f32.mrb[0].mxu0
    %4457 = vdwg.mxu0
    %4458 = vrot.lane.b32.xlu0 %v3725, 56
    %v4459 = vpop.permute.xlu0 %4458
    %4460 = vrot.lane.b32.xlu0 %v3730, 56
    %v4461 = vpop.permute.xlu0 %4460
    %v4465 = vsel %vm342, %v4369, 0
    %v4468 = vsel %vm342, %v4370, 0
    %4470 = vmatprep.subr.mxu0 0.0
    %4471 = vmatpush1.msra.mxu0 %v4459
    %4472 = vmatprep.subr.mxu0 0.0
    %4473 = vmatpush1.msra.mxu0 %v4461
    %4474 = vmatprep.subr.mxu0 0.0
    %4475 = vmatpush1.msra.mxu0 0.0
    %4476 = vmatprep.subr.mxu0 0.0
    %4477 = vmatpush1.msra.mxu0 0.0
    %4478 = vmatprep.subr.mxu0 0.0
    %4479 = vmatpush1.msra.mxu0 0.0
    %4480 = vmatprep.subr.mxu0 0.0
    %4481 = vmatpush1.msra.mxu0 0.0
    %4482 = vmatprep.subr.mxu0 0.0
    %4483 = vmatpush1.msra.mxu0 0.0
    %4484 = vmatprep.subr.mxu0 0.0
    %4485 = vmatpush1.msra.mxu0 0.0
    %4486 = vmatprep.subr.mxu0 0.0
    %4487 = vmatpush1.msra.mxu0 0.0
    %4488 = vmatprep.subr.mxu0 0.0
    %4489 = vmatpush1.msra.mxu0 0.0
    %4490 = vmatprep.subr.mxu0 0.0
    %4491 = vmatpush1.msra.mxu0 0.0
    %4492 = vmatprep.subr.mxu0 0.0
    %4493 = vmatpush1.msra.mxu0 0.0
    %4494 = vmatprep.subr.mxu0 0.0
    %4495 = vmatpush1.msra.mxu0 0.0
    %4496 = vmatprep.subr.mxu0 0.0
    %4497 = vmatpush1.msra.mxu0 0.0
    %4498 = vmatprep.subr.mxu0 0.0
    %4499 = vmatpush1.msra.mxu0 0.0
    %4500 = vmatprep.subr.mxu0 0.0
    %4501 = vmatpush1.msra.mxu0 0.0
    %4502 = vmatprep.subr.mxu0 0.0
    %4503 = vmatpush1.msra.mxu0 0.0
    %4504 = vmatprep.subr.mxu0 0.0
    %4505 = vmatpush1.msra.mxu0 0.0
    %4506 = vmatprep.subr.mxu0 0.0
    %4507 = vmatpush1.msra.mxu0 0.0
    %4508 = vmatprep.subr.mxu0 0.0
    %4509 = vmatpush1.msra.mxu0 0.0
    %4510 = vmatprep.subr.mxu0 0.0
    %4511 = vmatpush1.msra.mxu0 0.0
    %4512 = vmatprep.subr.mxu0 0.0
    %4513 = vmatpush1.msra.mxu0 0.0
    %4514 = vmatprep.subr.mxu0 0.0
    %4515 = vmatpush1.msra.mxu0 0.0
    %4516 = vmatprep.subr.mxu0 0.0
    %4517 = vmatpush1.msra.mxu0 0.0
    %4518 = vmatprep.subr.mxu0 0.0
    %4519 = vmatpush1.msra.mxu0 0.0
    %4520 = vmatprep.subr.mxu0 0.0
    %4521 = vmatpush1.msra.mxu0 0.0
    %4522 = vmatprep.subr.mxu0 0.0
    %4523 = vmatpush1.msra.mxu0 0.0
    %4524 = vmatprep.subr.mxu0 0.0
    %4525 = vmatpush1.msra.mxu0 0.0
    %4526 = vmatprep.subr.mxu0 0.0
    %4527 = vmatpush1.msra.mxu0 0.0
    %4528 = vmatprep.subr.mxu0 0.0
    %4529 = vmatpush1.msra.mxu0 0.0
    %4530 = vmatprep.subr.mxu0 0.0
    %4531 = vmatpush1.msra.mxu0 0.0
    %4532 = vmatprep.subr.mxu0 0.0
    %4533 = vmatpush1.msra.mxu0 0.0
    %4534 = vmatprep.mubr.f32.mxu0 0.0
    %4535 = vmatmul.mubr.f32.gmra.mrb[0].mxu0 %v4465
    %v4536 = vpop.f32.mrb[0].mxu0
    %v4537 = vadd.f32 0.0, %v4536
    %v4538 = vpop.f32.mrb[0].mxu0
    %4539 = vmatprep.mubr.f32.mxu0 0.0
    %4540 = vmatmul.mubr.f32.gmra.mrb[0].mxu0 %v4468
    %v4541 = vpop.f32.mrb[0].mxu0
    %v4542 = vadd.f32 0.0, %v4541
    %v4543 = vpop.f32.mrb[0].mxu0
    %4544 = vdwg.mxu0
    %4545 = vrot.lane.b32.xlu0 %v3715, 112
    %v4546 = vpop.permute.xlu0 %4545
    %4547 = vrot.lane.b32.xlu0 %v3720, 112
    %v4548 = vpop.permute.xlu0 %4547
    %4549 = vrot.lane.b32.xlu0 %v3715, 80
    %v4550 = vpop.permute.xlu0 %4549
    %4551 = vrot.lane.b32.xlu0 %v3720, 80
    %v4552 = vpop.permute.xlu0 %4551
    %v4553 = vsel %vm205, %v4546, 0
    %v4555 = vsel %vm205, %v4548, 0
    %v4557 = vsel %vm205, %v4550, 0
    %v4559 = vsel %vm205, %v4552, 0
    %4561 = vmatprep.subr.mxu0 0.0
    %4562 = vmatpush1.xpose.msra.mxu0 %v4557
    %4563 = vmatprep.subr.mxu0 0.0
    %4564 = vmatpush1.xpose.msra.mxu0 %v4559
    %4565 = vmatprep.subr.mxu0 0.0
    %4566 = vmatpush1.xpose.msra.mxu0 0.0
    %4567 = vmatprep.subr.mxu0 0.0
    %4568 = vmatpush1.xpose.msra.mxu0 0.0
    %4569 = vmatprep.subr.mxu0 0.0
    %4570 = vmatpush1.xpose.msra.mxu0 0.0
    %4571 = vmatprep.subr.mxu0 0.0
    %4572 = vmatpush1.xpose.msra.mxu0 0.0
    %4573 = vmatprep.subr.mxu0 0.0
    %4574 = vmatpush1.xpose.msra.mxu0 0.0
    %4575 = vmatprep.subr.mxu0 0.0
    %4576 = vmatpush1.xpose.msra.mxu0 0.0
    %4577 = vmatprep.subr.mxu0 0.0
    %4578 = vmatpush1.xpose.msra.mxu0 0.0
    %4579 = vmatprep.subr.mxu0 0.0
    %4580 = vmatpush1.xpose.msra.mxu0 0.0
    %4581 = vmatprep.subr.mxu0 0.0
    %4582 = vmatpush1.xpose.msra.mxu0 0.0
    %4583 = vmatprep.subr.mxu0 0.0
    %4584 = vmatpush1.xpose.msra.mxu0 0.0
    %4585 = vmatprep.subr.mxu0 0.0
    %4586 = vmatpush1.xpose.msra.mxu0 0.0
    %4587 = vmatprep.subr.mxu0 0.0
    %4588 = vmatpush1.xpose.msra.mxu0 0.0
    %4589 = vmatprep.subr.mxu0 0.0
    %4590 = vmatpush1.xpose.msra.mxu0 0.0
    %4591 = vmatprep.subr.mxu0 0.0
    %4592 = vmatpush1.xpose.msra.mxu0 0.0
    %4593 = vmatprep.subr.mxu0 0.0
    %4594 = vmatpush1.xpose.msra.mxu0 0.0
    %4595 = vmatprep.subr.mxu0 0.0
    %4596 = vmatpush1.xpose.msra.mxu0 0.0
    %4597 = vmatprep.subr.mxu0 0.0
    %4598 = vmatpush1.xpose.msra.mxu0 0.0
    %4599 = vmatprep.subr.mxu0 0.0
    %4600 = vmatpush1.xpose.msra.mxu0 0.0
    %4601 = vmatprep.subr.mxu0 0.0
    %4602 = vmatpush1.xpose.msra.mxu0 0.0
    %4603 = vmatprep.subr.mxu0 0.0
    %4604 = vmatpush1.xpose.msra.mxu0 0.0
    %4605 = vmatprep.subr.mxu0 0.0
    %4606 = vmatpush1.xpose.msra.mxu0 0.0
    %4607 = vmatprep.subr.mxu0 0.0
    %4608 = vmatpush1.xpose.msra.mxu0 0.0
    %4609 = vmatprep.subr.mxu0 0.0
    %4610 = vmatpush1.xpose.msra.mxu0 0.0
    %4611 = vmatprep.subr.mxu0 0.0
    %4612 = vmatpush1.xpose.msra.mxu0 0.0
    %4613 = vmatprep.subr.mxu0 0.0
    %4614 = vmatpush1.xpose.msra.mxu0 0.0
    %4615 = vmatprep.subr.mxu0 0.0
    %4616 = vmatpush1.xpose.msra.mxu0 0.0
    %4617 = vmatprep.subr.mxu0 0.0
    %4618 = vmatpush1.xpose.msra.mxu0 0.0
    %4619 = vmatprep.subr.mxu0 0.0
    %4620 = vmatpush1.xpose.msra.mxu0 0.0
    %4621 = vmatprep.subr.mxu0 0.0
    %4622 = vmatpush1.xpose.msra.mxu0 0.0
    %4623 = vmatprep.subr.mxu0 0.0
    %4624 = vmatpush1.xpose.msra.mxu0 0.0
    %4625 = vmatprep.mubr.f32.mxu0 0.0
    %4626 = vmatmul.mubr.f32.gmra.mrb[0].mxu0 %v4553
    %v4627 = vpop.f32.mrb[0].mxu0
    %v4628 = vadd.f32 0.0, %v4627
    %v4629 = vpop.f32.mrb[0].mxu0
    %4630 = vmatprep.mubr.f32.mxu0 0.0
    %4631 = vmatmul.mubr.f32.gmra.mrb[0].mxu0 %v4555
    %v4632 = vpop.f32.mrb[0].mxu0
    %v4633 = vadd.f32 0.0, %v4632
    %v4634 = vpop.f32.mrb[0].mxu0
    %4635 = vdwg.mxu0
    %4636 = vrot.lane.b32.xlu0 %v3725, 112
    %v4637 = vpop.permute.xlu0 %4636
    %4638 = vrot.lane.b32.xlu0 %v3730, 112
    %v4639 = vpop.permute.xlu0 %4638
    %4640 = vrot.lane.b32.xlu0 %v3725, 80
    %v4641 = vpop.permute.xlu0 %4640
    %4642 = vrot.lane.b32.xlu0 %v3730, 80
    %v4643 = vpop.permute.xlu0 %4642
    %v4644 = vsel %vm205, %v4637, 0
    %v4646 = vsel %vm205, %v4639, 0
    %v4648 = vsel %vm205, %v4641, 0
    %v4650 = vsel %vm205, %v4643, 0
    %4652 = vmatprep.subr.mxu0 0.0
    %4653 = vmatpush1.xpose.msra.mxu0 %v4648
    %4654 = vmatprep.subr.mxu0 0.0
    %4655 = vmatpush1.xpose.msra.mxu0 %v4650
    %4656 = vmatprep.subr.mxu0 0.0
    %4657 = vmatpush1.xpose.msra.mxu0 0.0
    %4658 = vmatprep.subr.mxu0 0.0
    %4659 = vmatpush1.xpose.msra.mxu0 0.0
    %4660 = vmatprep.subr.mxu0 0.0
    %4661 = vmatpush1.xpose.msra.mxu0 0.0
    %4662 = vmatprep.subr.mxu0 0.0
    %4663 = vmatpush1.xpose.msra.mxu0 0.0
    %4664 = vmatprep.subr.mxu0 0.0
    %4665 = vmatpush1.xpose.msra.mxu0 0.0
    %4666 = vmatprep.subr.mxu0 0.0
    %4667 = vmatpush1.xpose.msra.mxu0 0.0
    %4668 = vmatprep.subr.mxu0 0.0
    %4669 = vmatpush1.xpose.msra.mxu0 0.0
    %4670 = vmatprep.subr.mxu0 0.0
    %4671 = vmatpush1.xpose.msra.mxu0 0.0
    %4672 = vmatprep.subr.mxu0 0.0
    %4673 = vmatpush1.xpose.msra.mxu0 0.0
    %4674 = vmatprep.subr.mxu0 0.0
    %4675 = vmatpush1.xpose.msra.mxu0 0.0
    %4676 = vmatprep.subr.mxu0 0.0
    %4677 = vmatpush1.xpose.msra.mxu0 0.0
    %4678 = vmatprep.subr.mxu0 0.0
    %4679 = vmatpush1.xpose.msra.mxu0 0.0
    %4680 = vmatprep.subr.mxu0 0.0
    %4681 = vmatpush1.xpose.msra.mxu0 0.0
    %4682 = vmatprep.subr.mxu0 0.0
    %4683 = vmatpush1.xpose.msra.mxu0 0.0
    %4684 = vmatprep.subr.mxu0 0.0
    %4685 = vmatpush1.xpose.msra.mxu0 0.0
    %4686 = vmatprep.subr.mxu0 0.0
    %4687 = vmatpush1.xpose.msra.mxu0 0.0
    %4688 = vmatprep.subr.mxu0 0.0
    %4689 = vmatpush1.xpose.msra.mxu0 0.0
    %4690 = vmatprep.subr.mxu0 0.0
    %4691 = vmatpush1.xpose.msra.mxu0 0.0
    %4692 = vmatprep.subr.mxu0 0.0
    %4693 = vmatpush1.xpose.msra.mxu0 0.0
    %4694 = vmatprep.subr.mxu0 0.0
    %4695 = vmatpush1.xpose.msra.mxu0 0.0
    %4696 = vmatprep.subr.mxu0 0.0
    %4697 = vmatpush1.xpose.msra.mxu0 0.0
    %4698 = vmatprep.subr.mxu0 0.0
    %4699 = vmatpush1.xpose.msra.mxu0 0.0
    %4700 = vmatprep.subr.mxu0 0.0
    %4701 = vmatpush1.xpose.msra.mxu0 0.0
    %4702 = vmatprep.subr.mxu0 0.0
    %4703 = vmatpush1.xpose.msra.mxu0 0.0
    %4704 = vmatprep.subr.mxu0 0.0
    %4705 = vmatpush1.xpose.msra.mxu0 0.0
    %4706 = vmatprep.subr.mxu0 0.0
    %4707 = vmatpush1.xpose.msra.mxu0 0.0
    %4708 = vmatprep.subr.mxu0 0.0
    %4709 = vmatpush1.xpose.msra.mxu0 0.0
    %4710 = vmatprep.subr.mxu0 0.0
    %4711 = vmatpush1.xpose.msra.mxu0 0.0
    %4712 = vmatprep.subr.mxu0 0.0
    %4713 = vmatpush1.xpose.msra.mxu0 0.0
    %4714 = vmatprep.subr.mxu0 0.0
    %4715 = vmatpush1.xpose.msra.mxu0 0.0
    %4716 = vmatprep.mubr.f32.mxu0 0.0
    %4717 = vmatmul.mubr.f32.gmra.mrb[0].mxu0 %v4644
    %v4718 = vpop.f32.mrb[0].mxu0
    %v4719 = vadd.f32 0.0, %v4718
    %v4720 = vpop.f32.mrb[0].mxu0
    %4721 = vmatprep.mubr.f32.mxu0 0.0
    %4722 = vmatmul.mubr.f32.gmra.mrb[0].mxu0 %v4646
    %v4723 = vpop.f32.mrb[0].mxu0
    %v4724 = vadd.f32 0.0, %v4723
    %v4725 = vpop.f32.mrb[0].mxu0
    %4726 = vdwg.mxu0
    %v4727 = vmul.f32 %v4628, 0.35355338
    %v4728 = vmul.f32 %v4633, 0.35355338
    %v4729 = vmul.f32 %v4719, 0.35355338
    %v4730 = vmul.f32 %v4724, 0.35355338
    %v4731 = vadd.f32 %v4727, %v1177
    %v4732 = vadd.f32 %v4728, %v1178
    %v4733 = vadd.f32 %v4729, %v1179
    %v4734 = vadd.f32 %v4730, %v1180
    %v4735 = vsel %vm342, %v4731, -inf
    %4736 = vmax.xlane.f32.xlu0 %v4735
    %v4737 = vpop.xlane.xlu0 %4736
    %v4738 = vsel %vm342, %v4732, -inf
    %4739 = vmax.xlane.f32.xlu0 %v4738
    %v4740 = vpop.xlane.xlu0 %4739
    %v4741 = vsel %vm342, %v4733, -inf
    %4742 = vmax.xlane.f32.xlu0 %v4741
    %v4743 = vpop.xlane.xlu0 %4742
    %v4744 = vsel %vm342, %v4734, -inf
    %4745 = vmax.xlane.f32.xlu0 %v4744
    %v4746 = vpop.xlane.xlu0 %4745
    %v4747 = vsub.f32 %v4731, %v4737
    %v4748 = vsub.f32 %v4732, %v4740
    %v4749 = vsub.f32 %v4733, %v4743
    %v4750 = vsub.f32 %v4734, %v4746
    %v4751 = vmul.f32 %v4747, 1.442695
    %v4752 = vpow.pop %v4751
    %v4753 = vmul.f32 %v4748, 1.442695
    %v4754 = vpow.pop %v4753
    %v4755 = vmul.f32 %v4749, 1.442695
    %v4756 = vpow.pop %v4755
    %v4757 = vmul.f32 %v4750, 1.442695
    %v4758 = vpow.pop %v4757
    %v4759 = vsel %vm342, %v4752, 0.0
    %4760 = vadd.xlane.f32.xlu0 %v4759
    %v4761 = vpop.xlane.xlu0 %4760
    %v4762 = vsel %vm342, %v4754, 0.0
    %4763 = vadd.xlane.f32.xlu0 %v4762
    %v4764 = vpop.xlane.xlu0 %4763
    %v4765 = vsel %vm342, %v4756, 0.0
    %4766 = vadd.xlane.f32.xlu0 %v4765
    %v4767 = vpop.xlane.xlu0 %4766
    %v4768 = vsel %vm342, %v4758, 0.0
    %4769 = vadd.xlane.f32.xlu0 %v4768
    %v4770 = vpop.xlane.xlu0 %4769
    %v4771 = vrcp.pop %v4761
    %v4772 = vrcp.pop %v4764
    %v4773 = vrcp.pop %v4767
    %v4774 = vrcp.pop %v4770
    %v4775 = vmul.f32 %v4752, %v4771
    %v4776 = vmul.f32 %v4754, %v4772
    %v4777 = vmul.f32 %v4756, %v4773
    %v4778 = vmul.f32 %v4758, %v4774
    %4779 = vrot.lane.b32.xlu0 %v3715, 48
    %v4780 = vpop.permute.xlu0 %4779
    %4781 = vrot.lane.b32.xlu0 %v3720, 48
    %v4782 = vpop.permute.xlu0 %4781
    %v4786 = vsel %vm342, %v4775, 0
    %v4789 = vsel %vm342, %v4776, 0
    %4791 = vmatprep.subr.mxu0 0.0
    %4792 = vmatpush1.msra.mxu0 %v4780
    %4793 = vmatprep.subr.mxu0 0.0
    %4794 = vmatpush1.msra.mxu0 %v4782
    %4795 = vmatprep.subr.mxu0 0.0
    %4796 = vmatpush1.msra.mxu0 0.0
    %4797 = vmatprep.subr.mxu0 0.0
    %4798 = vmatpush1.msra.mxu0 0.0
    %4799 = vmatprep.subr.mxu0 0.0
    %4800 = vmatpush1.msra.mxu0 0.0
    %4801 = vmatprep.subr.mxu0 0.0
    %4802 = vmatpush1.msra.mxu0 0.0
    %4803 = vmatprep.subr.mxu0 0.0
    %4804 = vmatpush1.msra.mxu0 0.0
    %4805 = vmatprep.subr.mxu0 0.0
    %4806 = vmatpush1.msra.mxu0 0.0
    %4807 = vmatprep.subr.mxu0 0.0
    %4808 = vmatpush1.msra.mxu0 0.0
    %4809 = vmatprep.subr.mxu0 0.0
    %4810 = vmatpush1.msra.mxu0 0.0
    %4811 = vmatprep.subr.mxu0 0.0
    %4812 = vmatpush1.msra.mxu0 0.0
    %4813 = vmatprep.subr.mxu0 0.0
    %4814 = vmatpush1.msra.mxu0 0.0
    %4815 = vmatprep.subr.mxu0 0.0
    %4816 = vmatpush1.msra.mxu0 0.0
    %4817 = vmatprep.subr.mxu0 0.0
    %4818 = vmatpush1.msra.mxu0 0.0
    %4819 = vmatprep.subr.mxu0 0.0
    %4820 = vmatpush1.msra.mxu0 0.0
    %4821 = vmatprep.subr.mxu0 0.0
    %4822 = vmatpush1.msra.mxu0 0.0
    %4823 = vmatprep.subr.mxu0 0.0
    %4824 = vmatpush1.msra.mxu0 0.0
    %4825 = vmatprep.subr.mxu0 0.0
    %4826 = vmatpush1.msra.mxu0 0.0
    %4827 = vmatprep.subr.mxu0 0.0
    %4828 = vmatpush1.msra.mxu0 0.0
    %4829 = vmatprep.subr.mxu0 0.0
    %4830 = vmatpush1.msra.mxu0 0.0
    %4831 = vmatprep.subr.mxu0 0.0
    %4832 = vmatpush1.msra.mxu0 0.0
    %4833 = vmatprep.subr.mxu0 0.0
    %4834 = vmatpush1.msra.mxu0 0.0
    %4835 = vmatprep.subr.mxu0 0.0
    %4836 = vmatpush1.msra.mxu0 0.0
    %4837 = vmatprep.subr.mxu0 0.0
    %4838 = vmatpush1.msra.mxu0 0.0
    %4839 = vmatprep.subr.mxu0 0.0
    %4840 = vmatpush1.msra.mxu0 0.0
    %4841 = vmatprep.subr.mxu0 0.0
    %4842 = vmatpush1.msra.mxu0 0.0
    %4843 = vmatprep.subr.mxu0 0.0
    %4844 = vmatpush1.msra.mxu0 0.0
    %4845 = vmatprep.subr.mxu0 0.0
    %4846 = vmatpush1.msra.mxu0 0.0
    %4847 = vmatprep.subr.mxu0 0.0
    %4848 = vmatpush1.msra.mxu0 0.0
    %4849 = vmatprep.subr.mxu0 0.0
    %4850 = vmatpush1.msra.mxu0 0.0
    %4851 = vmatprep.subr.mxu0 0.0
    %4852 = vmatpush1.msra.mxu0 0.0
    %4853 = vmatprep.subr.mxu0 0.0
    %4854 = vmatpush1.msra.mxu0 0.0
    %4855 = vmatprep.mubr.f32.mxu0 0.0
    %4856 = vmatmul.mubr.f32.gmra.mrb[0].mxu0 %v4786
    %v4857 = vpop.f32.mrb[0].mxu0
    %v4858 = vadd.f32 0.0, %v4857
    %v4859 = vpop.f32.mrb[0].mxu0
    %4860 = vmatprep.mubr.f32.mxu0 0.0
    %4861 = vmatmul.mubr.f32.gmra.mrb[0].mxu0 %v4789
    %v4862 = vpop.f32.mrb[0].mxu0
    %v4863 = vadd.f32 0.0, %v4862
    %v4864 = vpop.f32.mrb[0].mxu0
    %4865 = vdwg.mxu0
    %4866 = vrot.lane.b32.xlu0 %v3725, 48
    %v4867 = vpop.permute.xlu0 %4866
    %4868 = vrot.lane.b32.xlu0 %v3730, 48
    %v4869 = vpop.permute.xlu0 %4868
    %v4873 = vsel %vm342, %v4777, 0
    %v4876 = vsel %vm342, %v4778, 0
    %4878 = vmatprep.subr.mxu0 0.0
    %4879 = vmatpush1.msra.mxu0 %v4867
    %4880 = vmatprep.subr.mxu0 0.0
    %4881 = vmatpush1.msra.mxu0 %v4869
    %4882 = vmatprep.subr.mxu0 0.0
    %4883 = vmatpush1.msra.mxu0 0.0
    %4884 = vmatprep.subr.mxu0 0.0
    %4885 = vmatpush1.msra.mxu0 0.0
    %4886 = vmatprep.subr.mxu0 0.0
    %4887 = vmatpush1.msra.mxu0 0.0
    %4888 = vmatprep.subr.mxu0 0.0
    %4889 = vmatpush1.msra.mxu0 0.0
    %4890 = vmatprep.subr.mxu0 0.0
    %4891 = vmatpush1.msra.mxu0 0.0
    %4892 = vmatprep.subr.mxu0 0.0
    %4893 = vmatpush1.msra.mxu0 0.0
    %4894 = vmatprep.subr.mxu0 0.0
    %4895 = vmatpush1.msra.mxu0 0.0
    %4896 = vmatprep.subr.mxu0 0.0
    %4897 = vmatpush1.msra.mxu0 0.0
    %4898 = vmatprep.subr.mxu0 0.0
    %4899 = vmatpush1.msra.mxu0 0.0
    %4900 = vmatprep.subr.mxu0 0.0
    %4901 = vmatpush1.msra.mxu0 0.0
    %4902 = vmatprep.subr.mxu0 0.0
    %4903 = vmatpush1.msra.mxu0 0.0
    %4904 = vmatprep.subr.mxu0 0.0
    %4905 = vmatpush1.msra.mxu0 0.0
    %4906 = vmatprep.subr.mxu0 0.0
    %4907 = vmatpush1.msra.mxu0 0.0
    %4908 = vmatprep.subr.mxu0 0.0
    %4909 = vmatpush1.msra.mxu0 0.0
    %4910 = vmatprep.subr.mxu0 0.0
    %4911 = vmatpush1.msra.mxu0 0.0
    %4912 = vmatprep.subr.mxu0 0.0
    %4913 = vmatpush1.msra.mxu0 0.0
    %4914 = vmatprep.subr.mxu0 0.0
    %4915 = vmatpush1.msra.mxu0 0.0
    %4916 = vmatprep.subr.mxu0 0.0
    %4917 = vmatpush1.msra.mxu0 0.0
    %4918 = vmatprep.subr.mxu0 0.0
    %4919 = vmatpush1.msra.mxu0 0.0
    %4920 = vmatprep.subr.mxu0 0.0
    %4921 = vmatpush1.msra.mxu0 0.0
    %4922 = vmatprep.subr.mxu0 0.0
    %4923 = vmatpush1.msra.mxu0 0.0
    %4924 = vmatprep.subr.mxu0 0.0
    %4925 = vmatpush1.msra.mxu0 0.0
    %4926 = vmatprep.subr.mxu0 0.0
    %4927 = vmatpush1.msra.mxu0 0.0
    %4928 = vmatprep.subr.mxu0 0.0
    %4929 = vmatpush1.msra.mxu0 0.0
    %4930 = vmatprep.subr.mxu0 0.0
    %4931 = vmatpush1.msra.mxu0 0.0
    %4932 = vmatprep.subr.mxu0 0.0
    %4933 = vmatpush1.msra.mxu0 0.0
    %4934 = vmatprep.subr.mxu0 0.0
    %4935 = vmatpush1.msra.mxu0 0.0
    %4936 = vmatprep.subr.mxu0 0.0
    %4937 = vmatpush1.msra.mxu0 0.0
    %4938 = vmatprep.subr.mxu0 0.0
    %4939 = vmatpush1.msra.mxu0 0.0
    %4940 = vmatprep.subr.mxu0 0.0
    %4941 = vmatpush1.msra.mxu0 0.0
    %4942 = vmatprep.mubr.f32.mxu0 0.0
    %4943 = vmatmul.mubr.f32.gmra.mrb[0].mxu0 %v4873
    %v4944 = vpop.f32.mrb[0].mxu0
    %v4945 = vadd.f32 0.0, %v4944
    %v4946 = vpop.f32.mrb[0].mxu0
    %4947 = vmatprep.mubr.f32.mxu0 0.0
    %4948 = vmatmul.mubr.f32.gmra.mrb[0].mxu0 %v4876
    %v4949 = vpop.f32.mrb[0].mxu0
    %v4950 = vadd.f32 0.0, %v4949
    %v4951 = vpop.f32.mrb[0].mxu0
    %4952 = vdwg.mxu0
    %4953 = vrot.lane.b32.xlu0 %v3715, 104
    %v4954 = vpop.permute.xlu0 %4953
    %4955 = vrot.lane.b32.xlu0 %v3720, 104
    %v4956 = vpop.permute.xlu0 %4955
    %4957 = vrot.lane.b32.xlu0 %v3715, 72
    %v4958 = vpop.permute.xlu0 %4957
    %4959 = vrot.lane.b32.xlu0 %v3720, 72
    %v4960 = vpop.permute.xlu0 %4959
    %v4961 = vsel %vm205, %v4954, 0
    %v4963 = vsel %vm205, %v4956, 0
    %v4965 = vsel %vm205, %v4958, 0
    %v4967 = vsel %vm205, %v4960, 0
    %4969 = vmatprep.subr.mxu0 0.0
    %4970 = vmatpush1.xpose.msra.mxu0 %v4965
    %4971 = vmatprep.subr.mxu0 0.0
    %4972 = vmatpush1.xpose.msra.mxu0 %v4967
    %4973 = vmatprep.subr.mxu0 0.0
    %4974 = vmatpush1.xpose.msra.mxu0 0.0
    %4975 = vmatprep.subr.mxu0 0.0
    %4976 = vmatpush1.xpose.msra.mxu0 0.0
    %4977 = vmatprep.subr.mxu0 0.0
    %4978 = vmatpush1.xpose.msra.mxu0 0.0
    %4979 = vmatprep.subr.mxu0 0.0
    %4980 = vmatpush1.xpose.msra.mxu0 0.0
    %4981 = vmatprep.subr.mxu0 0.0
    %4982 = vmatpush1.xpose.msra.mxu0 0.0
    %4983 = vmatprep.subr.mxu0 0.0
    %4984 = vmatpush1.xpose.msra.mxu0 0.0
    %4985 = vmatprep.subr.mxu0 0.0
    %4986 = vmatpush1.xpose.msra.mxu0 0.0
    %4987 = vmatprep.subr.mxu0 0.0
    %4988 = vmatpush1.xpose.msra.mxu0 0.0
    %4989 = vmatprep.subr.mxu0 0.0
    %4990 = vmatpush1.xpose.msra.mxu0 0.0
    %4991 = vmatprep.subr.mxu0 0.0
    %4992 = vmatpush1.xpose.msra.mxu0 0.0
    %4993 = vmatprep.subr.mxu0 0.0
    %4994 = vmatpush1.xpose.msra.mxu0 0.0
    %4995 = vmatprep.subr.mxu0 0.0
    %4996 = vmatpush1.xpose.msra.mxu0 0.0
    %4997 = vmatprep.subr.mxu0 0.0
    %4998 = vmatpush1.xpose.msra.mxu0 0.0
    %4999 = vmatprep.subr.mxu0 0.0
    %5000 = vmatpush1.xpose.msra.mxu0 0.0
    %5001 = vmatprep.subr.mxu0 0.0
    %5002 = vmatpush1.xpose.msra.mxu0 0.0
    %5003 = vmatprep.subr.mxu0 0.0
    %5004 = vmatpush1.xpose.msra.mxu0 0.0
    %5005 = vmatprep.subr.mxu0 0.0
    %5006 = vmatpush1.xpose.msra.mxu0 0.0
    %5007 = vmatprep.subr.mxu0 0.0
    %5008 = vmatpush1.xpose.msra.mxu0 0.0
    %5009 = vmatprep.subr.mxu0 0.0
    %5010 = vmatpush1.xpose.msra.mxu0 0.0
    %5011 = vmatprep.subr.mxu0 0.0
    %5012 = vmatpush1.xpose.msra.mxu0 0.0
    %5013 = vmatprep.subr.mxu0 0.0
    %5014 = vmatpush1.xpose.msra.mxu0 0.0
    %5015 = vmatprep.subr.mxu0 0.0
    %5016 = vmatpush1.xpose.msra.mxu0 0.0
    %5017 = vmatprep.subr.mxu0 0.0
    %5018 = vmatpush1.xpose.msra.mxu0 0.0
    %5019 = vmatprep.subr.mxu0 0.0
    %5020 = vmatpush1.xpose.msra.mxu0 0.0
    %5021 = vmatprep.subr.mxu0 0.0
    %5022 = vmatpush1.xpose.msra.mxu0 0.0
    %5023 = vmatprep.subr.mxu0 0.0
    %5024 = vmatpush1.xpose.msra.mxu0 0.0
    %5025 = vmatprep.subr.mxu0 0.0
    %5026 = vmatpush1.xpose.msra.mxu0 0.0
    %5027 = vmatprep.subr.mxu0 0.0
    %5028 = vmatpush1.xpose.msra.mxu0 0.0
    %5029 = vmatprep.subr.mxu0 0.0
    %5030 = vmatpush1.xpose.msra.mxu0 0.0
    %5031 = vmatprep.subr.mxu0 0.0
    %5032 = vmatpush1.xpose.msra.mxu0 0.0
    %5033 = vmatprep.mubr.f32.mxu0 0.0
    %5034 = vmatmul.mubr.f32.gmra.mrb[0].mxu0 %v4961
    %v5035 = vpop.f32.mrb[0].mxu0
    %v5036 = vadd.f32 0.0, %v5035
    %v5037 = vpop.f32.mrb[0].mxu0
    %5038 = vmatprep.mubr.f32.mxu0 0.0
    %5039 = vmatmul.mubr.f32.gmra.mrb[0].mxu0 %v4963
    %v5040 = vpop.f32.mrb[0].mxu0
    %v5041 = vadd.f32 0.0, %v5040
    %v5042 = vpop.f32.mrb[0].mxu0
    %5043 = vdwg.mxu0
    %5044 = vrot.lane.b32.xlu0 %v3725, 104
    %v5045 = vpop.permute.xlu0 %5044
    %5046 = vrot.lane.b32.xlu0 %v3730, 104
    %v5047 = vpop.permute.xlu0 %5046
    %5048 = vrot.lane.b32.xlu0 %v3725, 72
    %v5049 = vpop.permute.xlu0 %5048
    %5050 = vrot.lane.b32.xlu0 %v3730, 72
    %v5051 = vpop.permute.xlu0 %5050
    %v5052 = vsel %vm205, %v5045, 0
    %v5054 = vsel %vm205, %v5047, 0
    %v5056 = vsel %vm205, %v5049, 0
    %v5058 = vsel %vm205, %v5051, 0
    %5060 = vmatprep.subr.mxu0 0.0
    %5061 = vmatpush1.xpose.msra.mxu0 %v5056
    %5062 = vmatprep.subr.mxu0 0.0
    %5063 = vmatpush1.xpose.msra.mxu0 %v5058
    %5064 = vmatprep.subr.mxu0 0.0
    %5065 = vmatpush1.xpose.msra.mxu0 0.0
    %5066 = vmatprep.subr.mxu0 0.0
    %5067 = vmatpush1.xpose.msra.mxu0 0.0
    %5068 = vmatprep.subr.mxu0 0.0
    %5069 = vmatpush1.xpose.msra.mxu0 0.0
    %5070 = vmatprep.subr.mxu0 0.0
    %5071 = vmatpush1.xpose.msra.mxu0 0.0
    %5072 = vmatprep.subr.mxu0 0.0
    %5073 = vmatpush1.xpose.msra.mxu0 0.0
    %5074 = vmatprep.subr.mxu0 0.0
    %5075 = vmatpush1.xpose.msra.mxu0 0.0
    %5076 = vmatprep.subr.mxu0 0.0
    %5077 = vmatpush1.xpose.msra.mxu0 0.0
    %5078 = vmatprep.subr.mxu0 0.0
    %5079 = vmatpush1.xpose.msra.mxu0 0.0
    %5080 = vmatprep.subr.mxu0 0.0
    %5081 = vmatpush1.xpose.msra.mxu0 0.0
    %5082 = vmatprep.subr.mxu0 0.0
    %5083 = vmatpush1.xpose.msra.mxu0 0.0
    %5084 = vmatprep.subr.mxu0 0.0
    %5085 = vmatpush1.xpose.msra.mxu0 0.0
    %5086 = vmatprep.subr.mxu0 0.0
    %5087 = vmatpush1.xpose.msra.mxu0 0.0
    %5088 = vmatprep.subr.mxu0 0.0
    %5089 = vmatpush1.xpose.msra.mxu0 0.0
    %5090 = vmatprep.subr.mxu0 0.0
    %5091 = vmatpush1.xpose.msra.mxu0 0.0
    %5092 = vmatprep.subr.mxu0 0.0
    %5093 = vmatpush1.xpose.msra.mxu0 0.0
    %5094 = vmatprep.subr.mxu0 0.0
    %5095 = vmatpush1.xpose.msra.mxu0 0.0
    %5096 = vmatprep.subr.mxu0 0.0
    %5097 = vmatpush1.xpose.msra.mxu0 0.0
    %5098 = vmatprep.subr.mxu0 0.0
    %5099 = vmatpush1.xpose.msra.mxu0 0.0
    %5100 = vmatprep.subr.mxu0 0.0
    %5101 = vmatpush1.xpose.msra.mxu0 0.0
    %5102 = vmatprep.subr.mxu0 0.0
    %5103 = vmatpush1.xpose.msra.mxu0 0.0
    %5104 = vmatprep.subr.mxu0 0.0
    %5105 = vmatpush1.xpose.msra.mxu0 0.0
    %5106 = vmatprep.subr.mxu0 0.0
    %5107 = vmatpush1.xpose.msra.mxu0 0.0
    %5108 = vmatprep.subr.mxu0 0.0
    %5109 = vmatpush1.xpose.msra.mxu0 0.0
    %5110 = vmatprep.subr.mxu0 0.0
    %5111 = vmatpush1.xpose.msra.mxu0 0.0
    %5112 = vmatprep.subr.mxu0 0.0
    %5113 = vmatpush1.xpose.msra.mxu0 0.0
    %5114 = vmatprep.subr.mxu0 0.0
    %5115 = vmatpush1.xpose.msra.mxu0 0.0
    %5116 = vmatprep.subr.mxu0 0.0
    %5117 = vmatpush1.xpose.msra.mxu0 0.0
    %5118 = vmatprep.subr.mxu0 0.0
    %5119 = vmatpush1.xpose.msra.mxu0 0.0
    %5120 = vmatprep.subr.mxu0 0.0
    %5121 = vmatpush1.xpose.msra.mxu0 0.0
    %5122 = vmatprep.subr.mxu0 0.0
    %5123 = vmatpush1.xpose.msra.mxu0 0.0
    %5124 = vmatprep.mubr.f32.mxu0 0.0
    %5125 = vmatmul.mubr.f32.gmra.mrb[0].mxu0 %v5052
    %v5126 = vpop.f32.mrb[0].mxu0
    %v5127 = vadd.f32 0.0, %v5126
    %v5128 = vpop.f32.mrb[0].mxu0
    %5129 = vmatprep.mubr.f32.mxu0 0.0
    %5130 = vmatmul.mubr.f32.gmra.mrb[0].mxu0 %v5054
    %v5131 = vpop.f32.mrb[0].mxu0
    %v5132 = vadd.f32 0.0, %v5131
    %v5133 = vpop.f32.mrb[0].mxu0
    %5134 = vdwg.mxu0
    %v5135 = vmul.f32 %v5036, 0.35355338
    %v5136 = vmul.f32 %v5041, 0.35355338
    %v5137 = vmul.f32 %v5127, 0.35355338
    %v5138 = vmul.f32 %v5132, 0.35355338
    %v5139 = vadd.f32 %v5135, %v1363
    %v5140 = vadd.f32 %v5136, %v1364
    %v5141 = vadd.f32 %v5137, %v1365
    %v5142 = vadd.f32 %v5138, %v1366
    %v5143 = vsel %vm342, %v5139, -inf
    %5144 = vmax.xlane.f32.xlu0 %v5143
    %v5145 = vpop.xlane.xlu0 %5144
    %v5146 = vsel %vm342, %v5140, -inf
    %5147 = vmax.xlane.f32.xlu0 %v5146
    %v5148 = vpop.xlane.xlu0 %5147
    %v5149 = vsel %vm342, %v5141, -inf
    %5150 = vmax.xlane.f32.xlu0 %v5149
    %v5151 = vpop.xlane.xlu0 %5150
    %v5152 = vsel %vm342, %v5142, -inf
    %5153 = vmax.xlane.f32.xlu0 %v5152
    %v5154 = vpop.xlane.xlu0 %5153
    %v5155 = vsub.f32 %v5139, %v5145
    %v5156 = vsub.f32 %v5140, %v5148
    %v5157 = vsub.f32 %v5141, %v5151
    %v5158 = vsub.f32 %v5142, %v5154
    %v5159 = vmul.f32 %v5155, 1.442695
    %v5160 = vpow.pop %v5159
    %v5161 = vmul.f32 %v5156, 1.442695
    %v5162 = vpow.pop %v5161
    %v5163 = vmul.f32 %v5157, 1.442695
    %v5164 = vpow.pop %v5163
    %v5165 = vmul.f32 %v5158, 1.442695
    %v5166 = vpow.pop %v5165
    %v5167 = vsel %vm342, %v5160, 0.0
    %5168 = vadd.xlane.f32.xlu0 %v5167
    %v5169 = vpop.xlane.xlu0 %5168
    %v5170 = vsel %vm342, %v5162, 0.0
    %5171 = vadd.xlane.f32.xlu0 %v5170
    %v5172 = vpop.xlane.xlu0 %5171
    %v5173 = vsel %vm342, %v5164, 0.0
    %5174 = vadd.xlane.f32.xlu0 %v5173
    %v5175 = vpop.xlane.xlu0 %5174
    %v5176 = vsel %vm342, %v5166, 0.0
    %5177 = vadd.xlane.f32.xlu0 %v5176
    %v5178 = vpop.xlane.xlu0 %5177
    %v5179 = vrcp.pop %v5169
    %v5180 = vrcp.pop %v5172
    %v5181 = vrcp.pop %v5175
    %v5182 = vrcp.pop %v5178
    %v5183 = vmul.f32 %v5160, %v5179
    %v5184 = vmul.f32 %v5162, %v5180
    %v5185 = vmul.f32 %v5164, %v5181
    %v5186 = vmul.f32 %v5166, %v5182
    %5187 = vrot.lane.b32.xlu0 %v3715, 40
    %v5188 = vpop.permute.xlu0 %5187
    %5189 = vrot.lane.b32.xlu0 %v3720, 40
    %v5190 = vpop.permute.xlu0 %5189
    %v5194 = vsel %vm342, %v5183, 0
    %v5197 = vsel %vm342, %v5184, 0
    %5199 = vmatprep.subr.mxu0 0.0
    %5200 = vmatpush1.msra.mxu0 %v5188
    %5201 = vmatprep.subr.mxu0 0.0
    %5202 = vmatpush1.msra.mxu0 %v5190
    %5203 = vmatprep.subr.mxu0 0.0
    %5204 = vmatpush1.msra.mxu0 0.0
    %5205 = vmatprep.subr.mxu0 0.0
    %5206 = vmatpush1.msra.mxu0 0.0
    %5207 = vmatprep.subr.mxu0 0.0
    %5208 = vmatpush1.msra.mxu0 0.0
    %5209 = vmatprep.subr.mxu0 0.0
    %5210 = vmatpush1.msra.mxu0 0.0
    %5211 = vmatprep.subr.mxu0 0.0
    %5212 = vmatpush1.msra.mxu0 0.0
    %5213 = vmatprep.subr.mxu0 0.0
    %5214 = vmatpush1.msra.mxu0 0.0
    %5215 = vmatprep.subr.mxu0 0.0
    %5216 = vmatpush1.msra.mxu0 0.0
    %5217 = vmatprep.subr.mxu0 0.0
    %5218 = vmatpush1.msra.mxu0 0.0
    %5219 = vmatprep.subr.mxu0 0.0
    %5220 = vmatpush1.msra.mxu0 0.0
    %5221 = vmatprep.subr.mxu0 0.0
    %5222 = vmatpush1.msra.mxu0 0.0
    %5223 = vmatprep.subr.mxu0 0.0
    %5224 = vmatpush1.msra.mxu0 0.0
    %5225 = vmatprep.subr.mxu0 0.0
    %5226 = vmatpush1.msra.mxu0 0.0
    %5227 = vmatprep.subr.mxu0 0.0
    %5228 = vmatpush1.msra.mxu0 0.0
    %5229 = vmatprep.subr.mxu0 0.0
    %5230 = vmatpush1.msra.mxu0 0.0
    %5231 = vmatprep.subr.mxu0 0.0
    %5232 = vmatpush1.msra.mxu0 0.0
    %5233 = vmatprep.subr.mxu0 0.0
    %5234 = vmatpush1.msra.mxu0 0.0
    %5235 = vmatprep.subr.mxu0 0.0
    %5236 = vmatpush1.msra.mxu0 0.0
    %5237 = vmatprep.subr.mxu0 0.0
    %5238 = vmatpush1.msra.mxu0 0.0
    %5239 = vmatprep.subr.mxu0 0.0
    %5240 = vmatpush1.msra.mxu0 0.0
    %5241 = vmatprep.subr.mxu0 0.0
    %5242 = vmatpush1.msra.mxu0 0.0
    %5243 = vmatprep.subr.mxu0 0.0
    %5244 = vmatpush1.msra.mxu0 0.0
    %5245 = vmatprep.subr.mxu0 0.0
    %5246 = vmatpush1.msra.mxu0 0.0
    %5247 = vmatprep.subr.mxu0 0.0
    %5248 = vmatpush1.msra.mxu0 0.0
    %5249 = vmatprep.subr.mxu0 0.0
    %5250 = vmatpush1.msra.mxu0 0.0
    %5251 = vmatprep.subr.mxu0 0.0
    %5252 = vmatpush1.msra.mxu0 0.0
    %5253 = vmatprep.subr.mxu0 0.0
    %5254 = vmatpush1.msra.mxu0 0.0
    %5255 = vmatprep.subr.mxu0 0.0
    %5256 = vmatpush1.msra.mxu0 0.0
    %5257 = vmatprep.subr.mxu0 0.0
    %5258 = vmatpush1.msra.mxu0 0.0
    %5259 = vmatprep.subr.mxu0 0.0
    %5260 = vmatpush1.msra.mxu0 0.0
    %5261 = vmatprep.subr.mxu0 0.0
    %5262 = vmatpush1.msra.mxu0 0.0
    %5263 = vmatprep.mubr.f32.mxu0 0.0
    %5264 = vmatmul.mubr.f32.gmra.mrb[0].mxu0 %v5194
    %v5265 = vpop.f32.mrb[0].mxu0
    %v5266 = vadd.f32 0.0, %v5265
    %v5267 = vpop.f32.mrb[0].mxu0
    %5268 = vmatprep.mubr.f32.mxu0 0.0
    %5269 = vmatmul.mubr.f32.gmra.mrb[0].mxu0 %v5197
    %v5270 = vpop.f32.mrb[0].mxu0
    %v5271 = vadd.f32 0.0, %v5270
    %v5272 = vpop.f32.mrb[0].mxu0
    %5273 = vdwg.mxu0
    %5274 = vrot.lane.b32.xlu0 %v3725, 40
    %v5275 = vpop.permute.xlu0 %5274
    %5276 = vrot.lane.b32.xlu0 %v3730, 40
    %v5277 = vpop.permute.xlu0 %5276
    %v5281 = vsel %vm342, %v5185, 0
    %v5284 = vsel %vm342, %v5186, 0
    %5286 = vmatprep.subr.mxu0 0.0
    %5287 = vmatpush1.msra.mxu0 %v5275
    %5288 = vmatprep.subr.mxu0 0.0
    %5289 = vmatpush1.msra.mxu0 %v5277
    %5290 = vmatprep.subr.mxu0 0.0
    %5291 = vmatpush1.msra.mxu0 0.0
    %5292 = vmatprep.subr.mxu0 0.0
    %5293 = vmatpush1.msra.mxu0 0.0
    %5294 = vmatprep.subr.mxu0 0.0
    %5295 = vmatpush1.msra.mxu0 0.0
    %5296 = vmatprep.subr.mxu0 0.0
    %5297 = vmatpush1.msra.mxu0 0.0
    %5298 = vmatprep.subr.mxu0 0.0
    %5299 = vmatpush1.msra.mxu0 0.0
    %5300 = vmatprep.subr.mxu0 0.0
    %5301 = vmatpush1.msra.mxu0 0.0
    %5302 = vmatprep.subr.mxu0 0.0
    %5303 = vmatpush1.msra.mxu0 0.0
    %5304 = vmatprep.subr.mxu0 0.0
    %5305 = vmatpush1.msra.mxu0 0.0
    %5306 = vmatprep.subr.mxu0 0.0
    %5307 = vmatpush1.msra.mxu0 0.0
    %5308 = vmatprep.subr.mxu0 0.0
    %5309 = vmatpush1.msra.mxu0 0.0
    %5310 = vmatprep.subr.mxu0 0.0
    %5311 = vmatpush1.msra.mxu0 0.0
    %5312 = vmatprep.subr.mxu0 0.0
    %5313 = vmatpush1.msra.mxu0 0.0
    %5314 = vmatprep.subr.mxu0 0.0
    %5315 = vmatpush1.msra.mxu0 0.0
    %5316 = vmatprep.subr.mxu0 0.0
    %5317 = vmatpush1.msra.mxu0 0.0
    %5318 = vmatprep.subr.mxu0 0.0
    %5319 = vmatpush1.msra.mxu0 0.0
    %5320 = vmatprep.subr.mxu0 0.0
    %5321 = vmatpush1.msra.mxu0 0.0
    %5322 = vmatprep.subr.mxu0 0.0
    %5323 = vmatpush1.msra.mxu0 0.0
    %5324 = vmatprep.subr.mxu0 0.0
    %5325 = vmatpush1.msra.mxu0 0.0
    %5326 = vmatprep.subr.mxu0 0.0
    %5327 = vmatpush1.msra.mxu0 0.0
    %5328 = vmatprep.subr.mxu0 0.0
    %5329 = vmatpush1.msra.mxu0 0.0
    %5330 = vmatprep.subr.mxu0 0.0
    %5331 = vmatpush1.msra.mxu0 0.0
    %5332 = vmatprep.subr.mxu0 0.0
    %5333 = vmatpush1.msra.mxu0 0.0
    %5334 = vmatprep.subr.mxu0 0.0
    %5335 = vmatpush1.msra.mxu0 0.0
    %5336 = vmatprep.subr.mxu0 0.0
    %5337 = vmatpush1.msra.mxu0 0.0
    %5338 = vmatprep.subr.mxu0 0.0
    %5339 = vmatpush1.msra.mxu0 0.0
    %5340 = vmatprep.subr.mxu0 0.0
    %5341 = vmatpush1.msra.mxu0 0.0
    %5342 = vmatprep.subr.mxu0 0.0
    %5343 = vmatpush1.msra.mxu0 0.0
    %5344 = vmatprep.subr.mxu0 0.0
    %5345 = vmatpush1.msra.mxu0 0.0
    %5346 = vmatprep.subr.mxu0 0.0
    %5347 = vmatpush1.msra.mxu0 0.0
    %5348 = vmatprep.subr.mxu0 0.0
    %5349 = vmatpush1.msra.mxu0 0.0
    %5350 = vmatprep.mubr.f32.mxu0 0.0
    %5351 = vmatmul.mubr.f32.gmra.mrb[0].mxu0 %v5281
    %v5352 = vpop.f32.mrb[0].mxu0
    %v5353 = vadd.f32 0.0, %v5352
    %v5354 = vpop.f32.mrb[0].mxu0
    %5355 = vmatprep.mubr.f32.mxu0 0.0
    %5356 = vmatmul.mubr.f32.gmra.mrb[0].mxu0 %v5284
    %v5357 = vpop.f32.mrb[0].mxu0
    %v5358 = vadd.f32 0.0, %v5357
    %v5359 = vpop.f32.mrb[0].mxu0
    %5360 = vdwg.mxu0
    %5365 = vrot.lane.b32.xlu0 %v4450, 8
    %v5366 = vpop.permute.xlu0 %5365
    %5367 = vrot.lane.b32.xlu0 %v4455, 8
    %v5368 = vpop.permute.xlu0 %5367
    %5369 = vrot.lane.b32.xlu0 %v4537, 8
    %v5370 = vpop.permute.xlu0 %5369
    %5371 = vrot.lane.b32.xlu0 %v4542, 8
    %v5372 = vpop.permute.xlu0 %5371
    %5381 = vrot.lane.b32.xlu0 %v4858, 16
    %v5382 = vpop.permute.xlu0 %5381
    %5383 = vrot.lane.b32.xlu0 %v4863, 16
    %v5384 = vpop.permute.xlu0 %5383
    %5385 = vrot.lane.b32.xlu0 %v4945, 16
    %v5386 = vpop.permute.xlu0 %5385
    %5387 = vrot.lane.b32.xlu0 %v4950, 16
    %v5388 = vpop.permute.xlu0 %5387
    %5397 = vrot.lane.b32.xlu0 %v5266, 24
    %v5398 = vpop.permute.xlu0 %5397
    %5399 = vrot.lane.b32.xlu0 %v5271, 24
    %v5400 = vpop.permute.xlu0 %5399
    %5401 = vrot.lane.b32.xlu0 %v5353, 24
    %v5402 = vpop.permute.xlu0 %5401
    %5403 = vrot.lane.b32.xlu0 %v5358, 24
    %v5404 = vpop.permute.xlu0 %5403
    %v5409 = vsel %vm205, %v4042, %v5366
    %v5410 = vsel %vm205, %v4047, %v5368
    %v5411 = vsel %vm205, %v4129, %v5370
    %v5412 = vsel %vm205, %v4134, %v5372
    %v5413 = vsel %vm342, %v5409, %v5382
    %v5414 = vsel %vm342, %v5410, %v5384
    %v5415 = vsel %vm342, %v5411, %v5386
    %v5416 = vsel %vm342, %v5412, %v5388
    %v5417 = vsel %vm3153, %v5413, %v5398
    %v5418 = vsel %vm3153, %v5414, %v5400
    %v5419 = vsel %vm3153, %v5415, %v5402
    %v5420 = vsel %vm3153, %v5416, %v5404
    %s5421 = scalar_lea.vmem %s8, 32
    %v5422 = vld [vmem:[%s5421] sm:$0xff]
    %v5423 = vld [vmem:[%s5421 + $0x8] sm:$0xff]
    %v5424 = vld [vmem:[%s5421 + $0x10] sm:$0xff]
    %v5425 = vld [vmem:[%s5421 + $0x18] sm:$0xff]
    %v5427 = vsel %vm444, %v5417, 0
    %v5430 = vsel %vm444, %v5418, 0
    %v5433 = vsel %vm444, %v5419, 0
    %v5436 = vsel %vm444, %v5420, 0
    %5438 = vmatprep.subr.mxu0 0.0
    %5439 = vmatpush1.msra.mxu0 %v5422
    %5440 = vmatprep.subr.mxu0 0.0
    %5441 = vmatpush1.msra.mxu0 %v5423
    %5442 = vmatprep.subr.mxu0 0.0
    %5443 = vmatpush1.msra.mxu0 %v5424
    %5444 = vmatprep.subr.mxu0 0.0
    %5445 = vmatpush1.msra.mxu0 %v5425
    %5446 = vmatprep.subr.mxu0 0.0
    %5447 = vmatpush1.msra.mxu0 0.0
    %5448 = vmatprep.subr.mxu0 0.0
    %5449 = vmatpush1.msra.mxu0 0.0
    %5450 = vmatprep.subr.mxu0 0.0
    %5451 = vmatpush1.msra.mxu0 0.0
    %5452 = vmatprep.subr.mxu0 0.0
    %5453 = vmatpush1.msra.mxu0 0.0
    %5454 = vmatprep.subr.mxu0 0.0
    %5455 = vmatpush1.msra.mxu0 0.0
    %5456 = vmatprep.subr.mxu0 0.0
    %5457 = vmatpush1.msra.mxu0 0.0
    %5458 = vmatprep.subr.mxu0 0.0
    %5459 = vmatpush1.msra.mxu0 0.0
    %5460 = vmatprep.subr.mxu0 0.0
    %5461 = vmatpush1.msra.mxu0 0.0
    %5462 = vmatprep.subr.mxu0 0.0
    %5463 = vmatpush1.msra.mxu0 0.0
    %5464 = vmatprep.subr.mxu0 0.0
    %5465 = vmatpush1.msra.mxu0 0.0
    %5466 = vmatprep.subr.mxu0 0.0
    %5467 = vmatpush1.msra.mxu0 0.0
    %5468 = vmatprep.subr.mxu0 0.0
    %5469 = vmatpush1.msra.mxu0 0.0
    %5470 = vmatprep.subr.mxu0 0.0
    %5471 = vmatpush1.msra.mxu0 0.0
    %5472 = vmatprep.subr.mxu0 0.0
    %5473 = vmatpush1.msra.mxu0 0.0
    %5474 = vmatprep.subr.mxu0 0.0
    %5475 = vmatpush1.msra.mxu0 0.0
    %5476 = vmatprep.subr.mxu0 0.0
    %5477 = vmatpush1.msra.mxu0 0.0
    %5478 = vmatprep.subr.mxu0 0.0
    %5479 = vmatpush1.msra.mxu0 0.0
    %5480 = vmatprep.subr.mxu0 0.0
    %5481 = vmatpush1.msra.mxu0 0.0
    %5482 = vmatprep.subr.mxu0 0.0
    %5483 = vmatpush1.msra.mxu0 0.0
    %5484 = vmatprep.subr.mxu0 0.0
    %5485 = vmatpush1.msra.mxu0 0.0
    %5486 = vmatprep.subr.mxu0 0.0
    %5487 = vmatpush1.msra.mxu0 0.0
    %5488 = vmatprep.subr.mxu0 0.0
    %5489 = vmatpush1.msra.mxu0 0.0
    %5490 = vmatprep.subr.mxu0 0.0
    %5491 = vmatpush1.msra.mxu0 0.0
    %5492 = vmatprep.subr.mxu0 0.0
    %5493 = vmatpush1.msra.mxu0 0.0
    %5494 = vmatprep.subr.mxu0 0.0
    %5495 = vmatpush1.msra.mxu0 0.0
    %5496 = vmatprep.subr.mxu0 0.0
    %5497 = vmatpush1.msra.mxu0 0.0
    %5498 = vmatprep.subr.mxu0 0.0
    %5499 = vmatpush1.msra.mxu0 0.0
    %5500 = vmatprep.subr.mxu0 0.0
    %5501 = vmatpush1.msra.mxu0 0.0
    %5502 = vmatprep.mubr.f32.mxu0 0.0
    %5503 = vmatmul.mubr.f32.gmra.mrb[0].mxu0 %v5427
    %v5504 = vpop.f32.mrb[0].mxu0
    %v5505 = vadd.f32 0.0, %v5504
    %v5506 = vpop.f32.mrb[0].mxu0
    %5507 = vmatprep.mubr.f32.mxu0 0.0
    %5508 = vmatmul.mubr.f32.gmra.mrb[0].mxu0 %v5430
    %v5509 = vpop.f32.mrb[0].mxu0
    %v5510 = vadd.f32 0.0, %v5509
    %v5511 = vpop.f32.mrb[0].mxu0
    %5512 = vmatprep.mubr.f32.mxu0 0.0
    %5513 = vmatmul.mubr.f32.gmra.mrb[0].mxu0 %v5433
    %v5514 = vpop.f32.mrb[0].mxu0
    %v5515 = vadd.f32 0.0, %v5514
    %v5516 = vpop.f32.mrb[0].mxu0
    %5517 = vmatprep.mubr.f32.mxu0 0.0
    %5518 = vmatmul.mubr.f32.gmra.mrb[0].mxu0 %v5436
    %v5519 = vpop.f32.mrb[0].mxu0
    %v5520 = vadd.f32 0.0, %v5519
    %v5521 = vpop.f32.mrb[0].mxu0
    %5522 = vdwg.mxu0
    %v5523 = vadd.f32 %v3625, %v5505
    %v5524 = vadd.f32 %v3626, %v5510
    %v5525 = vadd.f32 %v3627, %v5515
    %v5526 = vadd.f32 %v3628, %v5520
    %v5527 = vsel %vm444, %v5523, 0.0
    %5528 = vadd.xlane.f32.xlu0 %v5527
    %v5529 = vpop.xlane.xlu0 %5528
    %v5530 = vsel %vm444, %v5524, 0.0
    %5531 = vadd.xlane.f32.xlu0 %v5530
    %v5532 = vpop.xlane.xlu0 %5531
    %v5533 = vsel %vm444, %v5525, 0.0
    %5534 = vadd.xlane.f32.xlu0 %v5533
    %v5535 = vpop.xlane.xlu0 %5534
    %v5536 = vsel %vm444, %v5526, 0.0
    %5537 = vadd.xlane.f32.xlu0 %v5536
    %v5538 = vpop.xlane.xlu0 %5537
    %v5539 = vmul.f32 %v5529, %v3275
    %v5540 = vmul.f32 %v5532, %v3275
    %v5541 = vmul.f32 %v5535, %v3275
    %v5542 = vmul.f32 %v5538, %v3275
    %v5543 = vsub.f32 %v5523, %v5539
    %v5544 = vsub.f32 %v5524, %v5540
    %v5545 = vsub.f32 %v5525, %v5541
    %v5546 = vsub.f32 %v5526, %v5542
    %v5547 = vmul.f32 %v5543, %v5543
    %v5548 = vmul.f32 %v5544, %v5544
    %v5549 = vmul.f32 %v5545, %v5545
    %v5550 = vmul.f32 %v5546, %v5546
    %v5551 = vsel %vm444, %v5547, 0.0
    %5552 = vadd.xlane.f32.xlu0 %v5551
    %v5553 = vpop.xlane.xlu0 %5552
    %v5554 = vsel %vm444, %v5548, 0.0
    %5555 = vadd.xlane.f32.xlu0 %v5554
    %v5556 = vpop.xlane.xlu0 %5555
    %v5557 = vsel %vm444, %v5549, 0.0
    %5558 = vadd.xlane.f32.xlu0 %v5557
    %v5559 = vpop.xlane.xlu0 %5558
    %v5560 = vsel %vm444, %v5550, 0.0
    %5561 = vadd.xlane.f32.xlu0 %v5560
    %v5562 = vpop.xlane.xlu0 %5561
    %v5563 = vmul.f32 %v5553, %v3275
    %v5564 = vmul.f32 %v5556, %v3275
    %v5565 = vmul.f32 %v5559, %v3275
    %v5566 = vmul.f32 %v5562, %v3275
    %v5567 = vadd.f32 %v5563, 1e-05
    %v5568 = vadd.f32 %v5564, 1e-05
    %v5569 = vadd.f32 %v5565, 1e-05
    %v5570 = vadd.f32 %v5566, 1e-05
    %v5571 = vrsqrt.pop %v5567
    %v5572 = vrsqrt.pop %v5568
    %v5573 = vrsqrt.pop %v5569
    %v5574 = vrsqrt.pop %v5570
    %v5575 = vmul.f32 %v5543, %v5571
    %v5576 = vmul.f32 %v5544, %v5572
    %v5577 = vmul.f32 %v5545, %v5573
    %v5578 = vmul.f32 %v5546, %v5574
    %v5579 = vlaneseq
    %v5580 = vshrl.u32 %v5579, 7
    %v5581 = vsub.s32 0, %v5580
    %v5582 = vrot.slane %v3630, %v5581
    %v5583 = vmul.f32 %v5575, %v5582
    %v5584 = vmul.f32 %v5576, %v5582
    %v5585 = vmul.f32 %v5577, %v5582
    %v5586 = vmul.f32 %v5578, %v5582
    %v5587 = vlaneseq
    %v5588 = vshrl.u32 %v5587, 7
    %v5589 = vsub.s32 1, %v5588
    %v5590 = vrot.slane %v3630, %v5589
    %v5591 = vadd.f32 %v5583, %v5590
    %v5592 = vadd.f32 %v5584, %v5590
    %v5593 = vadd.f32 %v5585, %v5590
    %v5594 = vadd.f32 %v5586, %v5590
    %s5595 = scalar_lea.vmem %s10, 32
    %v5596 = vld [vmem:[%s5595] sm:$0xff]
    %v5597 = vld [vmem:[%s5595 + $0x8] sm:$0xff]
    %v5598 = vld [vmem:[%s5595 + $0x10] sm:$0xff]
    %v5599 = vld [vmem:[%s5595 + $0x18] sm:$0xff]
    %s5600 = scalar_lea.vmem [#allocation13], 1
    %v5601 = vld [vmem:[%s5600] sm:$0x1]
    %v5603 = vlaneseq
    %v5604 = vshrl.u32 %v5603, 7
    %v5605 = vsub.s32 0, %v5604
    %v5606 = vrot.slane %v5601, %v5605
    %v5609 = vsel %vm444, %v5591, 0
    %v5612 = vsel %vm444, %v5592, 0
    %v5615 = vsel %vm444, %v5593, 0
    %v5618 = vsel %vm444, %v5594, 0
    %5620 = vmatprep.subr.mxu0 0.0
    %5621 = vmatpush1.msra.mxu0 %v5596
    %5622 = vmatprep.subr.mxu0 0.0
    %5623 = vmatpush1.msra.mxu0 %v5597
    %5624 = vmatprep.subr.mxu0 0.0
    %5625 = vmatpush1.msra.mxu0 %v5598
    %5626 = vmatprep.subr.mxu0 0.0
    %5627 = vmatpush1.msra.mxu0 %v5599
    %5628 = vmatprep.subr.mxu0 0.0
    %5629 = vmatpush1.msra.mxu0 0.0
    %5630 = vmatprep.subr.mxu0 0.0
    %5631 = vmatpush1.msra.mxu0 0.0
    %5632 = vmatprep.subr.mxu0 0.0
    %5633 = vmatpush1.msra.mxu0 0.0
    %5634 = vmatprep.subr.mxu0 0.0
    %5635 = vmatpush1.msra.mxu0 0.0
    %5636 = vmatprep.subr.mxu0 0.0
    %5637 = vmatpush1.msra.mxu0 0.0
    %5638 = vmatprep.subr.mxu0 0.0
    %5639 = vmatpush1.msra.mxu0 0.0
    %5640 = vmatprep.subr.mxu0 0.0
    %5641 = vmatpush1.msra.mxu0 0.0
    %5642 = vmatprep.subr.mxu0 0.0
    %5643 = vmatpush1.msra.mxu0 0.0
    %5644 = vmatprep.subr.mxu0 0.0
    %5645 = vmatpush1.msra.mxu0 0.0
    %5646 = vmatprep.subr.mxu0 0.0
    %5647 = vmatpush1.msra.mxu0 0.0
    %5648 = vmatprep.subr.mxu0 0.0
    %5649 = vmatpush1.msra.mxu0 0.0
    %5650 = vmatprep.subr.mxu0 0.0
    %5651 = vmatpush1.msra.mxu0 0.0
    %5652 = vmatprep.subr.mxu0 0.0
    %5653 = vmatpush1.msra.mxu0 0.0
    %5654 = vmatprep.subr.mxu0 0.0
    %5655 = vmatpush1.msra.mxu0 0.0
    %5656 = vmatprep.subr.mxu0 0.0
    %5657 = vmatpush1.msra.mxu0 0.0
    %5658 = vmatprep.subr.mxu0 0.0
    %5659 = vmatpush1.msra.mxu0 0.0
    %5660 = vmatprep.subr.mxu0 0.0
    %5661 = vmatpush1.msra.mxu0 0.0
    %5662 = vmatprep.subr.mxu0 0.0
    %5663 = vmatpush1.msra.mxu0 0.0
    %5664 = vmatprep.subr.mxu0 0.0
    %5665 = vmatpush1.msra.mxu0 0.0
    %5666 = vmatprep.subr.mxu0 0.0
    %5667 = vmatpush1.msra.mxu0 0.0
    %5668 = vmatprep.subr.mxu0 0.0
    %5669 = vmatpush1.msra.mxu0 0.0
    %5670 = vmatprep.subr.mxu0 0.0
    %5671 = vmatpush1.msra.mxu0 0.0
    %5672 = vmatprep.subr.mxu0 0.0
    %5673 = vmatpush1.msra.mxu0 0.0
    %5674 = vmatprep.subr.mxu0 0.0
    %5675 = vmatpush1.msra.mxu0 0.0
    %5676 = vmatprep.subr.mxu0 0.0
    %5677 = vmatpush1.msra.mxu0 0.0
    %5678 = vmatprep.subr.mxu0 0.0
    %5679 = vmatpush1.msra.mxu0 0.0
    %5680 = vmatprep.subr.mxu0 0.0
    %5681 = vmatpush1.msra.mxu0 0.0
    %5682 = vmatprep.subr.mxu0 0.0
    %5683 = vmatpush1.msra.mxu0 0.0
    %5684 = vmatprep.mubr.f32.mxu0 0.0
    %5685 = vmatmul.mubr.f32.gmra.mrb[0].mxu0 %v5609
    %v5686 = vpop.f32.mrb[0].mxu0
    %v5687 = vadd.f32 %v5606, %v5686
    %v5688 = vpop.f32.mrb[0].mxu0
    %5689 = vmatprep.mubr.f32.mxu0 0.0
    %5690 = vmatmul.mubr.f32.gmra.mrb[0].mxu0 %v5612
    %v5691 = vpop.f32.mrb[0].mxu0
    %v5692 = vadd.f32 %v5606, %v5691
    %v5693 = vpop.f32.mrb[0].mxu0
    %5694 = vmatprep.mubr.f32.mxu0 0.0
    %5695 = vmatmul.mubr.f32.gmra.mrb[0].mxu0 %v5615
    %v5696 = vpop.f32.mrb[0].mxu0
    %v5697 = vadd.f32 %v5606, %v5696
    %v5698 = vpop.f32.mrb[0].mxu0
    %5699 = vmatprep.mubr.f32.mxu0 0.0
    %5700 = vmatmul.mubr.f32.gmra.mrb[0].mxu0 %v5618
    %v5701 = vpop.f32.mrb[0].mxu0
    %v5702 = vadd.f32 %v5606, %v5701
    %v5703 = vpop.f32.mrb[0].mxu0
    %5704 = vdwg.mxu0
    %v5705 = vmax.f32 %v5687, 0.0
    %v5706 = vmax.f32 %v5692, 0.0
    %v5707 = vmax.f32 %v5697, 0.0
    %v5708 = vmax.f32 %v5702, 0.0
    %s5709 = scalar_lea.vmem %s12, 64
    %v5710 = vld [vmem:[%s5709] sm:$0xff]
    %v5711 = vld [vmem:[%s5709 + $0x8] sm:$0xff]
    %v5712 = vld [vmem:[%s5709 + $0x10] sm:$0xff]
    %v5713 = vld [vmem:[%s5709 + $0x18] sm:$0xff]
    %v5714 = vld [vmem:[%s5709 + $0x20] sm:$0xff]
    %v5715 = vld [vmem:[%s5709 + $0x28] sm:$0xff]
    %v5716 = vld [vmem:[%s5709 + $0x30] sm:$0xff]
    %v5717 = vld [vmem:[%s5709 + $0x38] sm:$0xff]
    %s5718 = scalar_lea.vmem [#allocation14], 1
    %v5719 = vld [vmem:[%s5718] sm:$0x1]
    %v5721 = vlaneseq
    %v5722 = vshrl.u32 %v5721, 7
    %v5723 = vsub.s32 0, %v5722
    %v5724 = vrot.slane %v5719, %v5723
    %v5727 = vsel %vm3459, %v5705, 0
    %v5730 = vsel %vm3459, %v5706, 0
    %v5733 = vsel %vm3459, %v5707, 0
    %v5736 = vsel %vm3459, %v5708, 0
    %5738 = vmatprep.subr.mxu0 0.0
    %5739 = vmatpush1.msra.mxu0 %v5710
    %5740 = vmatprep.subr.mxu0 0.0
    %5741 = vmatpush1.msra.mxu0 %v5711
    %5742 = vmatprep.subr.mxu0 0.0
    %5743 = vmatpush1.msra.mxu0 %v5712
    %5744 = vmatprep.subr.mxu0 0.0
    %5745 = vmatpush1.msra.mxu0 %v5713
    %5746 = vmatprep.subr.mxu0 0.0
    %5747 = vmatpush1.msra.mxu0 %v5714
    %5748 = vmatprep.subr.mxu0 0.0
    %5749 = vmatpush1.msra.mxu0 %v5715
    %5750 = vmatprep.subr.mxu0 0.0
    %5751 = vmatpush1.msra.mxu0 %v5716
    %5752 = vmatprep.subr.mxu0 0.0
    %5753 = vmatpush1.msra.mxu0 %v5717
    %5754 = vmatprep.subr.mxu0 0.0
    %5755 = vmatpush1.msra.mxu0 0.0
    %5756 = vmatprep.subr.mxu0 0.0
    %5757 = vmatpush1.msra.mxu0 0.0
    %5758 = vmatprep.subr.mxu0 0.0
    %5759 = vmatpush1.msra.mxu0 0.0
    %5760 = vmatprep.subr.mxu0 0.0
    %5761 = vmatpush1.msra.mxu0 0.0
    %5762 = vmatprep.subr.mxu0 0.0
    %5763 = vmatpush1.msra.mxu0 0.0
    %5764 = vmatprep.subr.mxu0 0.0
    %5765 = vmatpush1.msra.mxu0 0.0
    %5766 = vmatprep.subr.mxu0 0.0
    %5767 = vmatpush1.msra.mxu0 0.0
    %5768 = vmatprep.subr.mxu0 0.0
    %5769 = vmatpush1.msra.mxu0 0.0
    %5770 = vmatprep.subr.mxu0 0.0
    %5771 = vmatpush1.msra.mxu0 0.0
    %5772 = vmatprep.subr.mxu0 0.0
    %5773 = vmatpush1.msra.mxu0 0.0
    %5774 = vmatprep.subr.mxu0 0.0
    %5775 = vmatpush1.msra.mxu0 0.0
    %5776 = vmatprep.subr.mxu0 0.0
    %5777 = vmatpush1.msra.mxu0 0.0
    %5778 = vmatprep.subr.mxu0 0.0
    %5779 = vmatpush1.msra.mxu0 0.0
    %5780 = vmatprep.subr.mxu0 0.0
    %5781 = vmatpush1.msra.mxu0 0.0
    %5782 = vmatprep.subr.mxu0 0.0
    %5783 = vmatpush1.msra.mxu0 0.0
    %5784 = vmatprep.subr.mxu0 0.0
    %5785 = vmatpush1.msra.mxu0 0.0
    %5786 = vmatprep.subr.mxu0 0.0
    %5787 = vmatpush1.msra.mxu0 0.0
    %5788 = vmatprep.subr.mxu0 0.0
    %5789 = vmatpush1.msra.mxu0 0.0
    %5790 = vmatprep.subr.mxu0 0.0
    %5791 = vmatpush1.msra.mxu0 0.0
    %5792 = vmatprep.subr.mxu0 0.0
    %5793 = vmatpush1.msra.mxu0 0.0
    %5794 = vmatprep.subr.mxu0 0.0
    %5795 = vmatpush1.msra.mxu0 0.0
    %5796 = vmatprep.subr.mxu0 0.0
    %5797 = vmatpush1.msra.mxu0 0.0
    %5798 = vmatprep.subr.mxu0 0.0
    %5799 = vmatpush1.msra.mxu0 0.0
    %5800 = vmatprep.subr.mxu0 0.0
    %5801 = vmatpush1.msra.mxu0 0.0
    %5802 = vmatprep.mubr.f32.mxu0 0.0
    %5803 = vmatmul.mubr.f32.gmra.mrb[0].mxu0 %v5727
    %v5804 = vpop.f32.mrb[0].mxu0
    %v5805 = vadd.f32 %v5724, %v5804
    %v5806 = vpop.f32.mrb[0].mxu0
    %5807 = vmatprep.mubr.f32.mxu0 0.0
    %5808 = vmatmul.mubr.f32.gmra.mrb[0].mxu0 %v5730
    %v5809 = vpop.f32.mrb[0].mxu0
    %v5810 = vadd.f32 %v5724, %v5809
    %v5811 = vpop.f32.mrb[0].mxu0
    %5812 = vmatprep.mubr.f32.mxu0 0.0
    %5813 = vmatmul.mubr.f32.gmra.mrb[0].mxu0 %v5733
    %v5814 = vpop.f32.mrb[0].mxu0
    %v5815 = vadd.f32 %v5724, %v5814
    %v5816 = vpop.f32.mrb[0].mxu0
    %5817 = vmatprep.mubr.f32.mxu0 0.0
    %5818 = vmatmul.mubr.f32.gmra.mrb[0].mxu0 %v5736
    %v5819 = vpop.f32.mrb[0].mxu0
    %v5820 = vadd.f32 %v5724, %v5819
    %v5821 = vpop.f32.mrb[0].mxu0
    %5822 = vdwg.mxu0
    %v5823 = vadd.f32 %v5591, %v5805
    %v5824 = vadd.f32 %v5592, %v5810
    %v5825 = vadd.f32 %v5593, %v5815
    %v5826 = vadd.f32 %v5594, %v5820
    %v5827 = vsel %vm444, %v5823, 0.0
    %5828 = vadd.xlane.f32.xlu0 %v5827
    %v5829 = vpop.xlane.xlu0 %5828
    %v5830 = vsel %vm444, %v5824, 0.0
    %5831 = vadd.xlane.f32.xlu0 %v5830
    %v5832 = vpop.xlane.xlu0 %5831
    %v5833 = vsel %vm444, %v5825, 0.0
    %5834 = vadd.xlane.f32.xlu0 %v5833
    %v5835 = vpop.xlane.xlu0 %5834
    %v5836 = vsel %vm444, %v5826, 0.0
    %5837 = vadd.xlane.f32.xlu0 %v5836
    %v5838 = vpop.xlane.xlu0 %5837
    %v5839 = vmul.f32 %v5829, %v3275
    %v5840 = vmul.f32 %v5832, %v3275
    %v5841 = vmul.f32 %v5835, %v3275
    %v5842 = vmul.f32 %v5838, %v3275
    %v5843 = vsub.f32 %v5823, %v5839
    %v5844 = vsub.f32 %v5824, %v5840
    %v5845 = vsub.f32 %v5825, %v5841
    %v5846 = vsub.f32 %v5826, %v5842
    %v5847 = vmul.f32 %v5843, %v5843
    %v5848 = vmul.f32 %v5844, %v5844
    %v5849 = vmul.f32 %v5845, %v5845
    %v5850 = vmul.f32 %v5846, %v5846
    %v5851 = vsel %vm444, %v5847, 0.0
    %5852 = vadd.xlane.f32.xlu0 %v5851
    %v5853 = vpop.xlane.xlu0 %5852
    %v5854 = vsel %vm444, %v5848, 0.0
    %5855 = vadd.xlane.f32.xlu0 %v5854
    %v5856 = vpop.xlane.xlu0 %5855
    %v5857 = vsel %vm444, %v5849, 0.0
    %5858 = vadd.xlane.f32.xlu0 %v5857
    %v5859 = vpop.xlane.xlu0 %5858
    %v5860 = vsel %vm444, %v5850, 0.0
    %5861 = vadd.xlane.f32.xlu0 %v5860
    %v5862 = vpop.xlane.xlu0 %5861
    %v5863 = vmul.f32 %v5853, %v3275
    %v5864 = vmul.f32 %v5856, %v3275
    %v5865 = vmul.f32 %v5859, %v3275
    %v5866 = vmul.f32 %v5862, %v3275
    %v5867 = vadd.f32 %v5863, 1e-05
    %v5868 = vadd.f32 %v5864, 1e-05
    %v5869 = vadd.f32 %v5865, 1e-05
    %v5870 = vadd.f32 %v5866, 1e-05
    %v5871 = vrsqrt.pop %v5867
    %v5872 = vrsqrt.pop %v5868
    %v5873 = vrsqrt.pop %v5869
    %v5874 = vrsqrt.pop %v5870
    %v5875 = vmul.f32 %v5843, %v5871
    %v5876 = vmul.f32 %v5844, %v5872
    %v5877 = vmul.f32 %v5845, %v5873
    %v5878 = vmul.f32 %v5846, %v5874
    %v5879 = vlaneseq
    %v5880 = vshrl.u32 %v5879, 7
    %v5881 = vsub.s32 2, %v5880
    %v5882 = vrot.slane %v3630, %v5881
    %v5883 = vmul.f32 %v5875, %v5882
    %v5884 = vmul.f32 %v5876, %v5882
    %v5885 = vmul.f32 %v5877, %v5882
    %v5886 = vmul.f32 %v5878, %v5882
    %v5887 = vlaneseq
    %v5888 = vshrl.u32 %v5887, 7
    %v5889 = vsub.s32 3, %v5888
    %v5890 = vrot.slane %v3630, %v5889
    %v5891 = vadd.f32 %v5883, %v5890
    %v5892 = vadd.f32 %v5884, %v5890
    %v5893 = vadd.f32 %v5885, %v5890
    %v5894 = vadd.f32 %v5886, %v5890
    %5895 = vst.msk [vmem:[#allocation19] sm:$0xff] %vm444, %v5891
    %5896 = vst.msk [vmem:[#allocation19 + $0x8] sm:$0xff] %vm444, %v5892
    %5897 = vst.msk [vmem:[#allocation19 + $0x10] sm:$0xff] %vm444, %v5893
    %5898 = vst.msk [vmem:[#allocation19 + $0x18] sm:$0xff] %vm444, %v5894
    %v5899 = vld [vmem:[#allocation16] sm:$0xff]
    %v5900 = vld [vmem:[#allocation16 + $0x8] sm:$0xff]
    %v5901 = vld [vmem:[#allocation16 + $0x10] sm:$0xff]
    %v5902 = vld [vmem:[#allocation16 + $0x18] sm:$0xff]
    %v5904 = vsel %vm444, %v5891, 0
    %v5907 = vsel %vm444, %v5892, 0
    %v5910 = vsel %vm444, %v5893, 0
    %v5913 = vsel %vm444, %v5894, 0
    %5915 = vmatprep.subr.mxu0 0.0
    %5916 = vmatpush1.msra.mxu0 %v5899
    %5917 = vmatprep.subr.mxu0 0.0
    %5918 = vmatpush1.msra.mxu0 %v5900
    %5919 = vmatprep.subr.mxu0 0.0
    %5920 = vmatpush1.msra.mxu0 %v5901
    %5921 = vmatprep.subr.mxu0 0.0
    %5922 = vmatpush1.msra.mxu0 %v5902
    %5923 = vmatprep.subr.mxu0 0.0
    %5924 = vmatpush1.msra.mxu0 0.0
    %5925 = vmatprep.subr.mxu0 0.0
    %5926 = vmatpush1.msra.mxu0 0.0
    %5927 = vmatprep.subr.mxu0 0.0
    %5928 = vmatpush1.msra.mxu0 0.0
    %5929 = vmatprep.subr.mxu0 0.0
    %5930 = vmatpush1.msra.mxu0 0.0
    %5931 = vmatprep.subr.mxu0 0.0
    %5932 = vmatpush1.msra.mxu0 0.0
    %5933 = vmatprep.subr.mxu0 0.0
    %5934 = vmatpush1.msra.mxu0 0.0
    %5935 = vmatprep.subr.mxu0 0.0
    %5936 = vmatpush1.msra.mxu0 0.0
    %5937 = vmatprep.subr.mxu0 0.0
    %5938 = vmatpush1.msra.mxu0 0.0
    %5939 = vmatprep.subr.mxu0 0.0
    %5940 = vmatpush1.msra.mxu0 0.0
    %5941 = vmatprep.subr.mxu0 0.0
    %5942 = vmatpush1.msra.mxu0 0.0
    %5943 = vmatprep.subr.mxu0 0.0
    %5944 = vmatpush1.msra.mxu0 0.0
    %5945 = vmatprep.subr.mxu0 0.0
    %5946 = vmatpush1.msra.mxu0 0.0
    %5947 = vmatprep.subr.mxu0 0.0
    %5948 = vmatpush1.msra.mxu0 0.0
    %5949 = vmatprep.subr.mxu0 0.0
    %5950 = vmatpush1.msra.mxu0 0.0
    %5951 = vmatprep.subr.mxu0 0.0
    %5952 = vmatpush1.msra.mxu0 0.0
    %5953 = vmatprep.subr.mxu0 0.0
    %5954 = vmatpush1.msra.mxu0 0.0
    %5955 = vmatprep.subr.mxu0 0.0
    %5956 = vmatpush1.msra.mxu0 0.0
    %5957 = vmatprep.subr.mxu0 0.0
    %5958 = vmatpush1.msra.mxu0 0.0
    %5959 = vmatprep.subr.mxu0 0.0
    %5960 = vmatpush1.msra.mxu0 0.0
    %5961 = vmatprep.subr.mxu0 0.0
    %5962 = vmatpush1.msra.mxu0 0.0
    %5963 = vmatprep.subr.mxu0 0.0
    %5964 = vmatpush1.msra.mxu0 0.0
    %5965 = vmatprep.subr.mxu0 0.0
    %5966 = vmatpush1.msra.mxu0 0.0
    %5967 = vmatprep.subr.mxu0 0.0
    %5968 = vmatpush1.msra.mxu0 0.0
    %5969 = vmatprep.subr.mxu0 0.0
    %5970 = vmatpush1.msra.mxu0 0.0
    %5971 = vmatprep.subr.mxu0 0.0
    %5972 = vmatpush1.msra.mxu0 0.0
    %5973 = vmatprep.subr.mxu0 0.0
    %5974 = vmatpush1.msra.mxu0 0.0
    %5975 = vmatprep.subr.mxu0 0.0
    %5976 = vmatpush1.msra.mxu0 0.0
    %5977 = vmatprep.subr.mxu0 0.0
    %5978 = vmatpush1.msra.mxu0 0.0
    %5979 = vmatprep.mubr.f32.mxu0 0.0
    %5980 = vmatmul.mubr.f32.gmra.mrb[0].mxu0 %v5904
    %v5981 = vpop.f32.mrb[0].mxu0
    %v5982 = vadd.f32 0.0, %v5981
    %v5983 = vpop.f32.mrb[0].mxu0
    %5984 = vmatprep.mubr.f32.mxu0 0.0
    %5985 = vmatmul.mubr.f32.gmra.mrb[0].mxu0 %v5907
    %v5986 = vpop.f32.mrb[0].mxu0
    %v5987 = vadd.f32 0.0, %v5986
    %v5988 = vpop.f32.mrb[0].mxu0
    %5989 = vmatprep.mubr.f32.mxu0 0.0
    %5990 = vmatmul.mubr.f32.gmra.mrb[0].mxu0 %v5910
    %v5991 = vpop.f32.mrb[0].mxu0
    %v5992 = vadd.f32 0.0, %v5991
    %v5993 = vpop.f32.mrb[0].mxu0
    %5994 = vmatprep.mubr.f32.mxu0 0.0
    %5995 = vmatmul.mubr.f32.gmra.mrb[0].mxu0 %v5913
    %v5996 = vpop.f32.mrb[0].mxu0
    %v5997 = vadd.f32 0.0, %v5996
    %v5998 = vpop.f32.mrb[0].mxu0
    %5999 = vdwg.mxu0
    %v6000 = vld [vmem:[#allocation17] sm:$0xff]
    %v6001 = vld [vmem:[#allocation17 + $0x8] sm:$0xff]
    %v6002 = vld [vmem:[#allocation17 + $0x10] sm:$0xff]
    %v6003 = vld [vmem:[#allocation17 + $0x18] sm:$0xff]
    %6004 = vmatprep.subr.mxu0 0.0
    %6005 = vmatpush1.msra.mxu0 %v6000
    %6006 = vmatprep.subr.mxu0 0.0
    %6007 = vmatpush1.msra.mxu0 %v6001
    %6008 = vmatprep.subr.mxu0 0.0
    %6009 = vmatpush1.msra.mxu0 %v6002
    %6010 = vmatprep.subr.mxu0 0.0
    %6011 = vmatpush1.msra.mxu0 %v6003
    %6012 = vmatprep.subr.mxu0 0.0
    %6013 = vmatpush1.msra.mxu0 0.0
    %6014 = vmatprep.subr.mxu0 0.0
    %6015 = vmatpush1.msra.mxu0 0.0
    %6016 = vmatprep.subr.mxu0 0.0
    %6017 = vmatpush1.msra.mxu0 0.0
    %6018 = vmatprep.subr.mxu0 0.0
    %6019 = vmatpush1.msra.mxu0 0.0
    %6020 = vmatprep.subr.mxu0 0.0
    %6021 = vmatpush1.msra.mxu0 0.0
    %6022 = vmatprep.subr.mxu0 0.0
    %6023 = vmatpush1.msra.mxu0 0.0
    %6024 = vmatprep.subr.mxu0 0.0
    %6025 = vmatpush1.msra.mxu0 0.0
    %6026 = vmatprep.subr.mxu0 0.0
    %6027 = vmatpush1.msra.mxu0 0.0
    %6028 = vmatprep.subr.mxu0 0.0
    %6029 = vmatpush1.msra.mxu0 0.0
    %6030 = vmatprep.subr.mxu0 0.0
    %6031 = vmatpush1.msra.mxu0 0.0
    %6032 = vmatprep.subr.mxu0 0.0
    %6033 = vmatpush1.msra.mxu0 0.0
    %6034 = vmatprep.subr.mxu0 0.0
    %6035 = vmatpush1.msra.mxu0 0.0
    %6036 = vmatprep.subr.mxu0 0.0
    %6037 = vmatpush1.msra.mxu0 0.0
    %6038 = vmatprep.subr.mxu0 0.0
    %6039 = vmatpush1.msra.mxu0 0.0
    %6040 = vmatprep.subr.mxu0 0.0
    %6041 = vmatpush1.msra.mxu0 0.0
    %6042 = vmatprep.subr.mxu0 0.0
    %6043 = vmatpush1.msra.mxu0 0.0
    %6044 = vmatprep.subr.mxu0 0.0
    %6045 = vmatpush1.msra.mxu0 0.0
    %6046 = vmatprep.subr.mxu0 0.0
    %6047 = vmatpush1.msra.mxu0 0.0
    %6048 = vmatprep.subr.mxu0 0.0
    %6049 = vmatpush1.msra.mxu0 0.0
    %6050 = vmatprep.subr.mxu0 0.0
    %6051 = vmatpush1.msra.mxu0 0.0
    %6052 = vmatprep.subr.mxu0 0.0
    %6053 = vmatpush1.msra.mxu0 0.0
    %6054 = vmatprep.subr.mxu0 0.0
    %6055 = vmatpush1.msra.mxu0 0.0
    %6056 = vmatprep.subr.mxu0 0.0
    %6057 = vmatpush1.msra.mxu0 0.0
    %6058 = vmatprep.subr.mxu0 0.0
    %6059 = vmatpush1.msra.mxu0 0.0
    %6060 = vmatprep.subr.mxu0 0.0
    %6061 = vmatpush1.msra.mxu0 0.0
    %6062 = vmatprep.subr.mxu0 0.0
    %6063 = vmatpush1.msra.mxu0 0.0
    %6064 = vmatprep.subr.mxu0 0.0
    %6065 = vmatpush1.msra.mxu0 0.0
    %6066 = vmatprep.subr.mxu0 0.0
    %6067 = vmatpush1.msra.mxu0 0.0
    %6068 = vmatprep.mubr.f32.mxu0 0.0
    %6069 = vmatmul.mubr.f32.gmra.mrb[0].mxu0 %v5904
    %v6070 = vpop.f32.mrb[0].mxu0
    %v6071 = vadd.f32 0.0, %v6070
    %v6072 = vpop.f32.mrb[0].mxu0
    %6073 = vmatprep.mubr.f32.mxu0 0.0
    %6074 = vmatmul.mubr.f32.gmra.mrb[0].mxu0 %v5907
    %v6075 = vpop.f32.mrb[0].mxu0
    %v6076 = vadd.f32 0.0, %v6075
    %v6077 = vpop.f32.mrb[0].mxu0
    %6078 = vmatprep.mubr.f32.mxu0 0.0
    %6079 = vmatmul.mubr.f32.gmra.mrb[0].mxu0 %v5910
    %v6080 = vpop.f32.mrb[0].mxu0
    %v6081 = vadd.f32 0.0, %v6080
    %v6082 = vpop.f32.mrb[0].mxu0
    %6083 = vmatprep.mubr.f32.mxu0 0.0
    %6084 = vmatmul.mubr.f32.gmra.mrb[0].mxu0 %v5913
    %v6085 = vpop.f32.mrb[0].mxu0
    %v6086 = vadd.f32 0.0, %v6085
    %v6087 = vpop.f32.mrb[0].mxu0
    %6088 = vdwg.mxu0
    %v6089 = vsel %vm444, %v5891, 0.0
    %v6090 = vsel %vm444, %v5892, 0.0
    %v6091 = vadd.f32 %v6089, %v6090
    %v6092 = vrot.slane %v6091, 4
    %v6093 = vadd.f32 %v6091, %v6092
    %v6094 = vrot.slane %v6093, 2
    %v6095 = vadd.f32 %v6093, %v6094
    %v6096 = vrot.slane %v6095, 1
    %v6097 = vadd.f32 %v6095, %v6096
    %v6098 = vsel %vm444, %v5893, 0.0
    %v6099 = vsel %vm444, %v5894, 0.0
    %v6100 = vadd.f32 %v6098, %v6099
    %v6101 = vrot.slane %v6100, 4
    %v6102 = vadd.f32 %v6100, %v6101
    %v6103 = vrot.slane %v6102, 2
    %v6104 = vadd.f32 %v6102, %v6103
    %v6105 = vrot.slane %v6104, 1
    %v6106 = vadd.f32 %v6104, %v6105
    %v6107 = vrcp.pop 16.0
    %v6108 = vmul.f32 %v6097, %v6107
    %v6109 = vmul.f32 %v6106, %v6107
    %v6110 = vld [vmem:[%s14] sm:$0xff]
    %v6111 = vld [vmem:[%s14 + $0x8] sm:$0xff]
    %v6112 = vld [vmem:[%s14 + $0x10] sm:$0xff]
    %v6113 = vld [vmem:[%s14 + $0x18] sm:$0xff]
    %vm6116 = vcmask 1041409
    %v6117 = vsel %vm6116, %v6109, %v6108
    %v6118 = vsel %vm444, %v6117, 0
    %6120 = vmatprep.subr.mxu0 0.0
    %6121 = vmatpush1.msra.mxu0 %v6110
    %6122 = vmatprep.subr.mxu0 0.0
    %6123 = vmatpush1.msra.mxu0 %v6111
    %6124 = vmatprep.subr.mxu0 0.0
    %6125 = vmatpush1.msra.mxu0 %v6112
    %6126 = vmatprep.subr.mxu0 0.0
    %6127 = vmatpush1.msra.mxu0 %v6113
    %6128 = vmatprep.subr.mxu0 0.0
    %6129 = vmatpush1.msra.mxu0 0.0
    %6130 = vmatprep.subr.mxu0 0.0
    %6131 = vmatpush1.msra.mxu0 0.0
    %6132 = vmatprep.subr.mxu0 0.0
    %6133 = vmatpush1.msra.mxu0 0.0
    %6134 = vmatprep.subr.mxu0 0.0
    %6135 = vmatpush1.msra.mxu0 0.0
    %6136 = vmatprep.subr.mxu0 0.0
    %6137 = vmatpush1.msra.mxu0 0.0
    %6138 = vmatprep.subr.mxu0 0.0
    %6139 = vmatpush1.msra.mxu0 0.0
    %6140 = vmatprep.subr.mxu0 0.0
    %6141 = vmatpush1.msra.mxu0 0.0
    %6142 = vmatprep.subr.mxu0 0.0
    %6143 = vmatpush1.msra.mxu0 0.0
    %6144 = vmatprep.subr.mxu0 0.0
    %6145 = vmatpush1.msra.mxu0 0.0
    %6146 = vmatprep.subr.mxu0 0.0
    %6147 = vmatpush1.msra.mxu0 0.0
    %6148 = vmatprep.subr.mxu0 0.0
    %6149 = vmatpush1.msra.mxu0 0.0
    %6150 = vmatprep.subr.mxu0 0.0
    %6151 = vmatpush1.msra.mxu0 0.0
    %6152 = vmatprep.subr.mxu0 0.0
    %6153 = vmatpush1.msra.mxu0 0.0
    %6154 = vmatprep.subr.mxu0 0.0
    %6155 = vmatpush1.msra.mxu0 0.0
    %6156 = vmatprep.subr.mxu0 0.0
    %6157 = vmatpush1.msra.mxu0 0.0
    %6158 = vmatprep.subr.mxu0 0.0
    %6159 = vmatpush1.msra.mxu0 0.0
    %6160 = vmatprep.subr.mxu0 0.0
    %6161 = vmatpush1.msra.mxu0 0.0
    %6162 = vmatprep.subr.mxu0 0.0
    %6163 = vmatpush1.msra.mxu0 0.0
    %6164 = vmatprep.subr.mxu0 0.0
    %6165 = vmatpush1.msra.mxu0 0.0
    %6166 = vmatprep.subr.mxu0 0.0
    %6167 = vmatpush1.msra.mxu0 0.0
    %6168 = vmatprep.subr.mxu0 0.0
    %6169 = vmatpush1.msra.mxu0 0.0
    %6170 = vmatprep.subr.mxu0 0.0
    %6171 = vmatpush1.msra.mxu0 0.0
    %6172 = vmatprep.subr.mxu0 0.0
    %6173 = vmatpush1.msra.mxu0 0.0
    %6174 = vmatprep.subr.mxu0 0.0
    %6175 = vmatpush1.msra.mxu0 0.0
    %6176 = vmatprep.subr.mxu0 0.0
    %6177 = vmatpush1.msra.mxu0 0.0
    %6178 = vmatprep.subr.mxu0 0.0
    %6179 = vmatpush1.msra.mxu0 0.0
    %6180 = vmatprep.subr.mxu0 0.0
    %6181 = vmatpush1.msra.mxu0 0.0
    %6182 = vmatprep.subr.mxu0 0.0
    %6183 = vmatpush1.msra.mxu0 0.0
    %6184 = vmatprep.mubr.f32.mxu0 0.0
    %6185 = vmatmul.mubr.f32.gmra.mrb[0].mxu0 %v6118
    %v6186 = vpop.f32.mrb[0].mxu0
    %v6187 = vadd.f32 0.0, %v6186
    %v6188 = vpop.f32.mrb[0].mxu0
    %6189 = vdwg.mxu0
    %v6192 = vunpack.c.l.s4 1966171168
    %v6193 = vunpack.c.0.s8 %v6192
    %v6194 = vlaneseq
    %v6195 = vshrl.u32 %v6194, 7
    %v6196 = vsub.s32 %v6193, %v6195
    %v6197 = vrot.slane %v6187, %v6196
    %v6198 = vcombine.high %v6197, %v6197
    %v6200 = vunpack.c.l.s4 1966171168
    %v6201 = vunpack.c.0.s8 %v6200
    %v6202 = vlaneseq
    %v6203 = vshrl.u32 %v6202, 7
    %v6204 = vsub.s32 %v6201, %v6203
    %v6205 = vrot.slane %v6197, %v6204
    %v6207 = vunpack.c.l.s4 1966171168
    %v6208 = vunpack.c.0.s8 %v6207
    %v6209 = vlaneseq
    %v6210 = vshrl.u32 %v6209, 7
    %v6211 = vsub.s32 %v6208, %v6210
    %v6212 = vrot.slane %v6198, %v6211
    %v6213 = vlaneseq
    %v6214 = vshrl.u32 %v6213, 7
    %v6215 = vsub.s32 0, %v6214
    %v6216 = vrot.slane %v6205, %v6215
    %v6217 = vlaneseq
    %v6218 = vshrl.u32 %v6217, 7
    %v6219 = vsub.s32 0, %v6218
    %v6220 = vrot.slane %v6212, %v6219
    %v6223 = vmul.f32 %v6216, %v5982
    %v6224 = vmul.f32 %v6216, %v5987
    %v6225 = vmul.f32 %v6220, %v5992
    %v6226 = vmul.f32 %v6220, %v5997
    %v6227 = vsel %vm444, %v6223, 0.0
    %6228 = vadd.xlane.f32.xlu0 %v6227
    %v6229 = vpop.xlane.xlu0 %6228
    %v6230 = vsel %vm444, %v6224, 0.0
    %6231 = vadd.xlane.f32.xlu0 %v6230
    %v6232 = vpop.xlane.xlu0 %6231
    %v6233 = vsel %vm444, %v6225, 0.0
    %6234 = vadd.xlane.f32.xlu0 %v6233
    %v6235 = vpop.xlane.xlu0 %6234
    %v6236 = vsel %vm444, %v6226, 0.0
    %6237 = vadd.xlane.f32.xlu0 %v6236
    %v6238 = vpop.xlane.xlu0 %6237
    %v6239 = vmul.f32 %v6229, 0.17677669
    %v6240 = vmul.f32 %v6232, 0.17677669
    %v6241 = vmul.f32 %v6235, 0.17677669
    %v6242 = vmul.f32 %v6238, 0.17677669
    %v6243 = vtanh.pop %v6239
    %v6244 = vtanh.pop %v6240
    %v6245 = vtanh.pop %v6241
    %v6246 = vtanh.pop %v6242
    %v6247 = vmul.f32 %v6243, 6.0
    %v6248 = vmul.f32 %v6244, 6.0
    %v6249 = vmul.f32 %v6245, 6.0
    %v6250 = vmul.f32 %v6246, 6.0
    %vm6251 = vcmp.gt.f32.partialorder 0.0, 0.5
    %v6252 = vsel %vm6251, -1e+09, %v6247
    %v6253 = vsel %vm6251, -1e+09, %v6248
    %v6254 = vsel %vm6251, -1e+09, %v6249
    %v6255 = vsel %vm6251, -1e+09, %v6250
    %v6260 = vlaneseq
    %v6261 = vshrl.u32 %v6260, 7
    %v6262 = vsub.s32 %v305, %v6261
    %v6263 = vrot.slane %v6252, %v6262
    %v6264 = vadd.s32 %v305, 4294967288
    %v6265 = vlaneseq
    %v6266 = vshrl.u32 %v6265, 7
    %v6267 = vsub.s32 %v6264, %v6266
    %v6268 = vrot.slane %v6253, %v6267
    %vm6269 = vcmask 130112
    %v6270 = vsel %vm6269, %v6268, %v6263
    %v6271 = vlaneseq
    %v6272 = vshrl.u32 %v6271, 7
    %v6273 = vsub.s32 %v305, %v6272
    %v6274 = vrot.slane %v6254, %v6273
    %v6275 = vlaneseq
    %v6276 = vshrl.u32 %v6275, 7
    %v6277 = vsub.s32 %v6264, %v6276
    %v6278 = vrot.slane %v6255, %v6277
    %v6279 = vsel %vm6269, %v6278, %v6274
    %v6280 = vsel %vm6116, %v6279, %v6270
    %vm6282 = vcmask 123904
    %v6283 = vsel %vm6282, %v6280, -inf
    %6284 = vmax.xlane.f32.xlu0 %v6283
    %v6285 = vpop.xlane.xlu0 %6284
    %v6287 = vlaneseq
    %v6288 = vshrl.u32 %v6287, 7
    %v6289 = vsub.s32 0, %v6288
    %v6290 = vrot.slane %v6285, %v6289
    %v6291 = vlaneseq
    %v6292 = vshrl.u32 %v6291, 7
    %v6293 = vsub.s32 1, %v6292
    %v6294 = vrot.slane %v6285, %v6293
    %vm6297 = vcmp.eq.f32.partialorder %v6252, %v6290
    %vm6298 = vcmp.eq.f32.partialorder %v6253, %v6290
    %vm6299 = vcmp.eq.f32.partialorder %v6254, %v6294
    %vm6300 = vcmp.eq.f32.partialorder %v6255, %v6294
    %6302 = vbcast.lane.b32.xlu0 %v305, 256
    %v6303 = vpop.permute.xlu0 %6302
    %s6305 = sor.u32 256, 8
    %6306 = vbcast.lane.b32.xlu0 %v305, %s6305
    %v6307 = vpop.permute.xlu0 %6306
    %v6308 = vsel %vm6297, %v6303, 16
    %v6309 = vsel %vm6298, %v6307, 16
    %v6310 = vsel %vm6299, %v6303, 16
    %v6311 = vsel %vm6300, %v6307, 16
    %6312 = vset.pattern.permute.xlu0 0
    %6313 = vperm.xlu0 %6312, %v6308
    %v6314 = vpop.permute.xlu0 %6313
    %6315 = vset.pattern.permute.xlu0 0
    %6316 = vperm.xlu0 %6315, %v6309
    %v6317 = vpop.permute.xlu0 %6316
    %6318 = vset.pattern.permute.xlu0 0
    %6319 = vperm.xlu0 %6318, %v6310
    %v6320 = vpop.permute.xlu0 %6319
    %6321 = vset.pattern.permute.xlu0 0
    %6322 = vperm.xlu0 %6321, %v6311
    %v6323 = vpop.permute.xlu0 %6322
    %v6324 = vlaneseq
    %v6325 = vshrl.u32 %v6324, 7
    %v6326 = vsub.s32 %v305, %v6325
    %v6327 = vrot.slane %v6314, %v6326
    %v6328 = vlaneseq
    %v6329 = vshrl.u32 %v6328, 7
    %v6330 = vsub.s32 %v6264, %v6329
    %v6331 = vrot.slane %v6317, %v6330
    %v6332 = vsel %vm6269, %v6331, %v6327
    %v6333 = vlaneseq
    %v6334 = vshrl.u32 %v6333, 7
    %v6335 = vsub.s32 %v305, %v6334
    %v6336 = vrot.slane %v6320, %v6335
    %v6337 = vlaneseq
    %v6338 = vshrl.u32 %v6337, 7
    %v6339 = vsub.s32 %v6264, %v6338
    %v6340 = vrot.slane %v6323, %v6339
    %v6341 = vsel %vm6269, %v6340, %v6336
    %v6342 = vsel %vm6116, %v6341, %v6332
    %v6343 = vsel %vm6282, %v6342, 2147483647
    %v6344 = vand.u32 %v6343, 65535
    %v6345 = vshra.s32 %v6343, 16
    %v6346 = vcvt.s32.f32 %v6344
    %v6347 = vcvt.s32.f32 %v6345
    %6348 = vmin.xlane.f32.xlu0 %v6347
    %v6349 = vpop.xlane.xlu0 %6348
    %vm6350 = vcmp.eq.f32.partialorder %v6347, %v6349
    %v6351 = vsel %vm6350, %v6346, inf
    %6352 = vmin.xlane.f32.xlu0 %v6351
    %v6353 = vpop.xlane.xlu0 %6352
    %v6354 = vcvt.f32.s32 %v6353
    %v6355 = vcvt.f32.s32 %v6349
    %v6356 = vshll.u32 %v6355, 16
    %v6357 = vadd.s32 %v6356, %v6354
    %vm6358 = vcmp.eq.s32.totalorder %v305, %v6357
    %v6359 = vsel %vm6358, 1, 0
    %v6360 = vcvt.s32.f32 %v6359
    %v6361 = vsub.f32 %v6252, %v6290
    %v6362 = vsub.f32 %v6253, %v6290
    %v6363 = vsub.f32 %v6254, %v6294
    %v6364 = vsub.f32 %v6255, %v6294
    %v6365 = vmul.f32 %v6361, 1.442695
    %v6366 = vpow.pop %v6365
    %v6367 = vmul.f32 %v6362, 1.442695
    %v6368 = vpow.pop %v6367
    %v6369 = vmul.f32 %v6363, 1.442695
    %v6370 = vpow.pop %v6369
    %v6371 = vmul.f32 %v6364, 1.442695
    %v6372 = vpow.pop %v6371
    %6377 = vset.pattern.permute.xlu0 0
    %6378 = vperm.xlu0 %6377, %v6366
    %v6379 = vpop.permute.xlu0 %6378
    %6380 = vset.pattern.permute.xlu0 0
    %6381 = vperm.xlu0 %6380, %v6368
    %v6382 = vpop.permute.xlu0 %6381
    %6383 = vset.pattern.permute.xlu0 0
    %6384 = vperm.xlu0 %6383, %v6370
    %v6385 = vpop.permute.xlu0 %6384
    %6386 = vset.pattern.permute.xlu0 0
    %6387 = vperm.xlu0 %6386, %v6372
    %v6388 = vpop.permute.xlu0 %6387
    %v6389 = vlaneseq
    %v6390 = vshrl.u32 %v6389, 7
    %v6391 = vsub.s32 %v305, %v6390
    %v6392 = vrot.slane %v6379, %v6391
    %v6393 = vlaneseq
    %v6394 = vshrl.u32 %v6393, 7
    %v6395 = vsub.s32 %v6264, %v6394
    %v6396 = vrot.slane %v6382, %v6395
    %v6397 = vsel %vm6269, %v6396, %v6392
    %v6398 = vlaneseq
    %v6399 = vshrl.u32 %v6398, 7
    %v6400 = vsub.s32 %v305, %v6399
    %v6401 = vrot.slane %v6385, %v6400
    %v6402 = vlaneseq
    %v6403 = vshrl.u32 %v6402, 7
    %v6404 = vsub.s32 %v6264, %v6403
    %v6405 = vrot.slane %v6388, %v6404
    %v6406 = vsel %vm6269, %v6405, %v6401
    %v6407 = vsel %vm6116, %v6406, %v6397
    %v6409 = vsel %vm6282, %v6407, 0.0
    %6410 = vadd.xlane.f32.xlu0 %v6409
    %v6411 = vpop.xlane.xlu0 %6410
    %v6413 = vlaneseq
    %v6414 = vshrl.u32 %v6413, 7
    %v6415 = vsub.s32 0, %v6414
    %v6416 = vrot.slane %v6360, %v6415
    %6418 = vbcast.lane.b32.xlu0 %v6416, 256
    %v6419 = vpop.permute.xlu0 %6418
    %s6421 = sor.u32 256, 8
    %6422 = vbcast.lane.b32.xlu0 %v6416, %s6421
    %v6423 = vpop.permute.xlu0 %6422
    %v6424 = vlaneseq
    %v6425 = vshrl.u32 %v6424, 7
    %v6426 = vsub.s32 1, %v6425
    %v6427 = vrot.slane %v6360, %v6426
    %6429 = vbcast.lane.b32.xlu0 %v6427, 256
    %v6430 = vpop.permute.xlu0 %6429
    %s6432 = sor.u32 256, 8
    %6433 = vbcast.lane.b32.xlu0 %v6427, %s6432
    %v6434 = vpop.permute.xlu0 %6433
    %v6439 = vmul.f32 %v6252, %v6419
    %v6440 = vmul.f32 %v6253, %v6423
    %v6441 = vmul.f32 %v6254, %v6430
    %v6442 = vmul.f32 %v6255, %v6434
    %6447 = vset.pattern.permute.xlu0 0
    %6448 = vperm.xlu0 %6447, %v6439
    %v6449 = vpop.permute.xlu0 %6448
    %6450 = vset.pattern.permute.xlu0 0
    %6451 = vperm.xlu0 %6450, %v6440
    %v6452 = vpop.permute.xlu0 %6451
    %6453 = vset.pattern.permute.xlu0 0
    %6454 = vperm.xlu0 %6453, %v6441
    %v6455 = vpop.permute.xlu0 %6454
    %6456 = vset.pattern.permute.xlu0 0
    %6457 = vperm.xlu0 %6456, %v6442
    %v6458 = vpop.permute.xlu0 %6457
    %v6459 = vlaneseq
    %v6460 = vshrl.u32 %v6459, 7
    %v6461 = vsub.s32 %v305, %v6460
    %v6462 = vrot.slane %v6449, %v6461
    %v6463 = vlaneseq
    %v6464 = vshrl.u32 %v6463, 7
    %v6465 = vsub.s32 %v6264, %v6464
    %v6466 = vrot.slane %v6452, %v6465
    %v6467 = vsel %vm6269, %v6466, %v6462
    %v6468 = vlaneseq
    %v6469 = vshrl.u32 %v6468, 7
    %v6470 = vsub.s32 %v305, %v6469
    %v6471 = vrot.slane %v6455, %v6470
    %v6472 = vlaneseq
    %v6473 = vshrl.u32 %v6472, 7
    %v6474 = vsub.s32 %v6264, %v6473
    %v6475 = vrot.slane %v6458, %v6474
    %v6476 = vsel %vm6269, %v6475, %v6471
    %v6477 = vsel %vm6116, %v6476, %v6467
    %v6479 = vsel %vm6282, %v6477, 0.0
    %6480 = vadd.xlane.f32.xlu0 %v6479
    %v6481 = vpop.xlane.xlu0 %6480
    %v6482 = vsub.f32 %v6481, %v6285
    %v6483 = vadd.f32 %v6482, 0.0
    %v6484 = vlog2.pop %v6411
    %v6485 = vmul.f32 %v6484, 0.6931472
    %v6486 = vsub.f32 %v6483, %v6485
    %vm6487 = vcmp.eq.s32.totalorder %v305, 0
    %v6488 = vsel %vm6487, %v6357, 0
    %v6489 = vadd.f32 %v6360, 0.0
    %v6490 = vlaneseq
    %v6491 = vshrl.u32 %v6490, 7
    %v6492 = vsub.s32 0, %v6491
    %v6493 = vrot.slane %v6360, %v6492
    %6495 = vbcast.lane.b32.xlu0 %v6493, 256
    %v6496 = vpop.permute.xlu0 %6495
    %s6498 = sor.u32 256, 8
    %6499 = vbcast.lane.b32.xlu0 %v6493, %s6498
    %v6500 = vpop.permute.xlu0 %6499
    %v6501 = vlaneseq
    %v6502 = vshrl.u32 %v6501, 7
    %v6503 = vsub.s32 1, %v6502
    %v6504 = vrot.slane %v6360, %v6503
    %6506 = vbcast.lane.b32.xlu0 %v6504, 256
    %v6507 = vpop.permute.xlu0 %6506
    %s6509 = sor.u32 256, 8
    %6510 = vbcast.lane.b32.xlu0 %v6504, %s6509
    %v6511 = vpop.permute.xlu0 %6510
    %v6512 = vmul.f32 %v6496, %v6071
    %v6513 = vmul.f32 %v6500, %v6076
    %v6514 = vmul.f32 %v6507, %v6081
    %v6515 = vmul.f32 %v6511, %v6086
    %v6516 = vsel %vm444, %v6512, 0.0
    %v6517 = vsel %vm444, %v6513, 0.0
    %v6518 = vadd.f32 %v6516, %v6517
    %v6519 = vrot.slane %v6518, 4
    %v6520 = vadd.f32 %v6518, %v6519
    %v6521 = vrot.slane %v6520, 2
    %v6522 = vadd.f32 %v6520, %v6521
    %v6523 = vrot.slane %v6522, 1
    %v6524 = vadd.f32 %v6522, %v6523
    %v6525 = vsel %vm444, %v6514, 0.0
    %v6526 = vsel %vm444, %v6515, 0.0
    %v6527 = vadd.f32 %v6525, %v6526
    %v6528 = vrot.slane %v6527, 4
    %v6529 = vadd.f32 %v6527, %v6528
    %v6530 = vrot.slane %v6529, 2
    %v6531 = vadd.f32 %v6529, %v6530
    %v6532 = vrot.slane %v6531, 1
    %v6533 = vadd.f32 %v6531, %v6532
    %v6534 = vmul.f32 %v6524, %v5982
    %v6535 = vmul.f32 %v6524, %v5987
    %v6536 = vmul.f32 %v6533, %v5992
    %v6537 = vmul.f32 %v6533, %v5997
    %v6538 = vsel %vm444, %v6534, 0.0
    %6539 = vadd.xlane.f32.xlu0 %v6538
    %v6540 = vpop.xlane.xlu0 %6539
    %v6541 = vsel %vm444, %v6535, 0.0
    %6542 = vadd.xlane.f32.xlu0 %v6541
    %v6543 = vpop.xlane.xlu0 %6542
    %v6544 = vsel %vm444, %v6536, 0.0
    %6545 = vadd.xlane.f32.xlu0 %v6544
    %v6546 = vpop.xlane.xlu0 %6545
    %v6547 = vsel %vm444, %v6537, 0.0
    %6548 = vadd.xlane.f32.xlu0 %v6547
    %v6549 = vpop.xlane.xlu0 %6548
    %v6550 = vmul.f32 %v6540, 0.17677669
    %v6551 = vmul.f32 %v6543, 0.17677669
    %v6552 = vmul.f32 %v6546, 0.17677669
    %v6553 = vmul.f32 %v6549, 0.17677669
    %v6554 = vtanh.pop %v6550
    %v6555 = vtanh.pop %v6551
    %v6556 = vtanh.pop %v6552
    %v6557 = vtanh.pop %v6553
    %v6558 = vmul.f32 %v6554, 6.0
    %v6559 = vmul.f32 %v6555, 6.0
    %v6560 = vmul.f32 %v6556, 6.0
    %v6561 = vmul.f32 %v6557, 6.0
    %vm6562 = vcmp.gt.f32.partialorder %v6489, 0.5
    %v6567 = vlaneseq
    %v6568 = vshrl.u32 %v6567, 7
    %v6569 = vsub.s32 %v305, %v6568
    %v6570 = vrot.slane %v6558, %v6569
    %v6571 = vlaneseq
    %v6572 = vshrl.u32 %v6571, 7
    %v6573 = vsub.s32 %v6264, %v6572
    %v6574 = vrot.slane %v6559, %v6573
    %v6575 = vsel %vm6269, %v6574, %v6570
    %v6576 = vlaneseq
    %v6577 = vshrl.u32 %v6576, 7
    %v6578 = vsub.s32 %v305, %v6577
    %v6579 = vrot.slane %v6560, %v6578
    %v6580 = vlaneseq
    %v6581 = vshrl.u32 %v6580, 7
    %v6582 = vsub.s32 %v6264, %v6581
    %v6583 = vrot.slane %v6561, %v6582
    %v6584 = vsel %vm6269, %v6583, %v6579
    %v6585 = vsel %vm6116, %v6584, %v6575
    %v6587 = vsel %vm6562, -1e+09, %v6585
    %v6588 = vsel %vm6282, %v6587, -inf
    %6589 = vmax.xlane.f32.xlu0 %v6588
    %v6590 = vpop.xlane.xlu0 %6589
    %vm6591 = vcmp.eq.f32.partialorder %v6587, %v6590
    %v6592 = vsel %vm6591, %v305, 16
    %v6593 = vsel %vm6282, %v6592, 2147483647
    %v6594 = vand.u32 %v6593, 65535
    %v6595 = vshra.s32 %v6593, 16
    %v6596 = vcvt.s32.f32 %v6594
    %v6597 = vcvt.s32.f32 %v6595
    %6598 = vmin.xlane.f32.xlu0 %v6597
    %v6599 = vpop.xlane.xlu0 %6598
    %vm6600 = vcmp.eq.f32.partialorder %v6597, %v6599
    %v6601 = vsel %vm6600, %v6596, inf
    %6602 = vmin.xlane.f32.xlu0 %v6601
    %v6603 = vpop.xlane.xlu0 %6602
    %v6604 = vcvt.f32.s32 %v6603
    %v6605 = vcvt.f32.s32 %v6599
    %v6606 = vshll.u32 %v6605, 16
    %v6607 = vadd.s32 %v6606, %v6604
    %vm6608 = vcmp.eq.s32.totalorder %v305, %v6607
    %v6609 = vsel %vm6608, 1, 0
    %v6610 = vcvt.s32.f32 %v6609
    %v6611 = vsub.f32 %v6587, %v6590
    %v6612 = vmul.f32 %v6611, 1.442695
    %v6613 = vpow.pop %v6612
    %v6614 = vsel %vm6282, %v6613, 0.0
    %6615 = vadd.xlane.f32.xlu0 %v6614
    %v6616 = vpop.xlane.xlu0 %6615
    %v6617 = vmul.f32 %v6587, %v6610
    %v6618 = vsel %vm6282, %v6617, 0.0
    %6619 = vadd.xlane.f32.xlu0 %v6618
    %v6620 = vpop.xlane.xlu0 %6619
    %v6621 = vsub.f32 %v6620, %v6590
    %v6622 = vadd.f32 %v6486, %v6621
    %v6623 = vlog2.pop %v6616
    %v6624 = vmul.f32 %v6623, 0.6931472
    %v6625 = vsub.f32 %v6622, %v6624
    %vm6626 = vcmp.eq.s32.totalorder %v305, 1
    %v6627 = vsel %vm6626, %v6607, %v6488
    %v6628 = vadd.f32 %v6489, %v6610
    %v6629 = vlaneseq
    %v6630 = vshrl.u32 %v6629, 7
    %v6631 = vsub.s32 0, %v6630
    %v6632 = vrot.slane %v6610, %v6631
    %6634 = vbcast.lane.b32.xlu0 %v6632, 256
    %v6635 = vpop.permute.xlu0 %6634
    %s6637 = sor.u32 256, 8
    %6638 = vbcast.lane.b32.xlu0 %v6632, %s6637
    %v6639 = vpop.permute.xlu0 %6638
    %v6640 = vlaneseq
    %v6641 = vshrl.u32 %v6640, 7
    %v6642 = vsub.s32 1, %v6641
    %v6643 = vrot.slane %v6610, %v6642
    %6645 = vbcast.lane.b32.xlu0 %v6643, 256
    %v6646 = vpop.permute.xlu0 %6645
    %s6648 = sor.u32 256, 8
    %6649 = vbcast.lane.b32.xlu0 %v6643, %s6648
    %v6650 = vpop.permute.xlu0 %6649
    %v6651 = vmul.f32 %v6635, %v6071
    %v6652 = vmul.f32 %v6639, %v6076
    %v6653 = vmul.f32 %v6646, %v6081
    %v6654 = vmul.f32 %v6650, %v6086
    %v6655 = vsel %vm444, %v6651, 0.0
    %v6656 = vsel %vm444, %v6652, 0.0
    %v6657 = vadd.f32 %v6655, %v6656
    %v6658 = vrot.slane %v6657, 4
    %v6659 = vadd.f32 %v6657, %v6658
    %v6660 = vrot.slane %v6659, 2
    %v6661 = vadd.f32 %v6659, %v6660
    %v6662 = vrot.slane %v6661, 1
    %v6663 = vadd.f32 %v6661, %v6662
    %v6664 = vsel %vm444, %v6653, 0.0
    %v6665 = vsel %vm444, %v6654, 0.0
    %v6666 = vadd.f32 %v6664, %v6665
    %v6667 = vrot.slane %v6666, 4
    %v6668 = vadd.f32 %v6666, %v6667
    %v6669 = vrot.slane %v6668, 2
    %v6670 = vadd.f32 %v6668, %v6669
    %v6671 = vrot.slane %v6670, 1
    %v6672 = vadd.f32 %v6670, %v6671
    %v6673 = vmul.f32 %v6663, %v5982
    %v6674 = vmul.f32 %v6663, %v5987
    %v6675 = vmul.f32 %v6672, %v5992
    %v6676 = vmul.f32 %v6672, %v5997
    %v6677 = vsel %vm444, %v6673, 0.0
    %6678 = vadd.xlane.f32.xlu0 %v6677
    %v6679 = vpop.xlane.xlu0 %6678
    %v6680 = vsel %vm444, %v6674, 0.0
    %6681 = vadd.xlane.f32.xlu0 %v6680
    %v6682 = vpop.xlane.xlu0 %6681
    %v6683 = vsel %vm444, %v6675, 0.0
    %6684 = vadd.xlane.f32.xlu0 %v6683
    %v6685 = vpop.xlane.xlu0 %6684
    %v6686 = vsel %vm444, %v6676, 0.0
    %6687 = vadd.xlane.f32.xlu0 %v6686
    %v6688 = vpop.xlane.xlu0 %6687
    %v6689 = vmul.f32 %v6679, 0.17677669
    %v6690 = vmul.f32 %v6682, 0.17677669
    %v6691 = vmul.f32 %v6685, 0.17677669
    %v6692 = vmul.f32 %v6688, 0.17677669
    %v6693 = vtanh.pop %v6689
    %v6694 = vtanh.pop %v6690
    %v6695 = vtanh.pop %v6691
    %v6696 = vtanh.pop %v6692
    %v6697 = vmul.f32 %v6693, 6.0
    %v6698 = vmul.f32 %v6694, 6.0
    %v6699 = vmul.f32 %v6695, 6.0
    %v6700 = vmul.f32 %v6696, 6.0
    %vm6701 = vcmp.gt.f32.partialorder %v6628, 0.5
    %v6706 = vlaneseq
    %v6707 = vshrl.u32 %v6706, 7
    %v6708 = vsub.s32 %v305, %v6707
    %v6709 = vrot.slane %v6697, %v6708
    %v6710 = vlaneseq
    %v6711 = vshrl.u32 %v6710, 7
    %v6712 = vsub.s32 %v6264, %v6711
    %v6713 = vrot.slane %v6698, %v6712
    %v6714 = vsel %vm6269, %v6713, %v6709
    %v6715 = vlaneseq
    %v6716 = vshrl.u32 %v6715, 7
    %v6717 = vsub.s32 %v305, %v6716
    %v6718 = vrot.slane %v6699, %v6717
    %v6719 = vlaneseq
    %v6720 = vshrl.u32 %v6719, 7
    %v6721 = vsub.s32 %v6264, %v6720
    %v6722 = vrot.slane %v6700, %v6721
    %v6723 = vsel %vm6269, %v6722, %v6718
    %v6724 = vsel %vm6116, %v6723, %v6714
    %v6726 = vsel %vm6701, -1e+09, %v6724
    %v6727 = vsel %vm6282, %v6726, -inf
    %6728 = vmax.xlane.f32.xlu0 %v6727
    %v6729 = vpop.xlane.xlu0 %6728
    %vm6730 = vcmp.eq.f32.partialorder %v6726, %v6729
    %v6731 = vsel %vm6730, %v305, 16
    %v6732 = vsel %vm6282, %v6731, 2147483647
    %v6733 = vand.u32 %v6732, 65535
    %v6734 = vshra.s32 %v6732, 16
    %v6735 = vcvt.s32.f32 %v6733
    %v6736 = vcvt.s32.f32 %v6734
    %6737 = vmin.xlane.f32.xlu0 %v6736
    %v6738 = vpop.xlane.xlu0 %6737
    %vm6739 = vcmp.eq.f32.partialorder %v6736, %v6738
    %v6740 = vsel %vm6739, %v6735, inf
    %6741 = vmin.xlane.f32.xlu0 %v6740
    %v6742 = vpop.xlane.xlu0 %6741
    %v6743 = vcvt.f32.s32 %v6742
    %v6744 = vcvt.f32.s32 %v6738
    %v6745 = vshll.u32 %v6744, 16
    %v6746 = vadd.s32 %v6745, %v6743
    %vm6747 = vcmp.eq.s32.totalorder %v305, %v6746
    %v6748 = vsel %vm6747, 1, 0
    %v6749 = vcvt.s32.f32 %v6748
    %v6750 = vsub.f32 %v6726, %v6729
    %v6751 = vmul.f32 %v6750, 1.442695
    %v6752 = vpow.pop %v6751
    %v6753 = vsel %vm6282, %v6752, 0.0
    %6754 = vadd.xlane.f32.xlu0 %v6753
    %v6755 = vpop.xlane.xlu0 %6754
    %v6756 = vmul.f32 %v6726, %v6749
    %v6757 = vsel %vm6282, %v6756, 0.0
    %6758 = vadd.xlane.f32.xlu0 %v6757
    %v6759 = vpop.xlane.xlu0 %6758
    %v6760 = vsub.f32 %v6759, %v6729
    %v6761 = vadd.f32 %v6625, %v6760
    %v6762 = vlog2.pop %v6755
    %v6763 = vmul.f32 %v6762, 0.6931472
    %v6764 = vsub.f32 %v6761, %v6763
    %vm6765 = vcmp.eq.s32.totalorder %v305, 2
    %v6766 = vsel %vm6765, %v6746, %v6627
    %v6767 = vadd.f32 %v6628, %v6749
    %v6768 = vlaneseq
    %v6769 = vshrl.u32 %v6768, 7
    %v6770 = vsub.s32 0, %v6769
    %v6771 = vrot.slane %v6749, %v6770
    %6773 = vbcast.lane.b32.xlu0 %v6771, 256
    %v6774 = vpop.permute.xlu0 %6773
    %s6776 = sor.u32 256, 8
    %6777 = vbcast.lane.b32.xlu0 %v6771, %s6776
    %v6778 = vpop.permute.xlu0 %6777
    %v6779 = vlaneseq
    %v6780 = vshrl.u32 %v6779, 7
    %v6781 = vsub.s32 1, %v6780
    %v6782 = vrot.slane %v6749, %v6781
    %6784 = vbcast.lane.b32.xlu0 %v6782, 256
    %v6785 = vpop.permute.xlu0 %6784
    %s6787 = sor.u32 256, 8
    %6788 = vbcast.lane.b32.xlu0 %v6782, %s6787
    %v6789 = vpop.permute.xlu0 %6788
    %v6790 = vmul.f32 %v6774, %v6071
    %v6791 = vmul.f32 %v6778, %v6076
    %v6792 = vmul.f32 %v6785, %v6081
    %v6793 = vmul.f32 %v6789, %v6086
    %v6794 = vsel %vm444, %v6790, 0.0
    %v6795 = vsel %vm444, %v6791, 0.0
    %v6796 = vadd.f32 %v6794, %v6795
    %v6797 = vrot.slane %v6796, 4
    %v6798 = vadd.f32 %v6796, %v6797
    %v6799 = vrot.slane %v6798, 2
    %v6800 = vadd.f32 %v6798, %v6799
    %v6801 = vrot.slane %v6800, 1
    %v6802 = vadd.f32 %v6800, %v6801
    %v6803 = vsel %vm444, %v6792, 0.0
    %v6804 = vsel %vm444, %v6793, 0.0
    %v6805 = vadd.f32 %v6803, %v6804
    %v6806 = vrot.slane %v6805, 4
    %v6807 = vadd.f32 %v6805, %v6806
    %v6808 = vrot.slane %v6807, 2
    %v6809 = vadd.f32 %v6807, %v6808
    %v6810 = vrot.slane %v6809, 1
    %v6811 = vadd.f32 %v6809, %v6810
    %v6812 = vmul.f32 %v6802, %v5982
    %v6813 = vmul.f32 %v6802, %v5987
    %v6814 = vmul.f32 %v6811, %v5992
    %v6815 = vmul.f32 %v6811, %v5997
    %v6816 = vsel %vm444, %v6812, 0.0
    %6817 = vadd.xlane.f32.xlu0 %v6816
    %v6818 = vpop.xlane.xlu0 %6817
    %v6819 = vsel %vm444, %v6813, 0.0
    %6820 = vadd.xlane.f32.xlu0 %v6819
    %v6821 = vpop.xlane.xlu0 %6820
    %v6822 = vsel %vm444, %v6814, 0.0
    %6823 = vadd.xlane.f32.xlu0 %v6822
    %v6824 = vpop.xlane.xlu0 %6823
    %v6825 = vsel %vm444, %v6815, 0.0
    %6826 = vadd.xlane.f32.xlu0 %v6825
    %v6827 = vpop.xlane.xlu0 %6826
    %v6828 = vmul.f32 %v6818, 0.17677669
    %v6829 = vmul.f32 %v6821, 0.17677669
    %v6830 = vmul.f32 %v6824, 0.17677669
    %v6831 = vmul.f32 %v6827, 0.17677669
    %v6832 = vtanh.pop %v6828
    %v6833 = vtanh.pop %v6829
    %v6834 = vtanh.pop %v6830
    %v6835 = vtanh.pop %v6831
    %v6836 = vmul.f32 %v6832, 6.0
    %v6837 = vmul.f32 %v6833, 6.0
    %v6838 = vmul.f32 %v6834, 6.0
    %v6839 = vmul.f32 %v6835, 6.0
    %vm6840 = vcmp.gt.f32.partialorder %v6767, 0.5
    %v6845 = vlaneseq
    %v6846 = vshrl.u32 %v6845, 7
    %v6847 = vsub.s32 %v305, %v6846
    %v6848 = vrot.slane %v6836, %v6847
    %v6849 = vlaneseq
    %v6850 = vshrl.u32 %v6849, 7
    %v6851 = vsub.s32 %v6264, %v6850
    %v6852 = vrot.slane %v6837, %v6851
    %v6853 = vsel %vm6269, %v6852, %v6848
    %v6854 = vlaneseq
    %v6855 = vshrl.u32 %v6854, 7
    %v6856 = vsub.s32 %v305, %v6855
    %v6857 = vrot.slane %v6838, %v6856
    %v6858 = vlaneseq
    %v6859 = vshrl.u32 %v6858, 7
    %v6860 = vsub.s32 %v6264, %v6859
    %v6861 = vrot.slane %v6839, %v6860
    %v6862 = vsel %vm6269, %v6861, %v6857
    %v6863 = vsel %vm6116, %v6862, %v6853
    %v6865 = vsel %vm6840, -1e+09, %v6863
    %v6866 = vsel %vm6282, %v6865, -inf
    %6867 = vmax.xlane.f32.xlu0 %v6866
    %v6868 = vpop.xlane.xlu0 %6867
    %vm6869 = vcmp.eq.f32.partialorder %v6865, %v6868
    %v6870 = vsel %vm6869, %v305, 16
    %v6871 = vsel %vm6282, %v6870, 2147483647
    %v6872 = vand.u32 %v6871, 65535
    %v6873 = vshra.s32 %v6871, 16
    %v6874 = vcvt.s32.f32 %v6872
    %v6875 = vcvt.s32.f32 %v6873
    %6876 = vmin.xlane.f32.xlu0 %v6875
    %v6877 = vpop.xlane.xlu0 %6876
    %vm6878 = vcmp.eq.f32.partialorder %v6875, %v6877
    %v6879 = vsel %vm6878, %v6874, inf
    %6880 = vmin.xlane.f32.xlu0 %v6879
    %v6881 = vpop.xlane.xlu0 %6880
    %v6882 = vcvt.f32.s32 %v6881
    %v6883 = vcvt.f32.s32 %v6877
    %v6884 = vshll.u32 %v6883, 16
    %v6885 = vadd.s32 %v6884, %v6882
    %vm6886 = vcmp.eq.s32.totalorder %v305, %v6885
    %v6887 = vsel %vm6886, 1, 0
    %v6888 = vcvt.s32.f32 %v6887
    %v6889 = vsub.f32 %v6865, %v6868
    %v6890 = vmul.f32 %v6889, 1.442695
    %v6891 = vpow.pop %v6890
    %v6892 = vsel %vm6282, %v6891, 0.0
    %6893 = vadd.xlane.f32.xlu0 %v6892
    %v6894 = vpop.xlane.xlu0 %6893
    %v6895 = vmul.f32 %v6865, %v6888
    %v6896 = vsel %vm6282, %v6895, 0.0
    %6897 = vadd.xlane.f32.xlu0 %v6896
    %v6898 = vpop.xlane.xlu0 %6897
    %v6899 = vsub.f32 %v6898, %v6868
    %v6900 = vadd.f32 %v6764, %v6899
    %v6901 = vlog2.pop %v6894
    %v6902 = vmul.f32 %v6901, 0.6931472
    %v6903 = vsub.f32 %v6900, %v6902
    %vm6904 = vcmp.eq.s32.totalorder %v305, 3
    %v6905 = vsel %vm6904, %v6885, %v6766
    %vm6906 = vcmask 25600
    %6907 = vst.msk [vmem:[#allocation20] sm:$0x3] %vm6906, %v6905
    %vm6908 = vcmask 1024
    %6909 = vst.msk [vmem:[%s19] sm:$0x3] %vm6908, %v6903
    // Predicated region
    $region110: #{tpu_custom_call.1} parent=1 // pred_check
      _
    $region111: #{tpu_custom_call.1} parent=1 // pred_check_branch
      %6911 = sbr.rel (0) target = $region113
    $region112: #{tpu_custom_call.1} parent=1 // pred_region
      %s6913 = ssub.s32 512, 512
      %6914 = vsyncadd [#allocation4], %s6913
      %s6915 = sshll.u32 [#allocation19], 4
      %s6916 = int_to_ptr.vmem [resolvable:$true] %s6915
      %6921 = dma.vmem_to_hbm [thread:$0]  %s6916, 512, %s17, [#allocation4], 128, 128, 8
    $region113: #{tpu_custom_call.1} parent=1 // pred_fallthru
      _
    // Predicated region
    $region114: #{tpu_custom_call.1} parent=1 // pred_check
      _
    $region115: #{tpu_custom_call.1} parent=1 // pred_check_branch
      %6923 = sbr.rel (0) target = $region117
    $region116: #{tpu_custom_call.1} parent=1 // pred_region
      %s6925 = ssub.s32 32, 32
      %6926 = vsyncadd [#allocation21], %s6925
      %s6928 = sshll.u32 [#allocation20], 4
      %s6929 = int_to_ptr.vmem [resolvable:$true] %s6928
      %6931 = dma.vmem_to_hbm [thread:$0]  %s6929, 32, %s18, [#allocation21]
    $region117: #{tpu_custom_call.1} parent=1 // pred_fallthru
      _
    // Predicated region
    $region118: #{tpu_custom_call.1} parent=1 // pred_check
      _
    $region119: #{tpu_custom_call.1} parent=1 // pred_check_branch
      %6933 = sbr.rel (0) target = $region121
    $region120: #{tpu_custom_call.1} parent=1 // pred_region
      _
    $region121: #{tpu_custom_call.1} parent=1 // pred_fallthru
      _
    // Predicated region
    $region122: #{tpu_custom_call.1} parent=1 // pred_check
      _
    $region123: #{tpu_custom_call.1} parent=1 // pred_check_branch
      %6935 = sbr.rel (0) target = $region125
    $region124: #{tpu_custom_call.1} parent=1 // pred_region
      %6936 = dma.done [#allocation4], 512
    $region125: #{tpu_custom_call.1} parent=1 // pred_fallthru
      _
    // Predicated region
    $region126: #{tpu_custom_call.1} parent=1 // pred_check
      _
    $region127: #{tpu_custom_call.1} parent=1 // pred_check_branch
      %6938 = sbr.rel (0) target = $region129
    $region128: #{tpu_custom_call.1} parent=1 // pred_region
      %6939 = dma.done [#allocation21], 32
    $region129: #{tpu_custom_call.1} parent=1 // pred_fallthru
      _
    // Predicated region
    $region130: #{tpu_custom_call.1} parent=1 // pred_check
      _
    $region131: #{tpu_custom_call.1} parent=1 // pred_check_branch
      %6941 = sbr.rel (0) target = $region133
    $region132: #{tpu_custom_call.1} parent=1 // pred_region
      _
    $region133: #{tpu_custom_call.1} parent=1 // pred_fallthru
      _
    %6942 = vsyncpa [#allocation3], 1
    %6943 = vsyncpa [#allocation6], 1
    %6944 = vsyncpa [#allocation9], 1
    %6945 = vsyncpa [#allocation12], 1
    %6946 = vsyncpa [#allocation15], 1
    %6947 = vsyncpa [#allocation18], 1
    %6948 = vsyncpa [#allocation4], 1
    %6949 = vsyncpa [#allocation21], 1

</llo_original>
